<compile_context>
chip_gen: v6e
topology: v6e:2x2x1
jax: 0.10.0
libtpu: 0.0.40
codegen_flags: <defaults>
</compile_context>

<pallas_src>
import jax
import jax.numpy as jnp
from jax import lax
from jax.experimental import pallas as pl
from jax.experimental.pallas import tpu as pltpu


# ----------------------------------------------------------------------------
# Weight / bias repacking: fold the kernel's W axis (and the W "same"
# boundary) into per-(kd, kh) weight slices.
# ----------------------------------------------------------------------------
def _build_wslices(w_torch, w_out):
    """(Co, Ci, 3, 3, 3) conv weight -> (9, W*Ci, W*Co).

    Slice j = kd*3 + kh maps activation lanes (w_in, ci) to output lanes
    (w, co):  value = w[co, ci, kd, kh, w_in - w + 1] if |w_in - w| <= 1
    else 0 (the zeros ARE the W-boundary "same" padding).
    """
    co, ci = w_torch.shape[0], w_torch.shape[1]
    wt = jnp.transpose(w_torch, (2, 3, 4, 1, 0)).astype(jnp.float32)   # (3,3,3,Ci,Co)
    kw = jnp.arange(w_out)[:, None] - jnp.arange(w_out)[None, :] + 1   # (w_in, w)
    valid = (kw >= 0) & (kw < 3)
    m = wt[:, :, jnp.clip(kw, 0, 2), :, :]                             # (3,3,Win,W,Ci,Co)
    m = jnp.where(valid[None, None, :, :, None, None], m, 0.0)
    m = jnp.transpose(m, (0, 1, 2, 4, 3, 5))                           # (3,3,Win,Ci,W,Co)
    return m.reshape(9, w_out * ci, w_out * co)


def _tile_bias(b, w_out):
    b = b.astype(jnp.float32)
    return jnp.tile(b, (w_out,)).reshape(1, w_out * b.shape[0])


# ----------------------------------------------------------------------------
# Fused Pallas kernel (whole forward in one pallas_call, grid over batch)
# ----------------------------------------------------------------------------
def _encoder_pallas(xpad, W1a, B1a, W1b, B1b, W2a, B2a, W2b, B2b,
                    *, Nb, D, H, W, C1a, C1b, C2a, C2b):
    N = xpad.shape[0]
    assert N % Nb == 0
    D2, H2, W2 = D // 2, H // 2, W // 2
    D4, H4, W4 = D2 // 2, H2 // 2, W2 // 2
    f32 = jnp.float32

    def kernel(x_ref, w1a, b1a, w1b, b1b, w2a, b2a, w2b, b2b,
               x0_ref, x1_ref, xp_ref, apad1, apad2a, apad2b):

        def zero_borders(ref):
            # Interiors are fully rewritten each step; only the conv "same"
            # pad borders need zeroing.
            nb, dp, hp, wc = ref.shape
            zd = jnp.zeros((nb, 1, hp, wc), f32)
            ref[:, pl.ds(0, 1), :, :] = zd
            ref[:, pl.ds(dp - 1, 1), :, :] = zd
            zh = jnp.zeros((nb, dp - 2, 1, wc), f32)
            ref[:, pl.ds(1, dp - 2), pl.ds(0, 1), :] = zh
            ref[:, pl.ds(1, dp - 2), pl.ds(hp - 1, 1), :] = zh

        zero_borders(apad1)
        zero_borders(apad2a)
        zero_borders(apad2b)

        def conv_relu(src_ref, w_ref, b_ref, Dc, Hc, K, Ncol):
            # 3x3x3 "same" conv as 9 accumulate-dots; W axis/boundary folded
            # into w_ref; accumulator stays in vregs (no patch scratch).
            acc = jnp.zeros((Nb * Dc * Hc, Ncol), f32)
            for kd in range(3):
                for kh in range(3):
                    blk = src_ref[:, pl.ds(kd, Dc), pl.ds(kh, Hc), :]
                    acc = acc + jnp.dot(blk.reshape(Nb * Dc * Hc, K),
                                        w_ref[kd * 3 + kh],
                                        preferred_element_type=jnp.float32)
            return jnp.maximum(acc + b_ref[...], 0.0)      # (Nb*Dc*Hc, W*Co)

        def max_pool(y, Dc, Hc, Wc, C):
            # y: (Nb*Dc*Hc, Wc*C), rows=(n,d,h), lanes=(w,c) -> 2x2x2 max.
            y = y.reshape(Nb, Dc // 2, 2, Hc, Wc * C)
            y = jnp.maximum(y[:, :, 0], y[:, :, 1])                  # d-pool
            y = y.reshape(Nb, Dc // 2, Hc // 2, 2, Wc * C)
            y = jnp.maximum(y[:, :, :, 0, :], y[:, :, :, 1, :])      # h-pool
            parts = []
            for j in range(Wc // 2):                                 # w-pool (lanes)
                a = y[..., (2 * j) * C:(2 * j + 1) * C]
                b = y[..., (2 * j + 1) * C:(2 * j + 2) * C]
                parts.append(jnp.maximum(a, b))
            return jnp.concatenate(parts, axis=-1)   # (Nb, Dc/2, Hc/2, Wc/2*C)

        # ---- conv_1: Conv3d(1,16)+ReLU, Conv3d(16,16)+ReLU ----
        y1a = conv_relu(x_ref, w1a, b1a, D, H, W, W * C1a)
        apad1[:, pl.ds(1, D), pl.ds(1, H), :] = y1a.reshape(Nb, D, H, W * C1a)
        y1b = conv_relu(apad1, w1b, b1b, D, H, W * C1a, W * C1b)
        x0_ref[...] = y1b.reshape(Nb, D * H, W * C1b)

        # ---- pooling (2,2,2) -> conv_2 padded input (one dense store) ----
        apad2a[:, pl.ds(1, D2), pl.ds(1, H2), :] = max_pool(y1b, D, H, W, C1b)

        # ---- conv_2: Conv3d(16,32)+ReLU, Conv3d(32,20)+ReLU ----
        y2a = conv_relu(apad2a, w2a, b2a, D2, H2, W2 * C1b, W2 * C2a)
        apad2b[:, pl.ds(1, D2), pl.ds(1, H2), :] = y2a.reshape(Nb, D2, H2, W2 * C2a)
        y2b = conv_relu(apad2b, w2b, b2b, D2, H2, W2 * C2a, W2 * C2b)
        x1_ref[...] = y2b.reshape(Nb, D2 * H2, W2 * C2b)

        # ---- pooling2 -> final pooled output (one store) ----
        xp_ref[...] = max_pool(y2b, D2, H2, W2, C2b).reshape(Nb, D4 * H4, W4 * C2b)

    cw = lambda n: (0, 0, 0)     # weights: constant block across the grid
    cb = lambda n: (0, 0)        # biases:  constant block across the grid
    out_shape = (
        jax.ShapeDtypeStruct((N, D * H, W * C1b), f32),        # x0 (lane-dense)
        jax.ShapeDtypeStruct((N, D2 * H2, W2 * C2b), f32),     # x1
        jax.ShapeDtypeStruct((N, D4 * H4, W4 * C2b), f32),     # pooled x1
    )
    grid_spec = pltpu.PrefetchScalarGridSpec(
        num_scalar_prefetch=0,
        grid=(N // Nb,),
        in_specs=[
            pl.BlockSpec((Nb, D + 2, H + 2, W), lambda n: (n, 0, 0, 0)),
            pl.BlockSpec(W1a.shape, cw), pl.BlockSpec(B1a.shape, cb),
            pl.BlockSpec(W1b.shape, cw), pl.BlockSpec(B1b.shape, cb),
            pl.BlockSpec(W2a.shape, cw), pl.BlockSpec(B2a.shape, cb),
            pl.BlockSpec(W2b.shape, cw), pl.BlockSpec(B2b.shape, cb),
        ],
        out_specs=[
            pl.BlockSpec((Nb, D * H, W * C1b), lambda n: (n, 0, 0)),
            pl.BlockSpec((Nb, D2 * H2, W2 * C2b), lambda n: (n, 0, 0)),
            pl.BlockSpec((Nb, D4 * H4, W4 * C2b), lambda n: (n, 0, 0)),
        ],
        scratch_shapes=[
            pltpu.VMEM((Nb, D + 2, H + 2, W * C1a), f32),      # conv1b padded input
            pltpu.VMEM((Nb, D2 + 2, H2 + 2, W2 * C1b), f32),   # conv2a padded input
            pltpu.VMEM((Nb, D2 + 2, H2 + 2, W2 * C2a), f32),   # conv2b padded input
        ],
    )
    return pl.pallas_call(
        kernel,
        out_shape=out_shape,
        grid_spec=grid_spec,
        compiler_params=pltpu.CompilerParams(
            dimension_semantics=("parallel",),
            vmem_limit_bytes=32 * 1024 * 1024,
        ),
    )(xpad, W1a, B1a, W1b, B1b, W2a, B2a, W2b, B2b)


# ----------------------------------------------------------------------------
# Public wrapper (PyTorch NCDHW in / out)
# ----------------------------------------------------------------------------
def encoder_forward(x_ncdhw, params):
    N, cin, D, H, W = x_ncdhw.shape
    assert cin == 1 and D % 4 == 0 and H % 4 == 0 and W % 4 == 0
    x = x_ncdhw[:, 0].astype(jnp.float32)                  # (N, D, H, W), Ci = 1
    # Conv "same" padding on D/H is pre-applied here (the W boundary lives in
    # the repacked weights) -> no in-kernel staging / zeroing of the input.
    xpad = jnp.pad(x, ((0, 0), (1, 1), (1, 1), (0, 0)))

    (w1a, b1a), (w1b, b1b) = params["c1a"], params["c1b"]
    (w2a, b2a), (w2b, b2b) = params["c2a"], params["c2b"]
    C1a, C1b = w1a.shape[0], w1b.shape[0]
    C2a, C2b = w2a.shape[0], w2b.shape[0]

    # Batch block: fills MXU rows / amortizes per-step overhead, but keep the
    # grid length >= 2 so both v7x TensorCores get work (Nb=1 when N<=2).
    Nb = 2 if (N % 2 == 0 and N >= 4) else 1

    x0f, x1f, xpf = _encoder_pallas(
        xpad,
        _build_wslices(w1a, W), _tile_bias(b1a, W),
        _build_wslices(w1b, W), _tile_bias(b1b, W),
        _build_wslices(w2a, W // 2), _tile_bias(b2a, W // 2),
        _build_wslices(w2b, W // 2), _tile_bias(b2b, W // 2),
        Nb=Nb, D=D, H=H, W=W, C1a=C1a, C1b=C1b, C2a=C2a, C2b=C2b)

    x0 = x0f.reshape(N, D, H, W, C1b)
    x1 = x1f.reshape(N, D // 2, H // 2, W // 2, C2b)
    xp = xpf.reshape(N, D // 4, H // 4, W // 4, C2b)
    to_ncdhw = lambda t: jnp.transpose(t, (0, 4, 1, 2, 3))
    return to_ncdhw(x0), to_ncdhw(x1), to_ncdhw(xp)


# ----------------------------------------------------------------------------
# Pure-JAX reference (PyTorch semantics, NCDHW) for correctness checking
# ----------------------------------------------------------------------------
def reference_forward(x, params):
    def conv_relu(x, w, b):
        y = lax.conv_general_dilated(
            x, w, window_strides=(1, 1, 1),
            padding=((1, 1), (1, 1), (1, 1)),
            dimension_numbers=("NCDHW", "OIDHW", "NCDHW"),
            precision=lax.Precision.HIGHEST,
        )
        return jax.nn.relu(y + b[None, :, None, None, None])

    def pool(x):
        N, C, D, H, W = x.shape
        return x.reshape(N, C, D // 2, 2, H // 2, 2, W // 2, 2).max(axis=(3, 5, 7))

    x0 = conv_relu(conv_relu(x, *params["c1a"]), *params["c1b"])
    xp = pool(x0)
    x1 = conv_relu(conv_relu(xp, *params["c2a"]), *params["c2b"])
    return x0, x1, pool(x1)


# ----------------------------------------------------------------------------
# Deterministic parameter init (matches nn.Conv3d parameter shapes)
# ----------------------------------------------------------------------------
def init_params(key):
    def conv_init(k, ci, co):
        kw, kb = jax.random.split(k)
        bound = 1.0 / float((ci * 27) ** 0.5)
        w = jax.random.uniform(kw, (co, ci, 3, 3, 3), jnp.float32, -bound, bound)
        b = jax.random.uniform(kb, (co,), jnp.float32, -bound, bound)
        return w, b

    k1, k2, k3, k4 = jax.random.split(key, 4)
    return {
        "c1a": conv_init(k1, 1, 16),
        "c1b": conv_init(k2, 16, 16),
        "c2a": conv_init(k3, 16, 32),
        "c2b": conv_init(k4, 32, 20),
    }


if __name__ == "__main__":
    key = jax.random.PRNGKey(0)
    kx, kp = jax.random.split(key)
    # Small NCDHW input (batch=2, 1 channel, 8^3 volume), consistent with Conv3d(1,...)
    x = jax.random.normal(kx, (2, 1, 8, 8, 8), jnp.float32)
    params = init_params(kp)

    x0, x1, xp = jax.jit(encoder_forward)(x, params)
    jax.block_until_ready((x0, x1, xp))

    assert x0.shape == (2, 16, 8, 8, 8)
    assert x1.shape == (2, 20, 4, 4, 4)
    assert xp.shape == (2, 20, 2, 2, 2)

    r0, r1, rp = jax.jit(reference_forward)(x, params)
    jax.block_until_ready((r0, r1, rp))
    for got, ref in ((x0, r0), (x1, r1), (xp, rp)):
        assert bool(jnp.allclose(got, ref, rtol=2e-3, atol=2e-3)), "mismatch vs reference"

    print("KERNEL_OK")
</pallas_src>

<mosaic_0001>
module attributes {stable_mosaic.version = 11 : i64} {
  func.func @kernel(%arg0: i32, %arg1: memref<1x10x10x8xf32, #tpu.memory_space<vmem>>, %arg2: memref<9x8x128xf32, #tpu.memory_space<vmem>>, %arg3: memref<1x128xf32, #tpu.memory_space<vmem>>, %arg4: memref<9x128x128xf32, #tpu.memory_space<vmem>>, %arg5: memref<1x128xf32, #tpu.memory_space<vmem>>, %arg6: memref<9x64x128xf32, #tpu.memory_space<vmem>>, %arg7: memref<1x128xf32, #tpu.memory_space<vmem>>, %arg8: memref<9x128x80xf32, #tpu.memory_space<vmem>>, %arg9: memref<1x80xf32, #tpu.memory_space<vmem>>, %arg10: memref<1x64x128xf32, #tpu.memory_space<vmem>>, %arg11: memref<1x16x80xf32, #tpu.memory_space<vmem>>, %arg12: memref<1x4x40xf32, #tpu.memory_space<vmem>>, %arg13: memref<1x10x10x128xf32, #tpu.memory_space<vmem>>, %arg14: memref<1x6x6x64xf32, #tpu.memory_space<vmem>>, %arg15: memref<1x6x6x128xf32, #tpu.memory_space<vmem>>) attributes {dimension_semantics = [#tpu.dimension_semantics<parallel>], iteration_bounds = array<i64: 2>, scalar_prefetch = 0 : i64, scratch_operands = 3 : i64, tpu.core_type = #tpu.core_type<tc>, window_params = [{transform_indices = @transform_0, window_bounds = array<i64: 1, 10, 10, 8>}, {pipeline_mode = #tpu.pipeline_mode<synchronous>, transform_indices = @transform_1, window_bounds = array<i64: 9, 8, 128>}, {pipeline_mode = #tpu.pipeline_mode<synchronous>, transform_indices = @transform_2, window_bounds = array<i64: 1, 128>}, {pipeline_mode = #tpu.pipeline_mode<synchronous>, transform_indices = @transform_3, window_bounds = array<i64: 9, 128, 128>}, {pipeline_mode = #tpu.pipeline_mode<synchronous>, transform_indices = @transform_4, window_bounds = array<i64: 1, 128>}, {pipeline_mode = #tpu.pipeline_mode<synchronous>, transform_indices = @transform_5, window_bounds = array<i64: 9, 64, 128>}, {pipeline_mode = #tpu.pipeline_mode<synchronous>, transform_indices = @transform_6, window_bounds = array<i64: 1, 128>}, {pipeline_mode = #tpu.pipeline_mode<synchronous>, transform_indices = @transform_7, window_bounds = array<i64: 9, 128, 80>}, {pipeline_mode = #tpu.pipeline_mode<synchronous>, transform_indices = @transform_8, window_bounds = array<i64: 1, 80>}, {transform_indices = @transform_9, window_bounds = array<i64: 1, 64, 128>}, {transform_indices = @transform_10, window_bounds = array<i64: 1, 16, 80>}, {transform_indices = @transform_11, window_bounds = array<i64: 1, 4, 40>}]} {
    %cst = arith.constant 0.000000e+00 : f32
    %0 = vector.broadcast %cst : f32 to vector<1x1x10x128xf32>
    %c0 = arith.constant 0 : index
    %c0_0 = arith.constant 0 : index
    %c0_1 = arith.constant 0 : index
    %c0_2 = arith.constant 0 : index
    %1 = vector.load %arg13[%c0, %c0_0, %c0_1, %c0_2] : memref<1x10x10x128xf32, #tpu.memory_space<vmem>>, vector<1x1x10x128xf32>
    tpu.vector_store %arg13[%c0, %c0_0, %c0_1, %c0_2], %0 {strides = array<i32>} : memref<1x10x10x128xf32, #tpu.memory_space<vmem>>, vector<1x1x10x128xf32>,
    %c0_3 = arith.constant 0 : index
    %c9 = arith.constant 9 : index
    %c0_4 = arith.constant 0 : index
    %c0_5 = arith.constant 0 : index
    %2 = vector.load %arg13[%c0_3, %c9, %c0_4, %c0_5] : memref<1x10x10x128xf32, #tpu.memory_space<vmem>>, vector<1x1x10x128xf32>
    tpu.vector_store %arg13[%c0_3, %c9, %c0_4, %c0_5], %0 {strides = array<i32>} : memref<1x10x10x128xf32, #tpu.memory_space<vmem>>, vector<1x1x10x128xf32>,
    %cst_6 = arith.constant 0.000000e+00 : f32
    %3 = vector.broadcast %cst_6 : f32 to vector<1x8x1x128xf32>
    %c0_7 = arith.constant 0 : index
    %c1 = arith.constant 1 : index
    %c0_8 = arith.constant 0 : index
    %c0_9 = arith.constant 0 : index
    %4 = vector.load %arg13[%c0_7, %c1, %c0_8, %c0_9] : memref<1x10x10x128xf32, #tpu.memory_space<vmem>>, vector<1x8x1x128xf32>
    tpu.vector_store %arg13[%c0_7, %c1, %c0_8, %c0_9], %3 {strides = array<i32>} : memref<1x10x10x128xf32, #tpu.memory_space<vmem>>, vector<1x8x1x128xf32>,
    %c0_10 = arith.constant 0 : index
    %c1_11 = arith.constant 1 : index
    %c9_12 = arith.constant 9 : index
    %c0_13 = arith.constant 0 : index
    %5 = vector.load %arg13[%c0_10, %c1_11, %c9_12, %c0_13] : memref<1x10x10x128xf32, #tpu.memory_space<vmem>>, vector<1x8x1x128xf32>
    tpu.vector_store %arg13[%c0_10, %c1_11, %c9_12, %c0_13], %3 {strides = array<i32>} : memref<1x10x10x128xf32, #tpu.memory_space<vmem>>, vector<1x8x1x128xf32>,
    %cst_14 = arith.constant 0.000000e+00 : f32
    %6 = vector.broadcast %cst_14 : f32 to vector<1x1x6x64xf32>
    %c0_15 = arith.constant 0 : index
    %c0_16 = arith.constant 0 : index
    %c0_17 = arith.constant 0 : index
    %c0_18 = arith.constant 0 : index
    %7 = vector.load %arg14[%c0_15, %c0_16, %c0_17, %c0_18] : memref<1x6x6x64xf32, #tpu.memory_space<vmem>>, vector<1x1x6x64xf32>
    tpu.vector_store %arg14[%c0_15, %c0_16, %c0_17, %c0_18], %6 {strides = array<i32>} : memref<1x6x6x64xf32, #tpu.memory_space<vmem>>, vector<1x1x6x64xf32>,
    %c0_19 = arith.constant 0 : index
    %c5 = arith.constant 5 : index
    %c0_20 = arith.constant 0 : index
    %c0_21 = arith.constant 0 : index
    %8 = vector.load %arg14[%c0_19, %c5, %c0_20, %c0_21] : memref<1x6x6x64xf32, #tpu.memory_space<vmem>>, vector<1x1x6x64xf32>
    tpu.vector_store %arg14[%c0_19, %c5, %c0_20, %c0_21], %6 {strides = array<i32>} : memref<1x6x6x64xf32, #tpu.memory_space<vmem>>, vector<1x1x6x64xf32>,
    %cst_22 = arith.constant 0.000000e+00 : f32
    %9 = vector.broadcast %cst_22 : f32 to vector<1x4x1x64xf32>
    %c0_23 = arith.constant 0 : index
    %c1_24 = arith.constant 1 : index
    %c0_25 = arith.constant 0 : index
    %c0_26 = arith.constant 0 : index
    %10 = vector.load %arg14[%c0_23, %c1_24, %c0_25, %c0_26] : memref<1x6x6x64xf32, #tpu.memory_space<vmem>>, vector<1x4x1x64xf32>
    tpu.vector_store %arg14[%c0_23, %c1_24, %c0_25, %c0_26], %9 {strides = array<i32>} : memref<1x6x6x64xf32, #tpu.memory_space<vmem>>, vector<1x4x1x64xf32>,
    %c0_27 = arith.constant 0 : index
    %c1_28 = arith.constant 1 : index
    %c5_29 = arith.constant 5 : index
    %c0_30 = arith.constant 0 : index
    %11 = vector.load %arg14[%c0_27, %c1_28, %c5_29, %c0_30] : memref<1x6x6x64xf32, #tpu.memory_space<vmem>>, vector<1x4x1x64xf32>
    tpu.vector_store %arg14[%c0_27, %c1_28, %c5_29, %c0_30], %9 {strides = array<i32>} : memref<1x6x6x64xf32, #tpu.memory_space<vmem>>, vector<1x4x1x64xf32>,
    %cst_31 = arith.constant 0.000000e+00 : f32
    %12 = vector.broadcast %cst_31 : f32 to vector<1x1x6x128xf32>
    %c0_32 = arith.constant 0 : index
    %c0_33 = arith.constant 0 : index
    %c0_34 = arith.constant 0 : index
    %c0_35 = arith.constant 0 : index
    %13 = vector.load %arg15[%c0_32, %c0_33, %c0_34, %c0_35] : memref<1x6x6x128xf32, #tpu.memory_space<vmem>>, vector<1x1x6x128xf32>
    tpu.vector_store %arg15[%c0_32, %c0_33, %c0_34, %c0_35], %12 {strides = array<i32>} : memref<1x6x6x128xf32, #tpu.memory_space<vmem>>, vector<1x1x6x128xf32>,
    %c0_36 = arith.constant 0 : index
    %c5_37 = arith.constant 5 : index
    %c0_38 = arith.constant 0 : index
    %c0_39 = arith.constant 0 : index
    %14 = vector.load %arg15[%c0_36, %c5_37, %c0_38, %c0_39] : memref<1x6x6x128xf32, #tpu.memory_space<vmem>>, vector<1x1x6x128xf32>
    tpu.vector_store %arg15[%c0_36, %c5_37, %c0_38, %c0_39], %12 {strides = array<i32>} : memref<1x6x6x128xf32, #tpu.memory_space<vmem>>, vector<1x1x6x128xf32>,
    %cst_40 = arith.constant 0.000000e+00 : f32
    %15 = vector.broadcast %cst_40 : f32 to vector<1x4x1x128xf32>
    %c0_41 = arith.constant 0 : index
    %c1_42 = arith.constant 1 : index
    %c0_43 = arith.constant 0 : index
    %c0_44 = arith.constant 0 : index
    %16 = vector.load %arg15[%c0_41, %c1_42, %c0_43, %c0_44] : memref<1x6x6x128xf32, #tpu.memory_space<vmem>>, vector<1x4x1x128xf32>
    tpu.vector_store %arg15[%c0_41, %c1_42, %c0_43, %c0_44], %15 {strides = array<i32>} : memref<1x6x6x128xf32, #tpu.memory_space<vmem>>, vector<1x4x1x128xf32>,
    %c0_45 = arith.constant 0 : index
    %c1_46 = arith.constant 1 : index
    %c5_47 = arith.constant 5 : index
    %c0_48 = arith.constant 0 : index
    %17 = vector.load %arg15[%c0_45, %c1_46, %c5_47, %c0_48] : memref<1x6x6x128xf32, #tpu.memory_space<vmem>>, vector<1x4x1x128xf32>
    tpu.vector_store %arg15[%c0_45, %c1_46, %c5_47, %c0_48], %15 {strides = array<i32>} : memref<1x6x6x128xf32, #tpu.memory_space<vmem>>, vector<1x4x1x128xf32>,
    %cst_49 = arith.constant 0.000000e+00 : f32
    %18 = vector.broadcast %cst_49 : f32 to vector<64x128xf32>
    %c0_50 = arith.constant 0 : index
    %c0_51 = arith.constant 0 : index
    %c0_52 = arith.constant 0 : index
    %c0_53 = arith.constant 0 : index
    %19 = vector.load %arg1[%c0_50, %c0_51, %c0_52, %c0_53] : memref<1x10x10x8xf32, #tpu.memory_space<vmem>>, vector<1x8x8x8xf32>
    %20 = vector.shape_cast %19 : vector<1x8x8x8xf32> to vector<64x8xf32>
    %c0_54 = arith.constant 0 : index
    %c0_55 = arith.constant 0 : index
    %c0_56 = arith.constant 0 : index
    %21 = vector.load %arg2[%c0_54, %c0_55, %c0_56] : memref<9x8x128xf32, #tpu.memory_space<vmem>>, vector<1x8x128xf32>
    %22 = vector.shape_cast %21 : vector<1x8x128xf32> to vector<8x128xf32>
    %cst_57 = arith.constant dense<0.000000e+00> : vector<64x128xf32>
    %23 = tpu.matmul %20, %22, %cst_57 {dimension_numbers = #tpu.dot_dimension_numbers<[1], [0], [0], [1], [0, 0, 1, 1], [], []>} : vector<64x8xf32>, vector<8x128xf32>, vector<64x128xf32> -> vector<64x128xf32>
    %24 = arith.addf %18, %23 : vector<64x128xf32>
    %c0_58 = arith.constant 0 : index
    %c0_59 = arith.constant 0 : index
    %c1_60 = arith.constant 1 : index
    %c0_61 = arith.constant 0 : index
    %25 = vector.load %arg1[%c0_58, %c0_59, %c1_60, %c0_61] : memref<1x10x10x8xf32, #tpu.memory_space<vmem>>, vector<1x8x8x8xf32>
    %26 = vector.shape_cast %25 : vector<1x8x8x8xf32> to vector<64x8xf32>
    %c1_62 = arith.constant 1 : index
    %c0_63 = arith.constant 0 : index
    %c0_64 = arith.constant 0 : index
    %27 = vector.load %arg2[%c1_62, %c0_63, %c0_64] : memref<9x8x128xf32, #tpu.memory_space<vmem>>, vector<1x8x128xf32>
    %28 = vector.shape_cast %27 : vector<1x8x128xf32> to vector<8x128xf32>
    %cst_65 = arith.constant dense<0.000000e+00> : vector<64x128xf32>
    %29 = tpu.matmul %26, %28, %cst_65 {dimension_numbers = #tpu.dot_dimension_numbers<[1], [0], [0], [1], [0, 0, 1, 1], [], []>} : vector<64x8xf32>, vector<8x128xf32>, vector<64x128xf32> -> vector<64x128xf32>
    %30 = arith.addf %24, %29 : vector<64x128xf32>
    %c0_66 = arith.constant 0 : index
    %c0_67 = arith.constant 0 : index
    %c2 = arith.constant 2 : index
    %c0_68 = arith.constant 0 : index
    %31 = vector.load %arg1[%c0_66, %c0_67, %c2, %c0_68] : memref<1x10x10x8xf32, #tpu.memory_space<vmem>>, vector<1x8x8x8xf32>
    %32 = vector.shape_cast %31 : vector<1x8x8x8xf32> to vector<64x8xf32>
    %c2_69 = arith.constant 2 : index
    %c0_70 = arith.constant 0 : index
    %c0_71 = arith.constant 0 : index
    %33 = vector.load %arg2[%c2_69, %c0_70, %c0_71] : memref<9x8x128xf32, #tpu.memory_space<vmem>>, vector<1x8x128xf32>
    %34 = vector.shape_cast %33 : vector<1x8x128xf32> to vector<8x128xf32>
    %cst_72 = arith.constant dense<0.000000e+00> : vector<64x128xf32>
    %35 = tpu.matmul %32, %34, %cst_72 {dimension_numbers = #tpu.dot_dimension_numbers<[1], [0], [0], [1], [0, 0, 1, 1], [], []>} : vector<64x8xf32>, vector<8x128xf32>, vector<64x128xf32> -> vector<64x128xf32>
    %36 = arith.addf %30, %35 : vector<64x128xf32>
    %c0_73 = arith.constant 0 : index
    %c1_74 = arith.constant 1 : index
    %c0_75 = arith.constant 0 : index
    %c0_76 = arith.constant 0 : index
    %37 = vector.load %arg1[%c0_73, %c1_74, %c0_75, %c0_76] : memref<1x10x10x8xf32, #tpu.memory_space<vmem>>, vector<1x8x8x8xf32>
    %38 = vector.shape_cast %37 : vector<1x8x8x8xf32> to vector<64x8xf32>
    %c3 = arith.constant 3 : index
    %c0_77 = arith.constant 0 : index
    %c0_78 = arith.constant 0 : index
    %39 = vector.load %arg2[%c3, %c0_77, %c0_78] : memref<9x8x128xf32, #tpu.memory_space<vmem>>, vector<1x8x128xf32>
    %40 = vector.shape_cast %39 : vector<1x8x128xf32> to vector<8x128xf32>
    %cst_79 = arith.constant dense<0.000000e+00> : vector<64x128xf32>
    %41 = tpu.matmul %38, %40, %cst_79 {dimension_numbers = #tpu.dot_dimension_numbers<[1], [0], [0], [1], [0, 0, 1, 1], [], []>} : vector<64x8xf32>, vector<8x128xf32>, vector<64x128xf32> -> vector<64x128xf32>
    %42 = arith.addf %36, %41 : vector<64x128xf32>
    %c0_80 = arith.constant 0 : index
    %c1_81 = arith.constant 1 : index
    %c1_82 = arith.constant 1 : index
    %c0_83 = arith.constant 0 : index
    %43 = vector.load %arg1[%c0_80, %c1_81, %c1_82, %c0_83] : memref<1x10x10x8xf32, #tpu.memory_space<vmem>>, vector<1x8x8x8xf32>
    %44 = vector.shape_cast %43 : vector<1x8x8x8xf32> to vector<64x8xf32>
    %c4 = arith.constant 4 : index
    %c0_84 = arith.constant 0 : index
    %c0_85 = arith.constant 0 : index
    %45 = vector.load %arg2[%c4, %c0_84, %c0_85] : memref<9x8x128xf32, #tpu.memory_space<vmem>>, vector<1x8x128xf32>
    %46 = vector.shape_cast %45 : vector<1x8x128xf32> to vector<8x128xf32>
    %cst_86 = arith.constant dense<0.000000e+00> : vector<64x128xf32>
    %47 = tpu.matmul %44, %46, %cst_86 {dimension_numbers = #tpu.dot_dimension_numbers<[1], [0], [0], [1], [0, 0, 1, 1], [], []>} : vector<64x8xf32>, vector<8x128xf32>, vector<64x128xf32> -> vector<64x128xf32>
    %48 = arith.addf %42, %47 : vector<64x128xf32>
    %c0_87 = arith.constant 0 : index
    %c1_88 = arith.constant 1 : index
    %c2_89 = arith.constant 2 : index
    %c0_90 = arith.constant 0 : index
    %49 = vector.load %arg1[%c0_87, %c1_88, %c2_89, %c0_90] : memref<1x10x10x8xf32, #tpu.memory_space<vmem>>, vector<1x8x8x8xf32>
    %50 = vector.shape_cast %49 : vector<1x8x8x8xf32> to vector<64x8xf32>
    %c5_91 = arith.constant 5 : index
    %c0_92 = arith.constant 0 : index
    %c0_93 = arith.constant 0 : index
    %51 = vector.load %arg2[%c5_91, %c0_92, %c0_93] : memref<9x8x128xf32, #tpu.memory_space<vmem>>, vector<1x8x128xf32>
    %52 = vector.shape_cast %51 : vector<1x8x128xf32> to vector<8x128xf32>
    %cst_94 = arith.constant dense<0.000000e+00> : vector<64x128xf32>
    %53 = tpu.matmul %50, %52, %cst_94 {dimension_numbers = #tpu.dot_dimension_numbers<[1], [0], [0], [1], [0, 0, 1, 1], [], []>} : vector<64x8xf32>, vector<8x128xf32>, vector<64x128xf32> -> vector<64x128xf32>
    %54 = arith.addf %48, %53 : vector<64x128xf32>
    %c0_95 = arith.constant 0 : index
    %c2_96 = arith.constant 2 : index
    %c0_97 = arith.constant 0 : index
    %c0_98 = arith.constant 0 : index
    %55 = vector.load %arg1[%c0_95, %c2_96, %c0_97, %c0_98] : memref<1x10x10x8xf32, #tpu.memory_space<vmem>>, vector<1x8x8x8xf32>
    %56 = vector.shape_cast %55 : vector<1x8x8x8xf32> to vector<64x8xf32>
    %c6 = arith.constant 6 : index
    %c0_99 = arith.constant 0 : index
    %c0_100 = arith.constant 0 : index
    %57 = vector.load %arg2[%c6, %c0_99, %c0_100] : memref<9x8x128xf32, #tpu.memory_space<vmem>>, vector<1x8x128xf32>
    %58 = vector.shape_cast %57 : vector<1x8x128xf32> to vector<8x128xf32>
    %cst_101 = arith.constant dense<0.000000e+00> : vector<64x128xf32>
    %59 = tpu.matmul %56, %58, %cst_101 {dimension_numbers = #tpu.dot_dimension_numbers<[1], [0], [0], [1], [0, 0, 1, 1], [], []>} : vector<64x8xf32>, vector<8x128xf32>, vector<64x128xf32> -> vector<64x128xf32>
    %60 = arith.addf %54, %59 : vector<64x128xf32>
    %c0_102 = arith.constant 0 : index
    %c2_103 = arith.constant 2 : index
    %c1_104 = arith.constant 1 : index
    %c0_105 = arith.constant 0 : index
    %61 = vector.load %arg1[%c0_102, %c2_103, %c1_104, %c0_105] : memref<1x10x10x8xf32, #tpu.memory_space<vmem>>, vector<1x8x8x8xf32>
    %62 = vector.shape_cast %61 : vector<1x8x8x8xf32> to vector<64x8xf32>
    %c7 = arith.constant 7 : index
    %c0_106 = arith.constant 0 : index
    %c0_107 = arith.constant 0 : index
    %63 = vector.load %arg2[%c7, %c0_106, %c0_107] : memref<9x8x128xf32, #tpu.memory_space<vmem>>, vector<1x8x128xf32>
    %64 = vector.shape_cast %63 : vector<1x8x128xf32> to vector<8x128xf32>
    %cst_108 = arith.constant dense<0.000000e+00> : vector<64x128xf32>
    %65 = tpu.matmul %62, %64, %cst_108 {dimension_numbers = #tpu.dot_dimension_numbers<[1], [0], [0], [1], [0, 0, 1, 1], [], []>} : vector<64x8xf32>, vector<8x128xf32>, vector<64x128xf32> -> vector<64x128xf32>
    %66 = arith.addf %60, %65 : vector<64x128xf32>
    %c0_109 = arith.constant 0 : index
    %c2_110 = arith.constant 2 : index
    %c2_111 = arith.constant 2 : index
    %c0_112 = arith.constant 0 : index
    %67 = vector.load %arg1[%c0_109, %c2_110, %c2_111, %c0_112] : memref<1x10x10x8xf32, #tpu.memory_space<vmem>>, vector<1x8x8x8xf32>
    %68 = vector.shape_cast %67 : vector<1x8x8x8xf32> to vector<64x8xf32>
    %c8 = arith.constant 8 : index
    %c0_113 = arith.constant 0 : index
    %c0_114 = arith.constant 0 : index
    %69 = vector.load %arg2[%c8, %c0_113, %c0_114] : memref<9x8x128xf32, #tpu.memory_space<vmem>>, vector<1x8x128xf32>
    %70 = vector.shape_cast %69 : vector<1x8x128xf32> to vector<8x128xf32>
    %cst_115 = arith.constant dense<0.000000e+00> : vector<64x128xf32>
    %71 = tpu.matmul %68, %70, %cst_115 {dimension_numbers = #tpu.dot_dimension_numbers<[1], [0], [0], [1], [0, 0, 1, 1], [], []>} : vector<64x8xf32>, vector<8x128xf32>, vector<64x128xf32> -> vector<64x128xf32>
    %72 = arith.addf %66, %71 : vector<64x128xf32>
    %c0_116 = arith.constant 0 : index
    %c0_117 = arith.constant 0 : index
    %73 = vector.load %arg3[%c0_116, %c0_117] : memref<1x128xf32, #tpu.memory_space<vmem>>, vector<1x128xf32>
    %74 = vector.broadcast %73 : vector<1x128xf32> to vector<64x128xf32>
    %75 = arith.addf %72, %74 : vector<64x128xf32>
    %cst_118 = arith.constant 0.000000e+00 : f32
    %76 = vector.broadcast %cst_118 : f32 to vector<64x128xf32>
    %77 = arith.maximumf %75, %76 : vector<64x128xf32>
    %78 = vector.shape_cast %77 : vector<64x128xf32> to vector<1x8x8x128xf32>
    %c0_119 = arith.constant 0 : index
    %c1_120 = arith.constant 1 : index
    %c1_121 = arith.constant 1 : index
    %c0_122 = arith.constant 0 : index
    %79 = vector.load %arg13[%c0_119, %c1_120, %c1_121, %c0_122] : memref<1x10x10x128xf32, #tpu.memory_space<vmem>>, vector<1x8x8x128xf32>
    tpu.vector_store %arg13[%c0_119, %c1_120, %c1_121, %c0_122], %78 {strides = array<i32>} : memref<1x10x10x128xf32, #tpu.memory_space<vmem>>, vector<1x8x8x128xf32>,
    %cst_123 = arith.constant 0.000000e+00 : f32
    %80 = vector.broadcast %cst_123 : f32 to vector<64x128xf32>
    %c0_124 = arith.constant 0 : index
    %c0_125 = arith.constant 0 : index
    %c0_126 = arith.constant 0 : index
    %c0_127 = arith.constant 0 : index
    %81 = vector.load %arg13[%c0_124, %c0_125, %c0_126, %c0_127] : memref<1x10x10x128xf32, #tpu.memory_space<vmem>>, vector<1x8x8x128xf32>
    %82 = vector.shape_cast %81 : vector<1x8x8x128xf32> to vector<64x128xf32>
    %c0_128 = arith.constant 0 : index
    %c0_129 = arith.constant 0 : index
    %c0_130 = arith.constant 0 : index
    %83 = vector.load %arg4[%c0_128, %c0_129, %c0_130] : memref<9x128x128xf32, #tpu.memory_space<vmem>>, vector<1x128x128xf32>
    %84 = vector.shape_cast %83 : vector<1x128x128xf32> to vector<128x128xf32>
    %cst_131 = arith.constant dense<0.000000e+00> : vector<64x128xf32>
    %85 = tpu.matmul %82, %84, %cst_131 {dimension_numbers = #tpu.dot_dimension_numbers<[1], [0], [0], [1], [0, 0, 1, 1], [], []>} : vector<64x128xf32>, vector<128x128xf32>, vector<64x128xf32> -> vector<64x128xf32>
    %86 = arith.addf %80, %85 : vector<64x128xf32>
    %c0_132 = arith.constant 0 : index
    %c0_133 = arith.constant 0 : index
    %c1_134 = arith.constant 1 : index
    %c0_135 = arith.constant 0 : index
    %87 = vector.load %arg13[%c0_132, %c0_133, %c1_134, %c0_135] : memref<1x10x10x128xf32, #tpu.memory_space<vmem>>, vector<1x8x8x128xf32>
    %88 = vector.shape_cast %87 : vector<1x8x8x128xf32> to vector<64x128xf32>
    %c1_136 = arith.constant 1 : index
    %c0_137 = arith.constant 0 : index
    %c0_138 = arith.constant 0 : index
    %89 = vector.load %arg4[%c1_136, %c0_137, %c0_138] : memref<9x128x128xf32, #tpu.memory_space<vmem>>, vector<1x128x128xf32>
    %90 = vector.shape_cast %89 : vector<1x128x128xf32> to vector<128x128xf32>
    %cst_139 = arith.constant dense<0.000000e+00> : vector<64x128xf32>
    %91 = tpu.matmul %88, %90, %cst_139 {dimension_numbers = #tpu.dot_dimension_numbers<[1], [0], [0], [1], [0, 0, 1, 1], [], []>} : vector<64x128xf32>, vector<128x128xf32>, vector<64x128xf32> -> vector<64x128xf32>
    %92 = arith.addf %86, %91 : vector<64x128xf32>
    %c0_140 = arith.constant 0 : index
    %c0_141 = arith.constant 0 : index
    %c2_142 = arith.constant 2 : index
    %c0_143 = arith.constant 0 : index
    %93 = vector.load %arg13[%c0_140, %c0_141, %c2_142, %c0_143] : memref<1x10x10x128xf32, #tpu.memory_space<vmem>>, vector<1x8x8x128xf32>
    %94 = vector.shape_cast %93 : vector<1x8x8x128xf32> to vector<64x128xf32>
    %c2_144 = arith.constant 2 : index
    %c0_145 = arith.constant 0 : index
    %c0_146 = arith.constant 0 : index
    %95 = vector.load %arg4[%c2_144, %c0_145, %c0_146] : memref<9x128x128xf32, #tpu.memory_space<vmem>>, vector<1x128x128xf32>
    %96 = vector.shape_cast %95 : vector<1x128x128xf32> to vector<128x128xf32>
    %cst_147 = arith.constant dense<0.000000e+00> : vector<64x128xf32>
    %97 = tpu.matmul %94, %96, %cst_147 {dimension_numbers = #tpu.dot_dimension_numbers<[1], [0], [0], [1], [0, 0, 1, 1], [], []>} : vector<64x128xf32>, vector<128x128xf32>, vector<64x128xf32> -> vector<64x128xf32>
    %98 = arith.addf %92, %97 : vector<64x128xf32>
    %c0_148 = arith.constant 0 : index
    %c1_149 = arith.constant 1 : index
    %c0_150 = arith.constant 0 : index
    %c0_151 = arith.constant 0 : index
    %99 = vector.load %arg13[%c0_148, %c1_149, %c0_150, %c0_151] : memref<1x10x10x128xf32, #tpu.memory_space<vmem>>, vector<1x8x8x128xf32>
    %100 = vector.shape_cast %99 : vector<1x8x8x128xf32> to vector<64x128xf32>
    %c3_152 = arith.constant 3 : index
    %c0_153 = arith.constant 0 : index
    %c0_154 = arith.constant 0 : index
    %101 = vector.load %arg4[%c3_152, %c0_153, %c0_154] : memref<9x128x128xf32, #tpu.memory_space<vmem>>, vector<1x128x128xf32>
    %102 = vector.shape_cast %101 : vector<1x128x128xf32> to vector<128x128xf32>
    %cst_155 = arith.constant dense<0.000000e+00> : vector<64x128xf32>
    %103 = tpu.matmul %100, %102, %cst_155 {dimension_numbers = #tpu.dot_dimension_numbers<[1], [0], [0], [1], [0, 0, 1, 1], [], []>} : vector<64x128xf32>, vector<128x128xf32>, vector<64x128xf32> -> vector<64x128xf32>
    %104 = arith.addf %98, %103 : vector<64x128xf32>
    %c0_156 = arith.constant 0 : index
    %c1_157 = arith.constant 1 : index
    %c1_158 = arith.constant 1 : index
    %c0_159 = arith.constant 0 : index
    %105 = vector.load %arg13[%c0_156, %c1_157, %c1_158, %c0_159] : memref<1x10x10x128xf32, #tpu.memory_space<vmem>>, vector<1x8x8x128xf32>
    %106 = vector.shape_cast %105 : vector<1x8x8x128xf32> to vector<64x128xf32>
    %c4_160 = arith.constant 4 : index
    %c0_161 = arith.constant 0 : index
    %c0_162 = arith.constant 0 : index
    %107 = vector.load %arg4[%c4_160, %c0_161, %c0_162] : memref<9x128x128xf32, #tpu.memory_space<vmem>>, vector<1x128x128xf32>
    %108 = vector.shape_cast %107 : vector<1x128x128xf32> to vector<128x128xf32>
    %cst_163 = arith.constant dense<0.000000e+00> : vector<64x128xf32>
    %109 = tpu.matmul %106, %108, %cst_163 {dimension_numbers = #tpu.dot_dimension_numbers<[1], [0], [0], [1], [0, 0, 1, 1], [], []>} : vector<64x128xf32>, vector<128x128xf32>, vector<64x128xf32> -> vector<64x128xf32>
    %110 = arith.addf %104, %109 : vector<64x128xf32>
    %c0_164 = arith.constant 0 : index
    %c1_165 = arith.constant 1 : index
    %c2_166 = arith.constant 2 : index
    %c0_167 = arith.constant 0 : index
    %111 = vector.load %arg13[%c0_164, %c1_165, %c2_166, %c0_167] : memref<1x10x10x128xf32, #tpu.memory_space<vmem>>, vector<1x8x8x128xf32>
    %112 = vector.shape_cast %111 : vector<1x8x8x128xf32> to vector<64x128xf32>
    %c5_168 = arith.constant 5 : index
    %c0_169 = arith.constant 0 : index
    %c0_170 = arith.constant 0 : index
    %113 = vector.load %arg4[%c5_168, %c0_169, %c0_170] : memref<9x128x128xf32, #tpu.memory_space<vmem>>, vector<1x128x128xf32>
    %114 = vector.shape_cast %113 : vector<1x128x128xf32> to vector<128x128xf32>
    %cst_171 = arith.constant dense<0.000000e+00> : vector<64x128xf32>
    %115 = tpu.matmul %112, %114, %cst_171 {dimension_numbers = #tpu.dot_dimension_numbers<[1], [0], [0], [1], [0, 0, 1, 1], [], []>} : vector<64x128xf32>, vector<128x128xf32>, vector<64x128xf32> -> vector<64x128xf32>
    %116 = arith.addf %110, %115 : vector<64x128xf32>
    %c0_172 = arith.constant 0 : index
    %c2_173 = arith.constant 2 : index
    %c0_174 = arith.constant 0 : index
    %c0_175 = arith.constant 0 : index
    %117 = vector.load %arg13[%c0_172, %c2_173, %c0_174, %c0_175] : memref<1x10x10x128xf32, #tpu.memory_space<vmem>>, vector<1x8x8x128xf32>
    %118 = vector.shape_cast %117 : vector<1x8x8x128xf32> to vector<64x128xf32>
    %c6_176 = arith.constant 6 : index
    %c0_177 = arith.constant 0 : index
    %c0_178 = arith.constant 0 : index
    %119 = vector.load %arg4[%c6_176, %c0_177, %c0_178] : memref<9x128x128xf32, #tpu.memory_space<vmem>>, vector<1x128x128xf32>
    %120 = vector.shape_cast %119 : vector<1x128x128xf32> to vector<128x128xf32>
    %cst_179 = arith.constant dense<0.000000e+00> : vector<64x128xf32>
    %121 = tpu.matmul %118, %120, %cst_179 {dimension_numbers = #tpu.dot_dimension_numbers<[1], [0], [0], [1], [0, 0, 1, 1], [], []>} : vector<64x128xf32>, vector<128x128xf32>, vector<64x128xf32> -> vector<64x128xf32>
    %122 = arith.addf %116, %121 : vector<64x128xf32>
    %c0_180 = arith.constant 0 : index
    %c2_181 = arith.constant 2 : index
    %c1_182 = arith.constant 1 : index
    %c0_183 = arith.constant 0 : index
    %123 = vector.load %arg13[%c0_180, %c2_181, %c1_182, %c0_183] : memref<1x10x10x128xf32, #tpu.memory_space<vmem>>, vector<1x8x8x128xf32>
    %124 = vector.shape_cast %123 : vector<1x8x8x128xf32> to vector<64x128xf32>
    %c7_184 = arith.constant 7 : index
    %c0_185 = arith.constant 0 : index
    %c0_186 = arith.constant 0 : index
    %125 = vector.load %arg4[%c7_184, %c0_185, %c0_186] : memref<9x128x128xf32, #tpu.memory_space<vmem>>, vector<1x128x128xf32>
    %126 = vector.shape_cast %125 : vector<1x128x128xf32> to vector<128x128xf32>
    %cst_187 = arith.constant dense<0.000000e+00> : vector<64x128xf32>
    %127 = tpu.matmul %124, %126, %cst_187 {dimension_numbers = #tpu.dot_dimension_numbers<[1], [0], [0], [1], [0, 0, 1, 1], [], []>} : vector<64x128xf32>, vector<128x128xf32>, vector<64x128xf32> -> vector<64x128xf32>
    %128 = arith.addf %122, %127 : vector<64x128xf32>
    %c0_188 = arith.constant 0 : index
    %c2_189 = arith.constant 2 : index
    %c2_190 = arith.constant 2 : index
    %c0_191 = arith.constant 0 : index
    %129 = vector.load %arg13[%c0_188, %c2_189, %c2_190, %c0_191] : memref<1x10x10x128xf32, #tpu.memory_space<vmem>>, vector<1x8x8x128xf32>
    %130 = vector.shape_cast %129 : vector<1x8x8x128xf32> to vector<64x128xf32>
    %c8_192 = arith.constant 8 : index
    %c0_193 = arith.constant 0 : index
    %c0_194 = arith.constant 0 : index
    %131 = vector.load %arg4[%c8_192, %c0_193, %c0_194] : memref<9x128x128xf32, #tpu.memory_space<vmem>>, vector<1x128x128xf32>
    %132 = vector.shape_cast %131 : vector<1x128x128xf32> to vector<128x128xf32>
    %cst_195 = arith.constant dense<0.000000e+00> : vector<64x128xf32>
    %133 = tpu.matmul %130, %132, %cst_195 {dimension_numbers = #tpu.dot_dimension_numbers<[1], [0], [0], [1], [0, 0, 1, 1], [], []>} : vector<64x128xf32>, vector<128x128xf32>, vector<64x128xf32> -> vector<64x128xf32>
    %134 = arith.addf %128, %133 : vector<64x128xf32>
    %c0_196 = arith.constant 0 : index
    %c0_197 = arith.constant 0 : index
    %135 = vector.load %arg5[%c0_196, %c0_197] : memref<1x128xf32, #tpu.memory_space<vmem>>, vector<1x128xf32>
    %136 = vector.broadcast %135 : vector<1x128xf32> to vector<64x128xf32>
    %137 = arith.addf %134, %136 : vector<64x128xf32>
    %cst_198 = arith.constant 0.000000e+00 : f32
    %138 = vector.broadcast %cst_198 : f32 to vector<64x128xf32>
    %139 = arith.maximumf %137, %138 : vector<64x128xf32>
    %140 = vector.shape_cast %139 : vector<64x128xf32> to vector<1x64x128xf32>
    %c0_199 = arith.constant 0 : index
    %c0_200 = arith.constant 0 : index
    %c0_201 = arith.constant 0 : index
    %141 = vector.load %arg10[%c0_199, %c0_200, %c0_201] : memref<1x64x128xf32, #tpu.memory_space<vmem>>, vector<1x64x128xf32>
    tpu.vector_store %arg10[%c0_199, %c0_200, %c0_201], %140 {strides = array<i32>} : memref<1x64x128xf32, #tpu.memory_space<vmem>>, vector<1x64x128xf32>,
    %142 = vector.shape_cast %139 : vector<64x128xf32> to vector<1x4x2x8x128xf32>
    %143 = vector.extract_strided_slice %142 {offsets = [0, 0, 0, 0, 0], sizes = [1, 4, 1, 8, 128], strides = [1, 1, 1, 1, 1]} : vector<1x4x2x8x128xf32> to vector<1x4x1x8x128xf32>
    %144 = vector.shape_cast %143 : vector<1x4x1x8x128xf32> to vector<1x4x8x128xf32>
    %145 = vector.extract_strided_slice %142 {offsets = [0, 0, 1, 0, 0], sizes = [1, 4, 1, 8, 128], strides = [1, 1, 1, 1, 1]} : vector<1x4x2x8x128xf32> to vector<1x4x1x8x128xf32>
    %146 = vector.shape_cast %145 : vector<1x4x1x8x128xf32> to vector<1x4x8x128xf32>
    %147 = arith.maximumf %144, %146 : vector<1x4x8x128xf32>
    %148 = vector.shape_cast %147 : vector<1x4x8x128xf32> to vector<1x4x4x2x128xf32>
    %149 = vector.extract_strided_slice %148 {offsets = [0, 0, 0, 0, 0], sizes = [1, 4, 4, 1, 128], strides = [1, 1, 1, 1, 1]} : vector<1x4x4x2x128xf32> to vector<1x4x4x1x128xf32>
    %150 = vector.shape_cast %149 : vector<1x4x4x1x128xf32> to vector<1x4x4x128xf32>
    %151 = vector.extract_strided_slice %148 {offsets = [0, 0, 0, 1, 0], sizes = [1, 4, 4, 1, 128], strides = [1, 1, 1, 1, 1]} : vector<1x4x4x2x128xf32> to vector<1x4x4x1x128xf32>
    %152 = vector.shape_cast %151 : vector<1x4x4x1x128xf32> to vector<1x4x4x128xf32>
    %153 = arith.maximumf %150, %152 : vector<1x4x4x128xf32>
    %154 = vector.extract_strided_slice %153 {offsets = [0, 0, 0, 0], sizes = [1, 4, 4, 16], strides = [1, 1, 1, 1]} : vector<1x4x4x128xf32> to vector<1x4x4x16xf32>
    %155 = vector.extract_strided_slice %153 {offsets = [0, 0, 0, 16], sizes = [1, 4, 4, 16], strides = [1, 1, 1, 1]} : vector<1x4x4x128xf32> to vector<1x4x4x16xf32>
    %156 = arith.maximumf %154, %155 : vector<1x4x4x16xf32>
    %157 = vector.extract_strided_slice %153 {offsets = [0, 0, 0, 32], sizes = [1, 4, 4, 16], strides = [1, 1, 1, 1]} : vector<1x4x4x128xf32> to vector<1x4x4x16xf32>
    %158 = vector.extract_strided_slice %153 {offsets = [0, 0, 0, 48], sizes = [1, 4, 4, 16], strides = [1, 1, 1, 1]} : vector<1x4x4x128xf32> to vector<1x4x4x16xf32>
    %159 = arith.maximumf %157, %158 : vector<1x4x4x16xf32>
    %160 = vector.extract_strided_slice %153 {offsets = [0, 0, 0, 64], sizes = [1, 4, 4, 16], strides = [1, 1, 1, 1]} : vector<1x4x4x128xf32> to vector<1x4x4x16xf32>
    %161 = vector.extract_strided_slice %153 {offsets = [0, 0, 0, 80], sizes = [1, 4, 4, 16], strides = [1, 1, 1, 1]} : vector<1x4x4x128xf32> to vector<1x4x4x16xf32>
    %162 = arith.maximumf %160, %161 : vector<1x4x4x16xf32>
    %163 = vector.extract_strided_slice %153 {offsets = [0, 0, 0, 96], sizes = [1, 4, 4, 16], strides = [1, 1, 1, 1]} : vector<1x4x4x128xf32> to vector<1x4x4x16xf32>
    %164 = vector.extract_strided_slice %153 {offsets = [0, 0, 0, 112], sizes = [1, 4, 4, 16], strides = [1, 1, 1, 1]} : vector<1x4x4x128xf32> to vector<1x4x4x16xf32>
    %165 = arith.maximumf %163, %164 : vector<1x4x4x16xf32>
    %166 = tpu.concatenate %156, %159, %162, %165 in 3 : vector<1x4x4x16xf32>, vector<1x4x4x16xf32>, vector<1x4x4x16xf32>, vector<1x4x4x16xf32> -> vector<1x4x4x64xf32>
    %c0_202 = arith.constant 0 : index
    %c1_203 = arith.constant 1 : index
    %c1_204 = arith.constant 1 : index
    %c0_205 = arith.constant 0 : index
    %167 = vector.load %arg14[%c0_202, %c1_203, %c1_204, %c0_205] : memref<1x6x6x64xf32, #tpu.memory_space<vmem>>, vector<1x4x4x64xf32>
    tpu.vector_store %arg14[%c0_202, %c1_203, %c1_204, %c0_205], %166 {strides = array<i32>} : memref<1x6x6x64xf32, #tpu.memory_space<vmem>>, vector<1x4x4x64xf32>,
    %cst_206 = arith.constant 0.000000e+00 : f32
    %168 = vector.broadcast %cst_206 : f32 to vector<16x128xf32>
    %c0_207 = arith.constant 0 : index
    %c0_208 = arith.constant 0 : index
    %c0_209 = arith.constant 0 : index
    %c0_210 = arith.constant 0 : index
    %169 = vector.load %arg14[%c0_207, %c0_208, %c0_209, %c0_210] : memref<1x6x6x64xf32, #tpu.memory_space<vmem>>, vector<1x4x4x64xf32>
    %170 = vector.shape_cast %169 : vector<1x4x4x64xf32> to vector<16x64xf32>
    %c0_211 = arith.constant 0 : index
    %c0_212 = arith.constant 0 : index
    %c0_213 = arith.constant 0 : index
    %171 = vector.load %arg6[%c0_211, %c0_212, %c0_213] : memref<9x64x128xf32, #tpu.memory_space<vmem>>, vector<1x64x128xf32>
    %172 = vector.shape_cast %171 : vector<1x64x128xf32> to vector<64x128xf32>
    %cst_214 = arith.constant dense<0.000000e+00> : vector<16x128xf32>
    %173 = tpu.matmul %170, %172, %cst_214 {dimension_numbers = #tpu.dot_dimension_numbers<[1], [0], [0], [1], [0, 0, 1, 1], [], []>} : vector<16x64xf32>, vector<64x128xf32>, vector<16x128xf32> -> vector<16x128xf32>
    %174 = arith.addf %168, %173 : vector<16x128xf32>
    %c0_215 = arith.constant 0 : index
    %c0_216 = arith.constant 0 : index
    %c1_217 = arith.constant 1 : index
    %c0_218 = arith.constant 0 : index
    %175 = vector.load %arg14[%c0_215, %c0_216, %c1_217, %c0_218] : memref<1x6x6x64xf32, #tpu.memory_space<vmem>>, vector<1x4x4x64xf32>
    %176 = vector.shape_cast %175 : vector<1x4x4x64xf32> to vector<16x64xf32>
    %c1_219 = arith.constant 1 : index
    %c0_220 = arith.constant 0 : index
    %c0_221 = arith.constant 0 : index
    %177 = vector.load %arg6[%c1_219, %c0_220, %c0_221] : memref<9x64x128xf32, #tpu.memory_space<vmem>>, vector<1x64x128xf32>
    %178 = vector.shape_cast %177 : vector<1x64x128xf32> to vector<64x128xf32>
    %cst_222 = arith.constant dense<0.000000e+00> : vector<16x128xf32>
    %179 = tpu.matmul %176, %178, %cst_222 {dimension_numbers = #tpu.dot_dimension_numbers<[1], [0], [0], [1], [0, 0, 1, 1], [], []>} : vector<16x64xf32>, vector<64x128xf32>, vector<16x128xf32> -> vector<16x128xf32>
    %180 = arith.addf %174, %179 : vector<16x128xf32>
    %c0_223 = arith.constant 0 : index
    %c0_224 = arith.constant 0 : index
    %c2_225 = arith.constant 2 : index
    %c0_226 = arith.constant 0 : index
    %181 = vector.load %arg14[%c0_223, %c0_224, %c2_225, %c0_226] : memref<1x6x6x64xf32, #tpu.memory_space<vmem>>, vector<1x4x4x64xf32>
    %182 = vector.shape_cast %181 : vector<1x4x4x64xf32> to vector<16x64xf32>
    %c2_227 = arith.constant 2 : index
    %c0_228 = arith.constant 0 : index
    %c0_229 = arith.constant 0 : index
    %183 = vector.load %arg6[%c2_227, %c0_228, %c0_229] : memref<9x64x128xf32, #tpu.memory_space<vmem>>, vector<1x64x128xf32>
    %184 = vector.shape_cast %183 : vector<1x64x128xf32> to vector<64x128xf32>
    %cst_230 = arith.constant dense<0.000000e+00> : vector<16x128xf32>
    %185 = tpu.matmul %182, %184, %cst_230 {dimension_numbers = #tpu.dot_dimension_numbers<[1], [0], [0], [1], [0, 0, 1, 1], [], []>} : vector<16x64xf32>, vector<64x128xf32>, vector<16x128xf32> -> vector<16x128xf32>
    %186 = arith.addf %180, %185 : vector<16x128xf32>
    %c0_231 = arith.constant 0 : index
    %c1_232 = arith.constant 1 : index
    %c0_233 = arith.constant 0 : index
    %c0_234 = arith.constant 0 : index
    %187 = vector.load %arg14[%c0_231, %c1_232, %c0_233, %c0_234] : memref<1x6x6x64xf32, #tpu.memory_space<vmem>>, vector<1x4x4x64xf32>
    %188 = vector.shape_cast %187 : vector<1x4x4x64xf32> to vector<16x64xf32>
    %c3_235 = arith.constant 3 : index
    %c0_236 = arith.constant 0 : index
    %c0_237 = arith.constant 0 : index
    %189 = vector.load %arg6[%c3_235, %c0_236, %c0_237] : memref<9x64x128xf32, #tpu.memory_space<vmem>>, vector<1x64x128xf32>
    %190 = vector.shape_cast %189 : vector<1x64x128xf32> to vector<64x128xf32>
    %cst_238 = arith.constant dense<0.000000e+00> : vector<16x128xf32>
    %191 = tpu.matmul %188, %190, %cst_238 {dimension_numbers = #tpu.dot_dimension_numbers<[1], [0], [0], [1], [0, 0, 1, 1], [], []>} : vector<16x64xf32>, vector<64x128xf32>, vector<16x128xf32> -> vector<16x128xf32>
    %192 = arith.addf %186, %191 : vector<16x128xf32>
    %c0_239 = arith.constant 0 : index
    %c1_240 = arith.constant 1 : index
    %c1_241 = arith.constant 1 : index
    %c0_242 = arith.constant 0 : index
    %193 = vector.load %arg14[%c0_239, %c1_240, %c1_241, %c0_242] : memref<1x6x6x64xf32, #tpu.memory_space<vmem>>, vector<1x4x4x64xf32>
    %194 = vector.shape_cast %193 : vector<1x4x4x64xf32> to vector<16x64xf32>
    %c4_243 = arith.constant 4 : index
    %c0_244 = arith.constant 0 : index
    %c0_245 = arith.constant 0 : index
    %195 = vector.load %arg6[%c4_243, %c0_244, %c0_245] : memref<9x64x128xf32, #tpu.memory_space<vmem>>, vector<1x64x128xf32>
    %196 = vector.shape_cast %195 : vector<1x64x128xf32> to vector<64x128xf32>
    %cst_246 = arith.constant dense<0.000000e+00> : vector<16x128xf32>
    %197 = tpu.matmul %194, %196, %cst_246 {dimension_numbers = #tpu.dot_dimension_numbers<[1], [0], [0], [1], [0, 0, 1, 1], [], []>} : vector<16x64xf32>, vector<64x128xf32>, vector<16x128xf32> -> vector<16x128xf32>
    %198 = arith.addf %192, %197 : vector<16x128xf32>
    %c0_247 = arith.constant 0 : index
    %c1_248 = arith.constant 1 : index
    %c2_249 = arith.constant 2 : index
    %c0_250 = arith.constant 0 : index
    %199 = vector.load %arg14[%c0_247, %c1_248, %c2_249, %c0_250] : memref<1x6x6x64xf32, #tpu.memory_space<vmem>>, vector<1x4x4x64xf32>
    %200 = vector.shape_cast %199 : vector<1x4x4x64xf32> to vector<16x64xf32>
    %c5_251 = arith.constant 5 : index
    %c0_252 = arith.constant 0 : index
    %c0_253 = arith.constant 0 : index
    %201 = vector.load %arg6[%c5_251, %c0_252, %c0_253] : memref<9x64x128xf32, #tpu.memory_space<vmem>>, vector<1x64x128xf32>
    %202 = vector.shape_cast %201 : vector<1x64x128xf32> to vector<64x128xf32>
    %cst_254 = arith.constant dense<0.000000e+00> : vector<16x128xf32>
    %203 = tpu.matmul %200, %202, %cst_254 {dimension_numbers = #tpu.dot_dimension_numbers<[1], [0], [0], [1], [0, 0, 1, 1], [], []>} : vector<16x64xf32>, vector<64x128xf32>, vector<16x128xf32> -> vector<16x128xf32>
    %204 = arith.addf %198, %203 : vector<16x128xf32>
    %c0_255 = arith.constant 0 : index
    %c2_256 = arith.constant 2 : index
    %c0_257 = arith.constant 0 : index
    %c0_258 = arith.constant 0 : index
    %205 = vector.load %arg14[%c0_255, %c2_256, %c0_257, %c0_258] : memref<1x6x6x64xf32, #tpu.memory_space<vmem>>, vector<1x4x4x64xf32>
    %206 = vector.shape_cast %205 : vector<1x4x4x64xf32> to vector<16x64xf32>
    %c6_259 = arith.constant 6 : index
    %c0_260 = arith.constant 0 : index
    %c0_261 = arith.constant 0 : index
    %207 = vector.load %arg6[%c6_259, %c0_260, %c0_261] : memref<9x64x128xf32, #tpu.memory_space<vmem>>, vector<1x64x128xf32>
    %208 = vector.shape_cast %207 : vector<1x64x128xf32> to vector<64x128xf32>
    %cst_262 = arith.constant dense<0.000000e+00> : vector<16x128xf32>
    %209 = tpu.matmul %206, %208, %cst_262 {dimension_numbers = #tpu.dot_dimension_numbers<[1], [0], [0], [1], [0, 0, 1, 1], [], []>} : vector<16x64xf32>, vector<64x128xf32>, vector<16x128xf32> -> vector<16x128xf32>
    %210 = arith.addf %204, %209 : vector<16x128xf32>
    %c0_263 = arith.constant 0 : index
    %c2_264 = arith.constant 2 : index
    %c1_265 = arith.constant 1 : index
    %c0_266 = arith.constant 0 : index
    %211 = vector.load %arg14[%c0_263, %c2_264, %c1_265, %c0_266] : memref<1x6x6x64xf32, #tpu.memory_space<vmem>>, vector<1x4x4x64xf32>
    %212 = vector.shape_cast %211 : vector<1x4x4x64xf32> to vector<16x64xf32>
    %c7_267 = arith.constant 7 : index
    %c0_268 = arith.constant 0 : index
    %c0_269 = arith.constant 0 : index
    %213 = vector.load %arg6[%c7_267, %c0_268, %c0_269] : memref<9x64x128xf32, #tpu.memory_space<vmem>>, vector<1x64x128xf32>
    %214 = vector.shape_cast %213 : vector<1x64x128xf32> to vector<64x128xf32>
    %cst_270 = arith.constant dense<0.000000e+00> : vector<16x128xf32>
    %215 = tpu.matmul %212, %214, %cst_270 {dimension_numbers = #tpu.dot_dimension_numbers<[1], [0], [0], [1], [0, 0, 1, 1], [], []>} : vector<16x64xf32>, vector<64x128xf32>, vector<16x128xf32> -> vector<16x128xf32>
    %216 = arith.addf %210, %215 : vector<16x128xf32>
    %c0_271 = arith.constant 0 : index
    %c2_272 = arith.constant 2 : index
    %c2_273 = arith.constant 2 : index
    %c0_274 = arith.constant 0 : index
    %217 = vector.load %arg14[%c0_271, %c2_272, %c2_273, %c0_274] : memref<1x6x6x64xf32, #tpu.memory_space<vmem>>, vector<1x4x4x64xf32>
    %218 = vector.shape_cast %217 : vector<1x4x4x64xf32> to vector<16x64xf32>
    %c8_275 = arith.constant 8 : index
    %c0_276 = arith.constant 0 : index
    %c0_277 = arith.constant 0 : index
    %219 = vector.load %arg6[%c8_275, %c0_276, %c0_277] : memref<9x64x128xf32, #tpu.memory_space<vmem>>, vector<1x64x128xf32>
    %220 = vector.shape_cast %219 : vector<1x64x128xf32> to vector<64x128xf32>
    %cst_278 = arith.constant dense<0.000000e+00> : vector<16x128xf32>
    %221 = tpu.matmul %218, %220, %cst_278 {dimension_numbers = #tpu.dot_dimension_numbers<[1], [0], [0], [1], [0, 0, 1, 1], [], []>} : vector<16x64xf32>, vector<64x128xf32>, vector<16x128xf32> -> vector<16x128xf32>
    %222 = arith.addf %216, %221 : vector<16x128xf32>
    %c0_279 = arith.constant 0 : index
    %c0_280 = arith.constant 0 : index
    %223 = vector.load %arg7[%c0_279, %c0_280] : memref<1x128xf32, #tpu.memory_space<vmem>>, vector<1x128xf32>
    %224 = vector.broadcast %223 : vector<1x128xf32> to vector<16x128xf32>
    %225 = arith.addf %222, %224 : vector<16x128xf32>
    %cst_281 = arith.constant 0.000000e+00 : f32
    %226 = vector.broadcast %cst_281 : f32 to vector<16x128xf32>
    %227 = arith.maximumf %225, %226 : vector<16x128xf32>
    %228 = vector.shape_cast %227 : vector<16x128xf32> to vector<1x4x4x128xf32>
    %c0_282 = arith.constant 0 : index
    %c1_283 = arith.constant 1 : index
    %c1_284 = arith.constant 1 : index
    %c0_285 = arith.constant 0 : index
    %229 = vector.load %arg15[%c0_282, %c1_283, %c1_284, %c0_285] : memref<1x6x6x128xf32, #tpu.memory_space<vmem>>, vector<1x4x4x128xf32>
    tpu.vector_store %arg15[%c0_282, %c1_283, %c1_284, %c0_285], %228 {strides = array<i32>} : memref<1x6x6x128xf32, #tpu.memory_space<vmem>>, vector<1x4x4x128xf32>,
    %cst_286 = arith.constant 0.000000e+00 : f32
    %230 = vector.broadcast %cst_286 : f32 to vector<16x80xf32>
    %c0_287 = arith.constant 0 : index
    %c0_288 = arith.constant 0 : index
    %c0_289 = arith.constant 0 : index
    %c0_290 = arith.constant 0 : index
    %231 = vector.load %arg15[%c0_287, %c0_288, %c0_289, %c0_290] : memref<1x6x6x128xf32, #tpu.memory_space<vmem>>, vector<1x4x4x128xf32>
    %232 = vector.shape_cast %231 : vector<1x4x4x128xf32> to vector<16x128xf32>
    %c0_291 = arith.constant 0 : index
    %c0_292 = arith.constant 0 : index
    %c0_293 = arith.constant 0 : index
    %233 = vector.load %arg8[%c0_291, %c0_292, %c0_293] : memref<9x128x80xf32, #tpu.memory_space<vmem>>, vector<1x128x80xf32>
    %234 = vector.shape_cast %233 : vector<1x128x80xf32> to vector<128x80xf32>
    %cst_294 = arith.constant dense<0.000000e+00> : vector<16x80xf32>
    %235 = tpu.matmul %232, %234, %cst_294 {dimension_numbers = #tpu.dot_dimension_numbers<[1], [0], [0], [1], [0, 0, 1, 1], [], []>} : vector<16x128xf32>, vector<128x80xf32>, vector<16x80xf32> -> vector<16x80xf32>
    %236 = arith.addf %230, %235 : vector<16x80xf32>
    %c0_295 = arith.constant 0 : index
    %c0_296 = arith.constant 0 : index
    %c1_297 = arith.constant 1 : index
    %c0_298 = arith.constant 0 : index
    %237 = vector.load %arg15[%c0_295, %c0_296, %c1_297, %c0_298] : memref<1x6x6x128xf32, #tpu.memory_space<vmem>>, vector<1x4x4x128xf32>
    %238 = vector.shape_cast %237 : vector<1x4x4x128xf32> to vector<16x128xf32>
    %c1_299 = arith.constant 1 : index
    %c0_300 = arith.constant 0 : index
    %c0_301 = arith.constant 0 : index
    %239 = vector.load %arg8[%c1_299, %c0_300, %c0_301] : memref<9x128x80xf32, #tpu.memory_space<vmem>>, vector<1x128x80xf32>
    %240 = vector.shape_cast %239 : vector<1x128x80xf32> to vector<128x80xf32>
    %cst_302 = arith.constant dense<0.000000e+00> : vector<16x80xf32>
    %241 = tpu.matmul %238, %240, %cst_302 {dimension_numbers = #tpu.dot_dimension_numbers<[1], [0], [0], [1], [0, 0, 1, 1], [], []>} : vector<16x128xf32>, vector<128x80xf32>, vector<16x80xf32> -> vector<16x80xf32>
    %242 = arith.addf %236, %241 : vector<16x80xf32>
    %c0_303 = arith.constant 0 : index
    %c0_304 = arith.constant 0 : index
    %c2_305 = arith.constant 2 : index
    %c0_306 = arith.constant 0 : index
    %243 = vector.load %arg15[%c0_303, %c0_304, %c2_305, %c0_306] : memref<1x6x6x128xf32, #tpu.memory_space<vmem>>, vector<1x4x4x128xf32>
    %244 = vector.shape_cast %243 : vector<1x4x4x128xf32> to vector<16x128xf32>
    %c2_307 = arith.constant 2 : index
    %c0_308 = arith.constant 0 : index
    %c0_309 = arith.constant 0 : index
    %245 = vector.load %arg8[%c2_307, %c0_308, %c0_309] : memref<9x128x80xf32, #tpu.memory_space<vmem>>, vector<1x128x80xf32>
    %246 = vector.shape_cast %245 : vector<1x128x80xf32> to vector<128x80xf32>
    %cst_310 = arith.constant dense<0.000000e+00> : vector<16x80xf32>
    %247 = tpu.matmul %244, %246, %cst_310 {dimension_numbers = #tpu.dot_dimension_numbers<[1], [0], [0], [1], [0, 0, 1, 1], [], []>} : vector<16x128xf32>, vector<128x80xf32>, vector<16x80xf32> -> vector<16x80xf32>
    %248 = arith.addf %242, %247 : vector<16x80xf32>
    %c0_311 = arith.constant 0 : index
    %c1_312 = arith.constant 1 : index
    %c0_313 = arith.constant 0 : index
    %c0_314 = arith.constant 0 : index
    %249 = vector.load %arg15[%c0_311, %c1_312, %c0_313, %c0_314] : memref<1x6x6x128xf32, #tpu.memory_space<vmem>>, vector<1x4x4x128xf32>
    %250 = vector.shape_cast %249 : vector<1x4x4x128xf32> to vector<16x128xf32>
    %c3_315 = arith.constant 3 : index
    %c0_316 = arith.constant 0 : index
    %c0_317 = arith.constant 0 : index
    %251 = vector.load %arg8[%c3_315, %c0_316, %c0_317] : memref<9x128x80xf32, #tpu.memory_space<vmem>>, vector<1x128x80xf32>
    %252 = vector.shape_cast %251 : vector<1x128x80xf32> to vector<128x80xf32>
    %cst_318 = arith.constant dense<0.000000e+00> : vector<16x80xf32>
    %253 = tpu.matmul %250, %252, %cst_318 {dimension_numbers = #tpu.dot_dimension_numbers<[1], [0], [0], [1], [0, 0, 1, 1], [], []>} : vector<16x128xf32>, vector<128x80xf32>, vector<16x80xf32> -> vector<16x80xf32>
    %254 = arith.addf %248, %253 : vector<16x80xf32>
    %c0_319 = arith.constant 0 : index
    %c1_320 = arith.constant 1 : index
    %c1_321 = arith.constant 1 : index
    %c0_322 = arith.constant 0 : index
    %255 = vector.load %arg15[%c0_319, %c1_320, %c1_321, %c0_322] : memref<1x6x6x128xf32, #tpu.memory_space<vmem>>, vector<1x4x4x128xf32>
    %256 = vector.shape_cast %255 : vector<1x4x4x128xf32> to vector<16x128xf32>
    %c4_323 = arith.constant 4 : index
    %c0_324 = arith.constant 0 : index
    %c0_325 = arith.constant 0 : index
    %257 = vector.load %arg8[%c4_323, %c0_324, %c0_325] : memref<9x128x80xf32, #tpu.memory_space<vmem>>, vector<1x128x80xf32>
    %258 = vector.shape_cast %257 : vector<1x128x80xf32> to vector<128x80xf32>
    %cst_326 = arith.constant dense<0.000000e+00> : vector<16x80xf32>
    %259 = tpu.matmul %256, %258, %cst_326 {dimension_numbers = #tpu.dot_dimension_numbers<[1], [0], [0], [1], [0, 0, 1, 1], [], []>} : vector<16x128xf32>, vector<128x80xf32>, vector<16x80xf32> -> vector<16x80xf32>
    %260 = arith.addf %254, %259 : vector<16x80xf32>
    %c0_327 = arith.constant 0 : index
    %c1_328 = arith.constant 1 : index
    %c2_329 = arith.constant 2 : index
    %c0_330 = arith.constant 0 : index
    %261 = vector.load %arg15[%c0_327, %c1_328, %c2_329, %c0_330] : memref<1x6x6x128xf32, #tpu.memory_space<vmem>>, vector<1x4x4x128xf32>
    %262 = vector.shape_cast %261 : vector<1x4x4x128xf32> to vector<16x128xf32>
    %c5_331 = arith.constant 5 : index
    %c0_332 = arith.constant 0 : index
    %c0_333 = arith.constant 0 : index
    %263 = vector.load %arg8[%c5_331, %c0_332, %c0_333] : memref<9x128x80xf32, #tpu.memory_space<vmem>>, vector<1x128x80xf32>
    %264 = vector.shape_cast %263 : vector<1x128x80xf32> to vector<128x80xf32>
    %cst_334 = arith.constant dense<0.000000e+00> : vector<16x80xf32>
    %265 = tpu.matmul %262, %264, %cst_334 {dimension_numbers = #tpu.dot_dimension_numbers<[1], [0], [0], [1], [0, 0, 1, 1], [], []>} : vector<16x128xf32>, vector<128x80xf32>, vector<16x80xf32> -> vector<16x80xf32>
    %266 = arith.addf %260, %265 : vector<16x80xf32>
    %c0_335 = arith.constant 0 : index
    %c2_336 = arith.constant 2 : index
    %c0_337 = arith.constant 0 : index
    %c0_338 = arith.constant 0 : index
    %267 = vector.load %arg15[%c0_335, %c2_336, %c0_337, %c0_338] : memref<1x6x6x128xf32, #tpu.memory_space<vmem>>, vector<1x4x4x128xf32>
    %268 = vector.shape_cast %267 : vector<1x4x4x128xf32> to vector<16x128xf32>
    %c6_339 = arith.constant 6 : index
    %c0_340 = arith.constant 0 : index
    %c0_341 = arith.constant 0 : index
    %269 = vector.load %arg8[%c6_339, %c0_340, %c0_341] : memref<9x128x80xf32, #tpu.memory_space<vmem>>, vector<1x128x80xf32>
    %270 = vector.shape_cast %269 : vector<1x128x80xf32> to vector<128x80xf32>
    %cst_342 = arith.constant dense<0.000000e+00> : vector<16x80xf32>
    %271 = tpu.matmul %268, %270, %cst_342 {dimension_numbers = #tpu.dot_dimension_numbers<[1], [0], [0], [1], [0, 0, 1, 1], [], []>} : vector<16x128xf32>, vector<128x80xf32>, vector<16x80xf32> -> vector<16x80xf32>
    %272 = arith.addf %266, %271 : vector<16x80xf32>
    %c0_343 = arith.constant 0 : index
    %c2_344 = arith.constant 2 : index
    %c1_345 = arith.constant 1 : index
    %c0_346 = arith.constant 0 : index
    %273 = vector.load %arg15[%c0_343, %c2_344, %c1_345, %c0_346] : memref<1x6x6x128xf32, #tpu.memory_space<vmem>>, vector<1x4x4x128xf32>
    %274 = vector.shape_cast %273 : vector<1x4x4x128xf32> to vector<16x128xf32>
    %c7_347 = arith.constant 7 : index
    %c0_348 = arith.constant 0 : index
    %c0_349 = arith.constant 0 : index
    %275 = vector.load %arg8[%c7_347, %c0_348, %c0_349] : memref<9x128x80xf32, #tpu.memory_space<vmem>>, vector<1x128x80xf32>
    %276 = vector.shape_cast %275 : vector<1x128x80xf32> to vector<128x80xf32>
    %cst_350 = arith.constant dense<0.000000e+00> : vector<16x80xf32>
    %277 = tpu.matmul %274, %276, %cst_350 {dimension_numbers = #tpu.dot_dimension_numbers<[1], [0], [0], [1], [0, 0, 1, 1], [], []>} : vector<16x128xf32>, vector<128x80xf32>, vector<16x80xf32> -> vector<16x80xf32>
    %278 = arith.addf %272, %277 : vector<16x80xf32>
    %c0_351 = arith.constant 0 : index
    %c2_352 = arith.constant 2 : index
    %c2_353 = arith.constant 2 : index
    %c0_354 = arith.constant 0 : index
    %279 = vector.load %arg15[%c0_351, %c2_352, %c2_353, %c0_354] : memref<1x6x6x128xf32, #tpu.memory_space<vmem>>, vector<1x4x4x128xf32>
    %280 = vector.shape_cast %279 : vector<1x4x4x128xf32> to vector<16x128xf32>
    %c8_355 = arith.constant 8 : index
    %c0_356 = arith.constant 0 : index
    %c0_357 = arith.constant 0 : index
    %281 = vector.load %arg8[%c8_355, %c0_356, %c0_357] : memref<9x128x80xf32, #tpu.memory_space<vmem>>, vector<1x128x80xf32>
    %282 = vector.shape_cast %281 : vector<1x128x80xf32> to vector<128x80xf32>
    %cst_358 = arith.constant dense<0.000000e+00> : vector<16x80xf32>
    %283 = tpu.matmul %280, %282, %cst_358 {dimension_numbers = #tpu.dot_dimension_numbers<[1], [0], [0], [1], [0, 0, 1, 1], [], []>} : vector<16x128xf32>, vector<128x80xf32>, vector<16x80xf32> -> vector<16x80xf32>
    %284 = arith.addf %278, %283 : vector<16x80xf32>
    %c0_359 = arith.constant 0 : index
    %c0_360 = arith.constant 0 : index
    %285 = vector.load %arg9[%c0_359, %c0_360] : memref<1x80xf32, #tpu.memory_space<vmem>>, vector<1x80xf32>
    %286 = vector.broadcast %285 : vector<1x80xf32> to vector<16x80xf32>
    %287 = arith.addf %284, %286 : vector<16x80xf32>
    %cst_361 = arith.constant 0.000000e+00 : f32
    %288 = vector.broadcast %cst_361 : f32 to vector<16x80xf32>
    %289 = arith.maximumf %287, %288 : vector<16x80xf32>
    %290 = vector.shape_cast %289 : vector<16x80xf32> to vector<1x16x80xf32>
    %c0_362 = arith.constant 0 : index
    %c0_363 = arith.constant 0 : index
    %c0_364 = arith.constant 0 : index
    %291 = vector.load %arg11[%c0_362, %c0_363, %c0_364] : memref<1x16x80xf32, #tpu.memory_space<vmem>>, vector<1x16x80xf32>
    tpu.vector_store %arg11[%c0_362, %c0_363, %c0_364], %290 {strides = array<i32>} : memref<1x16x80xf32, #tpu.memory_space<vmem>>, vector<1x16x80xf32>,
    %292 = vector.shape_cast %289 : vector<16x80xf32> to vector<1x2x2x4x80xf32>
    %293 = vector.extract_strided_slice %292 {offsets = [0, 0, 0, 0, 0], sizes = [1, 2, 1, 4, 80], strides = [1, 1, 1, 1, 1]} : vector<1x2x2x4x80xf32> to vector<1x2x1x4x80xf32>
    %294 = vector.shape_cast %293 : vector<1x2x1x4x80xf32> to vector<1x2x4x80xf32>
    %295 = vector.extract_strided_slice %292 {offsets = [0, 0, 1, 0, 0], sizes = [1, 2, 1, 4, 80], strides = [1, 1, 1, 1, 1]} : vector<1x2x2x4x80xf32> to vector<1x2x1x4x80xf32>
    %296 = vector.shape_cast %295 : vector<1x2x1x4x80xf32> to vector<1x2x4x80xf32>
    %297 = arith.maximumf %294, %296 : vector<1x2x4x80xf32>
    %298 = vector.shape_cast %297 : vector<1x2x4x80xf32> to vector<1x2x2x2x80xf32>
    %299 = vector.extract_strided_slice %298 {offsets = [0, 0, 0, 0, 0], sizes = [1, 2, 2, 1, 80], strides = [1, 1, 1, 1, 1]} : vector<1x2x2x2x80xf32> to vector<1x2x2x1x80xf32>
    %300 = vector.shape_cast %299 : vector<1x2x2x1x80xf32> to vector<1x2x2x80xf32>
    %301 = vector.extract_strided_slice %298 {offsets = [0, 0, 0, 1, 0], sizes = [1, 2, 2, 1, 80], strides = [1, 1, 1, 1, 1]} : vector<1x2x2x2x80xf32> to vector<1x2x2x1x80xf32>
    %302 = vector.shape_cast %301 : vector<1x2x2x1x80xf32> to vector<1x2x2x80xf32>
    %303 = arith.maximumf %300, %302 : vector<1x2x2x80xf32>
    %304 = vector.extract_strided_slice %303 {offsets = [0, 0, 0, 0], sizes = [1, 2, 2, 20], strides = [1, 1, 1, 1]} : vector<1x2x2x80xf32> to vector<1x2x2x20xf32>
    %305 = vector.extract_strided_slice %303 {offsets = [0, 0, 0, 20], sizes = [1, 2, 2, 20], strides = [1, 1, 1, 1]} : vector<1x2x2x80xf32> to vector<1x2x2x20xf32>
    %306 = arith.maximumf %304, %305 : vector<1x2x2x20xf32>
    %307 = vector.extract_strided_slice %303 {offsets = [0, 0, 0, 40], sizes = [1, 2, 2, 20], strides = [1, 1, 1, 1]} : vector<1x2x2x80xf32> to vector<1x2x2x20xf32>
    %308 = vector.extract_strided_slice %303 {offsets = [0, 0, 0, 60], sizes = [1, 2, 2, 20], strides = [1, 1, 1, 1]} : vector<1x2x2x80xf32> to vector<1x2x2x20xf32>
    %309 = arith.maximumf %307, %308 : vector<1x2x2x20xf32>
    %310 = tpu.concatenate %306, %309 in 3 : vector<1x2x2x20xf32>, vector<1x2x2x20xf32> -> vector<1x2x2x40xf32>
    %311 = vector.shape_cast %310 : vector<1x2x2x40xf32> to vector<1x4x40xf32>
    %c0_365 = arith.constant 0 : index
    %c0_366 = arith.constant 0 : index
    %c0_367 = arith.constant 0 : index
    %312 = vector.load %arg12[%c0_365, %c0_366, %c0_367] : memref<1x4x40xf32, #tpu.memory_space<vmem>>, vector<1x4x40xf32>
    tpu.vector_store %arg12[%c0_365, %c0_366, %c0_367], %311 {strides = array<i32>} : memref<1x4x40xf32, #tpu.memory_space<vmem>>, vector<1x4x40xf32>,
    return
  }
  func.func @transform_0(%arg0: i32) -> (i32, i32, i32, i32) {
    %c0_i32 = arith.constant 0 : i32
    %c0_i32_0 = arith.constant 0 : i32
    %c0_i32_1 = arith.constant 0 : i32
    %c0_i32_2 = arith.constant 0 : i32
    return %arg0, %c0_i32, %c0_i32_0, %c0_i32_1 : i32, i32, i32, i32
  }
  func.func @transform_1(%arg0: i32) -> (i32, i32, i32) {
    %c0_i32 = arith.constant 0 : i32
    %c0_i32_0 = arith.constant 0 : i32
    %c0_i32_1 = arith.constant 0 : i32
    %c0_i32_2 = arith.constant 0 : i32
    return %c0_i32, %c0_i32_0, %c0_i32_1 : i32, i32, i32
  }
  func.func @transform_2(%arg0: i32) -> (i32, i32) {
    %c0_i32 = arith.constant 0 : i32
    %c0_i32_0 = arith.constant 0 : i32
    %c0_i32_1 = arith.constant 0 : i32
    return %c0_i32, %c0_i32_0 : i32, i32
  }
  func.func @transform_3(%arg0: i32) -> (i32, i32, i32) {
    %c0_i32 = arith.constant 0 : i32
    %c0_i32_0 = arith.constant 0 : i32
    %c0_i32_1 = arith.constant 0 : i32
    %c0_i32_2 = arith.constant 0 : i32
    return %c0_i32, %c0_i32_0, %c0_i32_1 : i32, i32, i32
  }
  func.func @transform_4(%arg0: i32) -> (i32, i32) {
    %c0_i32 = arith.constant 0 : i32
    %c0_i32_0 = arith.constant 0 : i32
    %c0_i32_1 = arith.constant 0 : i32
    return %c0_i32, %c0_i32_0 : i32, i32
  }
  func.func @transform_5(%arg0: i32) -> (i32, i32, i32) {
    %c0_i32 = arith.constant 0 : i32
    %c0_i32_0 = arith.constant 0 : i32
    %c0_i32_1 = arith.constant 0 : i32
    %c0_i32_2 = arith.constant 0 : i32
    return %c0_i32, %c0_i32_0, %c0_i32_1 : i32, i32, i32
  }
  func.func @transform_6(%arg0: i32) -> (i32, i32) {
    %c0_i32 = arith.constant 0 : i32
    %c0_i32_0 = arith.constant 0 : i32
    %c0_i32_1 = arith.constant 0 : i32
    return %c0_i32, %c0_i32_0 : i32, i32
  }
  func.func @transform_7(%arg0: i32) -> (i32, i32, i32) {
    %c0_i32 = arith.constant 0 : i32
    %c0_i32_0 = arith.constant 0 : i32
    %c0_i32_1 = arith.constant 0 : i32
    %c0_i32_2 = arith.constant 0 : i32
    return %c0_i32, %c0_i32_0, %c0_i32_1 : i32, i32, i32
  }
  func.func @transform_8(%arg0: i32) -> (i32, i32) {
    %c0_i32 = arith.constant 0 : i32
    %c0_i32_0 = arith.constant 0 : i32
    %c0_i32_1 = arith.constant 0 : i32
    return %c0_i32, %c0_i32_0 : i32, i32
  }
  func.func @transform_9(%arg0: i32) -> (i32, i32, i32) {
    %c0_i32 = arith.constant 0 : i32
    %c0_i32_0 = arith.constant 0 : i32
    %c0_i32_1 = arith.constant 0 : i32
    return %arg0, %c0_i32, %c0_i32_0 : i32, i32, i32
  }
  func.func @transform_10(%arg0: i32) -> (i32, i32, i32) {
    %c0_i32 = arith.constant 0 : i32
    %c0_i32_0 = arith.constant 0 : i32
    %c0_i32_1 = arith.constant 0 : i32
    return %arg0, %c0_i32, %c0_i32_0 : i32, i32, i32
  }
  func.func @transform_11(%arg0: i32) -> (i32, i32, i32) {
    %c0_i32 = arith.constant 0 : i32
    %c0_i32_0 = arith.constant 0 : i32
    %c0_i32_1 = arith.constant 0 : i32
    return %arg0, %c0_i32, %c0_i32_0 : i32, i32, i32
  }
}

</mosaic_0001>

<llo_original>
// kernel: tile.23
$region0: #{tile.23}
  #allocation0 [shape = 's32[1]{0}', space=sflag, size = 0x4, scoped, tag = 'scoped memory for tile.23']
  %s0 = inlined_call_operand.vmem [shape: f32[16], index: 0, kind: input, shape index: {}]
  %s1 = inlined_call_operand.vmem [shape: f32[8,16], index: 1, kind: output, shape index: {}]
  // Predicated region
  $region2: #{tile.23} parent=0 // pred_check
    _
  $region3: #{tile.23} parent=0 // pred_check_branch
    %3 = sbr.rel (0) target = $region5
  $region4: #{tile.23} parent=0 // pred_region
    _
  $region5: #{tile.23} parent=0 // pred_fallthru
    _
  %v4 = vld [vmem:[%s0] ss:$0 sm:$0xff]
  %5 = vst [vmem:[%s1] sm:$0xff] %v4

// kernel: tile.24
$region0: #{tile.24}
  %s0 = inlined_call_operand.vmem [shape: f32[8,16], index: 0, kind: input, shape index: {}]
  %s1 = inlined_call_operand.vmem [shape: f32[1,128], index: 1, kind: output, shape index: {}]
  $region1: #{tile.24} parent=0
    #allocation0 [shape = 'u8[4096]{0}', space=vmem, size = 0x1000, scoped, tag = 'scoped mem for output reshape']
    %v2 = vld [vmem:[%s0] sm:$0x1]
    %vm3 = vcmask 130048
    %4 = vst.msk [vmem:[#allocation0] sm:$0x1] %vm3, %v2
    %s5 = scalar_lea.vmem %s0, 7
    %v6 = vld [vmem:[%s5] sm:$0x1]
    %7 = vrot.lane.b32.xlu0 %v6, 112
    %v8 = vpop.permute.xlu0 %7
    %vm9 = vcmask 1048448
    %10 = vst.msk [vmem:[#allocation0] sm:$0x1] %vm9, %v8
    %s11 = scalar_lea.vmem %s0, 6
    %v12 = vld [vmem:[%s11] sm:$0x1]
    %13 = vrot.lane.b32.xlu0 %v12, 96
    %v14 = vpop.permute.xlu0 %13
    %vm15 = vcmask 917248
    %16 = vst.msk [vmem:[#allocation0] sm:$0x1] %vm15, %v14
    %s17 = scalar_lea.vmem %s0, 5
    %v18 = vld [vmem:[%s17] sm:$0x1]
    %19 = vrot.lane.b32.xlu0 %v18, 80
    %v20 = vpop.permute.xlu0 %19
    %vm21 = vcmask 786048
    %22 = vst.msk [vmem:[#allocation0] sm:$0x1] %vm21, %v20
    %s23 = scalar_lea.vmem %s0, 4
    %v24 = vld [vmem:[%s23] sm:$0x1]
    %25 = vrot.lane.b32.xlu0 %v24, 64
    %v26 = vpop.permute.xlu0 %25
    %vm27 = vcmask 654848
    %28 = vst.msk [vmem:[#allocation0] sm:$0x1] %vm27, %v26
    %s29 = scalar_lea.vmem %s0, 3
    %v30 = vld [vmem:[%s29] sm:$0x1]
    %31 = vrot.lane.b32.xlu0 %v30, 48
    %v32 = vpop.permute.xlu0 %31
    %vm33 = vcmask 523648
    %34 = vst.msk [vmem:[#allocation0] sm:$0x1] %vm33, %v32
    %s35 = scalar_lea.vmem %s0, 2
    %v36 = vld [vmem:[%s35] sm:$0x1]
    %37 = vrot.lane.b32.xlu0 %v36, 32
    %v38 = vpop.permute.xlu0 %37
    %vm39 = vcmask 392448
    %40 = vst.msk [vmem:[#allocation0] sm:$0x1] %vm39, %v38
    %s41 = scalar_lea.vmem %s0, 1
    %v42 = vld [vmem:[%s41] sm:$0x1]
    %43 = vrot.lane.b32.xlu0 %v42, 16
    %v44 = vpop.permute.xlu0 %43
    %vm45 = vcmask 261248
    %46 = vst.msk [vmem:[#allocation0] sm:$0x1] %vm45, %v44
    %s48 = sshll.u32 1, 1
    %s49 = ssub.s32 %s48, 1
    %v51 = vld [vmem:[#allocation0] sm:%s49]
    %s52 = sshll.u32 1, 1
    %s53 = ssub.s32 %s52, 1
    %54 = vst [vmem:[%s1] sm:%s53] %v51

// kernel: tile.33
$region0: #{tile.33}
  #allocation0 [shape = 's32[1]{0}', space=sflag, size = 0x4, scoped, tag = 'scoped memory for tile.33']
  %s0 = inlined_call_operand.vmem [shape: f32[32], index: 0, kind: input, shape index: {}]
  %s1 = inlined_call_operand.vmem [shape: f32[4,32], index: 1, kind: output, shape index: {}]
  // Predicated region
  $region2: #{tile.33} parent=0 // pred_check
    _
  $region3: #{tile.33} parent=0 // pred_check_branch
    %3 = sbr.rel (0) target = $region5
  $region4: #{tile.33} parent=0 // pred_region
    _
  $region5: #{tile.33} parent=0 // pred_fallthru
    _
  %v4 = vld [vmem:[%s0] ss:$0 sm:$0xff]
  %5 = vst [vmem:[%s1] sm:$0xf] %v4

// kernel: tile.34
$region0: #{tile.34}
  %s0 = inlined_call_operand.vmem [shape: f32[4,32], index: 0, kind: input, shape index: {}]
  %s1 = inlined_call_operand.vmem [shape: f32[1,128], index: 1, kind: output, shape index: {}]
  $region1: #{tile.34} parent=0
    #allocation0 [shape = 'u8[4096]{0}', space=vmem, size = 0x1000, scoped, tag = 'scoped mem for output reshape']
    #allocation1 [shape = 'u8[4096]{0}', space=vmem, size = 0x1000, scoped, tag = 'scoped mem for input reshape']
    %s3 = sshll.u32 1, 4
    %s4 = ssub.s32 %s3, 1
    %v5 = vld [vmem:[%s0] sm:%s4]
    %6 = vst [vmem:[#allocation1] sm:%s4] %v5
    %v7 = vld [vmem:[#allocation1] sm:$0x1]
    %vm8 = vcmask 261120
    %9 = vst.msk [vmem:[#allocation0] sm:$0x1] %vm8, %v7
    %s10 = scalar_lea.vmem [#allocation1], 3
    %v11 = vld [vmem:[%s10] sm:$0x1]
    %12 = vrot.lane.b32.xlu0 %v11, 96
    %v13 = vpop.permute.xlu0 %12
    %vm14 = vcmask 1048320
    %15 = vst.msk [vmem:[#allocation0] sm:$0x1] %vm14, %v13
    %s16 = scalar_lea.vmem [#allocation1], 2
    %v17 = vld [vmem:[%s16] sm:$0x1]
    %18 = vrot.lane.b32.xlu0 %v17, 64
    %v19 = vpop.permute.xlu0 %18
    %vm20 = vcmask 785920
    %21 = vst.msk [vmem:[#allocation0] sm:$0x1] %vm20, %v19
    %s22 = scalar_lea.vmem [#allocation1], 1
    %v23 = vld [vmem:[%s22] sm:$0x1]
    %24 = vrot.lane.b32.xlu0 %v23, 32
    %v25 = vpop.permute.xlu0 %24
    %vm26 = vcmask 523520
    %27 = vst.msk [vmem:[#allocation0] sm:$0x1] %vm26, %v25
    %s29 = sshll.u32 1, 1
    %s30 = ssub.s32 %s29, 1
    %v32 = vld [vmem:[#allocation0] sm:%s30]
    %s33 = sshll.u32 1, 1
    %s34 = ssub.s32 %s33, 1
    %35 = vst [vmem:[%s1] sm:%s34] %v32

// kernel: tile.38
$region0: #{tile.38}
  #allocation0 [shape = 's32[1]{0}', space=sflag, size = 0x4, scoped, tag = 'scoped memory for tile.38']
  %s0 = inlined_call_operand.vmem [shape: f32[20], index: 0, kind: input, shape index: {}]
  %s1 = inlined_call_operand.vmem [shape: f32[4,20], index: 1, kind: output, shape index: {}]
  // Predicated region
  $region2: #{tile.38} parent=0 // pred_check
    _
  $region3: #{tile.38} parent=0 // pred_check_branch
    %3 = sbr.rel (0) target = $region5
  $region4: #{tile.38} parent=0 // pred_region
    _
  $region5: #{tile.38} parent=0 // pred_fallthru
    _
  %v4 = vld [vmem:[%s0] ss:$0 sm:$0xff]
  %5 = vst [vmem:[%s1] sm:$0xf] %v4

// kernel: tile.39
$region0: #{tile.39}
  %s0 = inlined_call_operand.vmem [shape: f32[4,20], index: 0, kind: input, shape index: {}]
  %s1 = inlined_call_operand.vmem [shape: f32[1,80], index: 1, kind: output, shape index: {}]
  $region1: #{tile.39} parent=0
    #allocation0 [shape = 'u8[4096]{0}', space=vmem, size = 0x1000, scoped, tag = 'scoped mem for output reshape']
    #allocation1 [shape = 'u8[4096]{0}', space=vmem, size = 0x1000, scoped, tag = 'scoped mem for input reshape']
    %s3 = sshll.u32 1, 4
    %s4 = ssub.s32 %s3, 1
    %v5 = vld [vmem:[%s0] sm:%s4]
    %6 = vst [vmem:[#allocation1] sm:%s4] %v5
    %v7 = vld [vmem:[#allocation1] sm:$0x1]
    %vm8 = vcmask 162816
    %9 = vst.msk [vmem:[#allocation0] sm:$0x1] %vm8, %v7
    %s10 = scalar_lea.vmem [#allocation1], 3
    %v11 = vld [vmem:[%s10] sm:$0x1]
    %12 = vrot.lane.b32.xlu0 %v11, 60
    %v13 = vpop.permute.xlu0 %12
    %vm14 = vcmask 654816
    %15 = vst.msk [vmem:[#allocation0] sm:$0x1] %vm14, %v13
    %s16 = scalar_lea.vmem [#allocation1], 2
    %v17 = vld [vmem:[%s16] sm:$0x1]
    %18 = vrot.lane.b32.xlu0 %v17, 40
    %v19 = vpop.permute.xlu0 %18
    %vm20 = vcmask 490816
    %21 = vst.msk [vmem:[#allocation0] sm:$0x1] %vm20, %v19
    %s22 = scalar_lea.vmem [#allocation1], 1
    %v23 = vld [vmem:[%s22] sm:$0x1]
    %24 = vrot.lane.b32.xlu0 %v23, 20
    %v25 = vpop.permute.xlu0 %24
    %vm26 = vcmask 326816
    %27 = vst.msk [vmem:[#allocation0] sm:$0x1] %vm26, %v25
    %s29 = sshll.u32 1, 1
    %s30 = ssub.s32 %s29, 1
    %v32 = vld [vmem:[#allocation0] sm:%s30]
    %s33 = sshll.u32 1, 1
    %s34 = ssub.s32 %s33, 1
    %35 = vst [vmem:[%s1] sm:%s34] %v32

// kernel: encoder_forward.1
$region0: #{encoder_forward.1}
  #allocation0 [shape = 'u32[]', space=smem, size = 0x4, offset = 0x4, fixed_abs, tag = 'smem constant byte address 0x4 - core index']
  #allocation1 [shape = 'u32[144,128]{1,0:T(1,128)}', space=vmem, size = 0x12000, scoped, tag = 'internal scratch']
  #allocation2 [shape = 'f32[1,10,10,128]{3,2,1,0:T(8,128)}', space=vmem, size = 0x14000, scoped, tag = 'scratch operand']
  #allocation3 [shape = 'f32[1,6,6,64]{3,2,1,0:T(8,128)}', space=vmem, size = 0x6000, scoped, tag = 'scratch operand']
  #allocation4 [shape = 'f32[1,6,6,128]{3,2,1,0:T(8,128)}', space=vmem, size = 0x6000, scoped, tag = 'scratch operand']
  %s0 = inlined_call_operand.vmem [shape: f32[2,10,10,8], index: 0, kind: input, shape index: {}]
  %s1 = inlined_call_operand.vmem [shape: f32[9,8,128], index: 1, kind: input, shape index: {}]
  %s2 = inlined_call_operand.vmem [shape: f32[1,128], index: 2, kind: input, shape index: {}]
  %s3 = inlined_call_operand.vmem [shape: f32[9,128,128], index: 3, kind: input, shape index: {}]
  %s4 = inlined_call_operand.vmem [shape: f32[1,128], index: 4, kind: input, shape index: {}]
  %s5 = inlined_call_operand.vmem [shape: f32[9,64,128], index: 5, kind: input, shape index: {}]
  %s6 = inlined_call_operand.vmem [shape: f32[1,128], index: 6, kind: input, shape index: {}]
  %s7 = inlined_call_operand.vmem [shape: f32[9,128,80], index: 7, kind: input, shape index: {}]
  %s8 = inlined_call_operand.vmem [shape: f32[1,80], index: 8, kind: input, shape index: {}]
  %s9 = inlined_call_operand.vmem [shape: f32[2,64,128], index: 9, kind: output, shape index: {0}]
  %s10 = inlined_call_operand.vmem [shape: f32[2,16,80], index: 10, kind: output, shape index: {1}]
  %s11 = inlined_call_operand.vmem [shape: f32[2,4,40], index: 11, kind: output, shape index: {2}]
  %12 = xla_tuple %s9, %s10, %s11
  %s13 = sld [smem:[#allocation0]]
  $region85: #{encoder_forward.1} parent=0
    _
  %s15 = ssub.s32 1, %s13
  %s16 = scalar_select 0, %s15, %s13
  loop: start=0, step=1, limit=4
  $region2: #{encoder_forward.1} parent=0 // loop_pre_header
    _
  $region3: #{encoder_forward.1} parent=0 // loop_header
    %s18 = sphi 0, %s22
    %p19 = scmp.ge.s32.totalorder %s18, 4
    %s28 = sphi 0, %s30
    %s31 = sphi 0, %s28
    %s32 = sphi 0, %s31
    %s48 = sphi 0, %s32
    %s52 = sphi 0, %s52
    %s54 = sphi 0, %s52
    %s55 = sphi 0, %s54
    %s69 = sphi 0, %s55
    %s73 = sphi 0, %s73
    %s75 = sphi 0, %s73
    %s76 = sphi 0, %s75
    %s90 = sphi 0, %s76
    %s94 = sphi 0, %s94
    %s96 = sphi 0, %s94
    %s97 = sphi 0, %s96
    %s111 = sphi 0, %s97
    %s115 = sphi 0, %s115
    %s117 = sphi 0, %s115
    %s118 = sphi 0, %s117
    %s132 = sphi 0, %s118
    %s136 = sphi 0, %s136
    %s138 = sphi 0, %s136
    %s139 = sphi 0, %s138
    %s153 = sphi 0, %s139
    %s157 = sphi 0, %s157
    %s159 = sphi 0, %s157
    %s160 = sphi 0, %s159
    %s174 = sphi 0, %s160
    %s178 = sphi 0, %s178
    %s180 = sphi 0, %s178
    %s181 = sphi 0, %s180
    %s195 = sphi 0, %s181
    %s199 = sphi 0, %s199
    %s201 = sphi 0, %s199
    %s202 = sphi 0, %s201
    %s216 = sphi 0, %s202
    %s222 = sphi 0, %s224
    %s225 = sphi 0, %s222
    %s226 = sphi 0, %s225
    %s242 = sphi 0, %s226
    %s248 = sphi 0, %s250
    %s251 = sphi 0, %s248
    %s252 = sphi 0, %s251
    %s268 = sphi 0, %s252
    %s274 = sphi 0, %s276
    %s277 = sphi 0, %s274
    %s278 = sphi 0, %s277
    %s294 = sphi 0, %s278
  $region4: #{encoder_forward.1} parent=0 // loop_header_branch
    %21 = sbr.rel (%p19) target = $region8
  $region5: #{encoder_forward.1} parent=0 // loop_body
    %s23 = ssub.s32 %s18, 1
    %s24 = ssub.s32 %s18, 2
    %s25 = sadd.s32 %s18, 1
    %s26 = ssub.s32 %s18, %s25
    %p27 = scmp.eq.s32.totalorder %s26, 0
    %s29 = sadd.s32 %s28, 1
    %s30 = scalar_select %p27, %s28, %s29
    %p33 = pneg %p27
    %p34 = scmp.eq.s32.totalorder %s18, 1
    %p35 = por %p33, %p34
    %p36 = scmp.ne.s32.totalorder %s28, %s31
    %p37 = scmp.eq.s32.totalorder %s18, 0
    %p38 = por %p36, %p37
    %p39 = scmp.ne.s32.totalorder %s28, %s31
    %p40 = scmp.eq.s32.totalorder %s23, 1
    %p41 = por %p39, %p40
    %p42 = scmp.ne.s32.totalorder %s31, %s32
    %p43 = scmp.eq.s32.totalorder %s23, 0
    %p44 = por %p42, %p43
    %p45 = scmp.ne.s32.totalorder %s31, %s32
    %p46 = scmp.eq.s32.totalorder %s24, 1
    %p47 = por %p45, %p46
    %p49 = scmp.ne.s32.totalorder %s32, %s48
    %p50 = scmp.eq.s32.totalorder %s24, 0
    %p51 = por %p49, %p50
    %s53 = sadd.s32 %s52, 1
    %p56 = scmp.eq.s32.totalorder %s18, 1
    %p57 = scmp.ne.s32.totalorder %s52, %s54
    %p58 = scmp.eq.s32.totalorder %s18, 0
    %p59 = por %p57, %p58
    %p60 = scmp.ne.s32.totalorder %s52, %s54
    %p61 = scmp.eq.s32.totalorder %s23, 1
    %p62 = por %p60, %p61
    %p63 = scmp.ne.s32.totalorder %s54, %s55
    %p64 = scmp.eq.s32.totalorder %s23, 0
    %p65 = por %p63, %p64
    %p66 = scmp.ne.s32.totalorder %s54, %s55
    %p67 = scmp.eq.s32.totalorder %s24, 1
    %p68 = por %p66, %p67
    %p70 = scmp.ne.s32.totalorder %s55, %s69
    %p71 = scmp.eq.s32.totalorder %s24, 0
    %p72 = por %p70, %p71
    %s74 = sadd.s32 %s73, 1
    %p77 = scmp.eq.s32.totalorder %s18, 1
    %p78 = scmp.ne.s32.totalorder %s73, %s75
    %p79 = scmp.eq.s32.totalorder %s18, 0
    %p80 = por %p78, %p79
    %p81 = scmp.ne.s32.totalorder %s73, %s75
    %p82 = scmp.eq.s32.totalorder %s23, 1
    %p83 = por %p81, %p82
    %p84 = scmp.ne.s32.totalorder %s75, %s76
    %p85 = scmp.eq.s32.totalorder %s23, 0
    %p86 = por %p84, %p85
    %p87 = scmp.ne.s32.totalorder %s75, %s76
    %p88 = scmp.eq.s32.totalorder %s24, 1
    %p89 = por %p87, %p88
    %p91 = scmp.ne.s32.totalorder %s76, %s90
    %p92 = scmp.eq.s32.totalorder %s24, 0
    %p93 = por %p91, %p92
    %s95 = sadd.s32 %s94, 1
    %p98 = scmp.eq.s32.totalorder %s18, 1
    %p99 = scmp.ne.s32.totalorder %s94, %s96
    %p100 = scmp.eq.s32.totalorder %s18, 0
    %p101 = por %p99, %p100
    %p102 = scmp.ne.s32.totalorder %s94, %s96
    %p103 = scmp.eq.s32.totalorder %s23, 1
    %p104 = por %p102, %p103
    %p105 = scmp.ne.s32.totalorder %s96, %s97
    %p106 = scmp.eq.s32.totalorder %s23, 0
    %p107 = por %p105, %p106
    %p108 = scmp.ne.s32.totalorder %s96, %s97
    %p109 = scmp.eq.s32.totalorder %s24, 1
    %p110 = por %p108, %p109
    %p112 = scmp.ne.s32.totalorder %s97, %s111
    %p113 = scmp.eq.s32.totalorder %s24, 0
    %p114 = por %p112, %p113
    %s116 = sadd.s32 %s115, 1
    %p119 = scmp.eq.s32.totalorder %s18, 1
    %p120 = scmp.ne.s32.totalorder %s115, %s117
    %p121 = scmp.eq.s32.totalorder %s18, 0
    %p122 = por %p120, %p121
    %p123 = scmp.ne.s32.totalorder %s115, %s117
    %p124 = scmp.eq.s32.totalorder %s23, 1
    %p125 = por %p123, %p124
    %p126 = scmp.ne.s32.totalorder %s117, %s118
    %p127 = scmp.eq.s32.totalorder %s23, 0
    %p128 = por %p126, %p127
    %p129 = scmp.ne.s32.totalorder %s117, %s118
    %p130 = scmp.eq.s32.totalorder %s24, 1
    %p131 = por %p129, %p130
    %p133 = scmp.ne.s32.totalorder %s118, %s132
    %p134 = scmp.eq.s32.totalorder %s24, 0
    %p135 = por %p133, %p134
    %s137 = sadd.s32 %s136, 1
    %p140 = scmp.eq.s32.totalorder %s18, 1
    %p141 = scmp.ne.s32.totalorder %s136, %s138
    %p142 = scmp.eq.s32.totalorder %s18, 0
    %p143 = por %p141, %p142
    %p144 = scmp.ne.s32.totalorder %s136, %s138
    %p145 = scmp.eq.s32.totalorder %s23, 1
    %p146 = por %p144, %p145
    %p147 = scmp.ne.s32.totalorder %s138, %s139
    %p148 = scmp.eq.s32.totalorder %s23, 0
    %p149 = por %p147, %p148
    %p150 = scmp.ne.s32.totalorder %s138, %s139
    %p151 = scmp.eq.s32.totalorder %s24, 1
    %p152 = por %p150, %p151
    %p154 = scmp.ne.s32.totalorder %s139, %s153
    %p155 = scmp.eq.s32.totalorder %s24, 0
    %p156 = por %p154, %p155
    %s158 = sadd.s32 %s157, 1
    %p161 = scmp.eq.s32.totalorder %s18, 1
    %p162 = scmp.ne.s32.totalorder %s157, %s159
    %p163 = scmp.eq.s32.totalorder %s18, 0
    %p164 = por %p162, %p163
    %p165 = scmp.ne.s32.totalorder %s157, %s159
    %p166 = scmp.eq.s32.totalorder %s23, 1
    %p167 = por %p165, %p166
    %p168 = scmp.ne.s32.totalorder %s159, %s160
    %p169 = scmp.eq.s32.totalorder %s23, 0
    %p170 = por %p168, %p169
    %p171 = scmp.ne.s32.totalorder %s159, %s160
    %p172 = scmp.eq.s32.totalorder %s24, 1
    %p173 = por %p171, %p172
    %p175 = scmp.ne.s32.totalorder %s160, %s174
    %p176 = scmp.eq.s32.totalorder %s24, 0
    %p177 = por %p175, %p176
    %s179 = sadd.s32 %s178, 1
    %p182 = scmp.eq.s32.totalorder %s18, 1
    %p183 = scmp.ne.s32.totalorder %s178, %s180
    %p184 = scmp.eq.s32.totalorder %s18, 0
    %p185 = por %p183, %p184
    %p186 = scmp.ne.s32.totalorder %s178, %s180
    %p187 = scmp.eq.s32.totalorder %s23, 1
    %p188 = por %p186, %p187
    %p189 = scmp.ne.s32.totalorder %s180, %s181
    %p190 = scmp.eq.s32.totalorder %s23, 0
    %p191 = por %p189, %p190
    %p192 = scmp.ne.s32.totalorder %s180, %s181
    %p193 = scmp.eq.s32.totalorder %s24, 1
    %p194 = por %p192, %p193
    %p196 = scmp.ne.s32.totalorder %s181, %s195
    %p197 = scmp.eq.s32.totalorder %s24, 0
    %p198 = por %p196, %p197
    %s200 = sadd.s32 %s199, 1
    %p203 = scmp.eq.s32.totalorder %s18, 1
    %p204 = scmp.ne.s32.totalorder %s199, %s201
    %p205 = scmp.eq.s32.totalorder %s18, 0
    %p206 = por %p204, %p205
    %p207 = scmp.ne.s32.totalorder %s199, %s201
    %p208 = scmp.eq.s32.totalorder %s23, 1
    %p209 = por %p207, %p208
    %p210 = scmp.ne.s32.totalorder %s201, %s202
    %p211 = scmp.eq.s32.totalorder %s23, 0
    %p212 = por %p210, %p211
    %p213 = scmp.ne.s32.totalorder %s201, %s202
    %p214 = scmp.eq.s32.totalorder %s24, 1
    %p215 = por %p213, %p214
    %p217 = scmp.ne.s32.totalorder %s202, %s216
    %p218 = scmp.eq.s32.totalorder %s24, 0
    %p219 = por %p217, %p218
    %s220 = ssub.s32 %s18, %s25
    %p221 = scmp.eq.s32.totalorder %s220, 0
    %s223 = sadd.s32 %s222, 1
    %s224 = scalar_select %p221, %s222, %s223
    %p227 = pneg %p221
    %p228 = scmp.eq.s32.totalorder %s18, 1
    %p229 = por %p227, %p228
    %p230 = scmp.ne.s32.totalorder %s222, %s225
    %p231 = scmp.eq.s32.totalorder %s18, 0
    %p232 = por %p230, %p231
    %p233 = scmp.ne.s32.totalorder %s222, %s225
    %p234 = scmp.eq.s32.totalorder %s23, 1
    %p235 = por %p233, %p234
    %p236 = scmp.ne.s32.totalorder %s225, %s226
    %p237 = scmp.eq.s32.totalorder %s23, 0
    %p238 = por %p236, %p237
    %p239 = scmp.ne.s32.totalorder %s225, %s226
    %p240 = scmp.eq.s32.totalorder %s24, 1
    %p241 = por %p239, %p240
    %p243 = scmp.ne.s32.totalorder %s226, %s242
    %p244 = scmp.eq.s32.totalorder %s24, 0
    %p245 = por %p243, %p244
    %s246 = ssub.s32 %s18, %s25
    %p247 = scmp.eq.s32.totalorder %s246, 0
    %s249 = sadd.s32 %s248, 1
    %s250 = scalar_select %p247, %s248, %s249
    %p253 = pneg %p247
    %p254 = scmp.eq.s32.totalorder %s18, 1
    %p255 = por %p253, %p254
    %p256 = scmp.ne.s32.totalorder %s248, %s251
    %p257 = scmp.eq.s32.totalorder %s18, 0
    %p258 = por %p256, %p257
    %p259 = scmp.ne.s32.totalorder %s248, %s251
    %p260 = scmp.eq.s32.totalorder %s23, 1
    %p261 = por %p259, %p260
    %p262 = scmp.ne.s32.totalorder %s251, %s252
    %p263 = scmp.eq.s32.totalorder %s23, 0
    %p264 = por %p262, %p263
    %p265 = scmp.ne.s32.totalorder %s251, %s252
    %p266 = scmp.eq.s32.totalorder %s24, 1
    %p267 = por %p265, %p266
    %p269 = scmp.ne.s32.totalorder %s252, %s268
    %p270 = scmp.eq.s32.totalorder %s24, 0
    %p271 = por %p269, %p270
    %s272 = ssub.s32 %s18, %s25
    %p273 = scmp.eq.s32.totalorder %s272, 0
    %s275 = sadd.s32 %s274, 1
    %s276 = scalar_select %p273, %s274, %s275
    %p279 = pneg %p273
    %p280 = scmp.eq.s32.totalorder %s18, 1
    %p281 = por %p279, %p280
    %p282 = scmp.ne.s32.totalorder %s274, %s277
    %p283 = scmp.eq.s32.totalorder %s18, 0
    %p284 = por %p282, %p283
    %p285 = scmp.ne.s32.totalorder %s274, %s277
    %p286 = scmp.eq.s32.totalorder %s23, 1
    %p287 = por %p285, %p286
    %p288 = scmp.ne.s32.totalorder %s277, %s278
    %p289 = scmp.eq.s32.totalorder %s23, 0
    %p290 = por %p288, %p289
    %p291 = scmp.ne.s32.totalorder %s277, %s278
    %p292 = scmp.eq.s32.totalorder %s24, 1
    %p293 = por %p291, %p292
    %p295 = scmp.ne.s32.totalorder %s278, %s294
    %p296 = scmp.eq.s32.totalorder %s24, 0
    %p297 = por %p295, %p296
    %p298 = scmp.le.s32.totalorder 1, %s18
    %p299 = scmp.lt.s32.totalorder %s18, 3
    %p300 = pnand %p298, %p299
    %p301 = pneg %p300
    // Predicated region
    $region9: #{encoder_forward.1} parent=5 // pred_check
      _
    $region10: #{encoder_forward.1} parent=5 // pred_check_branch
      %303 = sbr.rel (%p300) target = $region12
    $region11: #{encoder_forward.1} parent=5 // pred_region
      %s304 = ssub.s32 %s18, 1
      // Predicated region
      $region13: #{encoder_forward.1} parent=11 // pred_check
        %p305 = pneg %p65
      $region14: #{encoder_forward.1} parent=11 // pred_check_branch
        %307 = sbr.rel (%p305) target = $region16
      $region15: #{encoder_forward.1} parent=11 // pred_region
        _
      $region16: #{encoder_forward.1} parent=11 // pred_fallthru
        _
      // Predicated region
      $region17: #{encoder_forward.1} parent=11 // pred_check
        %p308 = pneg %p86
      $region18: #{encoder_forward.1} parent=11 // pred_check_branch
        %310 = sbr.rel (%p308) target = $region20
      $region19: #{encoder_forward.1} parent=11 // pred_region
        _
      $region20: #{encoder_forward.1} parent=11 // pred_fallthru
        _
      // Predicated region
      $region21: #{encoder_forward.1} parent=11 // pred_check
        %p311 = pneg %p107
      $region22: #{encoder_forward.1} parent=11 // pred_check_branch
        %313 = sbr.rel (%p311) target = $region24
      $region23: #{encoder_forward.1} parent=11 // pred_region
        _
      $region24: #{encoder_forward.1} parent=11 // pred_fallthru
        _
      // Predicated region
      $region25: #{encoder_forward.1} parent=11 // pred_check
        %p314 = pneg %p128
      $region26: #{encoder_forward.1} parent=11 // pred_check_branch
        %316 = sbr.rel (%p314) target = $region28
      $region27: #{encoder_forward.1} parent=11 // pred_region
        _
      $region28: #{encoder_forward.1} parent=11 // pred_fallthru
        _
      // Predicated region
      $region29: #{encoder_forward.1} parent=11 // pred_check
        %p317 = pneg %p149
      $region30: #{encoder_forward.1} parent=11 // pred_check_branch
        %319 = sbr.rel (%p317) target = $region32
      $region31: #{encoder_forward.1} parent=11 // pred_region
        _
      $region32: #{encoder_forward.1} parent=11 // pred_fallthru
        _
      // Predicated region
      $region33: #{encoder_forward.1} parent=11 // pred_check
        %p320 = pneg %p170
      $region34: #{encoder_forward.1} parent=11 // pred_check_branch
        %322 = sbr.rel (%p320) target = $region36
      $region35: #{encoder_forward.1} parent=11 // pred_region
        _
      $region36: #{encoder_forward.1} parent=11 // pred_fallthru
        _
      // Predicated region
      $region37: #{encoder_forward.1} parent=11 // pred_check
        %p323 = pneg %p191
      $region38: #{encoder_forward.1} parent=11 // pred_check_branch
        %325 = sbr.rel (%p323) target = $region40
      $region39: #{encoder_forward.1} parent=11 // pred_region
        _
      $region40: #{encoder_forward.1} parent=11 // pred_fallthru
        _
      // Predicated region
      $region41: #{encoder_forward.1} parent=11 // pred_check
        %p326 = pneg %p212
      $region42: #{encoder_forward.1} parent=11 // pred_check_branch
        %328 = sbr.rel (%p326) target = $region44
      $region43: #{encoder_forward.1} parent=11 // pred_region
        _
      $region44: #{encoder_forward.1} parent=11 // pred_fallthru
        _
    $region12: #{encoder_forward.1} parent=5 // pred_fallthru
      _
    %p329 = scmp.lt.s32.totalorder %s18, 2
    // Predicated region
    $region45: #{encoder_forward.1} parent=5 // pred_check
      %p330 = pneg %p329
    $region46: #{encoder_forward.1} parent=5 // pred_check_branch
      %332 = sbr.rel (%p330) target = $region48
    $region47: #{encoder_forward.1} parent=5 // pred_region
      // Predicated region
      $region49: #{encoder_forward.1} parent=47 // pred_check
        %p333 = pneg %p38
      $region50: #{encoder_forward.1} parent=47 // pred_check_branch
        %335 = sbr.rel (%p333) target = $region52
      $region51: #{encoder_forward.1} parent=47 // pred_region
        %p336 = scmp.lt.s32.totalorder %s18, 1
        %s337 = scalar_select %p336, %s18, 1
        %s338 = smul.addr %s337, 20
        %s339 = smul.addr %s338, 8
        %s340 = scalar_lea.vmem %s0, %s339
      $region52: #{encoder_forward.1} parent=47 // pred_fallthru
        _
    $region48: #{encoder_forward.1} parent=5 // pred_fallthru
      _
    %p341 = scmp.le.s32.totalorder 1, %s18
    %p342 = scmp.lt.s32.totalorder %s18, 3
    %p343 = pnand %p341, %p342
    %p344 = pneg %p343
    // Predicated region
    $region53: #{encoder_forward.1} parent=5 // pred_check
      _
    $region54: #{encoder_forward.1} parent=5 // pred_check_branch
      %346 = sbr.rel (%p343) target = $region56
    $region55: #{encoder_forward.1} parent=5 // pred_region
      %s347 = ssub.s32 %s18, 1
      %p348 = scmp.lt.s32.totalorder %s23, 1
      %s349 = scalar_select %p348, %s23, 1
      %s350 = smul.addr %s349, 20
      %s351 = smul.addr %s350, 8
      %s352 = scalar_lea.vmem %s0, %s351
      %p353 = pneg %p44
      %p354 = pneg %p41
      %p355 = pneg %p65
      %p356 = pneg %p62
      %p357 = pneg %p86
      %p358 = pneg %p83
      %p359 = pneg %p107
      %p360 = pneg %p104
      %p361 = pneg %p128
      %p362 = pneg %p125
      %p363 = pneg %p149
      %p364 = pneg %p146
      %p365 = pneg %p170
      %p366 = pneg %p167
      %p367 = pneg %p191
      %p368 = pneg %p188
      %p369 = pneg %p212
      %p370 = pneg %p209
      %p371 = pneg %p238
      %p372 = pneg %p235
      %p373 = scmp.lt.s32.totalorder %s23, 1
      %s374 = scalar_select %p373, %s23, 1
      %s375 = smul.addr %s374, 8
      %s376 = smul.addr %s375, 8
      %s377 = scalar_lea.vmem %s9, %s376
      %p378 = pneg %p264
      %p379 = pneg %p261
      %p380 = scmp.lt.s32.totalorder %s23, 1
      %s381 = scalar_select %p380, %s23, 1
      %s382 = smul.addr %s381, 2
      %s383 = smul.addr %s382, 8
      %s384 = scalar_lea.vmem %s10, %s383
      %p385 = pneg %p290
      %p386 = pneg %p287
      %p387 = scmp.lt.s32.totalorder %s23, 1
      %s388 = scalar_select %p387, %s23, 1
      %s389 = smul.addr %s388, 4
      %s390 = scalar_lea.vmem %s11, %s389
      %p391 = scmp.lt.s32.totalorder %s23, 1
      %s392 = scalar_select %p391, %s23, 1
      %s393 = smul.addr %s392, 20
      %s394 = smul.addr %s393, 8
      %s395 = scalar_lea.vmem %s0, %s394
      %p396 = scmp.lt.s32.totalorder %s23, 1
      %s397 = scalar_select %p396, %s23, 1
      %s398 = smul.addr %s397, 8
      %s399 = smul.addr %s398, 8
      %s400 = scalar_lea.vmem %s9, %s399
      %p401 = scmp.lt.s32.totalorder %s23, 1
      %s402 = scalar_select %p401, %s23, 1
      %s403 = smul.addr %s402, 2
      %s404 = smul.addr %s403, 8
      %s405 = scalar_lea.vmem %s10, %s404
      %p406 = scmp.lt.s32.totalorder %s23, 1
      %s407 = scalar_select %p406, %s23, 1
      %s408 = smul.addr %s407, 4
      %s409 = scalar_lea.vmem %s11, %s408
      %410 = vst [vmem:[#allocation2] sm:$0xff] 0.0
      %411 = vst [vmem:[#allocation2 + $0x8] sm:$0x3] 0.0
      %s412 = scalar_lea.vmem [#allocation2], 144
      %413 = vst [vmem:[%s412] sm:$0xff] 0.0
      %414 = vst [vmem:[%s412 + $0x8] sm:$0x3] 0.0
      %s415 = scalar_lea.vmem [#allocation2], 16
      %416 = vst [vmem:[%s415] sm:$0x1] 0.0
      %417 = vst [vmem:[%s415 + $0x10] sm:$0x1] 0.0
      %418 = vst [vmem:[%s415 + $0x20] sm:$0x1] 0.0
      %419 = vst [vmem:[%s415 + $0x30] sm:$0x1] 0.0
      %420 = vst [vmem:[%s415 + $0x40] sm:$0x1] 0.0
      %421 = vst [vmem:[%s415 + $0x50] sm:$0x1] 0.0
      %422 = vst [vmem:[%s415 + $0x60] sm:$0x1] 0.0
      %423 = vst [vmem:[%s415 + $0x70] sm:$0x1] 0.0
      %424 = vst [vmem:[%s415 + $0x9] sm:$0x1] 0.0
      %425 = vst [vmem:[%s415 + $0x19] sm:$0x1] 0.0
      %426 = vst [vmem:[%s415 + $0x29] sm:$0x1] 0.0
      %427 = vst [vmem:[%s415 + $0x39] sm:$0x1] 0.0
      %428 = vst [vmem:[%s415 + $0x49] sm:$0x1] 0.0
      %429 = vst [vmem:[%s415 + $0x59] sm:$0x1] 0.0
      %430 = vst [vmem:[%s415 + $0x69] sm:$0x1] 0.0
      %431 = vst [vmem:[%s415 + $0x79] sm:$0x1] 0.0
      %vm432 = vcmask 521216
      %433 = vst.msk [vmem:[#allocation3] sm:$0x3f] %vm432, 0.0
      %s434 = scalar_lea.vmem [#allocation3], 40
      %435 = vst.msk [vmem:[%s434] sm:$0x3f] %vm432, 0.0
      %s436 = scalar_lea.vmem [#allocation3], 8
      %vm437 = vcmask 516096
      %438 = vst.msk [vmem:[%s436] sm:$0x1] %vm437, 0.0
      %439 = vst.msk [vmem:[%s436 + $0x8] sm:$0x1] %vm437, 0.0
      %440 = vst.msk [vmem:[%s436 + $0x10] sm:$0x1] %vm437, 0.0
      %441 = vst.msk [vmem:[%s436 + $0x18] sm:$0x1] %vm437, 0.0
      %442 = vst.msk [vmem:[%s436 + $0x5] sm:$0x1] %vm437, 0.0
      %443 = vst.msk [vmem:[%s436 + $0xd] sm:$0x1] %vm437, 0.0
      %444 = vst.msk [vmem:[%s436 + $0x15] sm:$0x1] %vm437, 0.0
      %445 = vst.msk [vmem:[%s436 + $0x1d] sm:$0x1] %vm437, 0.0
      %446 = vst [vmem:[#allocation4] sm:$0x3f] 0.0
      %s447 = scalar_lea.vmem [#allocation4], 40
      %448 = vst [vmem:[%s447] sm:$0x3f] 0.0
      %s449 = scalar_lea.vmem [#allocation4], 8
      %450 = vst [vmem:[%s449] sm:$0x1] 0.0
      %451 = vst [vmem:[%s449 + $0x8] sm:$0x1] 0.0
      %452 = vst [vmem:[%s449 + $0x10] sm:$0x1] 0.0
      %453 = vst [vmem:[%s449 + $0x18] sm:$0x1] 0.0
      %454 = vst [vmem:[%s449 + $0x5] sm:$0x1] 0.0
      %455 = vst [vmem:[%s449 + $0xd] sm:$0x1] 0.0
      %456 = vst [vmem:[%s449 + $0x15] sm:$0x1] 0.0
      %457 = vst [vmem:[%s449 + $0x1d] sm:$0x1] 0.0
      %v458 = vld [vmem:[%s395] sm:$0xff]
      %v459 = vld [vmem:[%s395 + $0x10] sm:$0xff]
      %v460 = vld [vmem:[%s395 + $0x20] sm:$0xff]
      %v461 = vld [vmem:[%s395 + $0x30] sm:$0xff]
      %v462 = vld [vmem:[%s395 + $0x40] sm:$0xff]
      %v463 = vld [vmem:[%s395 + $0x50] sm:$0xff]
      %v464 = vld [vmem:[%s395 + $0x60] sm:$0xff]
      %v465 = vld [vmem:[%s395 + $0x70] sm:$0xff]
      %v466 = vld [vmem:[%s1] sm:$0xff]
      %v467 = vld [vmem:[%s395 + $0x1] sm:$0xff]
      %v468 = vld [vmem:[%s395 + $0x11] sm:$0xff]
      %v469 = vld [vmem:[%s395 + $0x21] sm:$0xff]
      %v470 = vld [vmem:[%s395 + $0x31] sm:$0xff]
      %v471 = vld [vmem:[%s395 + $0x41] sm:$0xff]
      %v472 = vld [vmem:[%s395 + $0x51] sm:$0xff]
      %v473 = vld [vmem:[%s395 + $0x61] sm:$0xff]
      %v474 = vld [vmem:[%s395 + $0x71] sm:$0xff]
      %s475 = scalar_lea.vmem %s1, 8
      %v476 = vld [vmem:[%s475] sm:$0xff]
      %vm477 = vcmask 64512
      %v479 = vsel %vm477, %v467, 0
      %v482 = vsel %vm477, %v468, 0
      %v485 = vsel %vm477, %v469, 0
      %v488 = vsel %vm477, %v470, 0
      %v491 = vsel %vm477, %v471, 0
      %v494 = vsel %vm477, %v472, 0
      %v497 = vsel %vm477, %v473, 0
      %v500 = vsel %vm477, %v474, 0
      %502 = vmatprep.subr.mxu0 0.0
      %503 = vmatpush1.msra.mxu0 0.0
      %504 = vmatprep.subr.mxu0 0.0
      %505 = vmatpush1.msra.mxu0 0.0
      %506 = vmatprep.subr.mxu0 0.0
      %507 = vmatpush1.msra.mxu0 0.0
      %508 = vmatprep.subr.mxu0 0.0
      %509 = vmatpush1.msra.mxu0 0.0
      %510 = vmatprep.subr.mxu0 0.0
      %511 = vmatpush1.msra.mxu0 0.0
      %512 = vmatprep.subr.mxu0 0.0
      %513 = vmatpush1.msra.mxu0 0.0
      %514 = vmatprep.subr.mxu0 0.0
      %515 = vmatpush1.msra.mxu0 0.0
      %516 = vmatprep.subr.mxu0 0.0
      %517 = vmatpush1.msra.mxu0 0.0
      %518 = vmatprep.subr.mxu0 0.0
      %519 = vmatpush1.msra.mxu0 0.0
      %520 = vmatprep.subr.mxu0 0.0
      %521 = vmatpush1.msra.mxu0 0.0
      %522 = vmatprep.subr.mxu0 0.0
      %523 = vmatpush1.msra.mxu0 0.0
      %524 = vmatprep.subr.mxu0 0.0
      %525 = vmatpush1.msra.mxu0 0.0
      %526 = vmatprep.subr.mxu0 0.0
      %527 = vmatpush1.msra.mxu0 0.0
      %528 = vmatprep.subr.mxu0 0.0
      %529 = vmatpush1.msra.mxu0 0.0
      %530 = vmatprep.subr.mxu0 0.0
      %531 = vmatpush1.msra.mxu0 0.0
      %532 = vmatprep.subr.mxu0 0.0
      %533 = vmatpush1.msra.mxu0 %v476
      %534 = vmatprep.subr.mxu0 0.0
      %535 = vmatpush2.msra.mxu0 0.0
      %536 = vmatprep.subr.mxu0 0.0
      %537 = vmatpush2.msra.mxu0 0.0
      %538 = vmatprep.subr.mxu0 0.0
      %539 = vmatpush2.msra.mxu0 0.0
      %540 = vmatprep.subr.mxu0 0.0
      %541 = vmatpush2.msra.mxu0 0.0
      %542 = vmatprep.subr.mxu0 0.0
      %543 = vmatpush2.msra.mxu0 0.0
      %544 = vmatprep.subr.mxu0 0.0
      %545 = vmatpush2.msra.mxu0 0.0
      %546 = vmatprep.subr.mxu0 0.0
      %547 = vmatpush2.msra.mxu0 0.0
      %548 = vmatprep.subr.mxu0 0.0
      %549 = vmatpush2.msra.mxu0 0.0
      %550 = vmatprep.subr.mxu0 0.0
      %551 = vmatpush2.msra.mxu0 0.0
      %552 = vmatprep.subr.mxu0 0.0
      %553 = vmatpush2.msra.mxu0 0.0
      %554 = vmatprep.subr.mxu0 0.0
      %555 = vmatpush2.msra.mxu0 0.0
      %556 = vmatprep.subr.mxu0 0.0
      %557 = vmatpush2.msra.mxu0 0.0
      %558 = vmatprep.subr.mxu0 0.0
      %559 = vmatpush2.msra.mxu0 0.0
      %560 = vmatprep.subr.mxu0 0.0
      %561 = vmatpush2.msra.mxu0 0.0
      %562 = vmatprep.subr.mxu0 0.0
      %563 = vmatpush2.msra.mxu0 0.0
      %564 = vmatprep.subr.mxu0 0.0
      %565 = vmatpush2.msra.mxu0 0.0
      %566 = vmatprep.mubr.f32.mxu0 0.0
      %567 = vmatmul.mubr.f32.gmra.mxu0 %v479
      %v568 = vpop.f32.mrf.mxu0
      %v569 = vadd.f32 0.0, %v568
      %v570 = vpop.f32.mrf.mxu0
      %571 = vmatprep.mubr.f32.mxu0 0.0
      %572 = vmatmul.mubr.f32.gmra.mxu0 %v482
      %v573 = vpop.f32.mrf.mxu0
      %v574 = vadd.f32 0.0, %v573
      %v575 = vpop.f32.mrf.mxu0
      %576 = vmatprep.mubr.f32.mxu0 0.0
      %577 = vmatmul.mubr.f32.gmra.mxu0 %v485
      %v578 = vpop.f32.mrf.mxu0
      %v579 = vadd.f32 0.0, %v578
      %v580 = vpop.f32.mrf.mxu0
      %581 = vmatprep.mubr.f32.mxu0 0.0
      %582 = vmatmul.mubr.f32.gmra.mxu0 %v488
      %v583 = vpop.f32.mrf.mxu0
      %v584 = vadd.f32 0.0, %v583
      %v585 = vpop.f32.mrf.mxu0
      %586 = vmatprep.mubr.f32.mxu0 0.0
      %587 = vmatmul.mubr.f32.gmra.mxu0 %v491
      %v588 = vpop.f32.mrf.mxu0
      %v589 = vadd.f32 0.0, %v588
      %v590 = vpop.f32.mrf.mxu0
      %591 = vmatprep.mubr.f32.mxu0 0.0
      %592 = vmatmul.mubr.f32.gmra.mxu0 %v494
      %v593 = vpop.f32.mrf.mxu0
      %v594 = vadd.f32 0.0, %v593
      %v595 = vpop.f32.mrf.mxu0
      %596 = vmatprep.mubr.f32.mxu0 0.0
      %597 = vmatmul.mubr.f32.gmra.mxu0 %v497
      %v598 = vpop.f32.mrf.mxu0
      %v599 = vadd.f32 0.0, %v598
      %v600 = vpop.f32.mrf.mxu0
      %601 = vmatprep.mubr.f32.mxu0 0.0
      %602 = vmatmul.mubr.f32.gmra.mxu0 %v500
      %v603 = vpop.f32.mrf.mxu0
      %v604 = vadd.f32 0.0, %v603
      %v605 = vpop.f32.mrf.mxu0
      %606 = vdwg.mxu0
      %v608 = vsel %vm477, %v458, 0
      %v611 = vsel %vm477, %v459, 0
      %v614 = vsel %vm477, %v460, 0
      %v617 = vsel %vm477, %v461, 0
      %v620 = vsel %vm477, %v462, 0
      %v623 = vsel %vm477, %v463, 0
      %v626 = vsel %vm477, %v464, 0
      %v629 = vsel %vm477, %v465, 0
      %631 = vmatprep.subr.mxu0 0.0
      %632 = vmatpush1.msra.mxu0 0.0
      %633 = vmatprep.subr.mxu0 0.0
      %634 = vmatpush1.msra.mxu0 0.0
      %635 = vmatprep.subr.mxu0 0.0
      %636 = vmatpush1.msra.mxu0 0.0
      %637 = vmatprep.subr.mxu0 0.0
      %638 = vmatpush1.msra.mxu0 0.0
      %639 = vmatprep.subr.mxu0 0.0
      %640 = vmatpush1.msra.mxu0 0.0
      %641 = vmatprep.subr.mxu0 0.0
      %642 = vmatpush1.msra.mxu0 0.0
      %643 = vmatprep.subr.mxu0 0.0
      %644 = vmatpush1.msra.mxu0 0.0
      %645 = vmatprep.subr.mxu0 0.0
      %646 = vmatpush1.msra.mxu0 0.0
      %647 = vmatprep.subr.mxu0 0.0
      %648 = vmatpush1.msra.mxu0 0.0
      %649 = vmatprep.subr.mxu0 0.0
      %650 = vmatpush1.msra.mxu0 0.0
      %651 = vmatprep.subr.mxu0 0.0
      %652 = vmatpush1.msra.mxu0 0.0
      %653 = vmatprep.subr.mxu0 0.0
      %654 = vmatpush1.msra.mxu0 0.0
      %655 = vmatprep.subr.mxu0 0.0
      %656 = vmatpush1.msra.mxu0 0.0
      %657 = vmatprep.subr.mxu0 0.0
      %658 = vmatpush1.msra.mxu0 0.0
      %659 = vmatprep.subr.mxu0 0.0
      %660 = vmatpush1.msra.mxu0 0.0
      %661 = vmatprep.subr.mxu0 0.0
      %662 = vmatpush1.msra.mxu0 %v466
      %663 = vmatprep.subr.mxu0 0.0
      %664 = vmatpush2.msra.mxu0 0.0
      %665 = vmatprep.subr.mxu0 0.0
      %666 = vmatpush2.msra.mxu0 0.0
      %667 = vmatprep.subr.mxu0 0.0
      %668 = vmatpush2.msra.mxu0 0.0
      %669 = vmatprep.subr.mxu0 0.0
      %670 = vmatpush2.msra.mxu0 0.0
      %671 = vmatprep.subr.mxu0 0.0
      %672 = vmatpush2.msra.mxu0 0.0
      %673 = vmatprep.subr.mxu0 0.0
      %674 = vmatpush2.msra.mxu0 0.0
      %675 = vmatprep.subr.mxu0 0.0
      %676 = vmatpush2.msra.mxu0 0.0
      %677 = vmatprep.subr.mxu0 0.0
      %678 = vmatpush2.msra.mxu0 0.0
      %679 = vmatprep.subr.mxu0 0.0
      %680 = vmatpush2.msra.mxu0 0.0
      %681 = vmatprep.subr.mxu0 0.0
      %682 = vmatpush2.msra.mxu0 0.0
      %683 = vmatprep.subr.mxu0 0.0
      %684 = vmatpush2.msra.mxu0 0.0
      %685 = vmatprep.subr.mxu0 0.0
      %686 = vmatpush2.msra.mxu0 0.0
      %687 = vmatprep.subr.mxu0 0.0
      %688 = vmatpush2.msra.mxu0 0.0
      %689 = vmatprep.subr.mxu0 0.0
      %690 = vmatpush2.msra.mxu0 0.0
      %691 = vmatprep.subr.mxu0 0.0
      %692 = vmatpush2.msra.mxu0 0.0
      %693 = vmatprep.subr.mxu0 0.0
      %694 = vmatpush2.msra.mxu0 0.0
      %695 = vmatprep.mubr.f32.mxu0 0.0
      %696 = vmatmul.mubr.f32.gmra.mxu0 %v608
      %v697 = vpop.f32.mrf.mxu0
      %v698 = vadd.f32 %v569, %v697
      %v699 = vpop.f32.mrf.mxu0
      %700 = vmatprep.mubr.f32.mxu0 0.0
      %701 = vmatmul.mubr.f32.gmra.mxu0 %v611
      %v702 = vpop.f32.mrf.mxu0
      %v703 = vadd.f32 %v574, %v702
      %v704 = vpop.f32.mrf.mxu0
      %705 = vmatprep.mubr.f32.mxu0 0.0
      %706 = vmatmul.mubr.f32.gmra.mxu0 %v614
      %v707 = vpop.f32.mrf.mxu0
      %v708 = vadd.f32 %v579, %v707
      %v709 = vpop.f32.mrf.mxu0
      %710 = vmatprep.mubr.f32.mxu0 0.0
      %711 = vmatmul.mubr.f32.gmra.mxu0 %v617
      %v712 = vpop.f32.mrf.mxu0
      %v713 = vadd.f32 %v584, %v712
      %v714 = vpop.f32.mrf.mxu0
      %715 = vmatprep.mubr.f32.mxu0 0.0
      %716 = vmatmul.mubr.f32.gmra.mxu0 %v620
      %v717 = vpop.f32.mrf.mxu0
      %v718 = vadd.f32 %v589, %v717
      %v719 = vpop.f32.mrf.mxu0
      %720 = vmatprep.mubr.f32.mxu0 0.0
      %721 = vmatmul.mubr.f32.gmra.mxu0 %v623
      %v722 = vpop.f32.mrf.mxu0
      %v723 = vadd.f32 %v594, %v722
      %v724 = vpop.f32.mrf.mxu0
      %725 = vmatprep.mubr.f32.mxu0 0.0
      %726 = vmatmul.mubr.f32.gmra.mxu0 %v626
      %v727 = vpop.f32.mrf.mxu0
      %v728 = vadd.f32 %v599, %v727
      %v729 = vpop.f32.mrf.mxu0
      %730 = vmatprep.mubr.f32.mxu0 0.0
      %731 = vmatmul.mubr.f32.gmra.mxu0 %v629
      %v732 = vpop.f32.mrf.mxu0
      %v733 = vadd.f32 %v604, %v732
      %v734 = vpop.f32.mrf.mxu0
      %735 = vdwg.mxu0
      %v736 = vld [vmem:[%s395 + $0x2] sm:$0xff]
      %v737 = vld [vmem:[%s395 + $0x12] sm:$0xff]
      %v738 = vld [vmem:[%s395 + $0x22] sm:$0xff]
      %v739 = vld [vmem:[%s395 + $0x32] sm:$0xff]
      %v740 = vld [vmem:[%s395 + $0x42] sm:$0xff]
      %v741 = vld [vmem:[%s395 + $0x52] sm:$0xff]
      %v742 = vld [vmem:[%s395 + $0x62] sm:$0xff]
      %v743 = vld [vmem:[%s395 + $0x72] sm:$0xff]
      %s744 = scalar_lea.vmem %s1, 16
      %v745 = vld [vmem:[%s744] sm:$0xff]
      %v747 = vsel %vm477, %v736, 0
      %v750 = vsel %vm477, %v737, 0
      %v753 = vsel %vm477, %v738, 0
      %v756 = vsel %vm477, %v739, 0
      %v759 = vsel %vm477, %v740, 0
      %v762 = vsel %vm477, %v741, 0
      %v765 = vsel %vm477, %v742, 0
      %v768 = vsel %vm477, %v743, 0
      %770 = vmatprep.subr.mxu0 0.0
      %771 = vmatpush1.msra.mxu0 0.0
      %772 = vmatprep.subr.mxu0 0.0
      %773 = vmatpush1.msra.mxu0 0.0
      %774 = vmatprep.subr.mxu0 0.0
      %775 = vmatpush1.msra.mxu0 0.0
      %776 = vmatprep.subr.mxu0 0.0
      %777 = vmatpush1.msra.mxu0 0.0
      %778 = vmatprep.subr.mxu0 0.0
      %779 = vmatpush1.msra.mxu0 0.0
      %780 = vmatprep.subr.mxu0 0.0
      %781 = vmatpush1.msra.mxu0 0.0
      %782 = vmatprep.subr.mxu0 0.0
      %783 = vmatpush1.msra.mxu0 0.0
      %784 = vmatprep.subr.mxu0 0.0
      %785 = vmatpush1.msra.mxu0 0.0
      %786 = vmatprep.subr.mxu0 0.0
      %787 = vmatpush1.msra.mxu0 0.0
      %788 = vmatprep.subr.mxu0 0.0
      %789 = vmatpush1.msra.mxu0 0.0
      %790 = vmatprep.subr.mxu0 0.0
      %791 = vmatpush1.msra.mxu0 0.0
      %792 = vmatprep.subr.mxu0 0.0
      %793 = vmatpush1.msra.mxu0 0.0
      %794 = vmatprep.subr.mxu0 0.0
      %795 = vmatpush1.msra.mxu0 0.0
      %796 = vmatprep.subr.mxu0 0.0
      %797 = vmatpush1.msra.mxu0 0.0
      %798 = vmatprep.subr.mxu0 0.0
      %799 = vmatpush1.msra.mxu0 0.0
      %800 = vmatprep.subr.mxu0 0.0
      %801 = vmatpush1.msra.mxu0 %v745
      %802 = vmatprep.subr.mxu0 0.0
      %803 = vmatpush2.msra.mxu0 0.0
      %804 = vmatprep.subr.mxu0 0.0
      %805 = vmatpush2.msra.mxu0 0.0
      %806 = vmatprep.subr.mxu0 0.0
      %807 = vmatpush2.msra.mxu0 0.0
      %808 = vmatprep.subr.mxu0 0.0
      %809 = vmatpush2.msra.mxu0 0.0
      %810 = vmatprep.subr.mxu0 0.0
      %811 = vmatpush2.msra.mxu0 0.0
      %812 = vmatprep.subr.mxu0 0.0
      %813 = vmatpush2.msra.mxu0 0.0
      %814 = vmatprep.subr.mxu0 0.0
      %815 = vmatpush2.msra.mxu0 0.0
      %816 = vmatprep.subr.mxu0 0.0
      %817 = vmatpush2.msra.mxu0 0.0
      %818 = vmatprep.subr.mxu0 0.0
      %819 = vmatpush2.msra.mxu0 0.0
      %820 = vmatprep.subr.mxu0 0.0
      %821 = vmatpush2.msra.mxu0 0.0
      %822 = vmatprep.subr.mxu0 0.0
      %823 = vmatpush2.msra.mxu0 0.0
      %824 = vmatprep.subr.mxu0 0.0
      %825 = vmatpush2.msra.mxu0 0.0
      %826 = vmatprep.subr.mxu0 0.0
      %827 = vmatpush2.msra.mxu0 0.0
      %828 = vmatprep.subr.mxu0 0.0
      %829 = vmatpush2.msra.mxu0 0.0
      %830 = vmatprep.subr.mxu0 0.0
      %831 = vmatpush2.msra.mxu0 0.0
      %832 = vmatprep.subr.mxu0 0.0
      %833 = vmatpush2.msra.mxu0 0.0
      %834 = vmatprep.mubr.f32.mxu0 0.0
      %835 = vmatmul.mubr.f32.gmra.mxu0 %v747
      %v836 = vpop.f32.mrf.mxu0
      %v837 = vadd.f32 0.0, %v836
      %v838 = vpop.f32.mrf.mxu0
      %839 = vmatprep.mubr.f32.mxu0 0.0
      %840 = vmatmul.mubr.f32.gmra.mxu0 %v750
      %v841 = vpop.f32.mrf.mxu0
      %v842 = vadd.f32 0.0, %v841
      %v843 = vpop.f32.mrf.mxu0
      %844 = vmatprep.mubr.f32.mxu0 0.0
      %845 = vmatmul.mubr.f32.gmra.mxu0 %v753
      %v846 = vpop.f32.mrf.mxu0
      %v847 = vadd.f32 0.0, %v846
      %v848 = vpop.f32.mrf.mxu0
      %849 = vmatprep.mubr.f32.mxu0 0.0
      %850 = vmatmul.mubr.f32.gmra.mxu0 %v756
      %v851 = vpop.f32.mrf.mxu0
      %v852 = vadd.f32 0.0, %v851
      %v853 = vpop.f32.mrf.mxu0
      %854 = vmatprep.mubr.f32.mxu0 0.0
      %855 = vmatmul.mubr.f32.gmra.mxu0 %v759
      %v856 = vpop.f32.mrf.mxu0
      %v857 = vadd.f32 0.0, %v856
      %v858 = vpop.f32.mrf.mxu0
      %859 = vmatprep.mubr.f32.mxu0 0.0
      %860 = vmatmul.mubr.f32.gmra.mxu0 %v762
      %v861 = vpop.f32.mrf.mxu0
      %v862 = vadd.f32 0.0, %v861
      %v863 = vpop.f32.mrf.mxu0
      %864 = vmatprep.mubr.f32.mxu0 0.0
      %865 = vmatmul.mubr.f32.gmra.mxu0 %v765
      %v866 = vpop.f32.mrf.mxu0
      %v867 = vadd.f32 0.0, %v866
      %v868 = vpop.f32.mrf.mxu0
      %869 = vmatprep.mubr.f32.mxu0 0.0
      %870 = vmatmul.mubr.f32.gmra.mxu0 %v768
      %v871 = vpop.f32.mrf.mxu0
      %v872 = vadd.f32 0.0, %v871
      %v873 = vpop.f32.mrf.mxu0
      %874 = vdwg.mxu0
      %v875 = vadd.f32 %v698, %v837
      %v876 = vadd.f32 %v703, %v842
      %v877 = vadd.f32 %v708, %v847
      %v878 = vadd.f32 %v713, %v852
      %v879 = vadd.f32 %v718, %v857
      %v880 = vadd.f32 %v723, %v862
      %v881 = vadd.f32 %v728, %v867
      %v882 = vadd.f32 %v733, %v872
      %s883 = scalar_lea.vmem %s395, 16
      %v884 = vld [vmem:[%s883] sm:$0xff]
      %v885 = vld [vmem:[%s883 + $0x10] sm:$0xff]
      %v886 = vld [vmem:[%s883 + $0x20] sm:$0xff]
      %v887 = vld [vmem:[%s883 + $0x30] sm:$0xff]
      %v888 = vld [vmem:[%s883 + $0x40] sm:$0xff]
      %v889 = vld [vmem:[%s883 + $0x50] sm:$0xff]
      %v890 = vld [vmem:[%s883 + $0x60] sm:$0xff]
      %v891 = vld [vmem:[%s883 + $0x70] sm:$0xff]
      %s892 = scalar_lea.vmem %s1, 24
      %v893 = vld [vmem:[%s892] sm:$0xff]
      %v895 = vsel %vm477, %v884, 0
      %v898 = vsel %vm477, %v885, 0
      %v901 = vsel %vm477, %v886, 0
      %v904 = vsel %vm477, %v887, 0
      %v907 = vsel %vm477, %v888, 0
      %v910 = vsel %vm477, %v889, 0
      %v913 = vsel %vm477, %v890, 0
      %v916 = vsel %vm477, %v891, 0
      %918 = vmatprep.subr.mxu0 0.0
      %919 = vmatpush1.msra.mxu0 0.0
      %920 = vmatprep.subr.mxu0 0.0
      %921 = vmatpush1.msra.mxu0 0.0
      %922 = vmatprep.subr.mxu0 0.0
      %923 = vmatpush1.msra.mxu0 0.0
      %924 = vmatprep.subr.mxu0 0.0
      %925 = vmatpush1.msra.mxu0 0.0
      %926 = vmatprep.subr.mxu0 0.0
      %927 = vmatpush1.msra.mxu0 0.0
      %928 = vmatprep.subr.mxu0 0.0
      %929 = vmatpush1.msra.mxu0 0.0
      %930 = vmatprep.subr.mxu0 0.0
      %931 = vmatpush1.msra.mxu0 0.0
      %932 = vmatprep.subr.mxu0 0.0
      %933 = vmatpush1.msra.mxu0 0.0
      %934 = vmatprep.subr.mxu0 0.0
      %935 = vmatpush1.msra.mxu0 0.0
      %936 = vmatprep.subr.mxu0 0.0
      %937 = vmatpush1.msra.mxu0 0.0
      %938 = vmatprep.subr.mxu0 0.0
      %939 = vmatpush1.msra.mxu0 0.0
      %940 = vmatprep.subr.mxu0 0.0
      %941 = vmatpush1.msra.mxu0 0.0
      %942 = vmatprep.subr.mxu0 0.0
      %943 = vmatpush1.msra.mxu0 0.0
      %944 = vmatprep.subr.mxu0 0.0
      %945 = vmatpush1.msra.mxu0 0.0
      %946 = vmatprep.subr.mxu0 0.0
      %947 = vmatpush1.msra.mxu0 0.0
      %948 = vmatprep.subr.mxu0 0.0
      %949 = vmatpush1.msra.mxu0 %v893
      %950 = vmatprep.subr.mxu0 0.0
      %951 = vmatpush2.msra.mxu0 0.0
      %952 = vmatprep.subr.mxu0 0.0
      %953 = vmatpush2.msra.mxu0 0.0
      %954 = vmatprep.subr.mxu0 0.0
      %955 = vmatpush2.msra.mxu0 0.0
      %956 = vmatprep.subr.mxu0 0.0
      %957 = vmatpush2.msra.mxu0 0.0
      %958 = vmatprep.subr.mxu0 0.0
      %959 = vmatpush2.msra.mxu0 0.0
      %960 = vmatprep.subr.mxu0 0.0
      %961 = vmatpush2.msra.mxu0 0.0
      %962 = vmatprep.subr.mxu0 0.0
      %963 = vmatpush2.msra.mxu0 0.0
      %964 = vmatprep.subr.mxu0 0.0
      %965 = vmatpush2.msra.mxu0 0.0
      %966 = vmatprep.subr.mxu0 0.0
      %967 = vmatpush2.msra.mxu0 0.0
      %968 = vmatprep.subr.mxu0 0.0
      %969 = vmatpush2.msra.mxu0 0.0
      %970 = vmatprep.subr.mxu0 0.0
      %971 = vmatpush2.msra.mxu0 0.0
      %972 = vmatprep.subr.mxu0 0.0
      %973 = vmatpush2.msra.mxu0 0.0
      %974 = vmatprep.subr.mxu0 0.0
      %975 = vmatpush2.msra.mxu0 0.0
      %976 = vmatprep.subr.mxu0 0.0
      %977 = vmatpush2.msra.mxu0 0.0
      %978 = vmatprep.subr.mxu0 0.0
      %979 = vmatpush2.msra.mxu0 0.0
      %980 = vmatprep.subr.mxu0 0.0
      %981 = vmatpush2.msra.mxu0 0.0
      %982 = vmatprep.mubr.f32.mxu0 0.0
      %983 = vmatmul.mubr.f32.gmra.mxu0 %v895
      %v984 = vpop.f32.mrf.mxu0
      %v985 = vadd.f32 0.0, %v984
      %v986 = vpop.f32.mrf.mxu0
      %987 = vmatprep.mubr.f32.mxu0 0.0
      %988 = vmatmul.mubr.f32.gmra.mxu0 %v898
      %v989 = vpop.f32.mrf.mxu0
      %v990 = vadd.f32 0.0, %v989
      %v991 = vpop.f32.mrf.mxu0
      %992 = vmatprep.mubr.f32.mxu0 0.0
      %993 = vmatmul.mubr.f32.gmra.mxu0 %v901
      %v994 = vpop.f32.mrf.mxu0
      %v995 = vadd.f32 0.0, %v994
      %v996 = vpop.f32.mrf.mxu0
      %997 = vmatprep.mubr.f32.mxu0 0.0
      %998 = vmatmul.mubr.f32.gmra.mxu0 %v904
      %v999 = vpop.f32.mrf.mxu0
      %v1000 = vadd.f32 0.0, %v999
      %v1001 = vpop.f32.mrf.mxu0
      %1002 = vmatprep.mubr.f32.mxu0 0.0
      %1003 = vmatmul.mubr.f32.gmra.mxu0 %v907
      %v1004 = vpop.f32.mrf.mxu0
      %v1005 = vadd.f32 0.0, %v1004
      %v1006 = vpop.f32.mrf.mxu0
      %1007 = vmatprep.mubr.f32.mxu0 0.0
      %1008 = vmatmul.mubr.f32.gmra.mxu0 %v910
      %v1009 = vpop.f32.mrf.mxu0
      %v1010 = vadd.f32 0.0, %v1009
      %v1011 = vpop.f32.mrf.mxu0
      %1012 = vmatprep.mubr.f32.mxu0 0.0
      %1013 = vmatmul.mubr.f32.gmra.mxu0 %v913
      %v1014 = vpop.f32.mrf.mxu0
      %v1015 = vadd.f32 0.0, %v1014
      %v1016 = vpop.f32.mrf.mxu0
      %1017 = vmatprep.mubr.f32.mxu0 0.0
      %1018 = vmatmul.mubr.f32.gmra.mxu0 %v916
      %v1019 = vpop.f32.mrf.mxu0
      %v1020 = vadd.f32 0.0, %v1019
      %v1021 = vpop.f32.mrf.mxu0
      %1022 = vdwg.mxu0
      %v1023 = vadd.f32 %v875, %v985
      %v1024 = vadd.f32 %v876, %v990
      %v1025 = vadd.f32 %v877, %v995
      %v1026 = vadd.f32 %v878, %v1000
      %v1027 = vadd.f32 %v879, %v1005
      %v1028 = vadd.f32 %v880, %v1010
      %v1029 = vadd.f32 %v881, %v1015
      %v1030 = vadd.f32 %v882, %v1020
      %v1031 = vld [vmem:[%s883 + $0x1] sm:$0xff]
      %v1032 = vld [vmem:[%s883 + $0x11] sm:$0xff]
      %v1033 = vld [vmem:[%s883 + $0x21] sm:$0xff]
      %v1034 = vld [vmem:[%s883 + $0x31] sm:$0xff]
      %v1035 = vld [vmem:[%s883 + $0x41] sm:$0xff]
      %v1036 = vld [vmem:[%s883 + $0x51] sm:$0xff]
      %v1037 = vld [vmem:[%s883 + $0x61] sm:$0xff]
      %v1038 = vld [vmem:[%s883 + $0x71] sm:$0xff]
      %s1039 = scalar_lea.vmem %s1, 32
      %v1040 = vld [vmem:[%s1039] sm:$0xff]
      %v1042 = vsel %vm477, %v1031, 0
      %v1045 = vsel %vm477, %v1032, 0
      %v1048 = vsel %vm477, %v1033, 0
      %v1051 = vsel %vm477, %v1034, 0
      %v1054 = vsel %vm477, %v1035, 0
      %v1057 = vsel %vm477, %v1036, 0
      %v1060 = vsel %vm477, %v1037, 0
      %v1063 = vsel %vm477, %v1038, 0
      %1065 = vmatprep.subr.mxu0 0.0
      %1066 = vmatpush1.msra.mxu0 0.0
      %1067 = vmatprep.subr.mxu0 0.0
      %1068 = vmatpush1.msra.mxu0 0.0
      %1069 = vmatprep.subr.mxu0 0.0
      %1070 = vmatpush1.msra.mxu0 0.0
      %1071 = vmatprep.subr.mxu0 0.0
      %1072 = vmatpush1.msra.mxu0 0.0
      %1073 = vmatprep.subr.mxu0 0.0
      %1074 = vmatpush1.msra.mxu0 0.0
      %1075 = vmatprep.subr.mxu0 0.0
      %1076 = vmatpush1.msra.mxu0 0.0
      %1077 = vmatprep.subr.mxu0 0.0
      %1078 = vmatpush1.msra.mxu0 0.0
      %1079 = vmatprep.subr.mxu0 0.0
      %1080 = vmatpush1.msra.mxu0 0.0
      %1081 = vmatprep.subr.mxu0 0.0
      %1082 = vmatpush1.msra.mxu0 0.0
      %1083 = vmatprep.subr.mxu0 0.0
      %1084 = vmatpush1.msra.mxu0 0.0
      %1085 = vmatprep.subr.mxu0 0.0
      %1086 = vmatpush1.msra.mxu0 0.0
      %1087 = vmatprep.subr.mxu0 0.0
      %1088 = vmatpush1.msra.mxu0 0.0
      %1089 = vmatprep.subr.mxu0 0.0
      %1090 = vmatpush1.msra.mxu0 0.0
      %1091 = vmatprep.subr.mxu0 0.0
      %1092 = vmatpush1.msra.mxu0 0.0
      %1093 = vmatprep.subr.mxu0 0.0
      %1094 = vmatpush1.msra.mxu0 0.0
      %1095 = vmatprep.subr.mxu0 0.0
      %1096 = vmatpush1.msra.mxu0 %v1040
      %1097 = vmatprep.subr.mxu0 0.0
      %1098 = vmatpush2.msra.mxu0 0.0
      %1099 = vmatprep.subr.mxu0 0.0
      %1100 = vmatpush2.msra.mxu0 0.0
      %1101 = vmatprep.subr.mxu0 0.0
      %1102 = vmatpush2.msra.mxu0 0.0
      %1103 = vmatprep.subr.mxu0 0.0
      %1104 = vmatpush2.msra.mxu0 0.0
      %1105 = vmatprep.subr.mxu0 0.0
      %1106 = vmatpush2.msra.mxu0 0.0
      %1107 = vmatprep.subr.mxu0 0.0
      %1108 = vmatpush2.msra.mxu0 0.0
      %1109 = vmatprep.subr.mxu0 0.0
      %1110 = vmatpush2.msra.mxu0 0.0
      %1111 = vmatprep.subr.mxu0 0.0
      %1112 = vmatpush2.msra.mxu0 0.0
      %1113 = vmatprep.subr.mxu0 0.0
      %1114 = vmatpush2.msra.mxu0 0.0
      %1115 = vmatprep.subr.mxu0 0.0
      %1116 = vmatpush2.msra.mxu0 0.0
      %1117 = vmatprep.subr.mxu0 0.0
      %1118 = vmatpush2.msra.mxu0 0.0
      %1119 = vmatprep.subr.mxu0 0.0
      %1120 = vmatpush2.msra.mxu0 0.0
      %1121 = vmatprep.subr.mxu0 0.0
      %1122 = vmatpush2.msra.mxu0 0.0
      %1123 = vmatprep.subr.mxu0 0.0
      %1124 = vmatpush2.msra.mxu0 0.0
      %1125 = vmatprep.subr.mxu0 0.0
      %1126 = vmatpush2.msra.mxu0 0.0
      %1127 = vmatprep.subr.mxu0 0.0
      %1128 = vmatpush2.msra.mxu0 0.0
      %1129 = vmatprep.mubr.f32.mxu0 0.0
      %1130 = vmatmul.mubr.f32.gmra.mxu0 %v1042
      %v1131 = vpop.f32.mrf.mxu0
      %v1132 = vadd.f32 0.0, %v1131
      %v1133 = vpop.f32.mrf.mxu0
      %1134 = vmatprep.mubr.f32.mxu0 0.0
      %1135 = vmatmul.mubr.f32.gmra.mxu0 %v1045
      %v1136 = vpop.f32.mrf.mxu0
      %v1137 = vadd.f32 0.0, %v1136
      %v1138 = vpop.f32.mrf.mxu0
      %1139 = vmatprep.mubr.f32.mxu0 0.0
      %1140 = vmatmul.mubr.f32.gmra.mxu0 %v1048
      %v1141 = vpop.f32.mrf.mxu0
      %v1142 = vadd.f32 0.0, %v1141
      %v1143 = vpop.f32.mrf.mxu0
      %1144 = vmatprep.mubr.f32.mxu0 0.0
      %1145 = vmatmul.mubr.f32.gmra.mxu0 %v1051
      %v1146 = vpop.f32.mrf.mxu0
      %v1147 = vadd.f32 0.0, %v1146
      %v1148 = vpop.f32.mrf.mxu0
      %1149 = vmatprep.mubr.f32.mxu0 0.0
      %1150 = vmatmul.mubr.f32.gmra.mxu0 %v1054
      %v1151 = vpop.f32.mrf.mxu0
      %v1152 = vadd.f32 0.0, %v1151
      %v1153 = vpop.f32.mrf.mxu0
      %1154 = vmatprep.mubr.f32.mxu0 0.0
      %1155 = vmatmul.mubr.f32.gmra.mxu0 %v1057
      %v1156 = vpop.f32.mrf.mxu0
      %v1157 = vadd.f32 0.0, %v1156
      %v1158 = vpop.f32.mrf.mxu0
      %1159 = vmatprep.mubr.f32.mxu0 0.0
      %1160 = vmatmul.mubr.f32.gmra.mxu0 %v1060
      %v1161 = vpop.f32.mrf.mxu0
      %v1162 = vadd.f32 0.0, %v1161
      %v1163 = vpop.f32.mrf.mxu0
      %1164 = vmatprep.mubr.f32.mxu0 0.0
      %1165 = vmatmul.mubr.f32.gmra.mxu0 %v1063
      %v1166 = vpop.f32.mrf.mxu0
      %v1167 = vadd.f32 0.0, %v1166
      %v1168 = vpop.f32.mrf.mxu0
      %1169 = vdwg.mxu0
      %v1170 = vadd.f32 %v1023, %v1132
      %v1171 = vadd.f32 %v1024, %v1137
      %v1172 = vadd.f32 %v1025, %v1142
      %v1173 = vadd.f32 %v1026, %v1147
      %v1174 = vadd.f32 %v1027, %v1152
      %v1175 = vadd.f32 %v1028, %v1157
      %v1176 = vadd.f32 %v1029, %v1162
      %v1177 = vadd.f32 %v1030, %v1167
      %v1178 = vld [vmem:[%s883 + $0x2] sm:$0xff]
      %v1179 = vld [vmem:[%s883 + $0x12] sm:$0xff]
      %v1180 = vld [vmem:[%s883 + $0x22] sm:$0xff]
      %v1181 = vld [vmem:[%s883 + $0x32] sm:$0xff]
      %v1182 = vld [vmem:[%s883 + $0x42] sm:$0xff]
      %v1183 = vld [vmem:[%s883 + $0x52] sm:$0xff]
      %v1184 = vld [vmem:[%s883 + $0x62] sm:$0xff]
      %v1185 = vld [vmem:[%s883 + $0x72] sm:$0xff]
      %s1186 = scalar_lea.vmem %s1, 40
      %v1187 = vld [vmem:[%s1186] sm:$0xff]
      %v1189 = vsel %vm477, %v1178, 0
      %v1192 = vsel %vm477, %v1179, 0
      %v1195 = vsel %vm477, %v1180, 0
      %v1198 = vsel %vm477, %v1181, 0
      %v1201 = vsel %vm477, %v1182, 0
      %v1204 = vsel %vm477, %v1183, 0
      %v1207 = vsel %vm477, %v1184, 0
      %v1210 = vsel %vm477, %v1185, 0
      %1212 = vmatprep.subr.mxu0 0.0
      %1213 = vmatpush1.msra.mxu0 0.0
      %1214 = vmatprep.subr.mxu0 0.0
      %1215 = vmatpush1.msra.mxu0 0.0
      %1216 = vmatprep.subr.mxu0 0.0
      %1217 = vmatpush1.msra.mxu0 0.0
      %1218 = vmatprep.subr.mxu0 0.0
      %1219 = vmatpush1.msra.mxu0 0.0
      %1220 = vmatprep.subr.mxu0 0.0
      %1221 = vmatpush1.msra.mxu0 0.0
      %1222 = vmatprep.subr.mxu0 0.0
      %1223 = vmatpush1.msra.mxu0 0.0
      %1224 = vmatprep.subr.mxu0 0.0
      %1225 = vmatpush1.msra.mxu0 0.0
      %1226 = vmatprep.subr.mxu0 0.0
      %1227 = vmatpush1.msra.mxu0 0.0
      %1228 = vmatprep.subr.mxu0 0.0
      %1229 = vmatpush1.msra.mxu0 0.0
      %1230 = vmatprep.subr.mxu0 0.0
      %1231 = vmatpush1.msra.mxu0 0.0
      %1232 = vmatprep.subr.mxu0 0.0
      %1233 = vmatpush1.msra.mxu0 0.0
      %1234 = vmatprep.subr.mxu0 0.0
      %1235 = vmatpush1.msra.mxu0 0.0
      %1236 = vmatprep.subr.mxu0 0.0
      %1237 = vmatpush1.msra.mxu0 0.0
      %1238 = vmatprep.subr.mxu0 0.0
      %1239 = vmatpush1.msra.mxu0 0.0
      %1240 = vmatprep.subr.mxu0 0.0
      %1241 = vmatpush1.msra.mxu0 0.0
      %1242 = vmatprep.subr.mxu0 0.0
      %1243 = vmatpush1.msra.mxu0 %v1187
      %1244 = vmatprep.subr.mxu0 0.0
      %1245 = vmatpush2.msra.mxu0 0.0
      %1246 = vmatprep.subr.mxu0 0.0
      %1247 = vmatpush2.msra.mxu0 0.0
      %1248 = vmatprep.subr.mxu0 0.0
      %1249 = vmatpush2.msra.mxu0 0.0
      %1250 = vmatprep.subr.mxu0 0.0
      %1251 = vmatpush2.msra.mxu0 0.0
      %1252 = vmatprep.subr.mxu0 0.0
      %1253 = vmatpush2.msra.mxu0 0.0
      %1254 = vmatprep.subr.mxu0 0.0
      %1255 = vmatpush2.msra.mxu0 0.0
      %1256 = vmatprep.subr.mxu0 0.0
      %1257 = vmatpush2.msra.mxu0 0.0
      %1258 = vmatprep.subr.mxu0 0.0
      %1259 = vmatpush2.msra.mxu0 0.0
      %1260 = vmatprep.subr.mxu0 0.0
      %1261 = vmatpush2.msra.mxu0 0.0
      %1262 = vmatprep.subr.mxu0 0.0
      %1263 = vmatpush2.msra.mxu0 0.0
      %1264 = vmatprep.subr.mxu0 0.0
      %1265 = vmatpush2.msra.mxu0 0.0
      %1266 = vmatprep.subr.mxu0 0.0
      %1267 = vmatpush2.msra.mxu0 0.0
      %1268 = vmatprep.subr.mxu0 0.0
      %1269 = vmatpush2.msra.mxu0 0.0
      %1270 = vmatprep.subr.mxu0 0.0
      %1271 = vmatpush2.msra.mxu0 0.0
      %1272 = vmatprep.subr.mxu0 0.0
      %1273 = vmatpush2.msra.mxu0 0.0
      %1274 = vmatprep.subr.mxu0 0.0
      %1275 = vmatpush2.msra.mxu0 0.0
      %1276 = vmatprep.mubr.f32.mxu0 0.0
      %1277 = vmatmul.mubr.f32.gmra.mxu0 %v1189
      %v1278 = vpop.f32.mrf.mxu0
      %v1279 = vadd.f32 0.0, %v1278
      %v1280 = vpop.f32.mrf.mxu0
      %1281 = vmatprep.mubr.f32.mxu0 0.0
      %1282 = vmatmul.mubr.f32.gmra.mxu0 %v1192
      %v1283 = vpop.f32.mrf.mxu0
      %v1284 = vadd.f32 0.0, %v1283
      %v1285 = vpop.f32.mrf.mxu0
      %1286 = vmatprep.mubr.f32.mxu0 0.0
      %1287 = vmatmul.mubr.f32.gmra.mxu0 %v1195
      %v1288 = vpop.f32.mrf.mxu0
      %v1289 = vadd.f32 0.0, %v1288
      %v1290 = vpop.f32.mrf.mxu0
      %1291 = vmatprep.mubr.f32.mxu0 0.0
      %1292 = vmatmul.mubr.f32.gmra.mxu0 %v1198
      %v1293 = vpop.f32.mrf.mxu0
      %v1294 = vadd.f32 0.0, %v1293
      %v1295 = vpop.f32.mrf.mxu0
      %1296 = vmatprep.mubr.f32.mxu0 0.0
      %1297 = vmatmul.mubr.f32.gmra.mxu0 %v1201
      %v1298 = vpop.f32.mrf.mxu0
      %v1299 = vadd.f32 0.0, %v1298
      %v1300 = vpop.f32.mrf.mxu0
      %1301 = vmatprep.mubr.f32.mxu0 0.0
      %1302 = vmatmul.mubr.f32.gmra.mxu0 %v1204
      %v1303 = vpop.f32.mrf.mxu0
      %v1304 = vadd.f32 0.0, %v1303
      %v1305 = vpop.f32.mrf.mxu0
      %1306 = vmatprep.mubr.f32.mxu0 0.0
      %1307 = vmatmul.mubr.f32.gmra.mxu0 %v1207
      %v1308 = vpop.f32.mrf.mxu0
      %v1309 = vadd.f32 0.0, %v1308
      %v1310 = vpop.f32.mrf.mxu0
      %1311 = vmatprep.mubr.f32.mxu0 0.0
      %1312 = vmatmul.mubr.f32.gmra.mxu0 %v1210
      %v1313 = vpop.f32.mrf.mxu0
      %v1314 = vadd.f32 0.0, %v1313
      %v1315 = vpop.f32.mrf.mxu0
      %1316 = vdwg.mxu0
      %v1317 = vadd.f32 %v1170, %v1279
      %v1318 = vadd.f32 %v1171, %v1284
      %v1319 = vadd.f32 %v1172, %v1289
      %v1320 = vadd.f32 %v1173, %v1294
      %v1321 = vadd.f32 %v1174, %v1299
      %v1322 = vadd.f32 %v1175, %v1304
      %v1323 = vadd.f32 %v1176, %v1309
      %v1324 = vadd.f32 %v1177, %v1314
      %s1325 = scalar_lea.vmem %s395, 32
      %v1326 = vld [vmem:[%s1325] sm:$0xff]
      %v1327 = vld [vmem:[%s1325 + $0x10] sm:$0xff]
      %v1328 = vld [vmem:[%s1325 + $0x20] sm:$0xff]
      %v1329 = vld [vmem:[%s1325 + $0x30] sm:$0xff]
      %v1330 = vld [vmem:[%s1325 + $0x40] sm:$0xff]
      %v1331 = vld [vmem:[%s1325 + $0x50] sm:$0xff]
      %v1332 = vld [vmem:[%s1325 + $0x60] sm:$0xff]
      %v1333 = vld [vmem:[%s1325 + $0x70] sm:$0xff]
      %s1334 = scalar_lea.vmem %s1, 48
      %v1335 = vld [vmem:[%s1334] sm:$0xff]
      %v1337 = vsel %vm477, %v1326, 0
      %v1340 = vsel %vm477, %v1327, 0
      %v1343 = vsel %vm477, %v1328, 0
      %v1346 = vsel %vm477, %v1329, 0
      %v1349 = vsel %vm477, %v1330, 0
      %v1352 = vsel %vm477, %v1331, 0
      %v1355 = vsel %vm477, %v1332, 0
      %v1358 = vsel %vm477, %v1333, 0
      %1360 = vmatprep.subr.mxu0 0.0
      %1361 = vmatpush1.msra.mxu0 0.0
      %1362 = vmatprep.subr.mxu0 0.0
      %1363 = vmatpush1.msra.mxu0 0.0
      %1364 = vmatprep.subr.mxu0 0.0
      %1365 = vmatpush1.msra.mxu0 0.0
      %1366 = vmatprep.subr.mxu0 0.0
      %1367 = vmatpush1.msra.mxu0 0.0
      %1368 = vmatprep.subr.mxu0 0.0
      %1369 = vmatpush1.msra.mxu0 0.0
      %1370 = vmatprep.subr.mxu0 0.0
      %1371 = vmatpush1.msra.mxu0 0.0
      %1372 = vmatprep.subr.mxu0 0.0
      %1373 = vmatpush1.msra.mxu0 0.0
      %1374 = vmatprep.subr.mxu0 0.0
      %1375 = vmatpush1.msra.mxu0 0.0
      %1376 = vmatprep.subr.mxu0 0.0
      %1377 = vmatpush1.msra.mxu0 0.0
      %1378 = vmatprep.subr.mxu0 0.0
      %1379 = vmatpush1.msra.mxu0 0.0
      %1380 = vmatprep.subr.mxu0 0.0
      %1381 = vmatpush1.msra.mxu0 0.0
      %1382 = vmatprep.subr.mxu0 0.0
      %1383 = vmatpush1.msra.mxu0 0.0
      %1384 = vmatprep.subr.mxu0 0.0
      %1385 = vmatpush1.msra.mxu0 0.0
      %1386 = vmatprep.subr.mxu0 0.0
      %1387 = vmatpush1.msra.mxu0 0.0
      %1388 = vmatprep.subr.mxu0 0.0
      %1389 = vmatpush1.msra.mxu0 0.0
      %1390 = vmatprep.subr.mxu0 0.0
      %1391 = vmatpush1.msra.mxu0 %v1335
      %1392 = vmatprep.subr.mxu0 0.0
      %1393 = vmatpush2.msra.mxu0 0.0
      %1394 = vmatprep.subr.mxu0 0.0
      %1395 = vmatpush2.msra.mxu0 0.0
      %1396 = vmatprep.subr.mxu0 0.0
      %1397 = vmatpush2.msra.mxu0 0.0
      %1398 = vmatprep.subr.mxu0 0.0
      %1399 = vmatpush2.msra.mxu0 0.0
      %1400 = vmatprep.subr.mxu0 0.0
      %1401 = vmatpush2.msra.mxu0 0.0
      %1402 = vmatprep.subr.mxu0 0.0
      %1403 = vmatpush2.msra.mxu0 0.0
      %1404 = vmatprep.subr.mxu0 0.0
      %1405 = vmatpush2.msra.mxu0 0.0
      %1406 = vmatprep.subr.mxu0 0.0
      %1407 = vmatpush2.msra.mxu0 0.0
      %1408 = vmatprep.subr.mxu0 0.0
      %1409 = vmatpush2.msra.mxu0 0.0
      %1410 = vmatprep.subr.mxu0 0.0
      %1411 = vmatpush2.msra.mxu0 0.0
      %1412 = vmatprep.subr.mxu0 0.0
      %1413 = vmatpush2.msra.mxu0 0.0
      %1414 = vmatprep.subr.mxu0 0.0
      %1415 = vmatpush2.msra.mxu0 0.0
      %1416 = vmatprep.subr.mxu0 0.0
      %1417 = vmatpush2.msra.mxu0 0.0
      %1418 = vmatprep.subr.mxu0 0.0
      %1419 = vmatpush2.msra.mxu0 0.0
      %1420 = vmatprep.subr.mxu0 0.0
      %1421 = vmatpush2.msra.mxu0 0.0
      %1422 = vmatprep.subr.mxu0 0.0
      %1423 = vmatpush2.msra.mxu0 0.0
      %1424 = vmatprep.mubr.f32.mxu0 0.0
      %1425 = vmatmul.mubr.f32.gmra.mxu0 %v1337
      %v1426 = vpop.f32.mrf.mxu0
      %v1427 = vadd.f32 0.0, %v1426
      %v1428 = vpop.f32.mrf.mxu0
      %1429 = vmatprep.mubr.f32.mxu0 0.0
      %1430 = vmatmul.mubr.f32.gmra.mxu0 %v1340
      %v1431 = vpop.f32.mrf.mxu0
      %v1432 = vadd.f32 0.0, %v1431
      %v1433 = vpop.f32.mrf.mxu0
      %1434 = vmatprep.mubr.f32.mxu0 0.0
      %1435 = vmatmul.mubr.f32.gmra.mxu0 %v1343
      %v1436 = vpop.f32.mrf.mxu0
      %v1437 = vadd.f32 0.0, %v1436
      %v1438 = vpop.f32.mrf.mxu0
      %1439 = vmatprep.mubr.f32.mxu0 0.0
      %1440 = vmatmul.mubr.f32.gmra.mxu0 %v1346
      %v1441 = vpop.f32.mrf.mxu0
      %v1442 = vadd.f32 0.0, %v1441
      %v1443 = vpop.f32.mrf.mxu0
      %1444 = vmatprep.mubr.f32.mxu0 0.0
      %1445 = vmatmul.mubr.f32.gmra.mxu0 %v1349
      %v1446 = vpop.f32.mrf.mxu0
      %v1447 = vadd.f32 0.0, %v1446
      %v1448 = vpop.f32.mrf.mxu0
      %1449 = vmatprep.mubr.f32.mxu0 0.0
      %1450 = vmatmul.mubr.f32.gmra.mxu0 %v1352
      %v1451 = vpop.f32.mrf.mxu0
      %v1452 = vadd.f32 0.0, %v1451
      %v1453 = vpop.f32.mrf.mxu0
      %1454 = vmatprep.mubr.f32.mxu0 0.0
      %1455 = vmatmul.mubr.f32.gmra.mxu0 %v1355
      %v1456 = vpop.f32.mrf.mxu0
      %v1457 = vadd.f32 0.0, %v1456
      %v1458 = vpop.f32.mrf.mxu0
      %1459 = vmatprep.mubr.f32.mxu0 0.0
      %1460 = vmatmul.mubr.f32.gmra.mxu0 %v1358
      %v1461 = vpop.f32.mrf.mxu0
      %v1462 = vadd.f32 0.0, %v1461
      %v1463 = vpop.f32.mrf.mxu0
      %1464 = vdwg.mxu0
      %v1465 = vadd.f32 %v1317, %v1427
      %v1466 = vadd.f32 %v1318, %v1432
      %v1467 = vadd.f32 %v1319, %v1437
      %v1468 = vadd.f32 %v1320, %v1442
      %v1469 = vadd.f32 %v1321, %v1447
      %v1470 = vadd.f32 %v1322, %v1452
      %v1471 = vadd.f32 %v1323, %v1457
      %v1472 = vadd.f32 %v1324, %v1462
      %v1473 = vld [vmem:[%s1325 + $0x1] sm:$0xff]
      %v1474 = vld [vmem:[%s1325 + $0x11] sm:$0xff]
      %v1475 = vld [vmem:[%s1325 + $0x21] sm:$0xff]
      %v1476 = vld [vmem:[%s1325 + $0x31] sm:$0xff]
      %v1477 = vld [vmem:[%s1325 + $0x41] sm:$0xff]
      %v1478 = vld [vmem:[%s1325 + $0x51] sm:$0xff]
      %v1479 = vld [vmem:[%s1325 + $0x61] sm:$0xff]
      %v1480 = vld [vmem:[%s1325 + $0x71] sm:$0xff]
      %s1481 = scalar_lea.vmem %s1, 56
      %v1482 = vld [vmem:[%s1481] sm:$0xff]
      %v1484 = vsel %vm477, %v1473, 0
      %v1487 = vsel %vm477, %v1474, 0
      %v1490 = vsel %vm477, %v1475, 0
      %v1493 = vsel %vm477, %v1476, 0
      %v1496 = vsel %vm477, %v1477, 0
      %v1499 = vsel %vm477, %v1478, 0
      %v1502 = vsel %vm477, %v1479, 0
      %v1505 = vsel %vm477, %v1480, 0
      %1507 = vmatprep.subr.mxu0 0.0
      %1508 = vmatpush1.msra.mxu0 0.0
      %1509 = vmatprep.subr.mxu0 0.0
      %1510 = vmatpush1.msra.mxu0 0.0
      %1511 = vmatprep.subr.mxu0 0.0
      %1512 = vmatpush1.msra.mxu0 0.0
      %1513 = vmatprep.subr.mxu0 0.0
      %1514 = vmatpush1.msra.mxu0 0.0
      %1515 = vmatprep.subr.mxu0 0.0
      %1516 = vmatpush1.msra.mxu0 0.0
      %1517 = vmatprep.subr.mxu0 0.0
      %1518 = vmatpush1.msra.mxu0 0.0
      %1519 = vmatprep.subr.mxu0 0.0
      %1520 = vmatpush1.msra.mxu0 0.0
      %1521 = vmatprep.subr.mxu0 0.0
      %1522 = vmatpush1.msra.mxu0 0.0
      %1523 = vmatprep.subr.mxu0 0.0
      %1524 = vmatpush1.msra.mxu0 0.0
      %1525 = vmatprep.subr.mxu0 0.0
      %1526 = vmatpush1.msra.mxu0 0.0
      %1527 = vmatprep.subr.mxu0 0.0
      %1528 = vmatpush1.msra.mxu0 0.0
      %1529 = vmatprep.subr.mxu0 0.0
      %1530 = vmatpush1.msra.mxu0 0.0
      %1531 = vmatprep.subr.mxu0 0.0
      %1532 = vmatpush1.msra.mxu0 0.0
      %1533 = vmatprep.subr.mxu0 0.0
      %1534 = vmatpush1.msra.mxu0 0.0
      %1535 = vmatprep.subr.mxu0 0.0
      %1536 = vmatpush1.msra.mxu0 0.0
      %1537 = vmatprep.subr.mxu0 0.0
      %1538 = vmatpush1.msra.mxu0 %v1482
      %1539 = vmatprep.subr.mxu0 0.0
      %1540 = vmatpush2.msra.mxu0 0.0
      %1541 = vmatprep.subr.mxu0 0.0
      %1542 = vmatpush2.msra.mxu0 0.0
      %1543 = vmatprep.subr.mxu0 0.0
      %1544 = vmatpush2.msra.mxu0 0.0
      %1545 = vmatprep.subr.mxu0 0.0
      %1546 = vmatpush2.msra.mxu0 0.0
      %1547 = vmatprep.subr.mxu0 0.0
      %1548 = vmatpush2.msra.mxu0 0.0
      %1549 = vmatprep.subr.mxu0 0.0
      %1550 = vmatpush2.msra.mxu0 0.0
      %1551 = vmatprep.subr.mxu0 0.0
      %1552 = vmatpush2.msra.mxu0 0.0
      %1553 = vmatprep.subr.mxu0 0.0
      %1554 = vmatpush2.msra.mxu0 0.0
      %1555 = vmatprep.subr.mxu0 0.0
      %1556 = vmatpush2.msra.mxu0 0.0
      %1557 = vmatprep.subr.mxu0 0.0
      %1558 = vmatpush2.msra.mxu0 0.0
      %1559 = vmatprep.subr.mxu0 0.0
      %1560 = vmatpush2.msra.mxu0 0.0
      %1561 = vmatprep.subr.mxu0 0.0
      %1562 = vmatpush2.msra.mxu0 0.0
      %1563 = vmatprep.subr.mxu0 0.0
      %1564 = vmatpush2.msra.mxu0 0.0
      %1565 = vmatprep.subr.mxu0 0.0
      %1566 = vmatpush2.msra.mxu0 0.0
      %1567 = vmatprep.subr.mxu0 0.0
      %1568 = vmatpush2.msra.mxu0 0.0
      %1569 = vmatprep.subr.mxu0 0.0
      %1570 = vmatpush2.msra.mxu0 0.0
      %1571 = vmatprep.mubr.f32.mxu0 0.0
      %1572 = vmatmul.mubr.f32.gmra.mxu0 %v1484
      %v1573 = vpop.f32.mrf.mxu0
      %v1574 = vadd.f32 0.0, %v1573
      %v1575 = vpop.f32.mrf.mxu0
      %1576 = vmatprep.mubr.f32.mxu0 0.0
      %1577 = vmatmul.mubr.f32.gmra.mxu0 %v1487
      %v1578 = vpop.f32.mrf.mxu0
      %v1579 = vadd.f32 0.0, %v1578
      %v1580 = vpop.f32.mrf.mxu0
      %1581 = vmatprep.mubr.f32.mxu0 0.0
      %1582 = vmatmul.mubr.f32.gmra.mxu0 %v1490
      %v1583 = vpop.f32.mrf.mxu0
      %v1584 = vadd.f32 0.0, %v1583
      %v1585 = vpop.f32.mrf.mxu0
      %1586 = vmatprep.mubr.f32.mxu0 0.0
      %1587 = vmatmul.mubr.f32.gmra.mxu0 %v1493
      %v1588 = vpop.f32.mrf.mxu0
      %v1589 = vadd.f32 0.0, %v1588
      %v1590 = vpop.f32.mrf.mxu0
      %1591 = vmatprep.mubr.f32.mxu0 0.0
      %1592 = vmatmul.mubr.f32.gmra.mxu0 %v1496
      %v1593 = vpop.f32.mrf.mxu0
      %v1594 = vadd.f32 0.0, %v1593
      %v1595 = vpop.f32.mrf.mxu0
      %1596 = vmatprep.mubr.f32.mxu0 0.0
      %1597 = vmatmul.mubr.f32.gmra.mxu0 %v1499
      %v1598 = vpop.f32.mrf.mxu0
      %v1599 = vadd.f32 0.0, %v1598
      %v1600 = vpop.f32.mrf.mxu0
      %1601 = vmatprep.mubr.f32.mxu0 0.0
      %1602 = vmatmul.mubr.f32.gmra.mxu0 %v1502
      %v1603 = vpop.f32.mrf.mxu0
      %v1604 = vadd.f32 0.0, %v1603
      %v1605 = vpop.f32.mrf.mxu0
      %1606 = vmatprep.mubr.f32.mxu0 0.0
      %1607 = vmatmul.mubr.f32.gmra.mxu0 %v1505
      %v1608 = vpop.f32.mrf.mxu0
      %v1609 = vadd.f32 0.0, %v1608
      %v1610 = vpop.f32.mrf.mxu0
      %1611 = vdwg.mxu0
      %v1612 = vadd.f32 %v1465, %v1574
      %v1613 = vadd.f32 %v1466, %v1579
      %v1614 = vadd.f32 %v1467, %v1584
      %v1615 = vadd.f32 %v1468, %v1589
      %v1616 = vadd.f32 %v1469, %v1594
      %v1617 = vadd.f32 %v1470, %v1599
      %v1618 = vadd.f32 %v1471, %v1604
      %v1619 = vadd.f32 %v1472, %v1609
      %v1620 = vld [vmem:[%s1325 + $0x2] sm:$0xff]
      %v1621 = vld [vmem:[%s1325 + $0x12] sm:$0xff]
      %v1622 = vld [vmem:[%s1325 + $0x22] sm:$0xff]
      %v1623 = vld [vmem:[%s1325 + $0x32] sm:$0xff]
      %v1624 = vld [vmem:[%s1325 + $0x42] sm:$0xff]
      %v1625 = vld [vmem:[%s1325 + $0x52] sm:$0xff]
      %v1626 = vld [vmem:[%s1325 + $0x62] sm:$0xff]
      %v1627 = vld [vmem:[%s1325 + $0x72] sm:$0xff]
      %s1628 = scalar_lea.vmem %s1, 64
      %v1629 = vld [vmem:[%s1628] sm:$0xff]
      %v1631 = vsel %vm477, %v1620, 0
      %v1634 = vsel %vm477, %v1621, 0
      %v1637 = vsel %vm477, %v1622, 0
      %v1640 = vsel %vm477, %v1623, 0
      %v1643 = vsel %vm477, %v1624, 0
      %v1646 = vsel %vm477, %v1625, 0
      %v1649 = vsel %vm477, %v1626, 0
      %v1652 = vsel %vm477, %v1627, 0
      %1654 = vmatprep.subr.mxu0 0.0
      %1655 = vmatpush1.msra.mxu0 0.0
      %1656 = vmatprep.subr.mxu0 0.0
      %1657 = vmatpush1.msra.mxu0 0.0
      %1658 = vmatprep.subr.mxu0 0.0
      %1659 = vmatpush1.msra.mxu0 0.0
      %1660 = vmatprep.subr.mxu0 0.0
      %1661 = vmatpush1.msra.mxu0 0.0
      %1662 = vmatprep.subr.mxu0 0.0
      %1663 = vmatpush1.msra.mxu0 0.0
      %1664 = vmatprep.subr.mxu0 0.0
      %1665 = vmatpush1.msra.mxu0 0.0
      %1666 = vmatprep.subr.mxu0 0.0
      %1667 = vmatpush1.msra.mxu0 0.0
      %1668 = vmatprep.subr.mxu0 0.0
      %1669 = vmatpush1.msra.mxu0 0.0
      %1670 = vmatprep.subr.mxu0 0.0
      %1671 = vmatpush1.msra.mxu0 0.0
      %1672 = vmatprep.subr.mxu0 0.0
      %1673 = vmatpush1.msra.mxu0 0.0
      %1674 = vmatprep.subr.mxu0 0.0
      %1675 = vmatpush1.msra.mxu0 0.0
      %1676 = vmatprep.subr.mxu0 0.0
      %1677 = vmatpush1.msra.mxu0 0.0
      %1678 = vmatprep.subr.mxu0 0.0
      %1679 = vmatpush1.msra.mxu0 0.0
      %1680 = vmatprep.subr.mxu0 0.0
      %1681 = vmatpush1.msra.mxu0 0.0
      %1682 = vmatprep.subr.mxu0 0.0
      %1683 = vmatpush1.msra.mxu0 0.0
      %1684 = vmatprep.subr.mxu0 0.0
      %1685 = vmatpush1.msra.mxu0 %v1629
      %1686 = vmatprep.subr.mxu0 0.0
      %1687 = vmatpush2.msra.mxu0 0.0
      %1688 = vmatprep.subr.mxu0 0.0
      %1689 = vmatpush2.msra.mxu0 0.0
      %1690 = vmatprep.subr.mxu0 0.0
      %1691 = vmatpush2.msra.mxu0 0.0
      %1692 = vmatprep.subr.mxu0 0.0
      %1693 = vmatpush2.msra.mxu0 0.0
      %1694 = vmatprep.subr.mxu0 0.0
      %1695 = vmatpush2.msra.mxu0 0.0
      %1696 = vmatprep.subr.mxu0 0.0
      %1697 = vmatpush2.msra.mxu0 0.0
      %1698 = vmatprep.subr.mxu0 0.0
      %1699 = vmatpush2.msra.mxu0 0.0
      %1700 = vmatprep.subr.mxu0 0.0
      %1701 = vmatpush2.msra.mxu0 0.0
      %1702 = vmatprep.subr.mxu0 0.0
      %1703 = vmatpush2.msra.mxu0 0.0
      %1704 = vmatprep.subr.mxu0 0.0
      %1705 = vmatpush2.msra.mxu0 0.0
      %1706 = vmatprep.subr.mxu0 0.0
      %1707 = vmatpush2.msra.mxu0 0.0
      %1708 = vmatprep.subr.mxu0 0.0
      %1709 = vmatpush2.msra.mxu0 0.0
      %1710 = vmatprep.subr.mxu0 0.0
      %1711 = vmatpush2.msra.mxu0 0.0
      %1712 = vmatprep.subr.mxu0 0.0
      %1713 = vmatpush2.msra.mxu0 0.0
      %1714 = vmatprep.subr.mxu0 0.0
      %1715 = vmatpush2.msra.mxu0 0.0
      %1716 = vmatprep.subr.mxu0 0.0
      %1717 = vmatpush2.msra.mxu0 0.0
      %1718 = vmatprep.mubr.f32.mxu0 0.0
      %1719 = vmatmul.mubr.f32.gmra.mxu0 %v1631
      %v1720 = vpop.f32.mrf.mxu0
      %v1721 = vadd.f32 0.0, %v1720
      %v1722 = vpop.f32.mrf.mxu0
      %1723 = vmatprep.mubr.f32.mxu0 0.0
      %1724 = vmatmul.mubr.f32.gmra.mxu0 %v1634
      %v1725 = vpop.f32.mrf.mxu0
      %v1726 = vadd.f32 0.0, %v1725
      %v1727 = vpop.f32.mrf.mxu0
      %1728 = vmatprep.mubr.f32.mxu0 0.0
      %1729 = vmatmul.mubr.f32.gmra.mxu0 %v1637
      %v1730 = vpop.f32.mrf.mxu0
      %v1731 = vadd.f32 0.0, %v1730
      %v1732 = vpop.f32.mrf.mxu0
      %1733 = vmatprep.mubr.f32.mxu0 0.0
      %1734 = vmatmul.mubr.f32.gmra.mxu0 %v1640
      %v1735 = vpop.f32.mrf.mxu0
      %v1736 = vadd.f32 0.0, %v1735
      %v1737 = vpop.f32.mrf.mxu0
      %1738 = vmatprep.mubr.f32.mxu0 0.0
      %1739 = vmatmul.mubr.f32.gmra.mxu0 %v1643
      %v1740 = vpop.f32.mrf.mxu0
      %v1741 = vadd.f32 0.0, %v1740
      %v1742 = vpop.f32.mrf.mxu0
      %1743 = vmatprep.mubr.f32.mxu0 0.0
      %1744 = vmatmul.mubr.f32.gmra.mxu0 %v1646
      %v1745 = vpop.f32.mrf.mxu0
      %v1746 = vadd.f32 0.0, %v1745
      %v1747 = vpop.f32.mrf.mxu0
      %1748 = vmatprep.mubr.f32.mxu0 0.0
      %1749 = vmatmul.mubr.f32.gmra.mxu0 %v1649
      %v1750 = vpop.f32.mrf.mxu0
      %v1751 = vadd.f32 0.0, %v1750
      %v1752 = vpop.f32.mrf.mxu0
      %1753 = vmatprep.mubr.f32.mxu0 0.0
      %1754 = vmatmul.mubr.f32.gmra.mxu0 %v1652
      %v1755 = vpop.f32.mrf.mxu0
      %v1756 = vadd.f32 0.0, %v1755
      %v1757 = vpop.f32.mrf.mxu0
      %1758 = vdwg.mxu0
      %v1759 = vadd.f32 %v1612, %v1721
      %v1760 = vadd.f32 %v1613, %v1726
      %v1761 = vadd.f32 %v1614, %v1731
      %v1762 = vadd.f32 %v1615, %v1736
      %v1763 = vadd.f32 %v1616, %v1741
      %v1764 = vadd.f32 %v1617, %v1746
      %v1765 = vadd.f32 %v1618, %v1751
      %v1766 = vadd.f32 %v1619, %v1756
      %v1767 = vld [vmem:[%s2] sm:$0x1]
      %v1769 = vlaneseq
      %v1770 = vshrl.u32 %v1769, 7
      %v1771 = vsub.s32 0, %v1770
      %v1772 = vrot.slane %v1767, %v1771
      %v1774 = vadd.f32 %v1759, %v1772
      %v1775 = vadd.f32 %v1760, %v1772
      %v1776 = vadd.f32 %v1761, %v1772
      %v1777 = vadd.f32 %v1762, %v1772
      %v1778 = vadd.f32 %v1763, %v1772
      %v1779 = vadd.f32 %v1764, %v1772
      %v1780 = vadd.f32 %v1765, %v1772
      %v1781 = vadd.f32 %v1766, %v1772
      %v1782 = vmax.f32 %v1774, 0.0
      %v1783 = vmax.f32 %v1775, 0.0
      %v1784 = vmax.f32 %v1776, 0.0
      %v1785 = vmax.f32 %v1777, 0.0
      %v1786 = vmax.f32 %v1778, 0.0
      %v1787 = vmax.f32 %v1779, 0.0
      %v1788 = vmax.f32 %v1780, 0.0
      %v1789 = vmax.f32 %v1781, 0.0
      %1790 = vst [vmem:[%s415 + $0x1] sm:$0xff] %v1782
      %1791 = vst [vmem:[%s415 + $0x11] sm:$0xff] %v1783
      %1792 = vst [vmem:[%s415 + $0x21] sm:$0xff] %v1784
      %1793 = vst [vmem:[%s415 + $0x31] sm:$0xff] %v1785
      %1794 = vst [vmem:[%s415 + $0x41] sm:$0xff] %v1786
      %1795 = vst [vmem:[%s415 + $0x51] sm:$0xff] %v1787
      %1796 = vst [vmem:[%s415 + $0x61] sm:$0xff] %v1788
      %1797 = vst [vmem:[%s415 + $0x71] sm:$0xff] %v1789
      %v1798 = vld [vmem:[#allocation2] sm:$0xff]
      %v1799 = vld [vmem:[#allocation2 + $0x10] sm:$0xff]
      %v1800 = vld [vmem:[#allocation2 + $0x20] sm:$0xff]
      %v1801 = vld [vmem:[#allocation2 + $0x30] sm:$0xff]
      %v1802 = vld [vmem:[#allocation2 + $0x40] sm:$0xff]
      %v1803 = vld [vmem:[#allocation2 + $0x50] sm:$0xff]
      %v1804 = vld [vmem:[#allocation2 + $0x60] sm:$0xff]
      %v1805 = vld [vmem:[#allocation2 + $0x70] sm:$0xff]
      %v1806 = vld [vmem:[%s3] sm:$0xff]
      %v1807 = vld [vmem:[%s3 + $0x8] sm:$0xff]
      %v1808 = vld [vmem:[%s3 + $0x10] sm:$0xff]
      %v1809 = vld [vmem:[%s3 + $0x18] sm:$0xff]
      %v1810 = vld [vmem:[%s3 + $0x20] sm:$0xff]
      %v1811 = vld [vmem:[%s3 + $0x28] sm:$0xff]
      %v1812 = vld [vmem:[%s3 + $0x30] sm:$0xff]
      %v1813 = vld [vmem:[%s3 + $0x38] sm:$0xff]
      %v1814 = vld [vmem:[%s3 + $0x40] sm:$0xff]
      %v1815 = vld [vmem:[%s3 + $0x48] sm:$0xff]
      %v1816 = vld [vmem:[%s3 + $0x50] sm:$0xff]
      %v1817 = vld [vmem:[%s3 + $0x58] sm:$0xff]
      %v1818 = vld [vmem:[%s3 + $0x60] sm:$0xff]
      %v1819 = vld [vmem:[%s3 + $0x68] sm:$0xff]
      %v1820 = vld [vmem:[%s3 + $0x70] sm:$0xff]
      %v1821 = vld [vmem:[%s3 + $0x78] sm:$0xff]
      %v1822 = vld [vmem:[#allocation2 + $0x1] sm:$0xff]
      %v1823 = vld [vmem:[#allocation2 + $0x11] sm:$0xff]
      %v1824 = vld [vmem:[#allocation2 + $0x21] sm:$0xff]
      %v1825 = vld [vmem:[#allocation2 + $0x31] sm:$0xff]
      %v1826 = vld [vmem:[#allocation2 + $0x41] sm:$0xff]
      %v1827 = vld [vmem:[#allocation2 + $0x51] sm:$0xff]
      %v1828 = vld [vmem:[#allocation2 + $0x61] sm:$0xff]
      %v1829 = vld [vmem:[#allocation2 + $0x71] sm:$0xff]
      %s1830 = scalar_lea.vmem %s3, 128
      %v1831 = vld [vmem:[%s1830] sm:$0xff]
      %v1832 = vld [vmem:[%s1830 + $0x8] sm:$0xff]
      %v1833 = vld [vmem:[%s1830 + $0x10] sm:$0xff]
      %v1834 = vld [vmem:[%s1830 + $0x18] sm:$0xff]
      %v1835 = vld [vmem:[%s1830 + $0x20] sm:$0xff]
      %v1836 = vld [vmem:[%s1830 + $0x28] sm:$0xff]
      %v1837 = vld [vmem:[%s1830 + $0x30] sm:$0xff]
      %v1838 = vld [vmem:[%s1830 + $0x38] sm:$0xff]
      %v1839 = vld [vmem:[%s1830 + $0x40] sm:$0xff]
      %v1840 = vld [vmem:[%s1830 + $0x48] sm:$0xff]
      %v1841 = vld [vmem:[%s1830 + $0x50] sm:$0xff]
      %v1842 = vld [vmem:[%s1830 + $0x58] sm:$0xff]
      %v1843 = vld [vmem:[%s1830 + $0x60] sm:$0xff]
      %v1844 = vld [vmem:[%s1830 + $0x68] sm:$0xff]
      %v1845 = vld [vmem:[%s1830 + $0x70] sm:$0xff]
      %v1846 = vld [vmem:[%s1830 + $0x78] sm:$0xff]
      %1847 = vmatprep.subr.mxu0 0.0
      %1848 = vmatpush1.msra.mxu0 %v1846
      %1849 = vmatprep.subr.mxu0 0.0
      %1850 = vmatpush1.msra.mxu0 %v1845
      %1851 = vmatprep.subr.mxu0 0.0
      %1852 = vmatpush1.msra.mxu0 %v1844
      %1853 = vmatprep.subr.mxu0 0.0
      %1854 = vmatpush1.msra.mxu0 %v1843
      %1855 = vmatprep.subr.mxu0 0.0
      %1856 = vmatpush1.msra.mxu0 %v1842
      %1857 = vmatprep.subr.mxu0 0.0
      %1858 = vmatpush1.msra.mxu0 %v1841
      %1859 = vmatprep.subr.mxu0 0.0
      %1860 = vmatpush1.msra.mxu0 %v1840
      %1861 = vmatprep.subr.mxu0 0.0
      %1862 = vmatpush1.msra.mxu0 %v1839
      %1863 = vmatprep.subr.mxu0 0.0
      %1864 = vmatpush1.msra.mxu0 %v1838
      %1865 = vmatprep.subr.mxu0 0.0
      %1866 = vmatpush1.msra.mxu0 %v1837
      %1867 = vmatprep.subr.mxu0 0.0
      %1868 = vmatpush1.msra.mxu0 %v1836
      %1869 = vmatprep.subr.mxu0 0.0
      %1870 = vmatpush1.msra.mxu0 %v1835
      %1871 = vmatprep.subr.mxu0 0.0
      %1872 = vmatpush1.msra.mxu0 %v1834
      %1873 = vmatprep.subr.mxu0 0.0
      %1874 = vmatpush1.msra.mxu0 %v1833
      %1875 = vmatprep.subr.mxu0 0.0
      %1876 = vmatpush1.msra.mxu0 %v1832
      %1877 = vmatprep.subr.mxu0 0.0
      %1878 = vmatpush1.msra.mxu0 %v1831
      %1879 = vmatprep.subr.mxu0 0.0
      %1880 = vmatpush2.msra.mxu0 0.0
      %1881 = vmatprep.subr.mxu0 0.0
      %1882 = vmatpush2.msra.mxu0 0.0
      %1883 = vmatprep.subr.mxu0 0.0
      %1884 = vmatpush2.msra.mxu0 0.0
      %1885 = vmatprep.subr.mxu0 0.0
      %1886 = vmatpush2.msra.mxu0 0.0
      %1887 = vmatprep.subr.mxu0 0.0
      %1888 = vmatpush2.msra.mxu0 0.0
      %1889 = vmatprep.subr.mxu0 0.0
      %1890 = vmatpush2.msra.mxu0 0.0
      %1891 = vmatprep.subr.mxu0 0.0
      %1892 = vmatpush2.msra.mxu0 0.0
      %1893 = vmatprep.subr.mxu0 0.0
      %1894 = vmatpush2.msra.mxu0 0.0
      %1895 = vmatprep.subr.mxu0 0.0
      %1896 = vmatpush2.msra.mxu0 0.0
      %1897 = vmatprep.subr.mxu0 0.0
      %1898 = vmatpush2.msra.mxu0 0.0
      %1899 = vmatprep.subr.mxu0 0.0
      %1900 = vmatpush2.msra.mxu0 0.0
      %1901 = vmatprep.subr.mxu0 0.0
      %1902 = vmatpush2.msra.mxu0 0.0
      %1903 = vmatprep.subr.mxu0 0.0
      %1904 = vmatpush2.msra.mxu0 0.0
      %1905 = vmatprep.subr.mxu0 0.0
      %1906 = vmatpush2.msra.mxu0 0.0
      %1907 = vmatprep.subr.mxu0 0.0
      %1908 = vmatpush2.msra.mxu0 0.0
      %1909 = vmatprep.subr.mxu0 0.0
      %1910 = vmatpush2.msra.mxu0 0.0
      %1911 = vmatprep.mubr.f32.mxu0 0.0
      %1912 = vmatmul.mubr.f32.gmra.mxu0 %v1822
      %v1913 = vpop.f32.mrf.mxu0
      %v1914 = vadd.f32 0.0, %v1913
      %v1915 = vpop.f32.mrf.mxu0
      %1916 = vmatprep.mubr.f32.mxu0 0.0
      %1917 = vmatmul.mubr.f32.gmra.mxu0 %v1823
      %v1918 = vpop.f32.mrf.mxu0
      %v1919 = vadd.f32 0.0, %v1918
      %v1920 = vpop.f32.mrf.mxu0
      %1921 = vmatprep.mubr.f32.mxu0 0.0
      %1922 = vmatmul.mubr.f32.gmra.mxu0 %v1824
      %v1923 = vpop.f32.mrf.mxu0
      %v1924 = vadd.f32 0.0, %v1923
      %v1925 = vpop.f32.mrf.mxu0
      %1926 = vmatprep.mubr.f32.mxu0 0.0
      %1927 = vmatmul.mubr.f32.gmra.mxu0 %v1825
      %v1928 = vpop.f32.mrf.mxu0
      %v1929 = vadd.f32 0.0, %v1928
      %v1930 = vpop.f32.mrf.mxu0
      %1931 = vmatprep.mubr.f32.mxu0 0.0
      %1932 = vmatmul.mubr.f32.gmra.mxu0 %v1826
      %v1933 = vpop.f32.mrf.mxu0
      %v1934 = vadd.f32 0.0, %v1933
      %v1935 = vpop.f32.mrf.mxu0
      %1936 = vmatprep.mubr.f32.mxu0 0.0
      %1937 = vmatmul.mubr.f32.gmra.mxu0 %v1827
      %v1938 = vpop.f32.mrf.mxu0
      %v1939 = vadd.f32 0.0, %v1938
      %v1940 = vpop.f32.mrf.mxu0
      %1941 = vmatprep.mubr.f32.mxu0 0.0
      %1942 = vmatmul.mubr.f32.gmra.mxu0 %v1828
      %v1943 = vpop.f32.mrf.mxu0
      %v1944 = vadd.f32 0.0, %v1943
      %v1945 = vpop.f32.mrf.mxu0
      %1946 = vmatprep.mubr.f32.mxu0 0.0
      %1947 = vmatmul.mubr.f32.gmra.mxu0 %v1829
      %v1948 = vpop.f32.mrf.mxu0
      %v1949 = vadd.f32 0.0, %v1948
      %v1950 = vpop.f32.mrf.mxu0
      %1951 = vdwg.mxu0
      %1952 = vmatprep.subr.mxu0 0.0
      %1953 = vmatpush1.msra.mxu0 %v1821
      %1954 = vmatprep.subr.mxu0 0.0
      %1955 = vmatpush1.msra.mxu0 %v1820
      %1956 = vmatprep.subr.mxu0 0.0
      %1957 = vmatpush1.msra.mxu0 %v1819
      %1958 = vmatprep.subr.mxu0 0.0
      %1959 = vmatpush1.msra.mxu0 %v1818
      %1960 = vmatprep.subr.mxu0 0.0
      %1961 = vmatpush1.msra.mxu0 %v1817
      %1962 = vmatprep.subr.mxu0 0.0
      %1963 = vmatpush1.msra.mxu0 %v1816
      %1964 = vmatprep.subr.mxu0 0.0
      %1965 = vmatpush1.msra.mxu0 %v1815
      %1966 = vmatprep.subr.mxu0 0.0
      %1967 = vmatpush1.msra.mxu0 %v1814
      %1968 = vmatprep.subr.mxu0 0.0
      %1969 = vmatpush1.msra.mxu0 %v1813
      %1970 = vmatprep.subr.mxu0 0.0
      %1971 = vmatpush1.msra.mxu0 %v1812
      %1972 = vmatprep.subr.mxu0 0.0
      %1973 = vmatpush1.msra.mxu0 %v1811
      %1974 = vmatprep.subr.mxu0 0.0
      %1975 = vmatpush1.msra.mxu0 %v1810
      %1976 = vmatprep.subr.mxu0 0.0
      %1977 = vmatpush1.msra.mxu0 %v1809
      %1978 = vmatprep.subr.mxu0 0.0
      %1979 = vmatpush1.msra.mxu0 %v1808
      %1980 = vmatprep.subr.mxu0 0.0
      %1981 = vmatpush1.msra.mxu0 %v1807
      %1982 = vmatprep.subr.mxu0 0.0
      %1983 = vmatpush1.msra.mxu0 %v1806
      %1984 = vmatprep.subr.mxu0 0.0
      %1985 = vmatpush2.msra.mxu0 0.0
      %1986 = vmatprep.subr.mxu0 0.0
      %1987 = vmatpush2.msra.mxu0 0.0
      %1988 = vmatprep.subr.mxu0 0.0
      %1989 = vmatpush2.msra.mxu0 0.0
      %1990 = vmatprep.subr.mxu0 0.0
      %1991 = vmatpush2.msra.mxu0 0.0
      %1992 = vmatprep.subr.mxu0 0.0
      %1993 = vmatpush2.msra.mxu0 0.0
      %1994 = vmatprep.subr.mxu0 0.0
      %1995 = vmatpush2.msra.mxu0 0.0
      %1996 = vmatprep.subr.mxu0 0.0
      %1997 = vmatpush2.msra.mxu0 0.0
      %1998 = vmatprep.subr.mxu0 0.0
      %1999 = vmatpush2.msra.mxu0 0.0
      %2000 = vmatprep.subr.mxu0 0.0
      %2001 = vmatpush2.msra.mxu0 0.0
      %2002 = vmatprep.subr.mxu0 0.0
      %2003 = vmatpush2.msra.mxu0 0.0
      %2004 = vmatprep.subr.mxu0 0.0
      %2005 = vmatpush2.msra.mxu0 0.0
      %2006 = vmatprep.subr.mxu0 0.0
      %2007 = vmatpush2.msra.mxu0 0.0
      %2008 = vmatprep.subr.mxu0 0.0
      %2009 = vmatpush2.msra.mxu0 0.0
      %2010 = vmatprep.subr.mxu0 0.0
      %2011 = vmatpush2.msra.mxu0 0.0
      %2012 = vmatprep.subr.mxu0 0.0
      %2013 = vmatpush2.msra.mxu0 0.0
      %2014 = vmatprep.subr.mxu0 0.0
      %2015 = vmatpush2.msra.mxu0 0.0
      %2016 = vmatprep.mubr.f32.mxu0 0.0
      %2017 = vmatmul.mubr.f32.gmra.mxu0 %v1798
      %v2018 = vpop.f32.mrf.mxu0
      %v2019 = vadd.f32 %v1914, %v2018
      %v2020 = vpop.f32.mrf.mxu0
      %2021 = vmatprep.mubr.f32.mxu0 0.0
      %2022 = vmatmul.mubr.f32.gmra.mxu0 %v1799
      %v2023 = vpop.f32.mrf.mxu0
      %v2024 = vadd.f32 %v1919, %v2023
      %v2025 = vpop.f32.mrf.mxu0
      %2026 = vmatprep.mubr.f32.mxu0 0.0
      %2027 = vmatmul.mubr.f32.gmra.mxu0 %v1800
      %v2028 = vpop.f32.mrf.mxu0
      %v2029 = vadd.f32 %v1924, %v2028
      %v2030 = vpop.f32.mrf.mxu0
      %2031 = vmatprep.mubr.f32.mxu0 0.0
      %2032 = vmatmul.mubr.f32.gmra.mxu0 %v1801
      %v2033 = vpop.f32.mrf.mxu0
      %v2034 = vadd.f32 %v1929, %v2033
      %v2035 = vpop.f32.mrf.mxu0
      %2036 = vmatprep.mubr.f32.mxu0 0.0
      %2037 = vmatmul.mubr.f32.gmra.mxu0 %v1802
      %v2038 = vpop.f32.mrf.mxu0
      %v2039 = vadd.f32 %v1934, %v2038
      %v2040 = vpop.f32.mrf.mxu0
      %2041 = vmatprep.mubr.f32.mxu0 0.0
      %2042 = vmatmul.mubr.f32.gmra.mxu0 %v1803
      %v2043 = vpop.f32.mrf.mxu0
      %v2044 = vadd.f32 %v1939, %v2043
      %v2045 = vpop.f32.mrf.mxu0
      %2046 = vmatprep.mubr.f32.mxu0 0.0
      %2047 = vmatmul.mubr.f32.gmra.mxu0 %v1804
      %v2048 = vpop.f32.mrf.mxu0
      %v2049 = vadd.f32 %v1944, %v2048
      %v2050 = vpop.f32.mrf.mxu0
      %2051 = vmatprep.mubr.f32.mxu0 0.0
      %2052 = vmatmul.mubr.f32.gmra.mxu0 %v1805
      %v2053 = vpop.f32.mrf.mxu0
      %v2054 = vadd.f32 %v1949, %v2053
      %v2055 = vpop.f32.mrf.mxu0
      %2056 = vdwg.mxu0
      %v2057 = vld [vmem:[#allocation2 + $0x2] sm:$0xff]
      %v2058 = vld [vmem:[#allocation2 + $0x12] sm:$0xff]
      %v2059 = vld [vmem:[#allocation2 + $0x22] sm:$0xff]
      %v2060 = vld [vmem:[#allocation2 + $0x32] sm:$0xff]
      %v2061 = vld [vmem:[#allocation2 + $0x42] sm:$0xff]
      %v2062 = vld [vmem:[#allocation2 + $0x52] sm:$0xff]
      %v2063 = vld [vmem:[#allocation2 + $0x62] sm:$0xff]
      %v2064 = vld [vmem:[#allocation2 + $0x72] sm:$0xff]
      %s2065 = scalar_lea.vmem %s3, 256
      %v2066 = vld [vmem:[%s2065] sm:$0xff]
      %v2067 = vld [vmem:[%s2065 + $0x8] sm:$0xff]
      %v2068 = vld [vmem:[%s2065 + $0x10] sm:$0xff]
      %v2069 = vld [vmem:[%s2065 + $0x18] sm:$0xff]
      %v2070 = vld [vmem:[%s2065 + $0x20] sm:$0xff]
      %v2071 = vld [vmem:[%s2065 + $0x28] sm:$0xff]
      %v2072 = vld [vmem:[%s2065 + $0x30] sm:$0xff]
      %v2073 = vld [vmem:[%s2065 + $0x38] sm:$0xff]
      %v2074 = vld [vmem:[%s2065 + $0x40] sm:$0xff]
      %v2075 = vld [vmem:[%s2065 + $0x48] sm:$0xff]
      %v2076 = vld [vmem:[%s2065 + $0x50] sm:$0xff]
      %v2077 = vld [vmem:[%s2065 + $0x58] sm:$0xff]
      %v2078 = vld [vmem:[%s2065 + $0x60] sm:$0xff]
      %v2079 = vld [vmem:[%s2065 + $0x68] sm:$0xff]
      %v2080 = vld [vmem:[%s2065 + $0x70] sm:$0xff]
      %v2081 = vld [vmem:[%s2065 + $0x78] sm:$0xff]
      %2082 = vmatprep.subr.mxu0 0.0
      %2083 = vmatpush1.msra.mxu0 %v2081
      %2084 = vmatprep.subr.mxu0 0.0
      %2085 = vmatpush1.msra.mxu0 %v2080
      %2086 = vmatprep.subr.mxu0 0.0
      %2087 = vmatpush1.msra.mxu0 %v2079
      %2088 = vmatprep.subr.mxu0 0.0
      %2089 = vmatpush1.msra.mxu0 %v2078
      %2090 = vmatprep.subr.mxu0 0.0
      %2091 = vmatpush1.msra.mxu0 %v2077
      %2092 = vmatprep.subr.mxu0 0.0
      %2093 = vmatpush1.msra.mxu0 %v2076
      %2094 = vmatprep.subr.mxu0 0.0
      %2095 = vmatpush1.msra.mxu0 %v2075
      %2096 = vmatprep.subr.mxu0 0.0
      %2097 = vmatpush1.msra.mxu0 %v2074
      %2098 = vmatprep.subr.mxu0 0.0
      %2099 = vmatpush1.msra.mxu0 %v2073
      %2100 = vmatprep.subr.mxu0 0.0
      %2101 = vmatpush1.msra.mxu0 %v2072
      %2102 = vmatprep.subr.mxu0 0.0
      %2103 = vmatpush1.msra.mxu0 %v2071
      %2104 = vmatprep.subr.mxu0 0.0
      %2105 = vmatpush1.msra.mxu0 %v2070
      %2106 = vmatprep.subr.mxu0 0.0
      %2107 = vmatpush1.msra.mxu0 %v2069
      %2108 = vmatprep.subr.mxu0 0.0
      %2109 = vmatpush1.msra.mxu0 %v2068
      %2110 = vmatprep.subr.mxu0 0.0
      %2111 = vmatpush1.msra.mxu0 %v2067
      %2112 = vmatprep.subr.mxu0 0.0
      %2113 = vmatpush1.msra.mxu0 %v2066
      %2114 = vmatprep.subr.mxu0 0.0
      %2115 = vmatpush2.msra.mxu0 0.0
      %2116 = vmatprep.subr.mxu0 0.0
      %2117 = vmatpush2.msra.mxu0 0.0
      %2118 = vmatprep.subr.mxu0 0.0
      %2119 = vmatpush2.msra.mxu0 0.0
      %2120 = vmatprep.subr.mxu0 0.0
      %2121 = vmatpush2.msra.mxu0 0.0
      %2122 = vmatprep.subr.mxu0 0.0
      %2123 = vmatpush2.msra.mxu0 0.0
      %2124 = vmatprep.subr.mxu0 0.0
      %2125 = vmatpush2.msra.mxu0 0.0
      %2126 = vmatprep.subr.mxu0 0.0
      %2127 = vmatpush2.msra.mxu0 0.0
      %2128 = vmatprep.subr.mxu0 0.0
      %2129 = vmatpush2.msra.mxu0 0.0
      %2130 = vmatprep.subr.mxu0 0.0
      %2131 = vmatpush2.msra.mxu0 0.0
      %2132 = vmatprep.subr.mxu0 0.0
      %2133 = vmatpush2.msra.mxu0 0.0
      %2134 = vmatprep.subr.mxu0 0.0
      %2135 = vmatpush2.msra.mxu0 0.0
      %2136 = vmatprep.subr.mxu0 0.0
      %2137 = vmatpush2.msra.mxu0 0.0
      %2138 = vmatprep.subr.mxu0 0.0
      %2139 = vmatpush2.msra.mxu0 0.0
      %2140 = vmatprep.subr.mxu0 0.0
      %2141 = vmatpush2.msra.mxu0 0.0
      %2142 = vmatprep.subr.mxu0 0.0
      %2143 = vmatpush2.msra.mxu0 0.0
      %2144 = vmatprep.subr.mxu0 0.0
      %2145 = vmatpush2.msra.mxu0 0.0
      %2146 = vmatprep.mubr.f32.mxu0 0.0
      %2147 = vmatmul.mubr.f32.gmra.mxu0 %v2057
      %v2148 = vpop.f32.mrf.mxu0
      %v2149 = vadd.f32 0.0, %v2148
      %v2150 = vpop.f32.mrf.mxu0
      %2151 = vmatprep.mubr.f32.mxu0 0.0
      %2152 = vmatmul.mubr.f32.gmra.mxu0 %v2058
      %v2153 = vpop.f32.mrf.mxu0
      %v2154 = vadd.f32 0.0, %v2153
      %v2155 = vpop.f32.mrf.mxu0
      %2156 = vmatprep.mubr.f32.mxu0 0.0
      %2157 = vmatmul.mubr.f32.gmra.mxu0 %v2059
      %v2158 = vpop.f32.mrf.mxu0
      %v2159 = vadd.f32 0.0, %v2158
      %v2160 = vpop.f32.mrf.mxu0
      %2161 = vmatprep.mubr.f32.mxu0 0.0
      %2162 = vmatmul.mubr.f32.gmra.mxu0 %v2060
      %v2163 = vpop.f32.mrf.mxu0
      %v2164 = vadd.f32 0.0, %v2163
      %v2165 = vpop.f32.mrf.mxu0
      %2166 = vmatprep.mubr.f32.mxu0 0.0
      %2167 = vmatmul.mubr.f32.gmra.mxu0 %v2061
      %v2168 = vpop.f32.mrf.mxu0
      %v2169 = vadd.f32 0.0, %v2168
      %v2170 = vpop.f32.mrf.mxu0
      %2171 = vmatprep.mubr.f32.mxu0 0.0
      %2172 = vmatmul.mubr.f32.gmra.mxu0 %v2062
      %v2173 = vpop.f32.mrf.mxu0
      %v2174 = vadd.f32 0.0, %v2173
      %v2175 = vpop.f32.mrf.mxu0
      %2176 = vmatprep.mubr.f32.mxu0 0.0
      %2177 = vmatmul.mubr.f32.gmra.mxu0 %v2063
      %v2178 = vpop.f32.mrf.mxu0
      %v2179 = vadd.f32 0.0, %v2178
      %v2180 = vpop.f32.mrf.mxu0
      %2181 = vmatprep.mubr.f32.mxu0 0.0
      %2182 = vmatmul.mubr.f32.gmra.mxu0 %v2064
      %v2183 = vpop.f32.mrf.mxu0
      %v2184 = vadd.f32 0.0, %v2183
      %v2185 = vpop.f32.mrf.mxu0
      %2186 = vdwg.mxu0
      %v2187 = vadd.f32 %v2019, %v2149
      %v2188 = vadd.f32 %v2024, %v2154
      %v2189 = vadd.f32 %v2029, %v2159
      %v2190 = vadd.f32 %v2034, %v2164
      %v2191 = vadd.f32 %v2039, %v2169
      %v2192 = vadd.f32 %v2044, %v2174
      %v2193 = vadd.f32 %v2049, %v2179
      %v2194 = vadd.f32 %v2054, %v2184
      %v2195 = vld [vmem:[%s415] sm:$0xff]
      %v2196 = vld [vmem:[%s415 + $0x10] sm:$0xff]
      %v2197 = vld [vmem:[%s415 + $0x20] sm:$0xff]
      %v2198 = vld [vmem:[%s415 + $0x30] sm:$0xff]
      %v2199 = vld [vmem:[%s415 + $0x40] sm:$0xff]
      %v2200 = vld [vmem:[%s415 + $0x50] sm:$0xff]
      %v2201 = vld [vmem:[%s415 + $0x60] sm:$0xff]
      %v2202 = vld [vmem:[%s415 + $0x70] sm:$0xff]
      %s2203 = scalar_lea.vmem %s3, 384
      %v2204 = vld [vmem:[%s2203] sm:$0xff]
      %v2205 = vld [vmem:[%s2203 + $0x8] sm:$0xff]
      %v2206 = vld [vmem:[%s2203 + $0x10] sm:$0xff]
      %v2207 = vld [vmem:[%s2203 + $0x18] sm:$0xff]
      %v2208 = vld [vmem:[%s2203 + $0x20] sm:$0xff]
      %v2209 = vld [vmem:[%s2203 + $0x28] sm:$0xff]
      %v2210 = vld [vmem:[%s2203 + $0x30] sm:$0xff]
      %v2211 = vld [vmem:[%s2203 + $0x38] sm:$0xff]
      %v2212 = vld [vmem:[%s2203 + $0x40] sm:$0xff]
      %v2213 = vld [vmem:[%s2203 + $0x48] sm:$0xff]
      %v2214 = vld [vmem:[%s2203 + $0x50] sm:$0xff]
      %v2215 = vld [vmem:[%s2203 + $0x58] sm:$0xff]
      %v2216 = vld [vmem:[%s2203 + $0x60] sm:$0xff]
      %v2217 = vld [vmem:[%s2203 + $0x68] sm:$0xff]
      %v2218 = vld [vmem:[%s2203 + $0x70] sm:$0xff]
      %v2219 = vld [vmem:[%s2203 + $0x78] sm:$0xff]
      %2220 = vmatprep.subr.mxu0 0.0
      %2221 = vmatpush1.msra.mxu0 %v2219
      %2222 = vmatprep.subr.mxu0 0.0
      %2223 = vmatpush1.msra.mxu0 %v2218
      %2224 = vmatprep.subr.mxu0 0.0
      %2225 = vmatpush1.msra.mxu0 %v2217
      %2226 = vmatprep.subr.mxu0 0.0
      %2227 = vmatpush1.msra.mxu0 %v2216
      %2228 = vmatprep.subr.mxu0 0.0
      %2229 = vmatpush1.msra.mxu0 %v2215
      %2230 = vmatprep.subr.mxu0 0.0
      %2231 = vmatpush1.msra.mxu0 %v2214
      %2232 = vmatprep.subr.mxu0 0.0
      %2233 = vmatpush1.msra.mxu0 %v2213
      %2234 = vmatprep.subr.mxu0 0.0
      %2235 = vmatpush1.msra.mxu0 %v2212
      %2236 = vmatprep.subr.mxu0 0.0
      %2237 = vmatpush1.msra.mxu0 %v2211
      %2238 = vmatprep.subr.mxu0 0.0
      %2239 = vmatpush1.msra.mxu0 %v2210
      %2240 = vmatprep.subr.mxu0 0.0
      %2241 = vmatpush1.msra.mxu0 %v2209
      %2242 = vmatprep.subr.mxu0 0.0
      %2243 = vmatpush1.msra.mxu0 %v2208
      %2244 = vmatprep.subr.mxu0 0.0
      %2245 = vmatpush1.msra.mxu0 %v2207
      %2246 = vmatprep.subr.mxu0 0.0
      %2247 = vmatpush1.msra.mxu0 %v2206
      %2248 = vmatprep.subr.mxu0 0.0
      %2249 = vmatpush1.msra.mxu0 %v2205
      %2250 = vmatprep.subr.mxu0 0.0
      %2251 = vmatpush1.msra.mxu0 %v2204
      %2252 = vmatprep.subr.mxu0 0.0
      %2253 = vmatpush2.msra.mxu0 0.0
      %2254 = vmatprep.subr.mxu0 0.0
      %2255 = vmatpush2.msra.mxu0 0.0
      %2256 = vmatprep.subr.mxu0 0.0
      %2257 = vmatpush2.msra.mxu0 0.0
      %2258 = vmatprep.subr.mxu0 0.0
      %2259 = vmatpush2.msra.mxu0 0.0
      %2260 = vmatprep.subr.mxu0 0.0
      %2261 = vmatpush2.msra.mxu0 0.0
      %2262 = vmatprep.subr.mxu0 0.0
      %2263 = vmatpush2.msra.mxu0 0.0
      %2264 = vmatprep.subr.mxu0 0.0
      %2265 = vmatpush2.msra.mxu0 0.0
      %2266 = vmatprep.subr.mxu0 0.0
      %2267 = vmatpush2.msra.mxu0 0.0
      %2268 = vmatprep.subr.mxu0 0.0
      %2269 = vmatpush2.msra.mxu0 0.0
      %2270 = vmatprep.subr.mxu0 0.0
      %2271 = vmatpush2.msra.mxu0 0.0
      %2272 = vmatprep.subr.mxu0 0.0
      %2273 = vmatpush2.msra.mxu0 0.0
      %2274 = vmatprep.subr.mxu0 0.0
      %2275 = vmatpush2.msra.mxu0 0.0
      %2276 = vmatprep.subr.mxu0 0.0
      %2277 = vmatpush2.msra.mxu0 0.0
      %2278 = vmatprep.subr.mxu0 0.0
      %2279 = vmatpush2.msra.mxu0 0.0
      %2280 = vmatprep.subr.mxu0 0.0
      %2281 = vmatpush2.msra.mxu0 0.0
      %2282 = vmatprep.subr.mxu0 0.0
      %2283 = vmatpush2.msra.mxu0 0.0
      %2284 = vmatprep.mubr.f32.mxu0 0.0
      %2285 = vmatmul.mubr.f32.gmra.mxu0 %v2195
      %v2286 = vpop.f32.mrf.mxu0
      %v2287 = vadd.f32 0.0, %v2286
      %v2288 = vpop.f32.mrf.mxu0
      %2289 = vmatprep.mubr.f32.mxu0 0.0
      %2290 = vmatmul.mubr.f32.gmra.mxu0 %v2196
      %v2291 = vpop.f32.mrf.mxu0
      %v2292 = vadd.f32 0.0, %v2291
      %v2293 = vpop.f32.mrf.mxu0
      %2294 = vmatprep.mubr.f32.mxu0 0.0
      %2295 = vmatmul.mubr.f32.gmra.mxu0 %v2197
      %v2296 = vpop.f32.mrf.mxu0
      %v2297 = vadd.f32 0.0, %v2296
      %v2298 = vpop.f32.mrf.mxu0
      %2299 = vmatprep.mubr.f32.mxu0 0.0
      %2300 = vmatmul.mubr.f32.gmra.mxu0 %v2198
      %v2301 = vpop.f32.mrf.mxu0
      %v2302 = vadd.f32 0.0, %v2301
      %v2303 = vpop.f32.mrf.mxu0
      %2304 = vmatprep.mubr.f32.mxu0 0.0
      %2305 = vmatmul.mubr.f32.gmra.mxu0 %v2199
      %v2306 = vpop.f32.mrf.mxu0
      %v2307 = vadd.f32 0.0, %v2306
      %v2308 = vpop.f32.mrf.mxu0
      %2309 = vmatprep.mubr.f32.mxu0 0.0
      %2310 = vmatmul.mubr.f32.gmra.mxu0 %v2200
      %v2311 = vpop.f32.mrf.mxu0
      %v2312 = vadd.f32 0.0, %v2311
      %v2313 = vpop.f32.mrf.mxu0
      %2314 = vmatprep.mubr.f32.mxu0 0.0
      %2315 = vmatmul.mubr.f32.gmra.mxu0 %v2201
      %v2316 = vpop.f32.mrf.mxu0
      %v2317 = vadd.f32 0.0, %v2316
      %v2318 = vpop.f32.mrf.mxu0
      %2319 = vmatprep.mubr.f32.mxu0 0.0
      %2320 = vmatmul.mubr.f32.gmra.mxu0 %v2202
      %v2321 = vpop.f32.mrf.mxu0
      %v2322 = vadd.f32 0.0, %v2321
      %v2323 = vpop.f32.mrf.mxu0
      %2324 = vdwg.mxu0
      %v2325 = vadd.f32 %v2187, %v2287
      %v2326 = vadd.f32 %v2188, %v2292
      %v2327 = vadd.f32 %v2189, %v2297
      %v2328 = vadd.f32 %v2190, %v2302
      %v2329 = vadd.f32 %v2191, %v2307
      %v2330 = vadd.f32 %v2192, %v2312
      %v2331 = vadd.f32 %v2193, %v2317
      %v2332 = vadd.f32 %v2194, %v2322
      %v2333 = vld [vmem:[%s415 + $0x1] sm:$0xff]
      %v2334 = vld [vmem:[%s415 + $0x11] sm:$0xff]
      %v2335 = vld [vmem:[%s415 + $0x21] sm:$0xff]
      %v2336 = vld [vmem:[%s415 + $0x31] sm:$0xff]
      %v2337 = vld [vmem:[%s415 + $0x41] sm:$0xff]
      %v2338 = vld [vmem:[%s415 + $0x51] sm:$0xff]
      %v2339 = vld [vmem:[%s415 + $0x61] sm:$0xff]
      %v2340 = vld [vmem:[%s415 + $0x71] sm:$0xff]
      %s2341 = scalar_lea.vmem %s3, 512
      %v2342 = vld [vmem:[%s2341] sm:$0xff]
      %v2343 = vld [vmem:[%s2341 + $0x8] sm:$0xff]
      %v2344 = vld [vmem:[%s2341 + $0x10] sm:$0xff]
      %v2345 = vld [vmem:[%s2341 + $0x18] sm:$0xff]
      %v2346 = vld [vmem:[%s2341 + $0x20] sm:$0xff]
      %v2347 = vld [vmem:[%s2341 + $0x28] sm:$0xff]
      %v2348 = vld [vmem:[%s2341 + $0x30] sm:$0xff]
      %v2349 = vld [vmem:[%s2341 + $0x38] sm:$0xff]
      %v2350 = vld [vmem:[%s2341 + $0x40] sm:$0xff]
      %v2351 = vld [vmem:[%s2341 + $0x48] sm:$0xff]
      %v2352 = vld [vmem:[%s2341 + $0x50] sm:$0xff]
      %v2353 = vld [vmem:[%s2341 + $0x58] sm:$0xff]
      %v2354 = vld [vmem:[%s2341 + $0x60] sm:$0xff]
      %v2355 = vld [vmem:[%s2341 + $0x68] sm:$0xff]
      %v2356 = vld [vmem:[%s2341 + $0x70] sm:$0xff]
      %v2357 = vld [vmem:[%s2341 + $0x78] sm:$0xff]
      %2358 = vmatprep.subr.mxu0 0.0
      %2359 = vmatpush1.msra.mxu0 %v2357
      %2360 = vmatprep.subr.mxu0 0.0
      %2361 = vmatpush1.msra.mxu0 %v2356
      %2362 = vmatprep.subr.mxu0 0.0
      %2363 = vmatpush1.msra.mxu0 %v2355
      %2364 = vmatprep.subr.mxu0 0.0
      %2365 = vmatpush1.msra.mxu0 %v2354
      %2366 = vmatprep.subr.mxu0 0.0
      %2367 = vmatpush1.msra.mxu0 %v2353
      %2368 = vmatprep.subr.mxu0 0.0
      %2369 = vmatpush1.msra.mxu0 %v2352
      %2370 = vmatprep.subr.mxu0 0.0
      %2371 = vmatpush1.msra.mxu0 %v2351
      %2372 = vmatprep.subr.mxu0 0.0
      %2373 = vmatpush1.msra.mxu0 %v2350
      %2374 = vmatprep.subr.mxu0 0.0
      %2375 = vmatpush1.msra.mxu0 %v2349
      %2376 = vmatprep.subr.mxu0 0.0
      %2377 = vmatpush1.msra.mxu0 %v2348
      %2378 = vmatprep.subr.mxu0 0.0
      %2379 = vmatpush1.msra.mxu0 %v2347
      %2380 = vmatprep.subr.mxu0 0.0
      %2381 = vmatpush1.msra.mxu0 %v2346
      %2382 = vmatprep.subr.mxu0 0.0
      %2383 = vmatpush1.msra.mxu0 %v2345
      %2384 = vmatprep.subr.mxu0 0.0
      %2385 = vmatpush1.msra.mxu0 %v2344
      %2386 = vmatprep.subr.mxu0 0.0
      %2387 = vmatpush1.msra.mxu0 %v2343
      %2388 = vmatprep.subr.mxu0 0.0
      %2389 = vmatpush1.msra.mxu0 %v2342
      %2390 = vmatprep.subr.mxu0 0.0
      %2391 = vmatpush2.msra.mxu0 0.0
      %2392 = vmatprep.subr.mxu0 0.0
      %2393 = vmatpush2.msra.mxu0 0.0
      %2394 = vmatprep.subr.mxu0 0.0
      %2395 = vmatpush2.msra.mxu0 0.0
      %2396 = vmatprep.subr.mxu0 0.0
      %2397 = vmatpush2.msra.mxu0 0.0
      %2398 = vmatprep.subr.mxu0 0.0
      %2399 = vmatpush2.msra.mxu0 0.0
      %2400 = vmatprep.subr.mxu0 0.0
      %2401 = vmatpush2.msra.mxu0 0.0
      %2402 = vmatprep.subr.mxu0 0.0
      %2403 = vmatpush2.msra.mxu0 0.0
      %2404 = vmatprep.subr.mxu0 0.0
      %2405 = vmatpush2.msra.mxu0 0.0
      %2406 = vmatprep.subr.mxu0 0.0
      %2407 = vmatpush2.msra.mxu0 0.0
      %2408 = vmatprep.subr.mxu0 0.0
      %2409 = vmatpush2.msra.mxu0 0.0
      %2410 = vmatprep.subr.mxu0 0.0
      %2411 = vmatpush2.msra.mxu0 0.0
      %2412 = vmatprep.subr.mxu0 0.0
      %2413 = vmatpush2.msra.mxu0 0.0
      %2414 = vmatprep.subr.mxu0 0.0
      %2415 = vmatpush2.msra.mxu0 0.0
      %2416 = vmatprep.subr.mxu0 0.0
      %2417 = vmatpush2.msra.mxu0 0.0
      %2418 = vmatprep.subr.mxu0 0.0
      %2419 = vmatpush2.msra.mxu0 0.0
      %2420 = vmatprep.subr.mxu0 0.0
      %2421 = vmatpush2.msra.mxu0 0.0
      %2422 = vmatprep.mubr.f32.mxu0 0.0
      %2423 = vmatmul.mubr.f32.gmra.mxu0 %v2333
      %v2424 = vpop.f32.mrf.mxu0
      %v2425 = vadd.f32 0.0, %v2424
      %v2426 = vpop.f32.mrf.mxu0
      %2427 = vmatprep.mubr.f32.mxu0 0.0
      %2428 = vmatmul.mubr.f32.gmra.mxu0 %v2334
      %v2429 = vpop.f32.mrf.mxu0
      %v2430 = vadd.f32 0.0, %v2429
      %v2431 = vpop.f32.mrf.mxu0
      %2432 = vmatprep.mubr.f32.mxu0 0.0
      %2433 = vmatmul.mubr.f32.gmra.mxu0 %v2335
      %v2434 = vpop.f32.mrf.mxu0
      %v2435 = vadd.f32 0.0, %v2434
      %v2436 = vpop.f32.mrf.mxu0
      %2437 = vmatprep.mubr.f32.mxu0 0.0
      %2438 = vmatmul.mubr.f32.gmra.mxu0 %v2336
      %v2439 = vpop.f32.mrf.mxu0
      %v2440 = vadd.f32 0.0, %v2439
      %v2441 = vpop.f32.mrf.mxu0
      %2442 = vmatprep.mubr.f32.mxu0 0.0
      %2443 = vmatmul.mubr.f32.gmra.mxu0 %v2337
      %v2444 = vpop.f32.mrf.mxu0
      %v2445 = vadd.f32 0.0, %v2444
      %v2446 = vpop.f32.mrf.mxu0
      %2447 = vmatprep.mubr.f32.mxu0 0.0
      %2448 = vmatmul.mubr.f32.gmra.mxu0 %v2338
      %v2449 = vpop.f32.mrf.mxu0
      %v2450 = vadd.f32 0.0, %v2449
      %v2451 = vpop.f32.mrf.mxu0
      %2452 = vmatprep.mubr.f32.mxu0 0.0
      %2453 = vmatmul.mubr.f32.gmra.mxu0 %v2339
      %v2454 = vpop.f32.mrf.mxu0
      %v2455 = vadd.f32 0.0, %v2454
      %v2456 = vpop.f32.mrf.mxu0
      %2457 = vmatprep.mubr.f32.mxu0 0.0
      %2458 = vmatmul.mubr.f32.gmra.mxu0 %v2340
      %v2459 = vpop.f32.mrf.mxu0
      %v2460 = vadd.f32 0.0, %v2459
      %v2461 = vpop.f32.mrf.mxu0
      %2462 = vdwg.mxu0
      %v2463 = vadd.f32 %v2325, %v2425
      %v2464 = vadd.f32 %v2326, %v2430
      %v2465 = vadd.f32 %v2327, %v2435
      %v2466 = vadd.f32 %v2328, %v2440
      %v2467 = vadd.f32 %v2329, %v2445
      %v2468 = vadd.f32 %v2330, %v2450
      %v2469 = vadd.f32 %v2331, %v2455
      %v2470 = vadd.f32 %v2332, %v2460
      %v2471 = vld [vmem:[%s415 + $0x2] sm:$0xff]
      %v2472 = vld [vmem:[%s415 + $0x12] sm:$0xff]
      %v2473 = vld [vmem:[%s415 + $0x22] sm:$0xff]
      %v2474 = vld [vmem:[%s415 + $0x32] sm:$0xff]
      %v2475 = vld [vmem:[%s415 + $0x42] sm:$0xff]
      %v2476 = vld [vmem:[%s415 + $0x52] sm:$0xff]
      %v2477 = vld [vmem:[%s415 + $0x62] sm:$0xff]
      %v2478 = vld [vmem:[%s415 + $0x72] sm:$0xff]
      %s2479 = scalar_lea.vmem %s3, 640
      %v2480 = vld [vmem:[%s2479] sm:$0xff]
      %v2481 = vld [vmem:[%s2479 + $0x8] sm:$0xff]
      %v2482 = vld [vmem:[%s2479 + $0x10] sm:$0xff]
      %v2483 = vld [vmem:[%s2479 + $0x18] sm:$0xff]
      %v2484 = vld [vmem:[%s2479 + $0x20] sm:$0xff]
      %v2485 = vld [vmem:[%s2479 + $0x28] sm:$0xff]
      %v2486 = vld [vmem:[%s2479 + $0x30] sm:$0xff]
      %v2487 = vld [vmem:[%s2479 + $0x38] sm:$0xff]
      %v2488 = vld [vmem:[%s2479 + $0x40] sm:$0xff]
      %v2489 = vld [vmem:[%s2479 + $0x48] sm:$0xff]
      %v2490 = vld [vmem:[%s2479 + $0x50] sm:$0xff]
      %v2491 = vld [vmem:[%s2479 + $0x58] sm:$0xff]
      %v2492 = vld [vmem:[%s2479 + $0x60] sm:$0xff]
      %v2493 = vld [vmem:[%s2479 + $0x68] sm:$0xff]
      %v2494 = vld [vmem:[%s2479 + $0x70] sm:$0xff]
      %v2495 = vld [vmem:[%s2479 + $0x78] sm:$0xff]
      %2496 = vmatprep.subr.mxu0 0.0
      %2497 = vmatpush1.msra.mxu0 %v2495
      %2498 = vmatprep.subr.mxu0 0.0
      %2499 = vmatpush1.msra.mxu0 %v2494
      %2500 = vmatprep.subr.mxu0 0.0
      %2501 = vmatpush1.msra.mxu0 %v2493
      %2502 = vmatprep.subr.mxu0 0.0
      %2503 = vmatpush1.msra.mxu0 %v2492
      %2504 = vmatprep.subr.mxu0 0.0
      %2505 = vmatpush1.msra.mxu0 %v2491
      %2506 = vmatprep.subr.mxu0 0.0
      %2507 = vmatpush1.msra.mxu0 %v2490
      %2508 = vmatprep.subr.mxu0 0.0
      %2509 = vmatpush1.msra.mxu0 %v2489
      %2510 = vmatprep.subr.mxu0 0.0
      %2511 = vmatpush1.msra.mxu0 %v2488
      %2512 = vmatprep.subr.mxu0 0.0
      %2513 = vmatpush1.msra.mxu0 %v2487
      %2514 = vmatprep.subr.mxu0 0.0
      %2515 = vmatpush1.msra.mxu0 %v2486
      %2516 = vmatprep.subr.mxu0 0.0
      %2517 = vmatpush1.msra.mxu0 %v2485
      %2518 = vmatprep.subr.mxu0 0.0
      %2519 = vmatpush1.msra.mxu0 %v2484
      %2520 = vmatprep.subr.mxu0 0.0
      %2521 = vmatpush1.msra.mxu0 %v2483
      %2522 = vmatprep.subr.mxu0 0.0
      %2523 = vmatpush1.msra.mxu0 %v2482
      %2524 = vmatprep.subr.mxu0 0.0
      %2525 = vmatpush1.msra.mxu0 %v2481
      %2526 = vmatprep.subr.mxu0 0.0
      %2527 = vmatpush1.msra.mxu0 %v2480
      %2528 = vmatprep.subr.mxu0 0.0
      %2529 = vmatpush2.msra.mxu0 0.0
      %2530 = vmatprep.subr.mxu0 0.0
      %2531 = vmatpush2.msra.mxu0 0.0
      %2532 = vmatprep.subr.mxu0 0.0
      %2533 = vmatpush2.msra.mxu0 0.0
      %2534 = vmatprep.subr.mxu0 0.0
      %2535 = vmatpush2.msra.mxu0 0.0
      %2536 = vmatprep.subr.mxu0 0.0
      %2537 = vmatpush2.msra.mxu0 0.0
      %2538 = vmatprep.subr.mxu0 0.0
      %2539 = vmatpush2.msra.mxu0 0.0
      %2540 = vmatprep.subr.mxu0 0.0
      %2541 = vmatpush2.msra.mxu0 0.0
      %2542 = vmatprep.subr.mxu0 0.0
      %2543 = vmatpush2.msra.mxu0 0.0
      %2544 = vmatprep.subr.mxu0 0.0
      %2545 = vmatpush2.msra.mxu0 0.0
      %2546 = vmatprep.subr.mxu0 0.0
      %2547 = vmatpush2.msra.mxu0 0.0
      %2548 = vmatprep.subr.mxu0 0.0
      %2549 = vmatpush2.msra.mxu0 0.0
      %2550 = vmatprep.subr.mxu0 0.0
      %2551 = vmatpush2.msra.mxu0 0.0
      %2552 = vmatprep.subr.mxu0 0.0
      %2553 = vmatpush2.msra.mxu0 0.0
      %2554 = vmatprep.subr.mxu0 0.0
      %2555 = vmatpush2.msra.mxu0 0.0
      %2556 = vmatprep.subr.mxu0 0.0
      %2557 = vmatpush2.msra.mxu0 0.0
      %2558 = vmatprep.subr.mxu0 0.0
      %2559 = vmatpush2.msra.mxu0 0.0
      %2560 = vmatprep.mubr.f32.mxu0 0.0
      %2561 = vmatmul.mubr.f32.gmra.mxu0 %v2471
      %v2562 = vpop.f32.mrf.mxu0
      %v2563 = vadd.f32 0.0, %v2562
      %v2564 = vpop.f32.mrf.mxu0
      %2565 = vmatprep.mubr.f32.mxu0 0.0
      %2566 = vmatmul.mubr.f32.gmra.mxu0 %v2472
      %v2567 = vpop.f32.mrf.mxu0
      %v2568 = vadd.f32 0.0, %v2567
      %v2569 = vpop.f32.mrf.mxu0
      %2570 = vmatprep.mubr.f32.mxu0 0.0
      %2571 = vmatmul.mubr.f32.gmra.mxu0 %v2473
      %v2572 = vpop.f32.mrf.mxu0
      %v2573 = vadd.f32 0.0, %v2572
      %v2574 = vpop.f32.mrf.mxu0
      %2575 = vmatprep.mubr.f32.mxu0 0.0
      %2576 = vmatmul.mubr.f32.gmra.mxu0 %v2474
      %v2577 = vpop.f32.mrf.mxu0
      %v2578 = vadd.f32 0.0, %v2577
      %v2579 = vpop.f32.mrf.mxu0
      %2580 = vmatprep.mubr.f32.mxu0 0.0
      %2581 = vmatmul.mubr.f32.gmra.mxu0 %v2475
      %v2582 = vpop.f32.mrf.mxu0
      %v2583 = vadd.f32 0.0, %v2582
      %v2584 = vpop.f32.mrf.mxu0
      %2585 = vmatprep.mubr.f32.mxu0 0.0
      %2586 = vmatmul.mubr.f32.gmra.mxu0 %v2476
      %v2587 = vpop.f32.mrf.mxu0
      %v2588 = vadd.f32 0.0, %v2587
      %v2589 = vpop.f32.mrf.mxu0
      %2590 = vmatprep.mubr.f32.mxu0 0.0
      %2591 = vmatmul.mubr.f32.gmra.mxu0 %v2477
      %v2592 = vpop.f32.mrf.mxu0
      %v2593 = vadd.f32 0.0, %v2592
      %v2594 = vpop.f32.mrf.mxu0
      %2595 = vmatprep.mubr.f32.mxu0 0.0
      %2596 = vmatmul.mubr.f32.gmra.mxu0 %v2478
      %v2597 = vpop.f32.mrf.mxu0
      %v2598 = vadd.f32 0.0, %v2597
      %v2599 = vpop.f32.mrf.mxu0
      %2600 = vdwg.mxu0
      %v2601 = vadd.f32 %v2463, %v2563
      %v2602 = vadd.f32 %v2464, %v2568
      %v2603 = vadd.f32 %v2465, %v2573
      %v2604 = vadd.f32 %v2466, %v2578
      %v2605 = vadd.f32 %v2467, %v2583
      %v2606 = vadd.f32 %v2468, %v2588
      %v2607 = vadd.f32 %v2469, %v2593
      %v2608 = vadd.f32 %v2470, %v2598
      %s2609 = scalar_lea.vmem [#allocation2], 32
      %v2610 = vld [vmem:[%s2609] sm:$0xff]
      %v2611 = vld [vmem:[%s2609 + $0x10] sm:$0xff]
      %v2612 = vld [vmem:[%s2609 + $0x20] sm:$0xff]
      %v2613 = vld [vmem:[%s2609 + $0x30] sm:$0xff]
      %v2614 = vld [vmem:[%s2609 + $0x40] sm:$0xff]
      %v2615 = vld [vmem:[%s2609 + $0x50] sm:$0xff]
      %v2616 = vld [vmem:[%s2609 + $0x60] sm:$0xff]
      %v2617 = vld [vmem:[%s2609 + $0x70] sm:$0xff]
      %s2618 = scalar_lea.vmem %s3, 768
      %v2619 = vld [vmem:[%s2618] sm:$0xff]
      %v2620 = vld [vmem:[%s2618 + $0x8] sm:$0xff]
      %v2621 = vld [vmem:[%s2618 + $0x10] sm:$0xff]
      %v2622 = vld [vmem:[%s2618 + $0x18] sm:$0xff]
      %v2623 = vld [vmem:[%s2618 + $0x20] sm:$0xff]
      %v2624 = vld [vmem:[%s2618 + $0x28] sm:$0xff]
      %v2625 = vld [vmem:[%s2618 + $0x30] sm:$0xff]
      %v2626 = vld [vmem:[%s2618 + $0x38] sm:$0xff]
      %v2627 = vld [vmem:[%s2618 + $0x40] sm:$0xff]
      %v2628 = vld [vmem:[%s2618 + $0x48] sm:$0xff]
      %v2629 = vld [vmem:[%s2618 + $0x50] sm:$0xff]
      %v2630 = vld [vmem:[%s2618 + $0x58] sm:$0xff]
      %v2631 = vld [vmem:[%s2618 + $0x60] sm:$0xff]
      %v2632 = vld [vmem:[%s2618 + $0x68] sm:$0xff]
      %v2633 = vld [vmem:[%s2618 + $0x70] sm:$0xff]
      %v2634 = vld [vmem:[%s2618 + $0x78] sm:$0xff]
      %2635 = vmatprep.subr.mxu0 0.0
      %2636 = vmatpush1.msra.mxu0 %v2634
      %2637 = vmatprep.subr.mxu0 0.0
      %2638 = vmatpush1.msra.mxu0 %v2633
      %2639 = vmatprep.subr.mxu0 0.0
      %2640 = vmatpush1.msra.mxu0 %v2632
      %2641 = vmatprep.subr.mxu0 0.0
      %2642 = vmatpush1.msra.mxu0 %v2631
      %2643 = vmatprep.subr.mxu0 0.0
      %2644 = vmatpush1.msra.mxu0 %v2630
      %2645 = vmatprep.subr.mxu0 0.0
      %2646 = vmatpush1.msra.mxu0 %v2629
      %2647 = vmatprep.subr.mxu0 0.0
      %2648 = vmatpush1.msra.mxu0 %v2628
      %2649 = vmatprep.subr.mxu0 0.0
      %2650 = vmatpush1.msra.mxu0 %v2627
      %2651 = vmatprep.subr.mxu0 0.0
      %2652 = vmatpush1.msra.mxu0 %v2626
      %2653 = vmatprep.subr.mxu0 0.0
      %2654 = vmatpush1.msra.mxu0 %v2625
      %2655 = vmatprep.subr.mxu0 0.0
      %2656 = vmatpush1.msra.mxu0 %v2624
      %2657 = vmatprep.subr.mxu0 0.0
      %2658 = vmatpush1.msra.mxu0 %v2623
      %2659 = vmatprep.subr.mxu0 0.0
      %2660 = vmatpush1.msra.mxu0 %v2622
      %2661 = vmatprep.subr.mxu0 0.0
      %2662 = vmatpush1.msra.mxu0 %v2621
      %2663 = vmatprep.subr.mxu0 0.0
      %2664 = vmatpush1.msra.mxu0 %v2620
      %2665 = vmatprep.subr.mxu0 0.0
      %2666 = vmatpush1.msra.mxu0 %v2619
      %2667 = vmatprep.subr.mxu0 0.0
      %2668 = vmatpush2.msra.mxu0 0.0
      %2669 = vmatprep.subr.mxu0 0.0
      %2670 = vmatpush2.msra.mxu0 0.0
      %2671 = vmatprep.subr.mxu0 0.0
      %2672 = vmatpush2.msra.mxu0 0.0
      %2673 = vmatprep.subr.mxu0 0.0
      %2674 = vmatpush2.msra.mxu0 0.0
      %2675 = vmatprep.subr.mxu0 0.0
      %2676 = vmatpush2.msra.mxu0 0.0
      %2677 = vmatprep.subr.mxu0 0.0
      %2678 = vmatpush2.msra.mxu0 0.0
      %2679 = vmatprep.subr.mxu0 0.0
      %2680 = vmatpush2.msra.mxu0 0.0
      %2681 = vmatprep.subr.mxu0 0.0
      %2682 = vmatpush2.msra.mxu0 0.0
      %2683 = vmatprep.subr.mxu0 0.0
      %2684 = vmatpush2.msra.mxu0 0.0
      %2685 = vmatprep.subr.mxu0 0.0
      %2686 = vmatpush2.msra.mxu0 0.0
      %2687 = vmatprep.subr.mxu0 0.0
      %2688 = vmatpush2.msra.mxu0 0.0
      %2689 = vmatprep.subr.mxu0 0.0
      %2690 = vmatpush2.msra.mxu0 0.0
      %2691 = vmatprep.subr.mxu0 0.0
      %2692 = vmatpush2.msra.mxu0 0.0
      %2693 = vmatprep.subr.mxu0 0.0
      %2694 = vmatpush2.msra.mxu0 0.0
      %2695 = vmatprep.subr.mxu0 0.0
      %2696 = vmatpush2.msra.mxu0 0.0
      %2697 = vmatprep.subr.mxu0 0.0
      %2698 = vmatpush2.msra.mxu0 0.0
      %2699 = vmatprep.mubr.f32.mxu0 0.0
      %2700 = vmatmul.mubr.f32.gmra.mxu0 %v2610
      %v2701 = vpop.f32.mrf.mxu0
      %v2702 = vadd.f32 0.0, %v2701
      %v2703 = vpop.f32.mrf.mxu0
      %2704 = vmatprep.mubr.f32.mxu0 0.0
      %2705 = vmatmul.mubr.f32.gmra.mxu0 %v2611
      %v2706 = vpop.f32.mrf.mxu0
      %v2707 = vadd.f32 0.0, %v2706
      %v2708 = vpop.f32.mrf.mxu0
      %2709 = vmatprep.mubr.f32.mxu0 0.0
      %2710 = vmatmul.mubr.f32.gmra.mxu0 %v2612
      %v2711 = vpop.f32.mrf.mxu0
      %v2712 = vadd.f32 0.0, %v2711
      %v2713 = vpop.f32.mrf.mxu0
      %2714 = vmatprep.mubr.f32.mxu0 0.0
      %2715 = vmatmul.mubr.f32.gmra.mxu0 %v2613
      %v2716 = vpop.f32.mrf.mxu0
      %v2717 = vadd.f32 0.0, %v2716
      %v2718 = vpop.f32.mrf.mxu0
      %2719 = vmatprep.mubr.f32.mxu0 0.0
      %2720 = vmatmul.mubr.f32.gmra.mxu0 %v2614
      %v2721 = vpop.f32.mrf.mxu0
      %v2722 = vadd.f32 0.0, %v2721
      %v2723 = vpop.f32.mrf.mxu0
      %2724 = vmatprep.mubr.f32.mxu0 0.0
      %2725 = vmatmul.mubr.f32.gmra.mxu0 %v2615
      %v2726 = vpop.f32.mrf.mxu0
      %v2727 = vadd.f32 0.0, %v2726
      %v2728 = vpop.f32.mrf.mxu0
      %2729 = vmatprep.mubr.f32.mxu0 0.0
      %2730 = vmatmul.mubr.f32.gmra.mxu0 %v2616
      %v2731 = vpop.f32.mrf.mxu0
      %v2732 = vadd.f32 0.0, %v2731
      %v2733 = vpop.f32.mrf.mxu0
      %2734 = vmatprep.mubr.f32.mxu0 0.0
      %2735 = vmatmul.mubr.f32.gmra.mxu0 %v2617
      %v2736 = vpop.f32.mrf.mxu0
      %v2737 = vadd.f32 0.0, %v2736
      %v2738 = vpop.f32.mrf.mxu0
      %2739 = vdwg.mxu0
      %v2740 = vadd.f32 %v2601, %v2702
      %v2741 = vadd.f32 %v2602, %v2707
      %v2742 = vadd.f32 %v2603, %v2712
      %v2743 = vadd.f32 %v2604, %v2717
      %v2744 = vadd.f32 %v2605, %v2722
      %v2745 = vadd.f32 %v2606, %v2727
      %v2746 = vadd.f32 %v2607, %v2732
      %v2747 = vadd.f32 %v2608, %v2737
      %v2748 = vld [vmem:[%s2609 + $0x1] sm:$0xff]
      %v2749 = vld [vmem:[%s2609 + $0x11] sm:$0xff]
      %v2750 = vld [vmem:[%s2609 + $0x21] sm:$0xff]
      %v2751 = vld [vmem:[%s2609 + $0x31] sm:$0xff]
      %v2752 = vld [vmem:[%s2609 + $0x41] sm:$0xff]
      %v2753 = vld [vmem:[%s2609 + $0x51] sm:$0xff]
      %v2754 = vld [vmem:[%s2609 + $0x61] sm:$0xff]
      %v2755 = vld [vmem:[%s2609 + $0x71] sm:$0xff]
      %s2756 = scalar_lea.vmem %s3, 896
      %v2757 = vld [vmem:[%s2756] sm:$0xff]
      %v2758 = vld [vmem:[%s2756 + $0x8] sm:$0xff]
      %v2759 = vld [vmem:[%s2756 + $0x10] sm:$0xff]
      %v2760 = vld [vmem:[%s2756 + $0x18] sm:$0xff]
      %v2761 = vld [vmem:[%s2756 + $0x20] sm:$0xff]
      %v2762 = vld [vmem:[%s2756 + $0x28] sm:$0xff]
      %v2763 = vld [vmem:[%s2756 + $0x30] sm:$0xff]
      %v2764 = vld [vmem:[%s2756 + $0x38] sm:$0xff]
      %v2765 = vld [vmem:[%s2756 + $0x40] sm:$0xff]
      %v2766 = vld [vmem:[%s2756 + $0x48] sm:$0xff]
      %v2767 = vld [vmem:[%s2756 + $0x50] sm:$0xff]
      %v2768 = vld [vmem:[%s2756 + $0x58] sm:$0xff]
      %v2769 = vld [vmem:[%s2756 + $0x60] sm:$0xff]
      %v2770 = vld [vmem:[%s2756 + $0x68] sm:$0xff]
      %v2771 = vld [vmem:[%s2756 + $0x70] sm:$0xff]
      %v2772 = vld [vmem:[%s2756 + $0x78] sm:$0xff]
      %2773 = vmatprep.subr.mxu0 0.0
      %2774 = vmatpush1.msra.mxu0 %v2772
      %2775 = vmatprep.subr.mxu0 0.0
      %2776 = vmatpush1.msra.mxu0 %v2771
      %2777 = vmatprep.subr.mxu0 0.0
      %2778 = vmatpush1.msra.mxu0 %v2770
      %2779 = vmatprep.subr.mxu0 0.0
      %2780 = vmatpush1.msra.mxu0 %v2769
      %2781 = vmatprep.subr.mxu0 0.0
      %2782 = vmatpush1.msra.mxu0 %v2768
      %2783 = vmatprep.subr.mxu0 0.0
      %2784 = vmatpush1.msra.mxu0 %v2767
      %2785 = vmatprep.subr.mxu0 0.0
      %2786 = vmatpush1.msra.mxu0 %v2766
      %2787 = vmatprep.subr.mxu0 0.0
      %2788 = vmatpush1.msra.mxu0 %v2765
      %2789 = vmatprep.subr.mxu0 0.0
      %2790 = vmatpush1.msra.mxu0 %v2764
      %2791 = vmatprep.subr.mxu0 0.0
      %2792 = vmatpush1.msra.mxu0 %v2763
      %2793 = vmatprep.subr.mxu0 0.0
      %2794 = vmatpush1.msra.mxu0 %v2762
      %2795 = vmatprep.subr.mxu0 0.0
      %2796 = vmatpush1.msra.mxu0 %v2761
      %2797 = vmatprep.subr.mxu0 0.0
      %2798 = vmatpush1.msra.mxu0 %v2760
      %2799 = vmatprep.subr.mxu0 0.0
      %2800 = vmatpush1.msra.mxu0 %v2759
      %2801 = vmatprep.subr.mxu0 0.0
      %2802 = vmatpush1.msra.mxu0 %v2758
      %2803 = vmatprep.subr.mxu0 0.0
      %2804 = vmatpush1.msra.mxu0 %v2757
      %2805 = vmatprep.subr.mxu0 0.0
      %2806 = vmatpush2.msra.mxu0 0.0
      %2807 = vmatprep.subr.mxu0 0.0
      %2808 = vmatpush2.msra.mxu0 0.0
      %2809 = vmatprep.subr.mxu0 0.0
      %2810 = vmatpush2.msra.mxu0 0.0
      %2811 = vmatprep.subr.mxu0 0.0
      %2812 = vmatpush2.msra.mxu0 0.0
      %2813 = vmatprep.subr.mxu0 0.0
      %2814 = vmatpush2.msra.mxu0 0.0
      %2815 = vmatprep.subr.mxu0 0.0
      %2816 = vmatpush2.msra.mxu0 0.0
      %2817 = vmatprep.subr.mxu0 0.0
      %2818 = vmatpush2.msra.mxu0 0.0
      %2819 = vmatprep.subr.mxu0 0.0
      %2820 = vmatpush2.msra.mxu0 0.0
      %2821 = vmatprep.subr.mxu0 0.0
      %2822 = vmatpush2.msra.mxu0 0.0
      %2823 = vmatprep.subr.mxu0 0.0
      %2824 = vmatpush2.msra.mxu0 0.0
      %2825 = vmatprep.subr.mxu0 0.0
      %2826 = vmatpush2.msra.mxu0 0.0
      %2827 = vmatprep.subr.mxu0 0.0
      %2828 = vmatpush2.msra.mxu0 0.0
      %2829 = vmatprep.subr.mxu0 0.0
      %2830 = vmatpush2.msra.mxu0 0.0
      %2831 = vmatprep.subr.mxu0 0.0
      %2832 = vmatpush2.msra.mxu0 0.0
      %2833 = vmatprep.subr.mxu0 0.0
      %2834 = vmatpush2.msra.mxu0 0.0
      %2835 = vmatprep.subr.mxu0 0.0
      %2836 = vmatpush2.msra.mxu0 0.0
      %2837 = vmatprep.mubr.f32.mxu0 0.0
      %2838 = vmatmul.mubr.f32.gmra.mxu0 %v2748
      %v2839 = vpop.f32.mrf.mxu0
      %v2840 = vadd.f32 0.0, %v2839
      %v2841 = vpop.f32.mrf.mxu0
      %2842 = vmatprep.mubr.f32.mxu0 0.0
      %2843 = vmatmul.mubr.f32.gmra.mxu0 %v2749
      %v2844 = vpop.f32.mrf.mxu0
      %v2845 = vadd.f32 0.0, %v2844
      %v2846 = vpop.f32.mrf.mxu0
      %2847 = vmatprep.mubr.f32.mxu0 0.0
      %2848 = vmatmul.mubr.f32.gmra.mxu0 %v2750
      %v2849 = vpop.f32.mrf.mxu0
      %v2850 = vadd.f32 0.0, %v2849
      %v2851 = vpop.f32.mrf.mxu0
      %2852 = vmatprep.mubr.f32.mxu0 0.0
      %2853 = vmatmul.mubr.f32.gmra.mxu0 %v2751
      %v2854 = vpop.f32.mrf.mxu0
      %v2855 = vadd.f32 0.0, %v2854
      %v2856 = vpop.f32.mrf.mxu0
      %2857 = vmatprep.mubr.f32.mxu0 0.0
      %2858 = vmatmul.mubr.f32.gmra.mxu0 %v2752
      %v2859 = vpop.f32.mrf.mxu0
      %v2860 = vadd.f32 0.0, %v2859
      %v2861 = vpop.f32.mrf.mxu0
      %2862 = vmatprep.mubr.f32.mxu0 0.0
      %2863 = vmatmul.mubr.f32.gmra.mxu0 %v2753
      %v2864 = vpop.f32.mrf.mxu0
      %v2865 = vadd.f32 0.0, %v2864
      %v2866 = vpop.f32.mrf.mxu0
      %2867 = vmatprep.mubr.f32.mxu0 0.0
      %2868 = vmatmul.mubr.f32.gmra.mxu0 %v2754
      %v2869 = vpop.f32.mrf.mxu0
      %v2870 = vadd.f32 0.0, %v2869
      %v2871 = vpop.f32.mrf.mxu0
      %2872 = vmatprep.mubr.f32.mxu0 0.0
      %2873 = vmatmul.mubr.f32.gmra.mxu0 %v2755
      %v2874 = vpop.f32.mrf.mxu0
      %v2875 = vadd.f32 0.0, %v2874
      %v2876 = vpop.f32.mrf.mxu0
      %2877 = vdwg.mxu0
      %v2878 = vadd.f32 %v2740, %v2840
      %v2879 = vadd.f32 %v2741, %v2845
      %v2880 = vadd.f32 %v2742, %v2850
      %v2881 = vadd.f32 %v2743, %v2855
      %v2882 = vadd.f32 %v2744, %v2860
      %v2883 = vadd.f32 %v2745, %v2865
      %v2884 = vadd.f32 %v2746, %v2870
      %v2885 = vadd.f32 %v2747, %v2875
      %v2886 = vld [vmem:[%s2609 + $0x2] sm:$0xff]
      %v2887 = vld [vmem:[%s2609 + $0x12] sm:$0xff]
      %v2888 = vld [vmem:[%s2609 + $0x22] sm:$0xff]
      %v2889 = vld [vmem:[%s2609 + $0x32] sm:$0xff]
      %v2890 = vld [vmem:[%s2609 + $0x42] sm:$0xff]
      %v2891 = vld [vmem:[%s2609 + $0x52] sm:$0xff]
      %v2892 = vld [vmem:[%s2609 + $0x62] sm:$0xff]
      %v2893 = vld [vmem:[%s2609 + $0x72] sm:$0xff]
      %s2894 = scalar_lea.vmem %s3, 1024
      %v2895 = vld [vmem:[%s2894] sm:$0xff]
      %v2896 = vld [vmem:[%s2894 + $0x8] sm:$0xff]
      %v2897 = vld [vmem:[%s2894 + $0x10] sm:$0xff]
      %v2898 = vld [vmem:[%s2894 + $0x18] sm:$0xff]
      %v2899 = vld [vmem:[%s2894 + $0x20] sm:$0xff]
      %v2900 = vld [vmem:[%s2894 + $0x28] sm:$0xff]
      %v2901 = vld [vmem:[%s2894 + $0x30] sm:$0xff]
      %v2902 = vld [vmem:[%s2894 + $0x38] sm:$0xff]
      %v2903 = vld [vmem:[%s2894 + $0x40] sm:$0xff]
      %v2904 = vld [vmem:[%s2894 + $0x48] sm:$0xff]
      %v2905 = vld [vmem:[%s2894 + $0x50] sm:$0xff]
      %v2906 = vld [vmem:[%s2894 + $0x58] sm:$0xff]
      %v2907 = vld [vmem:[%s2894 + $0x60] sm:$0xff]
      %v2908 = vld [vmem:[%s2894 + $0x68] sm:$0xff]
      %v2909 = vld [vmem:[%s2894 + $0x70] sm:$0xff]
      %v2910 = vld [vmem:[%s2894 + $0x78] sm:$0xff]
      %2911 = vmatprep.subr.mxu0 0.0
      %2912 = vmatpush1.msra.mxu0 %v2910
      %2913 = vmatprep.subr.mxu0 0.0
      %2914 = vmatpush1.msra.mxu0 %v2909
      %2915 = vmatprep.subr.mxu0 0.0
      %2916 = vmatpush1.msra.mxu0 %v2908
      %2917 = vmatprep.subr.mxu0 0.0
      %2918 = vmatpush1.msra.mxu0 %v2907
      %2919 = vmatprep.subr.mxu0 0.0
      %2920 = vmatpush1.msra.mxu0 %v2906
      %2921 = vmatprep.subr.mxu0 0.0
      %2922 = vmatpush1.msra.mxu0 %v2905
      %2923 = vmatprep.subr.mxu0 0.0
      %2924 = vmatpush1.msra.mxu0 %v2904
      %2925 = vmatprep.subr.mxu0 0.0
      %2926 = vmatpush1.msra.mxu0 %v2903
      %2927 = vmatprep.subr.mxu0 0.0
      %2928 = vmatpush1.msra.mxu0 %v2902
      %2929 = vmatprep.subr.mxu0 0.0
      %2930 = vmatpush1.msra.mxu0 %v2901
      %2931 = vmatprep.subr.mxu0 0.0
      %2932 = vmatpush1.msra.mxu0 %v2900
      %2933 = vmatprep.subr.mxu0 0.0
      %2934 = vmatpush1.msra.mxu0 %v2899
      %2935 = vmatprep.subr.mxu0 0.0
      %2936 = vmatpush1.msra.mxu0 %v2898
      %2937 = vmatprep.subr.mxu0 0.0
      %2938 = vmatpush1.msra.mxu0 %v2897
      %2939 = vmatprep.subr.mxu0 0.0
      %2940 = vmatpush1.msra.mxu0 %v2896
      %2941 = vmatprep.subr.mxu0 0.0
      %2942 = vmatpush1.msra.mxu0 %v2895
      %2943 = vmatprep.subr.mxu0 0.0
      %2944 = vmatpush2.msra.mxu0 0.0
      %2945 = vmatprep.subr.mxu0 0.0
      %2946 = vmatpush2.msra.mxu0 0.0
      %2947 = vmatprep.subr.mxu0 0.0
      %2948 = vmatpush2.msra.mxu0 0.0
      %2949 = vmatprep.subr.mxu0 0.0
      %2950 = vmatpush2.msra.mxu0 0.0
      %2951 = vmatprep.subr.mxu0 0.0
      %2952 = vmatpush2.msra.mxu0 0.0
      %2953 = vmatprep.subr.mxu0 0.0
      %2954 = vmatpush2.msra.mxu0 0.0
      %2955 = vmatprep.subr.mxu0 0.0
      %2956 = vmatpush2.msra.mxu0 0.0
      %2957 = vmatprep.subr.mxu0 0.0
      %2958 = vmatpush2.msra.mxu0 0.0
      %2959 = vmatprep.subr.mxu0 0.0
      %2960 = vmatpush2.msra.mxu0 0.0
      %2961 = vmatprep.subr.mxu0 0.0
      %2962 = vmatpush2.msra.mxu0 0.0
      %2963 = vmatprep.subr.mxu0 0.0
      %2964 = vmatpush2.msra.mxu0 0.0
      %2965 = vmatprep.subr.mxu0 0.0
      %2966 = vmatpush2.msra.mxu0 0.0
      %2967 = vmatprep.subr.mxu0 0.0
      %2968 = vmatpush2.msra.mxu0 0.0
      %2969 = vmatprep.subr.mxu0 0.0
      %2970 = vmatpush2.msra.mxu0 0.0
      %2971 = vmatprep.subr.mxu0 0.0
      %2972 = vmatpush2.msra.mxu0 0.0
      %2973 = vmatprep.subr.mxu0 0.0
      %2974 = vmatpush2.msra.mxu0 0.0
      %2975 = vmatprep.mubr.f32.mxu0 0.0
      %2976 = vmatmul.mubr.f32.gmra.mxu0 %v2886
      %v2977 = vpop.f32.mrf.mxu0
      %v2978 = vadd.f32 0.0, %v2977
      %v2979 = vpop.f32.mrf.mxu0
      %2980 = vmatprep.mubr.f32.mxu0 0.0
      %2981 = vmatmul.mubr.f32.gmra.mxu0 %v2887
      %v2982 = vpop.f32.mrf.mxu0
      %v2983 = vadd.f32 0.0, %v2982
      %v2984 = vpop.f32.mrf.mxu0
      %2985 = vmatprep.mubr.f32.mxu0 0.0
      %2986 = vmatmul.mubr.f32.gmra.mxu0 %v2888
      %v2987 = vpop.f32.mrf.mxu0
      %v2988 = vadd.f32 0.0, %v2987
      %v2989 = vpop.f32.mrf.mxu0
      %2990 = vmatprep.mubr.f32.mxu0 0.0
      %2991 = vmatmul.mubr.f32.gmra.mxu0 %v2889
      %v2992 = vpop.f32.mrf.mxu0
      %v2993 = vadd.f32 0.0, %v2992
      %v2994 = vpop.f32.mrf.mxu0
      %2995 = vmatprep.mubr.f32.mxu0 0.0
      %2996 = vmatmul.mubr.f32.gmra.mxu0 %v2890
      %v2997 = vpop.f32.mrf.mxu0
      %v2998 = vadd.f32 0.0, %v2997
      %v2999 = vpop.f32.mrf.mxu0
      %3000 = vmatprep.mubr.f32.mxu0 0.0
      %3001 = vmatmul.mubr.f32.gmra.mxu0 %v2891
      %v3002 = vpop.f32.mrf.mxu0
      %v3003 = vadd.f32 0.0, %v3002
      %v3004 = vpop.f32.mrf.mxu0
      %3005 = vmatprep.mubr.f32.mxu0 0.0
      %3006 = vmatmul.mubr.f32.gmra.mxu0 %v2892
      %v3007 = vpop.f32.mrf.mxu0
      %v3008 = vadd.f32 0.0, %v3007
      %v3009 = vpop.f32.mrf.mxu0
      %3010 = vmatprep.mubr.f32.mxu0 0.0
      %3011 = vmatmul.mubr.f32.gmra.mxu0 %v2893
      %v3012 = vpop.f32.mrf.mxu0
      %v3013 = vadd.f32 0.0, %v3012
      %v3014 = vpop.f32.mrf.mxu0
      %3015 = vdwg.mxu0
      %v3016 = vadd.f32 %v2878, %v2978
      %v3017 = vadd.f32 %v2879, %v2983
      %v3018 = vadd.f32 %v2880, %v2988
      %v3019 = vadd.f32 %v2881, %v2993
      %v3020 = vadd.f32 %v2882, %v2998
      %v3021 = vadd.f32 %v2883, %v3003
      %v3022 = vadd.f32 %v2884, %v3008
      %v3023 = vadd.f32 %v2885, %v3013
      %v3024 = vld [vmem:[%s4] sm:$0x1]
      %v3026 = vlaneseq
      %v3027 = vshrl.u32 %v3026, 7
      %v3028 = vsub.s32 0, %v3027
      %v3029 = vrot.slane %v3024, %v3028
      %v3031 = vadd.f32 %v3016, %v3029
      %v3032 = vadd.f32 %v3017, %v3029
      %v3033 = vadd.f32 %v3018, %v3029
      %v3034 = vadd.f32 %v3019, %v3029
      %v3035 = vadd.f32 %v3020, %v3029
      %v3036 = vadd.f32 %v3021, %v3029
      %v3037 = vadd.f32 %v3022, %v3029
      %v3038 = vadd.f32 %v3023, %v3029
      %v3039 = vmax.f32 %v3031, 0.0
      %v3040 = vmax.f32 %v3032, 0.0
      %v3041 = vmax.f32 %v3033, 0.0
      %v3042 = vmax.f32 %v3034, 0.0
      %v3043 = vmax.f32 %v3035, 0.0
      %v3044 = vmax.f32 %v3036, 0.0
      %v3045 = vmax.f32 %v3037, 0.0
      %v3046 = vmax.f32 %v3038, 0.0
      %3047 = vst [vmem:[%s400] sm:$0xff] %v3039
      %3048 = vst [vmem:[%s400 + $0x8] sm:$0xff] %v3040
      %3049 = vst [vmem:[%s400 + $0x10] sm:$0xff] %v3041
      %3050 = vst [vmem:[%s400 + $0x18] sm:$0xff] %v3042
      %3051 = vst [vmem:[%s400 + $0x20] sm:$0xff] %v3043
      %3052 = vst [vmem:[%s400 + $0x28] sm:$0xff] %v3044
      %3053 = vst [vmem:[%s400 + $0x30] sm:$0xff] %v3045
      %3054 = vst [vmem:[%s400 + $0x38] sm:$0xff] %v3046
      %v3055 = vmax.f32 %v3039, %v3040
      %v3056 = vmax.f32 %v3041, %v3042
      %v3057 = vmax.f32 %v3043, %v3044
      %v3058 = vmax.f32 %v3045, %v3046
      %v3063 = vcombine.high %v3055, %v3055
      %v3065 = vunpack.c.l.s4 1983009808
      %v3066 = vunpack.c.0.s8 %v3065
      %v3067 = vlaneseq
      %v3068 = vshrl.u32 %v3067, 7
      %v3069 = vsub.s32 %v3066, %v3068
      %v3070 = vrot.slane %v3055, %v3069
      %v3072 = vunpack.c.l.s4 1983009808
      %v3073 = vunpack.c.0.s8 %v3072
      %v3074 = vlaneseq
      %v3075 = vshrl.u32 %v3074, 7
      %v3076 = vsub.s32 %v3073, %v3075
      %v3077 = vrot.slane %v3063, %v3076
      %v3078 = vcombine.high %v3070, %v3070
      %v3079 = vcombine.high %v3077, %v3077
      %v3080 = vcombine.high %v3056, %v3056
      %v3082 = vunpack.c.l.s4 1983009808
      %v3083 = vunpack.c.0.s8 %v3082
      %v3084 = vlaneseq
      %v3085 = vshrl.u32 %v3084, 7
      %v3086 = vsub.s32 %v3083, %v3085
      %v3087 = vrot.slane %v3056, %v3086
      %v3089 = vunpack.c.l.s4 1983009808
      %v3090 = vunpack.c.0.s8 %v3089
      %v3091 = vlaneseq
      %v3092 = vshrl.u32 %v3091, 7
      %v3093 = vsub.s32 %v3090, %v3092
      %v3094 = vrot.slane %v3080, %v3093
      %v3095 = vcombine.high %v3087, %v3087
      %v3096 = vcombine.high %v3094, %v3094
      %v3097 = vcombine.high %v3057, %v3057
      %v3099 = vunpack.c.l.s4 1983009808
      %v3100 = vunpack.c.0.s8 %v3099
      %v3101 = vlaneseq
      %v3102 = vshrl.u32 %v3101, 7
      %v3103 = vsub.s32 %v3100, %v3102
      %v3104 = vrot.slane %v3057, %v3103
      %v3106 = vunpack.c.l.s4 1983009808
      %v3107 = vunpack.c.0.s8 %v3106
      %v3108 = vlaneseq
      %v3109 = vshrl.u32 %v3108, 7
      %v3110 = vsub.s32 %v3107, %v3109
      %v3111 = vrot.slane %v3097, %v3110
      %v3112 = vcombine.high %v3104, %v3104
      %v3113 = vcombine.high %v3111, %v3111
      %v3114 = vcombine.high %v3058, %v3058
      %v3116 = vunpack.c.l.s4 1983009808
      %v3117 = vunpack.c.0.s8 %v3116
      %v3118 = vlaneseq
      %v3119 = vshrl.u32 %v3118, 7
      %v3120 = vsub.s32 %v3117, %v3119
      %v3121 = vrot.slane %v3058, %v3120
      %v3123 = vunpack.c.l.s4 1983009808
      %v3124 = vunpack.c.0.s8 %v3123
      %v3125 = vlaneseq
      %v3126 = vshrl.u32 %v3125, 7
      %v3127 = vsub.s32 %v3124, %v3126
      %v3128 = vrot.slane %v3114, %v3127
      %v3129 = vcombine.high %v3121, %v3121
      %v3130 = vcombine.high %v3128, %v3128
      %v3147 = vrot.slane %v3070, 7
      %v3148 = vrot.slane %v3147, 2
      %v3149 = vrot.slane %v3078, 7
      %v3150 = vrot.slane %v3149, 2
      %v3151 = vrot.slane %v3077, 7
      %v3152 = vrot.slane %v3151, 2
      %v3153 = vrot.slane %v3079, 7
      %v3154 = vrot.slane %v3153, 2
      %v3155 = vrot.slane %v3087, 7
      %v3156 = vrot.slane %v3155, 2
      %v3157 = vrot.slane %v3095, 7
      %v3158 = vrot.slane %v3157, 2
      %v3159 = vrot.slane %v3094, 7
      %v3160 = vrot.slane %v3159, 2
      %v3161 = vrot.slane %v3096, 7
      %v3162 = vrot.slane %v3161, 2
      %v3163 = vrot.slane %v3104, 7
      %v3164 = vrot.slane %v3163, 2
      %v3165 = vrot.slane %v3112, 7
      %v3166 = vrot.slane %v3165, 2
      %v3167 = vrot.slane %v3111, 7
      %v3168 = vrot.slane %v3167, 2
      %v3169 = vrot.slane %v3113, 7
      %v3170 = vrot.slane %v3169, 2
      %v3171 = vrot.slane %v3121, 7
      %v3172 = vrot.slane %v3171, 2
      %v3173 = vrot.slane %v3129, 7
      %v3174 = vrot.slane %v3173, 2
      %v3175 = vrot.slane %v3128, 7
      %v3176 = vrot.slane %v3175, 2
      %v3177 = vrot.slane %v3130, 7
      %v3178 = vrot.slane %v3177, 2
      %v3195 = vmax.f32 %v3070, %v3148
      %v3196 = vmax.f32 %v3078, %v3150
      %v3197 = vmax.f32 %v3077, %v3152
      %v3198 = vmax.f32 %v3079, %v3154
      %v3199 = vmax.f32 %v3087, %v3156
      %v3200 = vmax.f32 %v3095, %v3158
      %v3201 = vmax.f32 %v3094, %v3160
      %v3202 = vmax.f32 %v3096, %v3162
      %v3203 = vmax.f32 %v3104, %v3164
      %v3204 = vmax.f32 %v3112, %v3166
      %v3205 = vmax.f32 %v3111, %v3168
      %v3206 = vmax.f32 %v3113, %v3170
      %v3207 = vmax.f32 %v3121, %v3172
      %v3208 = vmax.f32 %v3129, %v3174
      %v3209 = vmax.f32 %v3128, %v3176
      %v3210 = vmax.f32 %v3130, %v3178
      %3227 = vrot.lane.b32.xlu0 %v3195, 112
      %v3228 = vpop.permute.xlu0 %3227
      %3229 = vrot.lane.b32.xlu0 %v3196, 112
      %v3230 = vpop.permute.xlu0 %3229
      %3231 = vrot.lane.b32.xlu0 %v3197, 112
      %v3232 = vpop.permute.xlu0 %3231
      %3233 = vrot.lane.b32.xlu0 %v3198, 112
      %v3234 = vpop.permute.xlu0 %3233
      %3235 = vrot.lane.b32.xlu0 %v3199, 112
      %v3236 = vpop.permute.xlu0 %3235
      %3237 = vrot.lane.b32.xlu0 %v3200, 112
      %v3238 = vpop.permute.xlu0 %3237
      %3239 = vrot.lane.b32.xlu0 %v3201, 112
      %v3240 = vpop.permute.xlu0 %3239
      %3241 = vrot.lane.b32.xlu0 %v3202, 112
      %v3242 = vpop.permute.xlu0 %3241
      %3243 = vrot.lane.b32.xlu0 %v3203, 112
      %v3244 = vpop.permute.xlu0 %3243
      %3245 = vrot.lane.b32.xlu0 %v3204, 112
      %v3246 = vpop.permute.xlu0 %3245
      %3247 = vrot.lane.b32.xlu0 %v3205, 112
      %v3248 = vpop.permute.xlu0 %3247
      %3249 = vrot.lane.b32.xlu0 %v3206, 112
      %v3250 = vpop.permute.xlu0 %3249
      %3251 = vrot.lane.b32.xlu0 %v3207, 112
      %v3252 = vpop.permute.xlu0 %3251
      %3253 = vrot.lane.b32.xlu0 %v3208, 112
      %v3254 = vpop.permute.xlu0 %3253
      %3255 = vrot.lane.b32.xlu0 %v3209, 112
      %v3256 = vpop.permute.xlu0 %3255
      %3257 = vrot.lane.b32.xlu0 %v3210, 112
      %v3258 = vpop.permute.xlu0 %3257
      %v3275 = vmax.f32 %v3195, %v3228
      %v3276 = vmax.f32 %v3196, %v3230
      %v3277 = vmax.f32 %v3197, %v3232
      %v3278 = vmax.f32 %v3198, %v3234
      %v3279 = vmax.f32 %v3199, %v3236
      %v3280 = vmax.f32 %v3200, %v3238
      %v3281 = vmax.f32 %v3201, %v3240
      %v3282 = vmax.f32 %v3202, %v3242
      %v3283 = vmax.f32 %v3203, %v3244
      %v3284 = vmax.f32 %v3204, %v3246
      %v3285 = vmax.f32 %v3205, %v3248
      %v3286 = vmax.f32 %v3206, %v3250
      %v3287 = vmax.f32 %v3207, %v3252
      %v3288 = vmax.f32 %v3208, %v3254
      %v3289 = vmax.f32 %v3209, %v3256
      %v3290 = vmax.f32 %v3210, %v3258
      %v3307 = vlaneseq
      %v3308 = vshrl.u32 %v3307, 7
      %v3309 = vsub.s32 0, %v3308
      %v3310 = vrot.slane %v3275, %v3309
      %v3311 = vlaneseq
      %v3312 = vshrl.u32 %v3311, 7
      %v3313 = vsub.s32 0, %v3312
      %v3314 = vrot.slane %v3276, %v3313
      %v3315 = vlaneseq
      %v3316 = vshrl.u32 %v3315, 7
      %v3317 = vsub.s32 0, %v3316
      %v3318 = vrot.slane %v3277, %v3317
      %v3319 = vlaneseq
      %v3320 = vshrl.u32 %v3319, 7
      %v3321 = vsub.s32 0, %v3320
      %v3322 = vrot.slane %v3278, %v3321
      %v3323 = vlaneseq
      %v3324 = vshrl.u32 %v3323, 7
      %v3325 = vsub.s32 0, %v3324
      %v3326 = vrot.slane %v3279, %v3325
      %v3327 = vlaneseq
      %v3328 = vshrl.u32 %v3327, 7
      %v3329 = vsub.s32 0, %v3328
      %v3330 = vrot.slane %v3280, %v3329
      %v3331 = vlaneseq
      %v3332 = vshrl.u32 %v3331, 7
      %v3333 = vsub.s32 0, %v3332
      %v3334 = vrot.slane %v3281, %v3333
      %v3335 = vlaneseq
      %v3336 = vshrl.u32 %v3335, 7
      %v3337 = vsub.s32 0, %v3336
      %v3338 = vrot.slane %v3282, %v3337
      %v3339 = vlaneseq
      %v3340 = vshrl.u32 %v3339, 7
      %v3341 = vsub.s32 0, %v3340
      %v3342 = vrot.slane %v3283, %v3341
      %v3343 = vlaneseq
      %v3344 = vshrl.u32 %v3343, 7
      %v3345 = vsub.s32 0, %v3344
      %v3346 = vrot.slane %v3284, %v3345
      %v3347 = vlaneseq
      %v3348 = vshrl.u32 %v3347, 7
      %v3349 = vsub.s32 0, %v3348
      %v3350 = vrot.slane %v3285, %v3349
      %v3351 = vlaneseq
      %v3352 = vshrl.u32 %v3351, 7
      %v3353 = vsub.s32 0, %v3352
      %v3354 = vrot.slane %v3286, %v3353
      %v3355 = vlaneseq
      %v3356 = vshrl.u32 %v3355, 7
      %v3357 = vsub.s32 0, %v3356
      %v3358 = vrot.slane %v3287, %v3357
      %v3359 = vlaneseq
      %v3360 = vshrl.u32 %v3359, 7
      %v3361 = vsub.s32 0, %v3360
      %v3362 = vrot.slane %v3288, %v3361
      %v3363 = vlaneseq
      %v3364 = vshrl.u32 %v3363, 7
      %v3365 = vsub.s32 0, %v3364
      %v3366 = vrot.slane %v3289, %v3365
      %v3367 = vlaneseq
      %v3368 = vshrl.u32 %v3367, 7
      %v3369 = vsub.s32 0, %v3368
      %v3370 = vrot.slane %v3290, %v3369
      %vm3371 = vcmask 1041409
      %v3372 = vsel %vm3371, %v3314, %v3310
      %vm3373 = vcmask 1042434
      %v3374 = vsel %vm3373, %v3318, %v3372
      %vm3375 = vcmask 1043459
      %v3376 = vsel %vm3375, %v3322, %v3374
      %v3377 = vsel %vm3371, %v3330, %v3326
      %v3378 = vsel %vm3373, %v3334, %v3377
      %v3379 = vsel %vm3375, %v3338, %v3378
      %v3380 = vsel %vm3371, %v3346, %v3342
      %v3381 = vsel %vm3373, %v3350, %v3380
      %v3382 = vsel %vm3375, %v3354, %v3381
      %v3383 = vsel %vm3371, %v3362, %v3358
      %v3384 = vsel %vm3373, %v3366, %v3383
      %v3385 = vsel %vm3375, %v3370, %v3384
      %3390 = vrot.lane.b32.xlu0 %v3376, 112
      %v3391 = vpop.permute.xlu0 %3390
      %3392 = vrot.lane.b32.xlu0 %v3379, 112
      %v3393 = vpop.permute.xlu0 %3392
      %3394 = vrot.lane.b32.xlu0 %v3382, 112
      %v3395 = vpop.permute.xlu0 %3394
      %3396 = vrot.lane.b32.xlu0 %v3385, 112
      %v3397 = vpop.permute.xlu0 %3396
      %3402 = vrot.lane.b32.xlu0 %v3376, 96
      %v3403 = vpop.permute.xlu0 %3402
      %3404 = vrot.lane.b32.xlu0 %v3379, 96
      %v3405 = vpop.permute.xlu0 %3404
      %3406 = vrot.lane.b32.xlu0 %v3382, 96
      %v3407 = vpop.permute.xlu0 %3406
      %3408 = vrot.lane.b32.xlu0 %v3385, 96
      %v3409 = vpop.permute.xlu0 %3408
      %3414 = vrot.lane.b32.xlu0 %v3376, 80
      %v3415 = vpop.permute.xlu0 %3414
      %3416 = vrot.lane.b32.xlu0 %v3379, 80
      %v3417 = vpop.permute.xlu0 %3416
      %3418 = vrot.lane.b32.xlu0 %v3382, 80
      %v3419 = vpop.permute.xlu0 %3418
      %3420 = vrot.lane.b32.xlu0 %v3385, 80
      %v3421 = vpop.permute.xlu0 %3420
      %vm3426 = vcmask 130048
      %v3427 = vsel %vm3426, %v3376, %v3391
      %v3428 = vsel %vm3426, %v3379, %v3393
      %v3429 = vsel %vm3426, %v3382, %v3395
      %v3430 = vsel %vm3426, %v3385, %v3397
      %vm3431 = vcmask 261120
      %v3432 = vsel %vm3431, %v3427, %v3403
      %v3433 = vsel %vm3431, %v3428, %v3405
      %v3434 = vsel %vm3431, %v3429, %v3407
      %v3435 = vsel %vm3431, %v3430, %v3409
      %vm3436 = vcmask 392192
      %v3437 = vsel %vm3436, %v3432, %v3415
      %v3438 = vsel %vm3436, %v3433, %v3417
      %v3439 = vsel %vm3436, %v3434, %v3419
      %v3440 = vsel %vm3436, %v3435, %v3421
      %vm3441 = vcmask 519168
      %3442 = vst.msk [vmem:[%s436 + $0x1] sm:$0xf] %vm3441, %v3437
      %3443 = vst.msk [vmem:[%s436 + $0x9] sm:$0xf] %vm3441, %v3438
      %3444 = vst.msk [vmem:[%s436 + $0x11] sm:$0xf] %vm3441, %v3439
      %3445 = vst.msk [vmem:[%s436 + $0x19] sm:$0xf] %vm3441, %v3440
      %v3446 = vld [vmem:[#allocation3] sm:$0xf]
      %v3447 = vld [vmem:[#allocation3 + $0x8] sm:$0xf]
      %v3448 = vld [vmem:[#allocation3 + $0x10] sm:$0xf]
      %v3449 = vld [vmem:[#allocation3 + $0x18] sm:$0xf]
      %v3450 = vld [vmem:[%s5] sm:$0xff]
      %v3451 = vld [vmem:[%s5 + $0x8] sm:$0xff]
      %v3452 = vld [vmem:[%s5 + $0x10] sm:$0xff]
      %v3453 = vld [vmem:[%s5 + $0x18] sm:$0xff]
      %v3454 = vld [vmem:[%s5 + $0x20] sm:$0xff]
      %v3455 = vld [vmem:[%s5 + $0x28] sm:$0xff]
      %v3456 = vld [vmem:[%s5 + $0x30] sm:$0xff]
      %v3457 = vld [vmem:[%s5 + $0x38] sm:$0xff]
      %v3458 = vld [vmem:[#allocation3 + $0x1] sm:$0xf]
      %v3459 = vld [vmem:[#allocation3 + $0x9] sm:$0xf]
      %v3460 = vld [vmem:[#allocation3 + $0x11] sm:$0xf]
      %v3461 = vld [vmem:[#allocation3 + $0x19] sm:$0xf]
      %s3462 = scalar_lea.vmem %s5, 64
      %v3463 = vld [vmem:[%s3462] sm:$0xff]
      %v3464 = vld [vmem:[%s3462 + $0x8] sm:$0xff]
      %v3465 = vld [vmem:[%s3462 + $0x10] sm:$0xff]
      %v3466 = vld [vmem:[%s3462 + $0x18] sm:$0xff]
      %v3467 = vld [vmem:[%s3462 + $0x20] sm:$0xff]
      %v3468 = vld [vmem:[%s3462 + $0x28] sm:$0xff]
      %v3469 = vld [vmem:[%s3462 + $0x30] sm:$0xff]
      %v3470 = vld [vmem:[%s3462 + $0x38] sm:$0xff]
      %v3475 = vcombine.low %v3458, %v3459
      %v3476 = vcombine.low %v3460, %v3461
      %vm3477 = vcmask 523264
      %v3478 = vsel %vm3477, %v3475, 0
      %v3480 = vsel %vm3477, %v3476, 0
      %3482 = vmatprep.subr.mxu0 0.0
      %3483 = vmatpush1.msra.mxu0 0.0
      %3484 = vmatprep.subr.mxu0 0.0
      %3485 = vmatpush1.msra.mxu0 0.0
      %3486 = vmatprep.subr.mxu0 0.0
      %3487 = vmatpush1.msra.mxu0 0.0
      %3488 = vmatprep.subr.mxu0 0.0
      %3489 = vmatpush1.msra.mxu0 0.0
      %3490 = vmatprep.subr.mxu0 0.0
      %3491 = vmatpush1.msra.mxu0 0.0
      %3492 = vmatprep.subr.mxu0 0.0
      %3493 = vmatpush1.msra.mxu0 0.0
      %3494 = vmatprep.subr.mxu0 0.0
      %3495 = vmatpush1.msra.mxu0 0.0
      %3496 = vmatprep.subr.mxu0 0.0
      %3497 = vmatpush1.msra.mxu0 0.0
      %3498 = vmatprep.subr.mxu0 0.0
      %3499 = vmatpush1.msra.mxu0 %v3470
      %3500 = vmatprep.subr.mxu0 0.0
      %3501 = vmatpush1.msra.mxu0 %v3469
      %3502 = vmatprep.subr.mxu0 0.0
      %3503 = vmatpush1.msra.mxu0 %v3468
      %3504 = vmatprep.subr.mxu0 0.0
      %3505 = vmatpush1.msra.mxu0 %v3467
      %3506 = vmatprep.subr.mxu0 0.0
      %3507 = vmatpush1.msra.mxu0 %v3466
      %3508 = vmatprep.subr.mxu0 0.0
      %3509 = vmatpush1.msra.mxu0 %v3465
      %3510 = vmatprep.subr.mxu0 0.0
      %3511 = vmatpush1.msra.mxu0 %v3464
      %3512 = vmatprep.subr.mxu0 0.0
      %3513 = vmatpush1.msra.mxu0 %v3463
      %3514 = vmatprep.subr.mxu0 0.0
      %3515 = vmatpush2.msra.mxu0 0.0
      %3516 = vmatprep.subr.mxu0 0.0
      %3517 = vmatpush2.msra.mxu0 0.0
      %3518 = vmatprep.subr.mxu0 0.0
      %3519 = vmatpush2.msra.mxu0 0.0
      %3520 = vmatprep.subr.mxu0 0.0
      %3521 = vmatpush2.msra.mxu0 0.0
      %3522 = vmatprep.subr.mxu0 0.0
      %3523 = vmatpush2.msra.mxu0 0.0
      %3524 = vmatprep.subr.mxu0 0.0
      %3525 = vmatpush2.msra.mxu0 0.0
      %3526 = vmatprep.subr.mxu0 0.0
      %3527 = vmatpush2.msra.mxu0 0.0
      %3528 = vmatprep.subr.mxu0 0.0
      %3529 = vmatpush2.msra.mxu0 0.0
      %3530 = vmatprep.subr.mxu0 0.0
      %3531 = vmatpush2.msra.mxu0 0.0
      %3532 = vmatprep.subr.mxu0 0.0
      %3533 = vmatpush2.msra.mxu0 0.0
      %3534 = vmatprep.subr.mxu0 0.0
      %3535 = vmatpush2.msra.mxu0 0.0
      %3536 = vmatprep.subr.mxu0 0.0
      %3537 = vmatpush2.msra.mxu0 0.0
      %3538 = vmatprep.subr.mxu0 0.0
      %3539 = vmatpush2.msra.mxu0 0.0
      %3540 = vmatprep.subr.mxu0 0.0
      %3541 = vmatpush2.msra.mxu0 0.0
      %3542 = vmatprep.subr.mxu0 0.0
      %3543 = vmatpush2.msra.mxu0 0.0
      %3544 = vmatprep.subr.mxu0 0.0
      %3545 = vmatpush2.msra.mxu0 0.0
      %3546 = vmatprep.mubr.f32.mxu0 0.0
      %3547 = vmatmul.mubr.f32.gmra.mxu0 %v3478
      %v3548 = vpop.f32.mrf.mxu0
      %v3549 = vadd.f32 0.0, %v3548
      %v3550 = vpop.f32.mrf.mxu0
      %3551 = vmatprep.mubr.f32.mxu0 0.0
      %3552 = vmatmul.mubr.f32.gmra.mxu0 %v3480
      %v3553 = vpop.f32.mrf.mxu0
      %v3554 = vadd.f32 0.0, %v3553
      %v3555 = vpop.f32.mrf.mxu0
      %3556 = vdwg.mxu0
      %v3561 = vcombine.low %v3446, %v3447
      %v3562 = vcombine.low %v3448, %v3449
      %v3563 = vsel %vm3477, %v3561, 0
      %v3565 = vsel %vm3477, %v3562, 0
      %3567 = vmatprep.subr.mxu0 0.0
      %3568 = vmatpush1.msra.mxu0 0.0
      %3569 = vmatprep.subr.mxu0 0.0
      %3570 = vmatpush1.msra.mxu0 0.0
      %3571 = vmatprep.subr.mxu0 0.0
      %3572 = vmatpush1.msra.mxu0 0.0
      %3573 = vmatprep.subr.mxu0 0.0
      %3574 = vmatpush1.msra.mxu0 0.0
      %3575 = vmatprep.subr.mxu0 0.0
      %3576 = vmatpush1.msra.mxu0 0.0
      %3577 = vmatprep.subr.mxu0 0.0
      %3578 = vmatpush1.msra.mxu0 0.0
      %3579 = vmatprep.subr.mxu0 0.0
      %3580 = vmatpush1.msra.mxu0 0.0
      %3581 = vmatprep.subr.mxu0 0.0
      %3582 = vmatpush1.msra.mxu0 0.0
      %3583 = vmatprep.subr.mxu0 0.0
      %3584 = vmatpush1.msra.mxu0 %v3457
      %3585 = vmatprep.subr.mxu0 0.0
      %3586 = vmatpush1.msra.mxu0 %v3456
      %3587 = vmatprep.subr.mxu0 0.0
      %3588 = vmatpush1.msra.mxu0 %v3455
      %3589 = vmatprep.subr.mxu0 0.0
      %3590 = vmatpush1.msra.mxu0 %v3454
      %3591 = vmatprep.subr.mxu0 0.0
      %3592 = vmatpush1.msra.mxu0 %v3453
      %3593 = vmatprep.subr.mxu0 0.0
      %3594 = vmatpush1.msra.mxu0 %v3452
      %3595 = vmatprep.subr.mxu0 0.0
      %3596 = vmatpush1.msra.mxu0 %v3451
      %3597 = vmatprep.subr.mxu0 0.0
      %3598 = vmatpush1.msra.mxu0 %v3450
      %3599 = vmatprep.subr.mxu0 0.0
      %3600 = vmatpush2.msra.mxu0 0.0
      %3601 = vmatprep.subr.mxu0 0.0
      %3602 = vmatpush2.msra.mxu0 0.0
      %3603 = vmatprep.subr.mxu0 0.0
      %3604 = vmatpush2.msra.mxu0 0.0
      %3605 = vmatprep.subr.mxu0 0.0
      %3606 = vmatpush2.msra.mxu0 0.0
      %3607 = vmatprep.subr.mxu0 0.0
      %3608 = vmatpush2.msra.mxu0 0.0
      %3609 = vmatprep.subr.mxu0 0.0
      %3610 = vmatpush2.msra.mxu0 0.0
      %3611 = vmatprep.subr.mxu0 0.0
      %3612 = vmatpush2.msra.mxu0 0.0
      %3613 = vmatprep.subr.mxu0 0.0
      %3614 = vmatpush2.msra.mxu0 0.0
      %3615 = vmatprep.subr.mxu0 0.0
      %3616 = vmatpush2.msra.mxu0 0.0
      %3617 = vmatprep.subr.mxu0 0.0
      %3618 = vmatpush2.msra.mxu0 0.0
      %3619 = vmatprep.subr.mxu0 0.0
      %3620 = vmatpush2.msra.mxu0 0.0
      %3621 = vmatprep.subr.mxu0 0.0
      %3622 = vmatpush2.msra.mxu0 0.0
      %3623 = vmatprep.subr.mxu0 0.0
      %3624 = vmatpush2.msra.mxu0 0.0
      %3625 = vmatprep.subr.mxu0 0.0
      %3626 = vmatpush2.msra.mxu0 0.0
      %3627 = vmatprep.subr.mxu0 0.0
      %3628 = vmatpush2.msra.mxu0 0.0
      %3629 = vmatprep.subr.mxu0 0.0
      %3630 = vmatpush2.msra.mxu0 0.0
      %3631 = vmatprep.mubr.f32.mxu0 0.0
      %3632 = vmatmul.mubr.f32.gmra.mxu0 %v3563
      %v3633 = vpop.f32.mrf.mxu0
      %v3634 = vadd.f32 %v3549, %v3633
      %v3635 = vpop.f32.mrf.mxu0
      %3636 = vmatprep.mubr.f32.mxu0 0.0
      %3637 = vmatmul.mubr.f32.gmra.mxu0 %v3565
      %v3638 = vpop.f32.mrf.mxu0
      %v3639 = vadd.f32 %v3554, %v3638
      %v3640 = vpop.f32.mrf.mxu0
      %3641 = vdwg.mxu0
      %v3642 = vld [vmem:[#allocation3 + $0x2] sm:$0xf]
      %v3643 = vld [vmem:[#allocation3 + $0xa] sm:$0xf]
      %v3644 = vld [vmem:[#allocation3 + $0x12] sm:$0xf]
      %v3645 = vld [vmem:[#allocation3 + $0x1a] sm:$0xf]
      %s3646 = scalar_lea.vmem %s5, 128
      %v3647 = vld [vmem:[%s3646] sm:$0xff]
      %v3648 = vld [vmem:[%s3646 + $0x8] sm:$0xff]
      %v3649 = vld [vmem:[%s3646 + $0x10] sm:$0xff]
      %v3650 = vld [vmem:[%s3646 + $0x18] sm:$0xff]
      %v3651 = vld [vmem:[%s3646 + $0x20] sm:$0xff]
      %v3652 = vld [vmem:[%s3646 + $0x28] sm:$0xff]
      %v3653 = vld [vmem:[%s3646 + $0x30] sm:$0xff]
      %v3654 = vld [vmem:[%s3646 + $0x38] sm:$0xff]
      %v3659 = vcombine.low %v3642, %v3643
      %v3660 = vcombine.low %v3644, %v3645
      %v3661 = vsel %vm3477, %v3659, 0
      %v3663 = vsel %vm3477, %v3660, 0
      %3665 = vmatprep.subr.mxu0 0.0
      %3666 = vmatpush1.msra.mxu0 0.0
      %3667 = vmatprep.subr.mxu0 0.0
      %3668 = vmatpush1.msra.mxu0 0.0
      %3669 = vmatprep.subr.mxu0 0.0
      %3670 = vmatpush1.msra.mxu0 0.0
      %3671 = vmatprep.subr.mxu0 0.0
      %3672 = vmatpush1.msra.mxu0 0.0
      %3673 = vmatprep.subr.mxu0 0.0
      %3674 = vmatpush1.msra.mxu0 0.0
      %3675 = vmatprep.subr.mxu0 0.0
      %3676 = vmatpush1.msra.mxu0 0.0
      %3677 = vmatprep.subr.mxu0 0.0
      %3678 = vmatpush1.msra.mxu0 0.0
      %3679 = vmatprep.subr.mxu0 0.0
      %3680 = vmatpush1.msra.mxu0 0.0
      %3681 = vmatprep.subr.mxu0 0.0
      %3682 = vmatpush1.msra.mxu0 %v3654
      %3683 = vmatprep.subr.mxu0 0.0
      %3684 = vmatpush1.msra.mxu0 %v3653
      %3685 = vmatprep.subr.mxu0 0.0
      %3686 = vmatpush1.msra.mxu0 %v3652
      %3687 = vmatprep.subr.mxu0 0.0
      %3688 = vmatpush1.msra.mxu0 %v3651
      %3689 = vmatprep.subr.mxu0 0.0
      %3690 = vmatpush1.msra.mxu0 %v3650
      %3691 = vmatprep.subr.mxu0 0.0
      %3692 = vmatpush1.msra.mxu0 %v3649
      %3693 = vmatprep.subr.mxu0 0.0
      %3694 = vmatpush1.msra.mxu0 %v3648
      %3695 = vmatprep.subr.mxu0 0.0
      %3696 = vmatpush1.msra.mxu0 %v3647
      %3697 = vmatprep.subr.mxu0 0.0
      %3698 = vmatpush2.msra.mxu0 0.0
      %3699 = vmatprep.subr.mxu0 0.0
      %3700 = vmatpush2.msra.mxu0 0.0
      %3701 = vmatprep.subr.mxu0 0.0
      %3702 = vmatpush2.msra.mxu0 0.0
      %3703 = vmatprep.subr.mxu0 0.0
      %3704 = vmatpush2.msra.mxu0 0.0
      %3705 = vmatprep.subr.mxu0 0.0
      %3706 = vmatpush2.msra.mxu0 0.0
      %3707 = vmatprep.subr.mxu0 0.0
      %3708 = vmatpush2.msra.mxu0 0.0
      %3709 = vmatprep.subr.mxu0 0.0
      %3710 = vmatpush2.msra.mxu0 0.0
      %3711 = vmatprep.subr.mxu0 0.0
      %3712 = vmatpush2.msra.mxu0 0.0
      %3713 = vmatprep.subr.mxu0 0.0
      %3714 = vmatpush2.msra.mxu0 0.0
      %3715 = vmatprep.subr.mxu0 0.0
      %3716 = vmatpush2.msra.mxu0 0.0
      %3717 = vmatprep.subr.mxu0 0.0
      %3718 = vmatpush2.msra.mxu0 0.0
      %3719 = vmatprep.subr.mxu0 0.0
      %3720 = vmatpush2.msra.mxu0 0.0
      %3721 = vmatprep.subr.mxu0 0.0
      %3722 = vmatpush2.msra.mxu0 0.0
      %3723 = vmatprep.subr.mxu0 0.0
      %3724 = vmatpush2.msra.mxu0 0.0
      %3725 = vmatprep.subr.mxu0 0.0
      %3726 = vmatpush2.msra.mxu0 0.0
      %3727 = vmatprep.subr.mxu0 0.0
      %3728 = vmatpush2.msra.mxu0 0.0
      %3729 = vmatprep.mubr.f32.mxu0 0.0
      %3730 = vmatmul.mubr.f32.gmra.mxu0 %v3661
      %v3731 = vpop.f32.mrf.mxu0
      %v3732 = vadd.f32 0.0, %v3731
      %v3733 = vpop.f32.mrf.mxu0
      %3734 = vmatprep.mubr.f32.mxu0 0.0
      %3735 = vmatmul.mubr.f32.gmra.mxu0 %v3663
      %v3736 = vpop.f32.mrf.mxu0
      %v3737 = vadd.f32 0.0, %v3736
      %v3738 = vpop.f32.mrf.mxu0
      %3739 = vdwg.mxu0
      %v3740 = vadd.f32 %v3634, %v3732
      %v3741 = vadd.f32 %v3639, %v3737
      %v3742 = vld [vmem:[%s436] sm:$0xf]
      %v3743 = vld [vmem:[%s436 + $0x8] sm:$0xf]
      %v3744 = vld [vmem:[%s436 + $0x10] sm:$0xf]
      %v3745 = vld [vmem:[%s436 + $0x18] sm:$0xf]
      %s3746 = scalar_lea.vmem %s5, 192
      %v3747 = vld [vmem:[%s3746] sm:$0xff]
      %v3748 = vld [vmem:[%s3746 + $0x8] sm:$0xff]
      %v3749 = vld [vmem:[%s3746 + $0x10] sm:$0xff]
      %v3750 = vld [vmem:[%s3746 + $0x18] sm:$0xff]
      %v3751 = vld [vmem:[%s3746 + $0x20] sm:$0xff]
      %v3752 = vld [vmem:[%s3746 + $0x28] sm:$0xff]
      %v3753 = vld [vmem:[%s3746 + $0x30] sm:$0xff]
      %v3754 = vld [vmem:[%s3746 + $0x38] sm:$0xff]
      %v3759 = vcombine.low %v3742, %v3743
      %v3760 = vcombine.low %v3744, %v3745
      %v3761 = vsel %vm3477, %v3759, 0
      %v3763 = vsel %vm3477, %v3760, 0
      %3765 = vmatprep.subr.mxu0 0.0
      %3766 = vmatpush1.msra.mxu0 0.0
      %3767 = vmatprep.subr.mxu0 0.0
      %3768 = vmatpush1.msra.mxu0 0.0
      %3769 = vmatprep.subr.mxu0 0.0
      %3770 = vmatpush1.msra.mxu0 0.0
      %3771 = vmatprep.subr.mxu0 0.0
      %3772 = vmatpush1.msra.mxu0 0.0
      %3773 = vmatprep.subr.mxu0 0.0
      %3774 = vmatpush1.msra.mxu0 0.0
      %3775 = vmatprep.subr.mxu0 0.0
      %3776 = vmatpush1.msra.mxu0 0.0
      %3777 = vmatprep.subr.mxu0 0.0
      %3778 = vmatpush1.msra.mxu0 0.0
      %3779 = vmatprep.subr.mxu0 0.0
      %3780 = vmatpush1.msra.mxu0 0.0
      %3781 = vmatprep.subr.mxu0 0.0
      %3782 = vmatpush1.msra.mxu0 %v3754
      %3783 = vmatprep.subr.mxu0 0.0
      %3784 = vmatpush1.msra.mxu0 %v3753
      %3785 = vmatprep.subr.mxu0 0.0
      %3786 = vmatpush1.msra.mxu0 %v3752
      %3787 = vmatprep.subr.mxu0 0.0
      %3788 = vmatpush1.msra.mxu0 %v3751
      %3789 = vmatprep.subr.mxu0 0.0
      %3790 = vmatpush1.msra.mxu0 %v3750
      %3791 = vmatprep.subr.mxu0 0.0
      %3792 = vmatpush1.msra.mxu0 %v3749
      %3793 = vmatprep.subr.mxu0 0.0
      %3794 = vmatpush1.msra.mxu0 %v3748
      %3795 = vmatprep.subr.mxu0 0.0
      %3796 = vmatpush1.msra.mxu0 %v3747
      %3797 = vmatprep.subr.mxu0 0.0
      %3798 = vmatpush2.msra.mxu0 0.0
      %3799 = vmatprep.subr.mxu0 0.0
      %3800 = vmatpush2.msra.mxu0 0.0
      %3801 = vmatprep.subr.mxu0 0.0
      %3802 = vmatpush2.msra.mxu0 0.0
      %3803 = vmatprep.subr.mxu0 0.0
      %3804 = vmatpush2.msra.mxu0 0.0
      %3805 = vmatprep.subr.mxu0 0.0
      %3806 = vmatpush2.msra.mxu0 0.0
      %3807 = vmatprep.subr.mxu0 0.0
      %3808 = vmatpush2.msra.mxu0 0.0
      %3809 = vmatprep.subr.mxu0 0.0
      %3810 = vmatpush2.msra.mxu0 0.0
      %3811 = vmatprep.subr.mxu0 0.0
      %3812 = vmatpush2.msra.mxu0 0.0
      %3813 = vmatprep.subr.mxu0 0.0
      %3814 = vmatpush2.msra.mxu0 0.0
      %3815 = vmatprep.subr.mxu0 0.0
      %3816 = vmatpush2.msra.mxu0 0.0
      %3817 = vmatprep.subr.mxu0 0.0
      %3818 = vmatpush2.msra.mxu0 0.0
      %3819 = vmatprep.subr.mxu0 0.0
      %3820 = vmatpush2.msra.mxu0 0.0
      %3821 = vmatprep.subr.mxu0 0.0
      %3822 = vmatpush2.msra.mxu0 0.0
      %3823 = vmatprep.subr.mxu0 0.0
      %3824 = vmatpush2.msra.mxu0 0.0
      %3825 = vmatprep.subr.mxu0 0.0
      %3826 = vmatpush2.msra.mxu0 0.0
      %3827 = vmatprep.subr.mxu0 0.0
      %3828 = vmatpush2.msra.mxu0 0.0
      %3829 = vmatprep.mubr.f32.mxu0 0.0
      %3830 = vmatmul.mubr.f32.gmra.mxu0 %v3761
      %v3831 = vpop.f32.mrf.mxu0
      %v3832 = vadd.f32 0.0, %v3831
      %v3833 = vpop.f32.mrf.mxu0
      %3834 = vmatprep.mubr.f32.mxu0 0.0
      %3835 = vmatmul.mubr.f32.gmra.mxu0 %v3763
      %v3836 = vpop.f32.mrf.mxu0
      %v3837 = vadd.f32 0.0, %v3836
      %v3838 = vpop.f32.mrf.mxu0
      %3839 = vdwg.mxu0
      %v3840 = vadd.f32 %v3740, %v3832
      %v3841 = vadd.f32 %v3741, %v3837
      %v3842 = vld [vmem:[%s436 + $0x1] sm:$0xf]
      %v3843 = vld [vmem:[%s436 + $0x9] sm:$0xf]
      %v3844 = vld [vmem:[%s436 + $0x11] sm:$0xf]
      %v3845 = vld [vmem:[%s436 + $0x19] sm:$0xf]
      %s3846 = scalar_lea.vmem %s5, 256
      %v3847 = vld [vmem:[%s3846] sm:$0xff]
      %v3848 = vld [vmem:[%s3846 + $0x8] sm:$0xff]
      %v3849 = vld [vmem:[%s3846 + $0x10] sm:$0xff]
      %v3850 = vld [vmem:[%s3846 + $0x18] sm:$0xff]
      %v3851 = vld [vmem:[%s3846 + $0x20] sm:$0xff]
      %v3852 = vld [vmem:[%s3846 + $0x28] sm:$0xff]
      %v3853 = vld [vmem:[%s3846 + $0x30] sm:$0xff]
      %v3854 = vld [vmem:[%s3846 + $0x38] sm:$0xff]
      %v3859 = vcombine.low %v3842, %v3843
      %v3860 = vcombine.low %v3844, %v3845
      %v3861 = vsel %vm3477, %v3859, 0
      %v3863 = vsel %vm3477, %v3860, 0
      %3865 = vmatprep.subr.mxu0 0.0
      %3866 = vmatpush1.msra.mxu0 0.0
      %3867 = vmatprep.subr.mxu0 0.0
      %3868 = vmatpush1.msra.mxu0 0.0
      %3869 = vmatprep.subr.mxu0 0.0
      %3870 = vmatpush1.msra.mxu0 0.0
      %3871 = vmatprep.subr.mxu0 0.0
      %3872 = vmatpush1.msra.mxu0 0.0
      %3873 = vmatprep.subr.mxu0 0.0
      %3874 = vmatpush1.msra.mxu0 0.0
      %3875 = vmatprep.subr.mxu0 0.0
      %3876 = vmatpush1.msra.mxu0 0.0
      %3877 = vmatprep.subr.mxu0 0.0
      %3878 = vmatpush1.msra.mxu0 0.0
      %3879 = vmatprep.subr.mxu0 0.0
      %3880 = vmatpush1.msra.mxu0 0.0
      %3881 = vmatprep.subr.mxu0 0.0
      %3882 = vmatpush1.msra.mxu0 %v3854
      %3883 = vmatprep.subr.mxu0 0.0
      %3884 = vmatpush1.msra.mxu0 %v3853
      %3885 = vmatprep.subr.mxu0 0.0
      %3886 = vmatpush1.msra.mxu0 %v3852
      %3887 = vmatprep.subr.mxu0 0.0
      %3888 = vmatpush1.msra.mxu0 %v3851
      %3889 = vmatprep.subr.mxu0 0.0
      %3890 = vmatpush1.msra.mxu0 %v3850
      %3891 = vmatprep.subr.mxu0 0.0
      %3892 = vmatpush1.msra.mxu0 %v3849
      %3893 = vmatprep.subr.mxu0 0.0
      %3894 = vmatpush1.msra.mxu0 %v3848
      %3895 = vmatprep.subr.mxu0 0.0
      %3896 = vmatpush1.msra.mxu0 %v3847
      %3897 = vmatprep.subr.mxu0 0.0
      %3898 = vmatpush2.msra.mxu0 0.0
      %3899 = vmatprep.subr.mxu0 0.0
      %3900 = vmatpush2.msra.mxu0 0.0
      %3901 = vmatprep.subr.mxu0 0.0
      %3902 = vmatpush2.msra.mxu0 0.0
      %3903 = vmatprep.subr.mxu0 0.0
      %3904 = vmatpush2.msra.mxu0 0.0
      %3905 = vmatprep.subr.mxu0 0.0
      %3906 = vmatpush2.msra.mxu0 0.0
      %3907 = vmatprep.subr.mxu0 0.0
      %3908 = vmatpush2.msra.mxu0 0.0
      %3909 = vmatprep.subr.mxu0 0.0
      %3910 = vmatpush2.msra.mxu0 0.0
      %3911 = vmatprep.subr.mxu0 0.0
      %3912 = vmatpush2.msra.mxu0 0.0
      %3913 = vmatprep.subr.mxu0 0.0
      %3914 = vmatpush2.msra.mxu0 0.0
      %3915 = vmatprep.subr.mxu0 0.0
      %3916 = vmatpush2.msra.mxu0 0.0
      %3917 = vmatprep.subr.mxu0 0.0
      %3918 = vmatpush2.msra.mxu0 0.0
      %3919 = vmatprep.subr.mxu0 0.0
      %3920 = vmatpush2.msra.mxu0 0.0
      %3921 = vmatprep.subr.mxu0 0.0
      %3922 = vmatpush2.msra.mxu0 0.0
      %3923 = vmatprep.subr.mxu0 0.0
      %3924 = vmatpush2.msra.mxu0 0.0
      %3925 = vmatprep.subr.mxu0 0.0
      %3926 = vmatpush2.msra.mxu0 0.0
      %3927 = vmatprep.subr.mxu0 0.0
      %3928 = vmatpush2.msra.mxu0 0.0
      %3929 = vmatprep.mubr.f32.mxu0 0.0
      %3930 = vmatmul.mubr.f32.gmra.mxu0 %v3861
      %v3931 = vpop.f32.mrf.mxu0
      %v3932 = vadd.f32 0.0, %v3931
      %v3933 = vpop.f32.mrf.mxu0
      %3934 = vmatprep.mubr.f32.mxu0 0.0
      %3935 = vmatmul.mubr.f32.gmra.mxu0 %v3863
      %v3936 = vpop.f32.mrf.mxu0
      %v3937 = vadd.f32 0.0, %v3936
      %v3938 = vpop.f32.mrf.mxu0
      %3939 = vdwg.mxu0
      %v3940 = vadd.f32 %v3840, %v3932
      %v3941 = vadd.f32 %v3841, %v3937
      %v3942 = vld [vmem:[%s436 + $0x2] sm:$0xf]
      %v3943 = vld [vmem:[%s436 + $0xa] sm:$0xf]
      %v3944 = vld [vmem:[%s436 + $0x12] sm:$0xf]
      %v3945 = vld [vmem:[%s436 + $0x1a] sm:$0xf]
      %s3946 = scalar_lea.vmem %s5, 320
      %v3947 = vld [vmem:[%s3946] sm:$0xff]
      %v3948 = vld [vmem:[%s3946 + $0x8] sm:$0xff]
      %v3949 = vld [vmem:[%s3946 + $0x10] sm:$0xff]
      %v3950 = vld [vmem:[%s3946 + $0x18] sm:$0xff]
      %v3951 = vld [vmem:[%s3946 + $0x20] sm:$0xff]
      %v3952 = vld [vmem:[%s3946 + $0x28] sm:$0xff]
      %v3953 = vld [vmem:[%s3946 + $0x30] sm:$0xff]
      %v3954 = vld [vmem:[%s3946 + $0x38] sm:$0xff]
      %v3959 = vcombine.low %v3942, %v3943
      %v3960 = vcombine.low %v3944, %v3945
      %v3961 = vsel %vm3477, %v3959, 0
      %v3963 = vsel %vm3477, %v3960, 0
      %3965 = vmatprep.subr.mxu0 0.0
      %3966 = vmatpush1.msra.mxu0 0.0
      %3967 = vmatprep.subr.mxu0 0.0
      %3968 = vmatpush1.msra.mxu0 0.0
      %3969 = vmatprep.subr.mxu0 0.0
      %3970 = vmatpush1.msra.mxu0 0.0
      %3971 = vmatprep.subr.mxu0 0.0
      %3972 = vmatpush1.msra.mxu0 0.0
      %3973 = vmatprep.subr.mxu0 0.0
      %3974 = vmatpush1.msra.mxu0 0.0
      %3975 = vmatprep.subr.mxu0 0.0
      %3976 = vmatpush1.msra.mxu0 0.0
      %3977 = vmatprep.subr.mxu0 0.0
      %3978 = vmatpush1.msra.mxu0 0.0
      %3979 = vmatprep.subr.mxu0 0.0
      %3980 = vmatpush1.msra.mxu0 0.0
      %3981 = vmatprep.subr.mxu0 0.0
      %3982 = vmatpush1.msra.mxu0 %v3954
      %3983 = vmatprep.subr.mxu0 0.0
      %3984 = vmatpush1.msra.mxu0 %v3953
      %3985 = vmatprep.subr.mxu0 0.0
      %3986 = vmatpush1.msra.mxu0 %v3952
      %3987 = vmatprep.subr.mxu0 0.0
      %3988 = vmatpush1.msra.mxu0 %v3951
      %3989 = vmatprep.subr.mxu0 0.0
      %3990 = vmatpush1.msra.mxu0 %v3950
      %3991 = vmatprep.subr.mxu0 0.0
      %3992 = vmatpush1.msra.mxu0 %v3949
      %3993 = vmatprep.subr.mxu0 0.0
      %3994 = vmatpush1.msra.mxu0 %v3948
      %3995 = vmatprep.subr.mxu0 0.0
      %3996 = vmatpush1.msra.mxu0 %v3947
      %3997 = vmatprep.subr.mxu0 0.0
      %3998 = vmatpush2.msra.mxu0 0.0
      %3999 = vmatprep.subr.mxu0 0.0
      %4000 = vmatpush2.msra.mxu0 0.0
      %4001 = vmatprep.subr.mxu0 0.0
      %4002 = vmatpush2.msra.mxu0 0.0
      %4003 = vmatprep.subr.mxu0 0.0
      %4004 = vmatpush2.msra.mxu0 0.0
      %4005 = vmatprep.subr.mxu0 0.0
      %4006 = vmatpush2.msra.mxu0 0.0
      %4007 = vmatprep.subr.mxu0 0.0
      %4008 = vmatpush2.msra.mxu0 0.0
      %4009 = vmatprep.subr.mxu0 0.0
      %4010 = vmatpush2.msra.mxu0 0.0
      %4011 = vmatprep.subr.mxu0 0.0
      %4012 = vmatpush2.msra.mxu0 0.0
      %4013 = vmatprep.subr.mxu0 0.0
      %4014 = vmatpush2.msra.mxu0 0.0
      %4015 = vmatprep.subr.mxu0 0.0
      %4016 = vmatpush2.msra.mxu0 0.0
      %4017 = vmatprep.subr.mxu0 0.0
      %4018 = vmatpush2.msra.mxu0 0.0
      %4019 = vmatprep.subr.mxu0 0.0
      %4020 = vmatpush2.msra.mxu0 0.0
      %4021 = vmatprep.subr.mxu0 0.0
      %4022 = vmatpush2.msra.mxu0 0.0
      %4023 = vmatprep.subr.mxu0 0.0
      %4024 = vmatpush2.msra.mxu0 0.0
      %4025 = vmatprep.subr.mxu0 0.0
      %4026 = vmatpush2.msra.mxu0 0.0
      %4027 = vmatprep.subr.mxu0 0.0
      %4028 = vmatpush2.msra.mxu0 0.0
      %4029 = vmatprep.mubr.f32.mxu0 0.0
      %4030 = vmatmul.mubr.f32.gmra.mxu0 %v3961
      %v4031 = vpop.f32.mrf.mxu0
      %v4032 = vadd.f32 0.0, %v4031
      %v4033 = vpop.f32.mrf.mxu0
      %4034 = vmatprep.mubr.f32.mxu0 0.0
      %4035 = vmatmul.mubr.f32.gmra.mxu0 %v3963
      %v4036 = vpop.f32.mrf.mxu0
      %v4037 = vadd.f32 0.0, %v4036
      %v4038 = vpop.f32.mrf.mxu0
      %4039 = vdwg.mxu0
      %v4040 = vadd.f32 %v3940, %v4032
      %v4041 = vadd.f32 %v3941, %v4037
      %s4042 = scalar_lea.vmem [#allocation3], 16
      %v4043 = vld [vmem:[%s4042] sm:$0xf]
      %v4044 = vld [vmem:[%s4042 + $0x8] sm:$0xf]
      %v4045 = vld [vmem:[%s4042 + $0x10] sm:$0xf]
      %v4046 = vld [vmem:[%s4042 + $0x18] sm:$0xf]
      %s4047 = scalar_lea.vmem %s5, 384
      %v4048 = vld [vmem:[%s4047] sm:$0xff]
      %v4049 = vld [vmem:[%s4047 + $0x8] sm:$0xff]
      %v4050 = vld [vmem:[%s4047 + $0x10] sm:$0xff]
      %v4051 = vld [vmem:[%s4047 + $0x18] sm:$0xff]
      %v4052 = vld [vmem:[%s4047 + $0x20] sm:$0xff]
      %v4053 = vld [vmem:[%s4047 + $0x28] sm:$0xff]
      %v4054 = vld [vmem:[%s4047 + $0x30] sm:$0xff]
      %v4055 = vld [vmem:[%s4047 + $0x38] sm:$0xff]
      %v4060 = vcombine.low %v4043, %v4044
      %v4061 = vcombine.low %v4045, %v4046
      %v4062 = vsel %vm3477, %v4060, 0
      %v4064 = vsel %vm3477, %v4061, 0
      %4066 = vmatprep.subr.mxu0 0.0
      %4067 = vmatpush1.msra.mxu0 0.0
      %4068 = vmatprep.subr.mxu0 0.0
      %4069 = vmatpush1.msra.mxu0 0.0
      %4070 = vmatprep.subr.mxu0 0.0
      %4071 = vmatpush1.msra.mxu0 0.0
      %4072 = vmatprep.subr.mxu0 0.0
      %4073 = vmatpush1.msra.mxu0 0.0
      %4074 = vmatprep.subr.mxu0 0.0
      %4075 = vmatpush1.msra.mxu0 0.0
      %4076 = vmatprep.subr.mxu0 0.0
      %4077 = vmatpush1.msra.mxu0 0.0
      %4078 = vmatprep.subr.mxu0 0.0
      %4079 = vmatpush1.msra.mxu0 0.0
      %4080 = vmatprep.subr.mxu0 0.0
      %4081 = vmatpush1.msra.mxu0 0.0
      %4082 = vmatprep.subr.mxu0 0.0
      %4083 = vmatpush1.msra.mxu0 %v4055
      %4084 = vmatprep.subr.mxu0 0.0
      %4085 = vmatpush1.msra.mxu0 %v4054
      %4086 = vmatprep.subr.mxu0 0.0
      %4087 = vmatpush1.msra.mxu0 %v4053
      %4088 = vmatprep.subr.mxu0 0.0
      %4089 = vmatpush1.msra.mxu0 %v4052
      %4090 = vmatprep.subr.mxu0 0.0
      %4091 = vmatpush1.msra.mxu0 %v4051
      %4092 = vmatprep.subr.mxu0 0.0
      %4093 = vmatpush1.msra.mxu0 %v4050
      %4094 = vmatprep.subr.mxu0 0.0
      %4095 = vmatpush1.msra.mxu0 %v4049
      %4096 = vmatprep.subr.mxu0 0.0
      %4097 = vmatpush1.msra.mxu0 %v4048
      %4098 = vmatprep.subr.mxu0 0.0
      %4099 = vmatpush2.msra.mxu0 0.0
      %4100 = vmatprep.subr.mxu0 0.0
      %4101 = vmatpush2.msra.mxu0 0.0
      %4102 = vmatprep.subr.mxu0 0.0
      %4103 = vmatpush2.msra.mxu0 0.0
      %4104 = vmatprep.subr.mxu0 0.0
      %4105 = vmatpush2.msra.mxu0 0.0
      %4106 = vmatprep.subr.mxu0 0.0
      %4107 = vmatpush2.msra.mxu0 0.0
      %4108 = vmatprep.subr.mxu0 0.0
      %4109 = vmatpush2.msra.mxu0 0.0
      %4110 = vmatprep.subr.mxu0 0.0
      %4111 = vmatpush2.msra.mxu0 0.0
      %4112 = vmatprep.subr.mxu0 0.0
      %4113 = vmatpush2.msra.mxu0 0.0
      %4114 = vmatprep.subr.mxu0 0.0
      %4115 = vmatpush2.msra.mxu0 0.0
      %4116 = vmatprep.subr.mxu0 0.0
      %4117 = vmatpush2.msra.mxu0 0.0
      %4118 = vmatprep.subr.mxu0 0.0
      %4119 = vmatpush2.msra.mxu0 0.0
      %4120 = vmatprep.subr.mxu0 0.0
      %4121 = vmatpush2.msra.mxu0 0.0
      %4122 = vmatprep.subr.mxu0 0.0
      %4123 = vmatpush2.msra.mxu0 0.0
      %4124 = vmatprep.subr.mxu0 0.0
      %4125 = vmatpush2.msra.mxu0 0.0
      %4126 = vmatprep.subr.mxu0 0.0
      %4127 = vmatpush2.msra.mxu0 0.0
      %4128 = vmatprep.subr.mxu0 0.0
      %4129 = vmatpush2.msra.mxu0 0.0
      %4130 = vmatprep.mubr.f32.mxu0 0.0
      %4131 = vmatmul.mubr.f32.gmra.mxu0 %v4062
      %v4132 = vpop.f32.mrf.mxu0
      %v4133 = vadd.f32 0.0, %v4132
      %v4134 = vpop.f32.mrf.mxu0
      %4135 = vmatprep.mubr.f32.mxu0 0.0
      %4136 = vmatmul.mubr.f32.gmra.mxu0 %v4064
      %v4137 = vpop.f32.mrf.mxu0
      %v4138 = vadd.f32 0.0, %v4137
      %v4139 = vpop.f32.mrf.mxu0
      %4140 = vdwg.mxu0
      %v4141 = vadd.f32 %v4040, %v4133
      %v4142 = vadd.f32 %v4041, %v4138
      %v4143 = vld [vmem:[%s4042 + $0x1] sm:$0xf]
      %v4144 = vld [vmem:[%s4042 + $0x9] sm:$0xf]
      %v4145 = vld [vmem:[%s4042 + $0x11] sm:$0xf]
      %v4146 = vld [vmem:[%s4042 + $0x19] sm:$0xf]
      %s4147 = scalar_lea.vmem %s5, 448
      %v4148 = vld [vmem:[%s4147] sm:$0xff]
      %v4149 = vld [vmem:[%s4147 + $0x8] sm:$0xff]
      %v4150 = vld [vmem:[%s4147 + $0x10] sm:$0xff]
      %v4151 = vld [vmem:[%s4147 + $0x18] sm:$0xff]
      %v4152 = vld [vmem:[%s4147 + $0x20] sm:$0xff]
      %v4153 = vld [vmem:[%s4147 + $0x28] sm:$0xff]
      %v4154 = vld [vmem:[%s4147 + $0x30] sm:$0xff]
      %v4155 = vld [vmem:[%s4147 + $0x38] sm:$0xff]
      %v4160 = vcombine.low %v4143, %v4144
      %v4161 = vcombine.low %v4145, %v4146
      %v4162 = vsel %vm3477, %v4160, 0
      %v4164 = vsel %vm3477, %v4161, 0
      %4166 = vmatprep.subr.mxu0 0.0
      %4167 = vmatpush1.msra.mxu0 0.0
      %4168 = vmatprep.subr.mxu0 0.0
      %4169 = vmatpush1.msra.mxu0 0.0
      %4170 = vmatprep.subr.mxu0 0.0
      %4171 = vmatpush1.msra.mxu0 0.0
      %4172 = vmatprep.subr.mxu0 0.0
      %4173 = vmatpush1.msra.mxu0 0.0
      %4174 = vmatprep.subr.mxu0 0.0
      %4175 = vmatpush1.msra.mxu0 0.0
      %4176 = vmatprep.subr.mxu0 0.0
      %4177 = vmatpush1.msra.mxu0 0.0
      %4178 = vmatprep.subr.mxu0 0.0
      %4179 = vmatpush1.msra.mxu0 0.0
      %4180 = vmatprep.subr.mxu0 0.0
      %4181 = vmatpush1.msra.mxu0 0.0
      %4182 = vmatprep.subr.mxu0 0.0
      %4183 = vmatpush1.msra.mxu0 %v4155
      %4184 = vmatprep.subr.mxu0 0.0
      %4185 = vmatpush1.msra.mxu0 %v4154
      %4186 = vmatprep.subr.mxu0 0.0
      %4187 = vmatpush1.msra.mxu0 %v4153
      %4188 = vmatprep.subr.mxu0 0.0
      %4189 = vmatpush1.msra.mxu0 %v4152
      %4190 = vmatprep.subr.mxu0 0.0
      %4191 = vmatpush1.msra.mxu0 %v4151
      %4192 = vmatprep.subr.mxu0 0.0
      %4193 = vmatpush1.msra.mxu0 %v4150
      %4194 = vmatprep.subr.mxu0 0.0
      %4195 = vmatpush1.msra.mxu0 %v4149
      %4196 = vmatprep.subr.mxu0 0.0
      %4197 = vmatpush1.msra.mxu0 %v4148
      %4198 = vmatprep.subr.mxu0 0.0
      %4199 = vmatpush2.msra.mxu0 0.0
      %4200 = vmatprep.subr.mxu0 0.0
      %4201 = vmatpush2.msra.mxu0 0.0
      %4202 = vmatprep.subr.mxu0 0.0
      %4203 = vmatpush2.msra.mxu0 0.0
      %4204 = vmatprep.subr.mxu0 0.0
      %4205 = vmatpush2.msra.mxu0 0.0
      %4206 = vmatprep.subr.mxu0 0.0
      %4207 = vmatpush2.msra.mxu0 0.0
      %4208 = vmatprep.subr.mxu0 0.0
      %4209 = vmatpush2.msra.mxu0 0.0
      %4210 = vmatprep.subr.mxu0 0.0
      %4211 = vmatpush2.msra.mxu0 0.0
      %4212 = vmatprep.subr.mxu0 0.0
      %4213 = vmatpush2.msra.mxu0 0.0
      %4214 = vmatprep.subr.mxu0 0.0
      %4215 = vmatpush2.msra.mxu0 0.0
      %4216 = vmatprep.subr.mxu0 0.0
      %4217 = vmatpush2.msra.mxu0 0.0
      %4218 = vmatprep.subr.mxu0 0.0
      %4219 = vmatpush2.msra.mxu0 0.0
      %4220 = vmatprep.subr.mxu0 0.0
      %4221 = vmatpush2.msra.mxu0 0.0
      %4222 = vmatprep.subr.mxu0 0.0
      %4223 = vmatpush2.msra.mxu0 0.0
      %4224 = vmatprep.subr.mxu0 0.0
      %4225 = vmatpush2.msra.mxu0 0.0
      %4226 = vmatprep.subr.mxu0 0.0
      %4227 = vmatpush2.msra.mxu0 0.0
      %4228 = vmatprep.subr.mxu0 0.0
      %4229 = vmatpush2.msra.mxu0 0.0
      %4230 = vmatprep.mubr.f32.mxu0 0.0
      %4231 = vmatmul.mubr.f32.gmra.mxu0 %v4162
      %v4232 = vpop.f32.mrf.mxu0
      %v4233 = vadd.f32 0.0, %v4232
      %v4234 = vpop.f32.mrf.mxu0
      %4235 = vmatprep.mubr.f32.mxu0 0.0
      %4236 = vmatmul.mubr.f32.gmra.mxu0 %v4164
      %v4237 = vpop.f32.mrf.mxu0
      %v4238 = vadd.f32 0.0, %v4237
      %v4239 = vpop.f32.mrf.mxu0
      %4240 = vdwg.mxu0
      %v4241 = vadd.f32 %v4141, %v4233
      %v4242 = vadd.f32 %v4142, %v4238
      %v4243 = vld [vmem:[%s4042 + $0x2] sm:$0xf]
      %v4244 = vld [vmem:[%s4042 + $0xa] sm:$0xf]
      %v4245 = vld [vmem:[%s4042 + $0x12] sm:$0xf]
      %v4246 = vld [vmem:[%s4042 + $0x1a] sm:$0xf]
      %s4247 = scalar_lea.vmem %s5, 512
      %v4248 = vld [vmem:[%s4247] sm:$0xff]
      %v4249 = vld [vmem:[%s4247 + $0x8] sm:$0xff]
      %v4250 = vld [vmem:[%s4247 + $0x10] sm:$0xff]
      %v4251 = vld [vmem:[%s4247 + $0x18] sm:$0xff]
      %v4252 = vld [vmem:[%s4247 + $0x20] sm:$0xff]
      %v4253 = vld [vmem:[%s4247 + $0x28] sm:$0xff]
      %v4254 = vld [vmem:[%s4247 + $0x30] sm:$0xff]
      %v4255 = vld [vmem:[%s4247 + $0x38] sm:$0xff]
      %v4260 = vcombine.low %v4243, %v4244
      %v4261 = vcombine.low %v4245, %v4246
      %v4262 = vsel %vm3477, %v4260, 0
      %v4264 = vsel %vm3477, %v4261, 0
      %4266 = vmatprep.subr.mxu0 0.0
      %4267 = vmatpush1.msra.mxu0 0.0
      %4268 = vmatprep.subr.mxu0 0.0
      %4269 = vmatpush1.msra.mxu0 0.0
      %4270 = vmatprep.subr.mxu0 0.0
      %4271 = vmatpush1.msra.mxu0 0.0
      %4272 = vmatprep.subr.mxu0 0.0
      %4273 = vmatpush1.msra.mxu0 0.0
      %4274 = vmatprep.subr.mxu0 0.0
      %4275 = vmatpush1.msra.mxu0 0.0
      %4276 = vmatprep.subr.mxu0 0.0
      %4277 = vmatpush1.msra.mxu0 0.0
      %4278 = vmatprep.subr.mxu0 0.0
      %4279 = vmatpush1.msra.mxu0 0.0
      %4280 = vmatprep.subr.mxu0 0.0
      %4281 = vmatpush1.msra.mxu0 0.0
      %4282 = vmatprep.subr.mxu0 0.0
      %4283 = vmatpush1.msra.mxu0 %v4255
      %4284 = vmatprep.subr.mxu0 0.0
      %4285 = vmatpush1.msra.mxu0 %v4254
      %4286 = vmatprep.subr.mxu0 0.0
      %4287 = vmatpush1.msra.mxu0 %v4253
      %4288 = vmatprep.subr.mxu0 0.0
      %4289 = vmatpush1.msra.mxu0 %v4252
      %4290 = vmatprep.subr.mxu0 0.0
      %4291 = vmatpush1.msra.mxu0 %v4251
      %4292 = vmatprep.subr.mxu0 0.0
      %4293 = vmatpush1.msra.mxu0 %v4250
      %4294 = vmatprep.subr.mxu0 0.0
      %4295 = vmatpush1.msra.mxu0 %v4249
      %4296 = vmatprep.subr.mxu0 0.0
      %4297 = vmatpush1.msra.mxu0 %v4248
      %4298 = vmatprep.subr.mxu0 0.0
      %4299 = vmatpush2.msra.mxu0 0.0
      %4300 = vmatprep.subr.mxu0 0.0
      %4301 = vmatpush2.msra.mxu0 0.0
      %4302 = vmatprep.subr.mxu0 0.0
      %4303 = vmatpush2.msra.mxu0 0.0
      %4304 = vmatprep.subr.mxu0 0.0
      %4305 = vmatpush2.msra.mxu0 0.0
      %4306 = vmatprep.subr.mxu0 0.0
      %4307 = vmatpush2.msra.mxu0 0.0
      %4308 = vmatprep.subr.mxu0 0.0
      %4309 = vmatpush2.msra.mxu0 0.0
      %4310 = vmatprep.subr.mxu0 0.0
      %4311 = vmatpush2.msra.mxu0 0.0
      %4312 = vmatprep.subr.mxu0 0.0
      %4313 = vmatpush2.msra.mxu0 0.0
      %4314 = vmatprep.subr.mxu0 0.0
      %4315 = vmatpush2.msra.mxu0 0.0
      %4316 = vmatprep.subr.mxu0 0.0
      %4317 = vmatpush2.msra.mxu0 0.0
      %4318 = vmatprep.subr.mxu0 0.0
      %4319 = vmatpush2.msra.mxu0 0.0
      %4320 = vmatprep.subr.mxu0 0.0
      %4321 = vmatpush2.msra.mxu0 0.0
      %4322 = vmatprep.subr.mxu0 0.0
      %4323 = vmatpush2.msra.mxu0 0.0
      %4324 = vmatprep.subr.mxu0 0.0
      %4325 = vmatpush2.msra.mxu0 0.0
      %4326 = vmatprep.subr.mxu0 0.0
      %4327 = vmatpush2.msra.mxu0 0.0
      %4328 = vmatprep.subr.mxu0 0.0
      %4329 = vmatpush2.msra.mxu0 0.0
      %4330 = vmatprep.mubr.f32.mxu0 0.0
      %4331 = vmatmul.mubr.f32.gmra.mxu0 %v4262
      %v4332 = vpop.f32.mrf.mxu0
      %v4333 = vadd.f32 0.0, %v4332
      %v4334 = vpop.f32.mrf.mxu0
      %4335 = vmatprep.mubr.f32.mxu0 0.0
      %4336 = vmatmul.mubr.f32.gmra.mxu0 %v4264
      %v4337 = vpop.f32.mrf.mxu0
      %v4338 = vadd.f32 0.0, %v4337
      %v4339 = vpop.f32.mrf.mxu0
      %4340 = vdwg.mxu0
      %v4341 = vadd.f32 %v4241, %v4333
      %v4342 = vadd.f32 %v4242, %v4338
      %v4343 = vld [vmem:[%s6] sm:$0x1]
      %v4345 = vlaneseq
      %v4346 = vshrl.u32 %v4345, 7
      %v4347 = vsub.s32 0, %v4346
      %v4348 = vrot.slane %v4343, %v4347
      %v4350 = vadd.f32 %v4341, %v4348
      %v4351 = vadd.f32 %v4342, %v4348
      %v4352 = vmax.f32 %v4350, 0.0
      %v4353 = vmax.f32 %v4351, 0.0
      %v4356 = vcombine.high %v4352, %v4352
      %v4357 = vcombine.high %v4353, %v4353
      %4360 = vst [vmem:[%s449 + $0x1] sm:$0xf] %v4352
      %4361 = vst [vmem:[%s449 + $0x9] sm:$0xf] %v4356
      %4362 = vst [vmem:[%s449 + $0x11] sm:$0xf] %v4353
      %4363 = vst [vmem:[%s449 + $0x19] sm:$0xf] %v4357
      %v4364 = vld [vmem:[#allocation4] sm:$0xf]
      %v4365 = vld [vmem:[#allocation4 + $0x8] sm:$0xf]
      %v4366 = vld [vmem:[#allocation4 + $0x10] sm:$0xf]
      %v4367 = vld [vmem:[#allocation4 + $0x18] sm:$0xf]
      %v4368 = vld [vmem:[%s7] sm:$0xff]
      %v4369 = vld [vmem:[%s7 + $0x8] sm:$0xff]
      %v4370 = vld [vmem:[%s7 + $0x10] sm:$0xff]
      %v4371 = vld [vmem:[%s7 + $0x18] sm:$0xff]
      %v4372 = vld [vmem:[%s7 + $0x20] sm:$0xff]
      %v4373 = vld [vmem:[%s7 + $0x28] sm:$0xff]
      %v4374 = vld [vmem:[%s7 + $0x30] sm:$0xff]
      %v4375 = vld [vmem:[%s7 + $0x38] sm:$0xff]
      %v4376 = vld [vmem:[%s7 + $0x40] sm:$0xff]
      %v4377 = vld [vmem:[%s7 + $0x48] sm:$0xff]
      %v4378 = vld [vmem:[%s7 + $0x50] sm:$0xff]
      %v4379 = vld [vmem:[%s7 + $0x58] sm:$0xff]
      %v4380 = vld [vmem:[%s7 + $0x60] sm:$0xff]
      %v4381 = vld [vmem:[%s7 + $0x68] sm:$0xff]
      %v4382 = vld [vmem:[%s7 + $0x70] sm:$0xff]
      %v4383 = vld [vmem:[%s7 + $0x78] sm:$0xff]
      %v4384 = vld [vmem:[#allocation4 + $0x1] sm:$0xf]
      %v4385 = vld [vmem:[#allocation4 + $0x9] sm:$0xf]
      %v4386 = vld [vmem:[#allocation4 + $0x11] sm:$0xf]
      %v4387 = vld [vmem:[#allocation4 + $0x19] sm:$0xf]
      %s4388 = scalar_lea.vmem %s7, 128
      %v4389 = vld [vmem:[%s4388] sm:$0xff]
      %v4390 = vld [vmem:[%s4388 + $0x8] sm:$0xff]
      %v4391 = vld [vmem:[%s4388 + $0x10] sm:$0xff]
      %v4392 = vld [vmem:[%s4388 + $0x18] sm:$0xff]
      %v4393 = vld [vmem:[%s4388 + $0x20] sm:$0xff]
      %v4394 = vld [vmem:[%s4388 + $0x28] sm:$0xff]
      %v4395 = vld [vmem:[%s4388 + $0x30] sm:$0xff]
      %v4396 = vld [vmem:[%s4388 + $0x38] sm:$0xff]
      %v4397 = vld [vmem:[%s4388 + $0x40] sm:$0xff]
      %v4398 = vld [vmem:[%s4388 + $0x48] sm:$0xff]
      %v4399 = vld [vmem:[%s4388 + $0x50] sm:$0xff]
      %v4400 = vld [vmem:[%s4388 + $0x58] sm:$0xff]
      %v4401 = vld [vmem:[%s4388 + $0x60] sm:$0xff]
      %v4402 = vld [vmem:[%s4388 + $0x68] sm:$0xff]
      %v4403 = vld [vmem:[%s4388 + $0x70] sm:$0xff]
      %v4404 = vld [vmem:[%s4388 + $0x78] sm:$0xff]
      %v4409 = vcombine.low %v4384, %v4385
      %v4410 = vcombine.low %v4386, %v4387
      %4413 = vmatprep.subr.mxu0 0.0
      %4414 = vmatpush1.msra.mxu0 %v4404
      %4415 = vmatprep.subr.mxu0 0.0
      %4416 = vmatpush1.msra.mxu0 %v4403
      %4417 = vmatprep.subr.mxu0 0.0
      %4418 = vmatpush1.msra.mxu0 %v4402
      %4419 = vmatprep.subr.mxu0 0.0
      %4420 = vmatpush1.msra.mxu0 %v4401
      %4421 = vmatprep.subr.mxu0 0.0
      %4422 = vmatpush1.msra.mxu0 %v4400
      %4423 = vmatprep.subr.mxu0 0.0
      %4424 = vmatpush1.msra.mxu0 %v4399
      %4425 = vmatprep.subr.mxu0 0.0
      %4426 = vmatpush1.msra.mxu0 %v4398
      %4427 = vmatprep.subr.mxu0 0.0
      %4428 = vmatpush1.msra.mxu0 %v4397
      %4429 = vmatprep.subr.mxu0 0.0
      %4430 = vmatpush1.msra.mxu0 %v4396
      %4431 = vmatprep.subr.mxu0 0.0
      %4432 = vmatpush1.msra.mxu0 %v4395
      %4433 = vmatprep.subr.mxu0 0.0
      %4434 = vmatpush1.msra.mxu0 %v4394
      %4435 = vmatprep.subr.mxu0 0.0
      %4436 = vmatpush1.msra.mxu0 %v4393
      %4437 = vmatprep.subr.mxu0 0.0
      %4438 = vmatpush1.msra.mxu0 %v4392
      %4439 = vmatprep.subr.mxu0 0.0
      %4440 = vmatpush1.msra.mxu0 %v4391
      %4441 = vmatprep.subr.mxu0 0.0
      %4442 = vmatpush1.msra.mxu0 %v4390
      %4443 = vmatprep.subr.mxu0 0.0
      %4444 = vmatpush1.msra.mxu0 %v4389
      %4445 = vmatprep.subr.mxu0 0.0
      %4446 = vmatpush2.msra.mxu0 0.0
      %4447 = vmatprep.subr.mxu0 0.0
      %4448 = vmatpush2.msra.mxu0 0.0
      %4449 = vmatprep.subr.mxu0 0.0
      %4450 = vmatpush2.msra.mxu0 0.0
      %4451 = vmatprep.subr.mxu0 0.0
      %4452 = vmatpush2.msra.mxu0 0.0
      %4453 = vmatprep.subr.mxu0 0.0
      %4454 = vmatpush2.msra.mxu0 0.0
      %4455 = vmatprep.subr.mxu0 0.0
      %4456 = vmatpush2.msra.mxu0 0.0
      %4457 = vmatprep.subr.mxu0 0.0
      %4458 = vmatpush2.msra.mxu0 0.0
      %4459 = vmatprep.subr.mxu0 0.0
      %4460 = vmatpush2.msra.mxu0 0.0
      %4461 = vmatprep.subr.mxu0 0.0
      %4462 = vmatpush2.msra.mxu0 0.0
      %4463 = vmatprep.subr.mxu0 0.0
      %4464 = vmatpush2.msra.mxu0 0.0
      %4465 = vmatprep.subr.mxu0 0.0
      %4466 = vmatpush2.msra.mxu0 0.0
      %4467 = vmatprep.subr.mxu0 0.0
      %4468 = vmatpush2.msra.mxu0 0.0
      %4469 = vmatprep.subr.mxu0 0.0
      %4470 = vmatpush2.msra.mxu0 0.0
      %4471 = vmatprep.subr.mxu0 0.0
      %4472 = vmatpush2.msra.mxu0 0.0
      %4473 = vmatprep.subr.mxu0 0.0
      %4474 = vmatpush2.msra.mxu0 0.0
      %4475 = vmatprep.subr.mxu0 0.0
      %4476 = vmatpush2.msra.mxu0 0.0
      %4477 = vmatprep.mubr.f32.mxu0 0.0
      %4478 = vmatmul.mubr.f32.gmra.mxu0 %v4409
      %v4479 = vpop.f32.mrf.mxu0
      %v4480 = vadd.f32 0.0, %v4479
      %v4481 = vpop.f32.mrf.mxu0
      %4482 = vmatprep.mubr.f32.mxu0 0.0
      %4483 = vmatmul.mubr.f32.gmra.mxu0 %v4410
      %v4484 = vpop.f32.mrf.mxu0
      %v4485 = vadd.f32 0.0, %v4484
      %v4486 = vpop.f32.mrf.mxu0
      %4487 = vdwg.mxu0
      %v4492 = vcombine.low %v4364, %v4365
      %v4493 = vcombine.low %v4366, %v4367
      %4496 = vmatprep.subr.mxu0 0.0
      %4497 = vmatpush1.msra.mxu0 %v4383
      %4498 = vmatprep.subr.mxu0 0.0
      %4499 = vmatpush1.msra.mxu0 %v4382
      %4500 = vmatprep.subr.mxu0 0.0
      %4501 = vmatpush1.msra.mxu0 %v4381
      %4502 = vmatprep.subr.mxu0 0.0
      %4503 = vmatpush1.msra.mxu0 %v4380
      %4504 = vmatprep.subr.mxu0 0.0
      %4505 = vmatpush1.msra.mxu0 %v4379
      %4506 = vmatprep.subr.mxu0 0.0
      %4507 = vmatpush1.msra.mxu0 %v4378
      %4508 = vmatprep.subr.mxu0 0.0
      %4509 = vmatpush1.msra.mxu0 %v4377
      %4510 = vmatprep.subr.mxu0 0.0
      %4511 = vmatpush1.msra.mxu0 %v4376
      %4512 = vmatprep.subr.mxu0 0.0
      %4513 = vmatpush1.msra.mxu0 %v4375
      %4514 = vmatprep.subr.mxu0 0.0
      %4515 = vmatpush1.msra.mxu0 %v4374
      %4516 = vmatprep.subr.mxu0 0.0
      %4517 = vmatpush1.msra.mxu0 %v4373
      %4518 = vmatprep.subr.mxu0 0.0
      %4519 = vmatpush1.msra.mxu0 %v4372
      %4520 = vmatprep.subr.mxu0 0.0
      %4521 = vmatpush1.msra.mxu0 %v4371
      %4522 = vmatprep.subr.mxu0 0.0
      %4523 = vmatpush1.msra.mxu0 %v4370
      %4524 = vmatprep.subr.mxu0 0.0
      %4525 = vmatpush1.msra.mxu0 %v4369
      %4526 = vmatprep.subr.mxu0 0.0
      %4527 = vmatpush1.msra.mxu0 %v4368
      %4528 = vmatprep.subr.mxu0 0.0
      %4529 = vmatpush2.msra.mxu0 0.0
      %4530 = vmatprep.subr.mxu0 0.0
      %4531 = vmatpush2.msra.mxu0 0.0
      %4532 = vmatprep.subr.mxu0 0.0
      %4533 = vmatpush2.msra.mxu0 0.0
      %4534 = vmatprep.subr.mxu0 0.0
      %4535 = vmatpush2.msra.mxu0 0.0
      %4536 = vmatprep.subr.mxu0 0.0
      %4537 = vmatpush2.msra.mxu0 0.0
      %4538 = vmatprep.subr.mxu0 0.0
      %4539 = vmatpush2.msra.mxu0 0.0
      %4540 = vmatprep.subr.mxu0 0.0
      %4541 = vmatpush2.msra.mxu0 0.0
      %4542 = vmatprep.subr.mxu0 0.0
      %4543 = vmatpush2.msra.mxu0 0.0
      %4544 = vmatprep.subr.mxu0 0.0
      %4545 = vmatpush2.msra.mxu0 0.0
      %4546 = vmatprep.subr.mxu0 0.0
      %4547 = vmatpush2.msra.mxu0 0.0
      %4548 = vmatprep.subr.mxu0 0.0
      %4549 = vmatpush2.msra.mxu0 0.0
      %4550 = vmatprep.subr.mxu0 0.0
      %4551 = vmatpush2.msra.mxu0 0.0
      %4552 = vmatprep.subr.mxu0 0.0
      %4553 = vmatpush2.msra.mxu0 0.0
      %4554 = vmatprep.subr.mxu0 0.0
      %4555 = vmatpush2.msra.mxu0 0.0
      %4556 = vmatprep.subr.mxu0 0.0
      %4557 = vmatpush2.msra.mxu0 0.0
      %4558 = vmatprep.subr.mxu0 0.0
      %4559 = vmatpush2.msra.mxu0 0.0
      %4560 = vmatprep.mubr.f32.mxu0 0.0
      %4561 = vmatmul.mubr.f32.gmra.mxu0 %v4492
      %v4562 = vpop.f32.mrf.mxu0
      %v4563 = vadd.f32 %v4480, %v4562
      %v4564 = vpop.f32.mrf.mxu0
      %4565 = vmatprep.mubr.f32.mxu0 0.0
      %4566 = vmatmul.mubr.f32.gmra.mxu0 %v4493
      %v4567 = vpop.f32.mrf.mxu0
      %v4568 = vadd.f32 %v4485, %v4567
      %v4569 = vpop.f32.mrf.mxu0
      %4570 = vdwg.mxu0
      %v4571 = vld [vmem:[#allocation4 + $0x2] sm:$0xf]
      %v4572 = vld [vmem:[#allocation4 + $0xa] sm:$0xf]
      %v4573 = vld [vmem:[#allocation4 + $0x12] sm:$0xf]
      %v4574 = vld [vmem:[#allocation4 + $0x1a] sm:$0xf]
      %s4575 = scalar_lea.vmem %s7, 256
      %v4576 = vld [vmem:[%s4575] sm:$0xff]
      %v4577 = vld [vmem:[%s4575 + $0x8] sm:$0xff]
      %v4578 = vld [vmem:[%s4575 + $0x10] sm:$0xff]
      %v4579 = vld [vmem:[%s4575 + $0x18] sm:$0xff]
      %v4580 = vld [vmem:[%s4575 + $0x20] sm:$0xff]
      %v4581 = vld [vmem:[%s4575 + $0x28] sm:$0xff]
      %v4582 = vld [vmem:[%s4575 + $0x30] sm:$0xff]
      %v4583 = vld [vmem:[%s4575 + $0x38] sm:$0xff]
      %v4584 = vld [vmem:[%s4575 + $0x40] sm:$0xff]
      %v4585 = vld [vmem:[%s4575 + $0x48] sm:$0xff]
      %v4586 = vld [vmem:[%s4575 + $0x50] sm:$0xff]
      %v4587 = vld [vmem:[%s4575 + $0x58] sm:$0xff]
      %v4588 = vld [vmem:[%s4575 + $0x60] sm:$0xff]
      %v4589 = vld [vmem:[%s4575 + $0x68] sm:$0xff]
      %v4590 = vld [vmem:[%s4575 + $0x70] sm:$0xff]
      %v4591 = vld [vmem:[%s4575 + $0x78] sm:$0xff]
      %v4596 = vcombine.low %v4571, %v4572
      %v4597 = vcombine.low %v4573, %v4574
      %4600 = vmatprep.subr.mxu0 0.0
      %4601 = vmatpush1.msra.mxu0 %v4591
      %4602 = vmatprep.subr.mxu0 0.0
      %4603 = vmatpush1.msra.mxu0 %v4590
      %4604 = vmatprep.subr.mxu0 0.0
      %4605 = vmatpush1.msra.mxu0 %v4589
      %4606 = vmatprep.subr.mxu0 0.0
      %4607 = vmatpush1.msra.mxu0 %v4588
      %4608 = vmatprep.subr.mxu0 0.0
      %4609 = vmatpush1.msra.mxu0 %v4587
      %4610 = vmatprep.subr.mxu0 0.0
      %4611 = vmatpush1.msra.mxu0 %v4586
      %4612 = vmatprep.subr.mxu0 0.0
      %4613 = vmatpush1.msra.mxu0 %v4585
      %4614 = vmatprep.subr.mxu0 0.0
      %4615 = vmatpush1.msra.mxu0 %v4584
      %4616 = vmatprep.subr.mxu0 0.0
      %4617 = vmatpush1.msra.mxu0 %v4583
      %4618 = vmatprep.subr.mxu0 0.0
      %4619 = vmatpush1.msra.mxu0 %v4582
      %4620 = vmatprep.subr.mxu0 0.0
      %4621 = vmatpush1.msra.mxu0 %v4581
      %4622 = vmatprep.subr.mxu0 0.0
      %4623 = vmatpush1.msra.mxu0 %v4580
      %4624 = vmatprep.subr.mxu0 0.0
      %4625 = vmatpush1.msra.mxu0 %v4579
      %4626 = vmatprep.subr.mxu0 0.0
      %4627 = vmatpush1.msra.mxu0 %v4578
      %4628 = vmatprep.subr.mxu0 0.0
      %4629 = vmatpush1.msra.mxu0 %v4577
      %4630 = vmatprep.subr.mxu0 0.0
      %4631 = vmatpush1.msra.mxu0 %v4576
      %4632 = vmatprep.subr.mxu0 0.0
      %4633 = vmatpush2.msra.mxu0 0.0
      %4634 = vmatprep.subr.mxu0 0.0
      %4635 = vmatpush2.msra.mxu0 0.0
      %4636 = vmatprep.subr.mxu0 0.0
      %4637 = vmatpush2.msra.mxu0 0.0
      %4638 = vmatprep.subr.mxu0 0.0
      %4639 = vmatpush2.msra.mxu0 0.0
      %4640 = vmatprep.subr.mxu0 0.0
      %4641 = vmatpush2.msra.mxu0 0.0
      %4642 = vmatprep.subr.mxu0 0.0
      %4643 = vmatpush2.msra.mxu0 0.0
      %4644 = vmatprep.subr.mxu0 0.0
      %4645 = vmatpush2.msra.mxu0 0.0
      %4646 = vmatprep.subr.mxu0 0.0
      %4647 = vmatpush2.msra.mxu0 0.0
      %4648 = vmatprep.subr.mxu0 0.0
      %4649 = vmatpush2.msra.mxu0 0.0
      %4650 = vmatprep.subr.mxu0 0.0
      %4651 = vmatpush2.msra.mxu0 0.0
      %4652 = vmatprep.subr.mxu0 0.0
      %4653 = vmatpush2.msra.mxu0 0.0
      %4654 = vmatprep.subr.mxu0 0.0
      %4655 = vmatpush2.msra.mxu0 0.0
      %4656 = vmatprep.subr.mxu0 0.0
      %4657 = vmatpush2.msra.mxu0 0.0
      %4658 = vmatprep.subr.mxu0 0.0
      %4659 = vmatpush2.msra.mxu0 0.0
      %4660 = vmatprep.subr.mxu0 0.0
      %4661 = vmatpush2.msra.mxu0 0.0
      %4662 = vmatprep.subr.mxu0 0.0
      %4663 = vmatpush2.msra.mxu0 0.0
      %4664 = vmatprep.mubr.f32.mxu0 0.0
      %4665 = vmatmul.mubr.f32.gmra.mxu0 %v4596
      %v4666 = vpop.f32.mrf.mxu0
      %v4667 = vadd.f32 0.0, %v4666
      %v4668 = vpop.f32.mrf.mxu0
      %4669 = vmatprep.mubr.f32.mxu0 0.0
      %4670 = vmatmul.mubr.f32.gmra.mxu0 %v4597
      %v4671 = vpop.f32.mrf.mxu0
      %v4672 = vadd.f32 0.0, %v4671
      %v4673 = vpop.f32.mrf.mxu0
      %4674 = vdwg.mxu0
      %v4675 = vadd.f32 %v4563, %v4667
      %v4676 = vadd.f32 %v4568, %v4672
      %v4677 = vld [vmem:[%s449] sm:$0xf]
      %v4678 = vld [vmem:[%s449 + $0x8] sm:$0xf]
      %v4679 = vld [vmem:[%s449 + $0x10] sm:$0xf]
      %v4680 = vld [vmem:[%s449 + $0x18] sm:$0xf]
      %s4681 = scalar_lea.vmem %s7, 384
      %v4682 = vld [vmem:[%s4681] sm:$0xff]
      %v4683 = vld [vmem:[%s4681 + $0x8] sm:$0xff]
      %v4684 = vld [vmem:[%s4681 + $0x10] sm:$0xff]
      %v4685 = vld [vmem:[%s4681 + $0x18] sm:$0xff]
      %v4686 = vld [vmem:[%s4681 + $0x20] sm:$0xff]
      %v4687 = vld [vmem:[%s4681 + $0x28] sm:$0xff]
      %v4688 = vld [vmem:[%s4681 + $0x30] sm:$0xff]
      %v4689 = vld [vmem:[%s4681 + $0x38] sm:$0xff]
      %v4690 = vld [vmem:[%s4681 + $0x40] sm:$0xff]
      %v4691 = vld [vmem:[%s4681 + $0x48] sm:$0xff]
      %v4692 = vld [vmem:[%s4681 + $0x50] sm:$0xff]
      %v4693 = vld [vmem:[%s4681 + $0x58] sm:$0xff]
      %v4694 = vld [vmem:[%s4681 + $0x60] sm:$0xff]
      %v4695 = vld [vmem:[%s4681 + $0x68] sm:$0xff]
      %v4696 = vld [vmem:[%s4681 + $0x70] sm:$0xff]
      %v4697 = vld [vmem:[%s4681 + $0x78] sm:$0xff]
      %v4702 = vcombine.low %v4677, %v4678
      %v4703 = vcombine.low %v4679, %v4680
      %4706 = vmatprep.subr.mxu0 0.0
      %4707 = vmatpush1.msra.mxu0 %v4697
      %4708 = vmatprep.subr.mxu0 0.0
      %4709 = vmatpush1.msra.mxu0 %v4696
      %4710 = vmatprep.subr.mxu0 0.0
      %4711 = vmatpush1.msra.mxu0 %v4695
      %4712 = vmatprep.subr.mxu0 0.0
      %4713 = vmatpush1.msra.mxu0 %v4694
      %4714 = vmatprep.subr.mxu0 0.0
      %4715 = vmatpush1.msra.mxu0 %v4693
      %4716 = vmatprep.subr.mxu0 0.0
      %4717 = vmatpush1.msra.mxu0 %v4692
      %4718 = vmatprep.subr.mxu0 0.0
      %4719 = vmatpush1.msra.mxu0 %v4691
      %4720 = vmatprep.subr.mxu0 0.0
      %4721 = vmatpush1.msra.mxu0 %v4690
      %4722 = vmatprep.subr.mxu0 0.0
      %4723 = vmatpush1.msra.mxu0 %v4689
      %4724 = vmatprep.subr.mxu0 0.0
      %4725 = vmatpush1.msra.mxu0 %v4688
      %4726 = vmatprep.subr.mxu0 0.0
      %4727 = vmatpush1.msra.mxu0 %v4687
      %4728 = vmatprep.subr.mxu0 0.0
      %4729 = vmatpush1.msra.mxu0 %v4686
      %4730 = vmatprep.subr.mxu0 0.0
      %4731 = vmatpush1.msra.mxu0 %v4685
      %4732 = vmatprep.subr.mxu0 0.0
      %4733 = vmatpush1.msra.mxu0 %v4684
      %4734 = vmatprep.subr.mxu0 0.0
      %4735 = vmatpush1.msra.mxu0 %v4683
      %4736 = vmatprep.subr.mxu0 0.0
      %4737 = vmatpush1.msra.mxu0 %v4682
      %4738 = vmatprep.subr.mxu0 0.0
      %4739 = vmatpush2.msra.mxu0 0.0
      %4740 = vmatprep.subr.mxu0 0.0
      %4741 = vmatpush2.msra.mxu0 0.0
      %4742 = vmatprep.subr.mxu0 0.0
      %4743 = vmatpush2.msra.mxu0 0.0
      %4744 = vmatprep.subr.mxu0 0.0
      %4745 = vmatpush2.msra.mxu0 0.0
      %4746 = vmatprep.subr.mxu0 0.0
      %4747 = vmatpush2.msra.mxu0 0.0
      %4748 = vmatprep.subr.mxu0 0.0
      %4749 = vmatpush2.msra.mxu0 0.0
      %4750 = vmatprep.subr.mxu0 0.0
      %4751 = vmatpush2.msra.mxu0 0.0
      %4752 = vmatprep.subr.mxu0 0.0
      %4753 = vmatpush2.msra.mxu0 0.0
      %4754 = vmatprep.subr.mxu0 0.0
      %4755 = vmatpush2.msra.mxu0 0.0
      %4756 = vmatprep.subr.mxu0 0.0
      %4757 = vmatpush2.msra.mxu0 0.0
      %4758 = vmatprep.subr.mxu0 0.0
      %4759 = vmatpush2.msra.mxu0 0.0
      %4760 = vmatprep.subr.mxu0 0.0
      %4761 = vmatpush2.msra.mxu0 0.0
      %4762 = vmatprep.subr.mxu0 0.0
      %4763 = vmatpush2.msra.mxu0 0.0
      %4764 = vmatprep.subr.mxu0 0.0
      %4765 = vmatpush2.msra.mxu0 0.0
      %4766 = vmatprep.subr.mxu0 0.0
      %4767 = vmatpush2.msra.mxu0 0.0
      %4768 = vmatprep.subr.mxu0 0.0
      %4769 = vmatpush2.msra.mxu0 0.0
      %4770 = vmatprep.mubr.f32.mxu0 0.0
      %4771 = vmatmul.mubr.f32.gmra.mxu0 %v4702
      %v4772 = vpop.f32.mrf.mxu0
      %v4773 = vadd.f32 0.0, %v4772
      %v4774 = vpop.f32.mrf.mxu0
      %4775 = vmatprep.mubr.f32.mxu0 0.0
      %4776 = vmatmul.mubr.f32.gmra.mxu0 %v4703
      %v4777 = vpop.f32.mrf.mxu0
      %v4778 = vadd.f32 0.0, %v4777
      %v4779 = vpop.f32.mrf.mxu0
      %4780 = vdwg.mxu0
      %v4781 = vadd.f32 %v4675, %v4773
      %v4782 = vadd.f32 %v4676, %v4778
      %v4783 = vld [vmem:[%s449 + $0x1] sm:$0xf]
      %v4784 = vld [vmem:[%s449 + $0x9] sm:$0xf]
      %v4785 = vld [vmem:[%s449 + $0x11] sm:$0xf]
      %v4786 = vld [vmem:[%s449 + $0x19] sm:$0xf]
      %s4787 = scalar_lea.vmem %s7, 512
      %v4788 = vld [vmem:[%s4787] sm:$0xff]
      %v4789 = vld [vmem:[%s4787 + $0x8] sm:$0xff]
      %v4790 = vld [vmem:[%s4787 + $0x10] sm:$0xff]
      %v4791 = vld [vmem:[%s4787 + $0x18] sm:$0xff]
      %v4792 = vld [vmem:[%s4787 + $0x20] sm:$0xff]
      %v4793 = vld [vmem:[%s4787 + $0x28] sm:$0xff]
      %v4794 = vld [vmem:[%s4787 + $0x30] sm:$0xff]
      %v4795 = vld [vmem:[%s4787 + $0x38] sm:$0xff]
      %v4796 = vld [vmem:[%s4787 + $0x40] sm:$0xff]
      %v4797 = vld [vmem:[%s4787 + $0x48] sm:$0xff]
      %v4798 = vld [vmem:[%s4787 + $0x50] sm:$0xff]
      %v4799 = vld [vmem:[%s4787 + $0x58] sm:$0xff]
      %v4800 = vld [vmem:[%s4787 + $0x60] sm:$0xff]
      %v4801 = vld [vmem:[%s4787 + $0x68] sm:$0xff]
      %v4802 = vld [vmem:[%s4787 + $0x70] sm:$0xff]
      %v4803 = vld [vmem:[%s4787 + $0x78] sm:$0xff]
      %v4808 = vcombine.low %v4783, %v4784
      %v4809 = vcombine.low %v4785, %v4786
      %4812 = vmatprep.subr.mxu0 0.0
      %4813 = vmatpush1.msra.mxu0 %v4803
      %4814 = vmatprep.subr.mxu0 0.0
      %4815 = vmatpush1.msra.mxu0 %v4802
      %4816 = vmatprep.subr.mxu0 0.0
      %4817 = vmatpush1.msra.mxu0 %v4801
      %4818 = vmatprep.subr.mxu0 0.0
      %4819 = vmatpush1.msra.mxu0 %v4800
      %4820 = vmatprep.subr.mxu0 0.0
      %4821 = vmatpush1.msra.mxu0 %v4799
      %4822 = vmatprep.subr.mxu0 0.0
      %4823 = vmatpush1.msra.mxu0 %v4798
      %4824 = vmatprep.subr.mxu0 0.0
      %4825 = vmatpush1.msra.mxu0 %v4797
      %4826 = vmatprep.subr.mxu0 0.0
      %4827 = vmatpush1.msra.mxu0 %v4796
      %4828 = vmatprep.subr.mxu0 0.0
      %4829 = vmatpush1.msra.mxu0 %v4795
      %4830 = vmatprep.subr.mxu0 0.0
      %4831 = vmatpush1.msra.mxu0 %v4794
      %4832 = vmatprep.subr.mxu0 0.0
      %4833 = vmatpush1.msra.mxu0 %v4793
      %4834 = vmatprep.subr.mxu0 0.0
      %4835 = vmatpush1.msra.mxu0 %v4792
      %4836 = vmatprep.subr.mxu0 0.0
      %4837 = vmatpush1.msra.mxu0 %v4791
      %4838 = vmatprep.subr.mxu0 0.0
      %4839 = vmatpush1.msra.mxu0 %v4790
      %4840 = vmatprep.subr.mxu0 0.0
      %4841 = vmatpush1.msra.mxu0 %v4789
      %4842 = vmatprep.subr.mxu0 0.0
      %4843 = vmatpush1.msra.mxu0 %v4788
      %4844 = vmatprep.subr.mxu0 0.0
      %4845 = vmatpush2.msra.mxu0 0.0
      %4846 = vmatprep.subr.mxu0 0.0
      %4847 = vmatpush2.msra.mxu0 0.0
      %4848 = vmatprep.subr.mxu0 0.0
      %4849 = vmatpush2.msra.mxu0 0.0
      %4850 = vmatprep.subr.mxu0 0.0
      %4851 = vmatpush2.msra.mxu0 0.0
      %4852 = vmatprep.subr.mxu0 0.0
      %4853 = vmatpush2.msra.mxu0 0.0
      %4854 = vmatprep.subr.mxu0 0.0
      %4855 = vmatpush2.msra.mxu0 0.0
      %4856 = vmatprep.subr.mxu0 0.0
      %4857 = vmatpush2.msra.mxu0 0.0
      %4858 = vmatprep.subr.mxu0 0.0
      %4859 = vmatpush2.msra.mxu0 0.0
      %4860 = vmatprep.subr.mxu0 0.0
      %4861 = vmatpush2.msra.mxu0 0.0
      %4862 = vmatprep.subr.mxu0 0.0
      %4863 = vmatpush2.msra.mxu0 0.0
      %4864 = vmatprep.subr.mxu0 0.0
      %4865 = vmatpush2.msra.mxu0 0.0
      %4866 = vmatprep.subr.mxu0 0.0
      %4867 = vmatpush2.msra.mxu0 0.0
      %4868 = vmatprep.subr.mxu0 0.0
      %4869 = vmatpush2.msra.mxu0 0.0
      %4870 = vmatprep.subr.mxu0 0.0
      %4871 = vmatpush2.msra.mxu0 0.0
      %4872 = vmatprep.subr.mxu0 0.0
      %4873 = vmatpush2.msra.mxu0 0.0
      %4874 = vmatprep.subr.mxu0 0.0
      %4875 = vmatpush2.msra.mxu0 0.0
      %4876 = vmatprep.mubr.f32.mxu0 0.0
      %4877 = vmatmul.mubr.f32.gmra.mxu0 %v4808
      %v4878 = vpop.f32.mrf.mxu0
      %v4879 = vadd.f32 0.0, %v4878
      %v4880 = vpop.f32.mrf.mxu0
      %4881 = vmatprep.mubr.f32.mxu0 0.0
      %4882 = vmatmul.mubr.f32.gmra.mxu0 %v4809
      %v4883 = vpop.f32.mrf.mxu0
      %v4884 = vadd.f32 0.0, %v4883
      %v4885 = vpop.f32.mrf.mxu0
      %4886 = vdwg.mxu0
      %v4887 = vadd.f32 %v4781, %v4879
      %v4888 = vadd.f32 %v4782, %v4884
      %v4889 = vld [vmem:[%s449 + $0x2] sm:$0xf]
      %v4890 = vld [vmem:[%s449 + $0xa] sm:$0xf]
      %v4891 = vld [vmem:[%s449 + $0x12] sm:$0xf]
      %v4892 = vld [vmem:[%s449 + $0x1a] sm:$0xf]
      %s4893 = scalar_lea.vmem %s7, 640
      %v4894 = vld [vmem:[%s4893] sm:$0xff]
      %v4895 = vld [vmem:[%s4893 + $0x8] sm:$0xff]
      %v4896 = vld [vmem:[%s4893 + $0x10] sm:$0xff]
      %v4897 = vld [vmem:[%s4893 + $0x18] sm:$0xff]
      %v4898 = vld [vmem:[%s4893 + $0x20] sm:$0xff]
      %v4899 = vld [vmem:[%s4893 + $0x28] sm:$0xff]
      %v4900 = vld [vmem:[%s4893 + $0x30] sm:$0xff]
      %v4901 = vld [vmem:[%s4893 + $0x38] sm:$0xff]
      %v4902 = vld [vmem:[%s4893 + $0x40] sm:$0xff]
      %v4903 = vld [vmem:[%s4893 + $0x48] sm:$0xff]
      %v4904 = vld [vmem:[%s4893 + $0x50] sm:$0xff]
      %v4905 = vld [vmem:[%s4893 + $0x58] sm:$0xff]
      %v4906 = vld [vmem:[%s4893 + $0x60] sm:$0xff]
      %v4907 = vld [vmem:[%s4893 + $0x68] sm:$0xff]
      %v4908 = vld [vmem:[%s4893 + $0x70] sm:$0xff]
      %v4909 = vld [vmem:[%s4893 + $0x78] sm:$0xff]
      %v4914 = vcombine.low %v4889, %v4890
      %v4915 = vcombine.low %v4891, %v4892
      %4918 = vmatprep.subr.mxu0 0.0
      %4919 = vmatpush1.msra.mxu0 %v4909
      %4920 = vmatprep.subr.mxu0 0.0
      %4921 = vmatpush1.msra.mxu0 %v4908
      %4922 = vmatprep.subr.mxu0 0.0
      %4923 = vmatpush1.msra.mxu0 %v4907
      %4924 = vmatprep.subr.mxu0 0.0
      %4925 = vmatpush1.msra.mxu0 %v4906
      %4926 = vmatprep.subr.mxu0 0.0
      %4927 = vmatpush1.msra.mxu0 %v4905
      %4928 = vmatprep.subr.mxu0 0.0
      %4929 = vmatpush1.msra.mxu0 %v4904
      %4930 = vmatprep.subr.mxu0 0.0
      %4931 = vmatpush1.msra.mxu0 %v4903
      %4932 = vmatprep.subr.mxu0 0.0
      %4933 = vmatpush1.msra.mxu0 %v4902
      %4934 = vmatprep.subr.mxu0 0.0
      %4935 = vmatpush1.msra.mxu0 %v4901
      %4936 = vmatprep.subr.mxu0 0.0
      %4937 = vmatpush1.msra.mxu0 %v4900
      %4938 = vmatprep.subr.mxu0 0.0
      %4939 = vmatpush1.msra.mxu0 %v4899
      %4940 = vmatprep.subr.mxu0 0.0
      %4941 = vmatpush1.msra.mxu0 %v4898
      %4942 = vmatprep.subr.mxu0 0.0
      %4943 = vmatpush1.msra.mxu0 %v4897
      %4944 = vmatprep.subr.mxu0 0.0
      %4945 = vmatpush1.msra.mxu0 %v4896
      %4946 = vmatprep.subr.mxu0 0.0
      %4947 = vmatpush1.msra.mxu0 %v4895
      %4948 = vmatprep.subr.mxu0 0.0
      %4949 = vmatpush1.msra.mxu0 %v4894
      %4950 = vmatprep.subr.mxu0 0.0
      %4951 = vmatpush2.msra.mxu0 0.0
      %4952 = vmatprep.subr.mxu0 0.0
      %4953 = vmatpush2.msra.mxu0 0.0
      %4954 = vmatprep.subr.mxu0 0.0
      %4955 = vmatpush2.msra.mxu0 0.0
      %4956 = vmatprep.subr.mxu0 0.0
      %4957 = vmatpush2.msra.mxu0 0.0
      %4958 = vmatprep.subr.mxu0 0.0
      %4959 = vmatpush2.msra.mxu0 0.0
      %4960 = vmatprep.subr.mxu0 0.0
      %4961 = vmatpush2.msra.mxu0 0.0
      %4962 = vmatprep.subr.mxu0 0.0
      %4963 = vmatpush2.msra.mxu0 0.0
      %4964 = vmatprep.subr.mxu0 0.0
      %4965 = vmatpush2.msra.mxu0 0.0
      %4966 = vmatprep.subr.mxu0 0.0
      %4967 = vmatpush2.msra.mxu0 0.0
      %4968 = vmatprep.subr.mxu0 0.0
      %4969 = vmatpush2.msra.mxu0 0.0
      %4970 = vmatprep.subr.mxu0 0.0
      %4971 = vmatpush2.msra.mxu0 0.0
      %4972 = vmatprep.subr.mxu0 0.0
      %4973 = vmatpush2.msra.mxu0 0.0
      %4974 = vmatprep.subr.mxu0 0.0
      %4975 = vmatpush2.msra.mxu0 0.0
      %4976 = vmatprep.subr.mxu0 0.0
      %4977 = vmatpush2.msra.mxu0 0.0
      %4978 = vmatprep.subr.mxu0 0.0
      %4979 = vmatpush2.msra.mxu0 0.0
      %4980 = vmatprep.subr.mxu0 0.0
      %4981 = vmatpush2.msra.mxu0 0.0
      %4982 = vmatprep.mubr.f32.mxu0 0.0
      %4983 = vmatmul.mubr.f32.gmra.mxu0 %v4914
      %v4984 = vpop.f32.mrf.mxu0
      %v4985 = vadd.f32 0.0, %v4984
      %v4986 = vpop.f32.mrf.mxu0
      %4987 = vmatprep.mubr.f32.mxu0 0.0
      %4988 = vmatmul.mubr.f32.gmra.mxu0 %v4915
      %v4989 = vpop.f32.mrf.mxu0
      %v4990 = vadd.f32 0.0, %v4989
      %v4991 = vpop.f32.mrf.mxu0
      %4992 = vdwg.mxu0
      %v4993 = vadd.f32 %v4887, %v4985
      %v4994 = vadd.f32 %v4888, %v4990
      %s4995 = scalar_lea.vmem [#allocation4], 16
      %v4996 = vld [vmem:[%s4995] sm:$0xf]
      %v4997 = vld [vmem:[%s4995 + $0x8] sm:$0xf]
      %v4998 = vld [vmem:[%s4995 + $0x10] sm:$0xf]
      %v4999 = vld [vmem:[%s4995 + $0x18] sm:$0xf]
      %s5000 = scalar_lea.vmem %s7, 768
      %v5001 = vld [vmem:[%s5000] sm:$0xff]
      %v5002 = vld [vmem:[%s5000 + $0x8] sm:$0xff]
      %v5003 = vld [vmem:[%s5000 + $0x10] sm:$0xff]
      %v5004 = vld [vmem:[%s5000 + $0x18] sm:$0xff]
      %v5005 = vld [vmem:[%s5000 + $0x20] sm:$0xff]
      %v5006 = vld [vmem:[%s5000 + $0x28] sm:$0xff]
      %v5007 = vld [vmem:[%s5000 + $0x30] sm:$0xff]
      %v5008 = vld [vmem:[%s5000 + $0x38] sm:$0xff]
      %v5009 = vld [vmem:[%s5000 + $0x40] sm:$0xff]
      %v5010 = vld [vmem:[%s5000 + $0x48] sm:$0xff]
      %v5011 = vld [vmem:[%s5000 + $0x50] sm:$0xff]
      %v5012 = vld [vmem:[%s5000 + $0x58] sm:$0xff]
      %v5013 = vld [vmem:[%s5000 + $0x60] sm:$0xff]
      %v5014 = vld [vmem:[%s5000 + $0x68] sm:$0xff]
      %v5015 = vld [vmem:[%s5000 + $0x70] sm:$0xff]
      %v5016 = vld [vmem:[%s5000 + $0x78] sm:$0xff]
      %v5021 = vcombine.low %v4996, %v4997
      %v5022 = vcombine.low %v4998, %v4999
      %5025 = vmatprep.subr.mxu0 0.0
      %5026 = vmatpush1.msra.mxu0 %v5016
      %5027 = vmatprep.subr.mxu0 0.0
      %5028 = vmatpush1.msra.mxu0 %v5015
      %5029 = vmatprep.subr.mxu0 0.0
      %5030 = vmatpush1.msra.mxu0 %v5014
      %5031 = vmatprep.subr.mxu0 0.0
      %5032 = vmatpush1.msra.mxu0 %v5013
      %5033 = vmatprep.subr.mxu0 0.0
      %5034 = vmatpush1.msra.mxu0 %v5012
      %5035 = vmatprep.subr.mxu0 0.0
      %5036 = vmatpush1.msra.mxu0 %v5011
      %5037 = vmatprep.subr.mxu0 0.0
      %5038 = vmatpush1.msra.mxu0 %v5010
      %5039 = vmatprep.subr.mxu0 0.0
      %5040 = vmatpush1.msra.mxu0 %v5009
      %5041 = vmatprep.subr.mxu0 0.0
      %5042 = vmatpush1.msra.mxu0 %v5008
      %5043 = vmatprep.subr.mxu0 0.0
      %5044 = vmatpush1.msra.mxu0 %v5007
      %5045 = vmatprep.subr.mxu0 0.0
      %5046 = vmatpush1.msra.mxu0 %v5006
      %5047 = vmatprep.subr.mxu0 0.0
      %5048 = vmatpush1.msra.mxu0 %v5005
      %5049 = vmatprep.subr.mxu0 0.0
      %5050 = vmatpush1.msra.mxu0 %v5004
      %5051 = vmatprep.subr.mxu0 0.0
      %5052 = vmatpush1.msra.mxu0 %v5003
      %5053 = vmatprep.subr.mxu0 0.0
      %5054 = vmatpush1.msra.mxu0 %v5002
      %5055 = vmatprep.subr.mxu0 0.0
      %5056 = vmatpush1.msra.mxu0 %v5001
      %5057 = vmatprep.subr.mxu0 0.0
      %5058 = vmatpush2.msra.mxu0 0.0
      %5059 = vmatprep.subr.mxu0 0.0
      %5060 = vmatpush2.msra.mxu0 0.0
      %5061 = vmatprep.subr.mxu0 0.0
      %5062 = vmatpush2.msra.mxu0 0.0
      %5063 = vmatprep.subr.mxu0 0.0
      %5064 = vmatpush2.msra.mxu0 0.0
      %5065 = vmatprep.subr.mxu0 0.0
      %5066 = vmatpush2.msra.mxu0 0.0
      %5067 = vmatprep.subr.mxu0 0.0
      %5068 = vmatpush2.msra.mxu0 0.0
      %5069 = vmatprep.subr.mxu0 0.0
      %5070 = vmatpush2.msra.mxu0 0.0
      %5071 = vmatprep.subr.mxu0 0.0
      %5072 = vmatpush2.msra.mxu0 0.0
      %5073 = vmatprep.subr.mxu0 0.0
      %5074 = vmatpush2.msra.mxu0 0.0
      %5075 = vmatprep.subr.mxu0 0.0
      %5076 = vmatpush2.msra.mxu0 0.0
      %5077 = vmatprep.subr.mxu0 0.0
      %5078 = vmatpush2.msra.mxu0 0.0
      %5079 = vmatprep.subr.mxu0 0.0
      %5080 = vmatpush2.msra.mxu0 0.0
      %5081 = vmatprep.subr.mxu0 0.0
      %5082 = vmatpush2.msra.mxu0 0.0
      %5083 = vmatprep.subr.mxu0 0.0
      %5084 = vmatpush2.msra.mxu0 0.0
      %5085 = vmatprep.subr.mxu0 0.0
      %5086 = vmatpush2.msra.mxu0 0.0
      %5087 = vmatprep.subr.mxu0 0.0
      %5088 = vmatpush2.msra.mxu0 0.0
      %5089 = vmatprep.mubr.f32.mxu0 0.0
      %5090 = vmatmul.mubr.f32.gmra.mxu0 %v5021
      %v5091 = vpop.f32.mrf.mxu0
      %v5092 = vadd.f32 0.0, %v5091
      %v5093 = vpop.f32.mrf.mxu0
      %5094 = vmatprep.mubr.f32.mxu0 0.0
      %5095 = vmatmul.mubr.f32.gmra.mxu0 %v5022
      %v5096 = vpop.f32.mrf.mxu0
      %v5097 = vadd.f32 0.0, %v5096
      %v5098 = vpop.f32.mrf.mxu0
      %5099 = vdwg.mxu0
      %v5100 = vadd.f32 %v4993, %v5092
      %v5101 = vadd.f32 %v4994, %v5097
      %v5102 = vld [vmem:[%s4995 + $0x1] sm:$0xf]
      %v5103 = vld [vmem:[%s4995 + $0x9] sm:$0xf]
      %v5104 = vld [vmem:[%s4995 + $0x11] sm:$0xf]
      %v5105 = vld [vmem:[%s4995 + $0x19] sm:$0xf]
      %s5106 = scalar_lea.vmem %s7, 896
      %v5107 = vld [vmem:[%s5106] sm:$0xff]
      %v5108 = vld [vmem:[%s5106 + $0x8] sm:$0xff]
      %v5109 = vld [vmem:[%s5106 + $0x10] sm:$0xff]
      %v5110 = vld [vmem:[%s5106 + $0x18] sm:$0xff]
      %v5111 = vld [vmem:[%s5106 + $0x20] sm:$0xff]
      %v5112 = vld [vmem:[%s5106 + $0x28] sm:$0xff]
      %v5113 = vld [vmem:[%s5106 + $0x30] sm:$0xff]
      %v5114 = vld [vmem:[%s5106 + $0x38] sm:$0xff]
      %v5115 = vld [vmem:[%s5106 + $0x40] sm:$0xff]
      %v5116 = vld [vmem:[%s5106 + $0x48] sm:$0xff]
      %v5117 = vld [vmem:[%s5106 + $0x50] sm:$0xff]
      %v5118 = vld [vmem:[%s5106 + $0x58] sm:$0xff]
      %v5119 = vld [vmem:[%s5106 + $0x60] sm:$0xff]
      %v5120 = vld [vmem:[%s5106 + $0x68] sm:$0xff]
      %v5121 = vld [vmem:[%s5106 + $0x70] sm:$0xff]
      %v5122 = vld [vmem:[%s5106 + $0x78] sm:$0xff]
      %v5127 = vcombine.low %v5102, %v5103
      %v5128 = vcombine.low %v5104, %v5105
      %5131 = vmatprep.subr.mxu0 0.0
      %5132 = vmatpush1.msra.mxu0 %v5122
      %5133 = vmatprep.subr.mxu0 0.0
      %5134 = vmatpush1.msra.mxu0 %v5121
      %5135 = vmatprep.subr.mxu0 0.0
      %5136 = vmatpush1.msra.mxu0 %v5120
      %5137 = vmatprep.subr.mxu0 0.0
      %5138 = vmatpush1.msra.mxu0 %v5119
      %5139 = vmatprep.subr.mxu0 0.0
      %5140 = vmatpush1.msra.mxu0 %v5118
      %5141 = vmatprep.subr.mxu0 0.0
      %5142 = vmatpush1.msra.mxu0 %v5117
      %5143 = vmatprep.subr.mxu0 0.0
      %5144 = vmatpush1.msra.mxu0 %v5116
      %5145 = vmatprep.subr.mxu0 0.0
      %5146 = vmatpush1.msra.mxu0 %v5115
      %5147 = vmatprep.subr.mxu0 0.0
      %5148 = vmatpush1.msra.mxu0 %v5114
      %5149 = vmatprep.subr.mxu0 0.0
      %5150 = vmatpush1.msra.mxu0 %v5113
      %5151 = vmatprep.subr.mxu0 0.0
      %5152 = vmatpush1.msra.mxu0 %v5112
      %5153 = vmatprep.subr.mxu0 0.0
      %5154 = vmatpush1.msra.mxu0 %v5111
      %5155 = vmatprep.subr.mxu0 0.0
      %5156 = vmatpush1.msra.mxu0 %v5110
      %5157 = vmatprep.subr.mxu0 0.0
      %5158 = vmatpush1.msra.mxu0 %v5109
      %5159 = vmatprep.subr.mxu0 0.0
      %5160 = vmatpush1.msra.mxu0 %v5108
      %5161 = vmatprep.subr.mxu0 0.0
      %5162 = vmatpush1.msra.mxu0 %v5107
      %5163 = vmatprep.subr.mxu0 0.0
      %5164 = vmatpush2.msra.mxu0 0.0
      %5165 = vmatprep.subr.mxu0 0.0
      %5166 = vmatpush2.msra.mxu0 0.0
      %5167 = vmatprep.subr.mxu0 0.0
      %5168 = vmatpush2.msra.mxu0 0.0
      %5169 = vmatprep.subr.mxu0 0.0
      %5170 = vmatpush2.msra.mxu0 0.0
      %5171 = vmatprep.subr.mxu0 0.0
      %5172 = vmatpush2.msra.mxu0 0.0
      %5173 = vmatprep.subr.mxu0 0.0
      %5174 = vmatpush2.msra.mxu0 0.0
      %5175 = vmatprep.subr.mxu0 0.0
      %5176 = vmatpush2.msra.mxu0 0.0
      %5177 = vmatprep.subr.mxu0 0.0
      %5178 = vmatpush2.msra.mxu0 0.0
      %5179 = vmatprep.subr.mxu0 0.0
      %5180 = vmatpush2.msra.mxu0 0.0
      %5181 = vmatprep.subr.mxu0 0.0
      %5182 = vmatpush2.msra.mxu0 0.0
      %5183 = vmatprep.subr.mxu0 0.0
      %5184 = vmatpush2.msra.mxu0 0.0
      %5185 = vmatprep.subr.mxu0 0.0
      %5186 = vmatpush2.msra.mxu0 0.0
      %5187 = vmatprep.subr.mxu0 0.0
      %5188 = vmatpush2.msra.mxu0 0.0
      %5189 = vmatprep.subr.mxu0 0.0
      %5190 = vmatpush2.msra.mxu0 0.0
      %5191 = vmatprep.subr.mxu0 0.0
      %5192 = vmatpush2.msra.mxu0 0.0
      %5193 = vmatprep.subr.mxu0 0.0
      %5194 = vmatpush2.msra.mxu0 0.0
      %5195 = vmatprep.mubr.f32.mxu0 0.0
      %5196 = vmatmul.mubr.f32.gmra.mxu0 %v5127
      %v5197 = vpop.f32.mrf.mxu0
      %v5198 = vadd.f32 0.0, %v5197
      %v5199 = vpop.f32.mrf.mxu0
      %5200 = vmatprep.mubr.f32.mxu0 0.0
      %5201 = vmatmul.mubr.f32.gmra.mxu0 %v5128
      %v5202 = vpop.f32.mrf.mxu0
      %v5203 = vadd.f32 0.0, %v5202
      %v5204 = vpop.f32.mrf.mxu0
      %5205 = vdwg.mxu0
      %v5206 = vadd.f32 %v5100, %v5198
      %v5207 = vadd.f32 %v5101, %v5203
      %v5208 = vld [vmem:[%s4995 + $0x2] sm:$0xf]
      %v5209 = vld [vmem:[%s4995 + $0xa] sm:$0xf]
      %v5210 = vld [vmem:[%s4995 + $0x12] sm:$0xf]
      %v5211 = vld [vmem:[%s4995 + $0x1a] sm:$0xf]
      %s5212 = scalar_lea.vmem %s7, 1024
      %v5213 = vld [vmem:[%s5212] sm:$0xff]
      %v5214 = vld [vmem:[%s5212 + $0x8] sm:$0xff]
      %v5215 = vld [vmem:[%s5212 + $0x10] sm:$0xff]
      %v5216 = vld [vmem:[%s5212 + $0x18] sm:$0xff]
      %v5217 = vld [vmem:[%s5212 + $0x20] sm:$0xff]
      %v5218 = vld [vmem:[%s5212 + $0x28] sm:$0xff]
      %v5219 = vld [vmem:[%s5212 + $0x30] sm:$0xff]
      %v5220 = vld [vmem:[%s5212 + $0x38] sm:$0xff]
      %v5221 = vld [vmem:[%s5212 + $0x40] sm:$0xff]
      %v5222 = vld [vmem:[%s5212 + $0x48] sm:$0xff]
      %v5223 = vld [vmem:[%s5212 + $0x50] sm:$0xff]
      %v5224 = vld [vmem:[%s5212 + $0x58] sm:$0xff]
      %v5225 = vld [vmem:[%s5212 + $0x60] sm:$0xff]
      %v5226 = vld [vmem:[%s5212 + $0x68] sm:$0xff]
      %v5227 = vld [vmem:[%s5212 + $0x70] sm:$0xff]
      %v5228 = vld [vmem:[%s5212 + $0x78] sm:$0xff]
      %v5233 = vcombine.low %v5208, %v5209
      %v5234 = vcombine.low %v5210, %v5211
      %5237 = vmatprep.subr.mxu0 0.0
      %5238 = vmatpush1.msra.mxu0 %v5228
      %5239 = vmatprep.subr.mxu0 0.0
      %5240 = vmatpush1.msra.mxu0 %v5227
      %5241 = vmatprep.subr.mxu0 0.0
      %5242 = vmatpush1.msra.mxu0 %v5226
      %5243 = vmatprep.subr.mxu0 0.0
      %5244 = vmatpush1.msra.mxu0 %v5225
      %5245 = vmatprep.subr.mxu0 0.0
      %5246 = vmatpush1.msra.mxu0 %v5224
      %5247 = vmatprep.subr.mxu0 0.0
      %5248 = vmatpush1.msra.mxu0 %v5223
      %5249 = vmatprep.subr.mxu0 0.0
      %5250 = vmatpush1.msra.mxu0 %v5222
      %5251 = vmatprep.subr.mxu0 0.0
      %5252 = vmatpush1.msra.mxu0 %v5221
      %5253 = vmatprep.subr.mxu0 0.0
      %5254 = vmatpush1.msra.mxu0 %v5220
      %5255 = vmatprep.subr.mxu0 0.0
      %5256 = vmatpush1.msra.mxu0 %v5219
      %5257 = vmatprep.subr.mxu0 0.0
      %5258 = vmatpush1.msra.mxu0 %v5218
      %5259 = vmatprep.subr.mxu0 0.0
      %5260 = vmatpush1.msra.mxu0 %v5217
      %5261 = vmatprep.subr.mxu0 0.0
      %5262 = vmatpush1.msra.mxu0 %v5216
      %5263 = vmatprep.subr.mxu0 0.0
      %5264 = vmatpush1.msra.mxu0 %v5215
      %5265 = vmatprep.subr.mxu0 0.0
      %5266 = vmatpush1.msra.mxu0 %v5214
      %5267 = vmatprep.subr.mxu0 0.0
      %5268 = vmatpush1.msra.mxu0 %v5213
      %5269 = vmatprep.subr.mxu0 0.0
      %5270 = vmatpush2.msra.mxu0 0.0
      %5271 = vmatprep.subr.mxu0 0.0
      %5272 = vmatpush2.msra.mxu0 0.0
      %5273 = vmatprep.subr.mxu0 0.0
      %5274 = vmatpush2.msra.mxu0 0.0
      %5275 = vmatprep.subr.mxu0 0.0
      %5276 = vmatpush2.msra.mxu0 0.0
      %5277 = vmatprep.subr.mxu0 0.0
      %5278 = vmatpush2.msra.mxu0 0.0
      %5279 = vmatprep.subr.mxu0 0.0
      %5280 = vmatpush2.msra.mxu0 0.0
      %5281 = vmatprep.subr.mxu0 0.0
      %5282 = vmatpush2.msra.mxu0 0.0
      %5283 = vmatprep.subr.mxu0 0.0
      %5284 = vmatpush2.msra.mxu0 0.0
      %5285 = vmatprep.subr.mxu0 0.0
      %5286 = vmatpush2.msra.mxu0 0.0
      %5287 = vmatprep.subr.mxu0 0.0
      %5288 = vmatpush2.msra.mxu0 0.0
      %5289 = vmatprep.subr.mxu0 0.0
      %5290 = vmatpush2.msra.mxu0 0.0
      %5291 = vmatprep.subr.mxu0 0.0
      %5292 = vmatpush2.msra.mxu0 0.0
      %5293 = vmatprep.subr.mxu0 0.0
      %5294 = vmatpush2.msra.mxu0 0.0
      %5295 = vmatprep.subr.mxu0 0.0
      %5296 = vmatpush2.msra.mxu0 0.0
      %5297 = vmatprep.subr.mxu0 0.0
      %5298 = vmatpush2.msra.mxu0 0.0
      %5299 = vmatprep.subr.mxu0 0.0
      %5300 = vmatpush2.msra.mxu0 0.0
      %5301 = vmatprep.mubr.f32.mxu0 0.0
      %5302 = vmatmul.mubr.f32.gmra.mxu0 %v5233
      %v5303 = vpop.f32.mrf.mxu0
      %v5304 = vadd.f32 0.0, %v5303
      %v5305 = vpop.f32.mrf.mxu0
      %5306 = vmatprep.mubr.f32.mxu0 0.0
      %5307 = vmatmul.mubr.f32.gmra.mxu0 %v5234
      %v5308 = vpop.f32.mrf.mxu0
      %v5309 = vadd.f32 0.0, %v5308
      %v5310 = vpop.f32.mrf.mxu0
      %5311 = vdwg.mxu0
      %v5312 = vadd.f32 %v5206, %v5304
      %v5313 = vadd.f32 %v5207, %v5309
      %v5314 = vld [vmem:[%s8] sm:$0x1]
      %v5316 = vlaneseq
      %v5317 = vshrl.u32 %v5316, 7
      %v5318 = vsub.s32 0, %v5317
      %v5319 = vrot.slane %v5314, %v5318
      %v5321 = vadd.f32 %v5312, %v5319
      %v5322 = vadd.f32 %v5313, %v5319
      %v5323 = vmax.f32 %v5321, 0.0
      %v5324 = vmax.f32 %v5322, 0.0
      %vm5325 = vcmask 654336
      %5326 = vst.msk [vmem:[%s405] sm:$0xff] %vm5325, %v5323
      %5327 = vst.msk [vmem:[%s405 + $0x8] sm:$0xff] %vm5325, %v5324
      %v5330 = vcombine.high %v5323, %v5323
      %v5331 = vcombine.high %v5324, %v5324
      %v5334 = vmax.f32 %v5323, %v5330
      %v5335 = vmax.f32 %v5324, %v5331
      %v5339 = vunpack.c.l.s4 1983009808
      %v5340 = vunpack.c.0.s8 %v5339
      %v5341 = vlaneseq
      %v5342 = vshrl.u32 %v5341, 7
      %v5343 = vsub.s32 %v5340, %v5342
      %v5344 = vrot.slane %v5334, %v5343
      %v5345 = vcombine.high %v5344, %v5344
      %v5347 = vunpack.c.l.s4 1983009808
      %v5348 = vunpack.c.0.s8 %v5347
      %v5349 = vlaneseq
      %v5350 = vshrl.u32 %v5349, 7
      %v5351 = vsub.s32 %v5348, %v5350
      %v5352 = vrot.slane %v5335, %v5351
      %v5353 = vcombine.high %v5352, %v5352
      %v5358 = vrot.slane %v5344, 7
      %v5359 = vrot.slane %v5358, 2
      %v5360 = vrot.slane %v5345, 7
      %v5361 = vrot.slane %v5360, 2
      %v5362 = vrot.slane %v5352, 7
      %v5363 = vrot.slane %v5362, 2
      %v5364 = vrot.slane %v5353, 7
      %v5365 = vrot.slane %v5364, 2
      %v5370 = vmax.f32 %v5344, %v5359
      %v5371 = vmax.f32 %v5345, %v5361
      %v5372 = vmax.f32 %v5352, %v5363
      %v5373 = vmax.f32 %v5353, %v5365
      %5378 = vrot.lane.b32.xlu0 %v5370, 108
      %v5379 = vpop.permute.xlu0 %5378
      %5380 = vrot.lane.b32.xlu0 %v5371, 108
      %v5381 = vpop.permute.xlu0 %5380
      %5382 = vrot.lane.b32.xlu0 %v5372, 108
      %v5383 = vpop.permute.xlu0 %5382
      %5384 = vrot.lane.b32.xlu0 %v5373, 108
      %v5385 = vpop.permute.xlu0 %5384
      %v5390 = vmax.f32 %v5370, %v5379
      %v5391 = vmax.f32 %v5371, %v5381
      %v5392 = vmax.f32 %v5372, %v5383
      %v5393 = vmax.f32 %v5373, %v5385
      %v5398 = vlaneseq
      %v5399 = vshrl.u32 %v5398, 7
      %v5400 = vsub.s32 0, %v5399
      %v5401 = vrot.slane %v5390, %v5400
      %v5402 = vlaneseq
      %v5403 = vshrl.u32 %v5402, 7
      %v5404 = vsub.s32 0, %v5403
      %v5405 = vrot.slane %v5391, %v5404
      %v5406 = vlaneseq
      %v5407 = vshrl.u32 %v5406, 7
      %v5408 = vsub.s32 0, %v5407
      %v5409 = vrot.slane %v5392, %v5408
      %v5410 = vlaneseq
      %v5411 = vshrl.u32 %v5410, 7
      %v5412 = vsub.s32 0, %v5411
      %v5413 = vrot.slane %v5393, %v5412
      %v5414 = vsel %vm3371, %v5405, %v5401
      %v5415 = vsel %vm3371, %v5413, %v5409
      %5418 = vrot.lane.b32.xlu0 %v5414, 108
      %v5419 = vpop.permute.xlu0 %5418
      %5420 = vrot.lane.b32.xlu0 %v5415, 108
      %v5421 = vpop.permute.xlu0 %5420
      %vm5424 = vcmask 162816
      %v5425 = vsel %vm5424, %v5414, %v5419
      %v5426 = vsel %vm5424, %v5415, %v5421
      %v5429 = vcombine.low %v5425, %v5426
      %v5431 = vunpack.c.l.s4 1983009808
      %v5432 = vunpack.c.0.s8 %v5431
      %v5433 = vlaneseq
      %v5434 = vshrl.u32 %v5433, 7
      %v5435 = vsub.s32 %v5432, %v5434
      %v5436 = vrot.slane %v5429, %v5435
      %vm5438 = vcmask 322560
      %5439 = vst.msk [vmem:[%s409] sm:$0xf] %vm5438, %v5436
      %p5440 = scmp.lt.s32.totalorder %s23, 1
      %s5441 = scalar_select %p5440, %s23, 1
      %s5442 = smul.addr %s5441, 8
      %s5443 = smul.addr %s5442, 8
      %s5444 = scalar_lea.vmem %s9, %s5443
      %p5445 = scmp.lt.s32.totalorder %s23, 1
      %s5446 = scalar_select %p5445, %s23, 1
      %s5447 = smul.addr %s5446, 2
      %s5448 = smul.addr %s5447, 8
      %s5449 = scalar_lea.vmem %s10, %s5448
      %p5450 = scmp.lt.s32.totalorder %s23, 1
      %s5451 = scalar_select %p5450, %s23, 1
      %s5452 = smul.addr %s5451, 4
      %s5453 = scalar_lea.vmem %s11, %s5452
      // Predicated region
      $region57: #{encoder_forward.1} parent=55 // pred_check
        %p5454 = pneg %p235
      $region58: #{encoder_forward.1} parent=55 // pred_check_branch
        %5456 = sbr.rel (%p5454) target = $region60
      $region59: #{encoder_forward.1} parent=55 // pred_region
        _
      $region60: #{encoder_forward.1} parent=55 // pred_fallthru
        _
      // Predicated region
      $region61: #{encoder_forward.1} parent=55 // pred_check
        %p5457 = pneg %p261
      $region62: #{encoder_forward.1} parent=55 // pred_check_branch
        %5459 = sbr.rel (%p5457) target = $region64
      $region63: #{encoder_forward.1} parent=55 // pred_region
        _
      $region64: #{encoder_forward.1} parent=55 // pred_fallthru
        _
      // Predicated region
      $region65: #{encoder_forward.1} parent=55 // pred_check
        %p5460 = pneg %p287
      $region66: #{encoder_forward.1} parent=55 // pred_check_branch
        %5462 = sbr.rel (%p5460) target = $region68
      $region67: #{encoder_forward.1} parent=55 // pred_region
        _
      $region68: #{encoder_forward.1} parent=55 // pred_fallthru
        _
    $region56: #{encoder_forward.1} parent=5 // pred_fallthru
      _
    %p5463 = scmp.le.s32.totalorder 2, %s18
    // Predicated region
    $region69: #{encoder_forward.1} parent=5 // pred_check
      %p5464 = pneg %p5463
    $region70: #{encoder_forward.1} parent=5 // pred_check_branch
      %5466 = sbr.rel (%p5464) target = $region72
    $region71: #{encoder_forward.1} parent=5 // pred_region
      %s5467 = ssub.s32 %s18, 2
      // Predicated region
      $region73: #{encoder_forward.1} parent=71 // pred_check
        %p5468 = pneg %p241
      $region74: #{encoder_forward.1} parent=71 // pred_check_branch
        %5470 = sbr.rel (%p5468) target = $region76
      $region75: #{encoder_forward.1} parent=71 // pred_region
        %p5471 = scmp.lt.s32.totalorder %s24, 1
        %s5472 = scalar_select %p5471, %s24, 1
        %s5473 = smul.addr %s5472, 8
        %s5474 = smul.addr %s5473, 8
        %s5475 = scalar_lea.vmem %s9, %s5474
      $region76: #{encoder_forward.1} parent=71 // pred_fallthru
        _
      // Predicated region
      $region77: #{encoder_forward.1} parent=71 // pred_check
        %p5476 = pneg %p267
      $region78: #{encoder_forward.1} parent=71 // pred_check_branch
        %5478 = sbr.rel (%p5476) target = $region80
      $region79: #{encoder_forward.1} parent=71 // pred_region
        %p5479 = scmp.lt.s32.totalorder %s24, 1
        %s5480 = scalar_select %p5479, %s24, 1
        %s5481 = smul.addr %s5480, 2
        %s5482 = smul.addr %s5481, 8
        %s5483 = scalar_lea.vmem %s10, %s5482
      $region80: #{encoder_forward.1} parent=71 // pred_fallthru
        _
      // Predicated region
      $region81: #{encoder_forward.1} parent=71 // pred_check
        %p5484 = pneg %p293
      $region82: #{encoder_forward.1} parent=71 // pred_check_branch
        %5486 = sbr.rel (%p5484) target = $region84
      $region83: #{encoder_forward.1} parent=71 // pred_region
        %p5487 = scmp.lt.s32.totalorder %s24, 1
        %s5488 = scalar_select %p5487, %s24, 1
        %s5489 = smul.addr %s5488, 4
        %s5490 = scalar_lea.vmem %s11, %s5489
      $region84: #{encoder_forward.1} parent=71 // pred_fallthru
        _
    $region72: #{encoder_forward.1} parent=5 // pred_fallthru
      _
  $region6: #{encoder_forward.1} parent=0 // loop_footer
    %s22 = sadd.s32 1, %s18
  $region7: #{encoder_forward.1} parent=0 // loop_footer_branch
    %17 = sbr.rel target = $region3
  $region8: #{encoder_forward.1} parent=0 // loop_exit
    _

</llo_original>
